<compile_context>
chip_gen: v6e
topology: v6e:2x2x1
jax: 0.10.0
libtpu: 0.0.40
codegen_flags: <defaults>
</compile_context>

<pallas_src>
import functools

import jax
import jax.numpy as jnp
from jax import lax
from jax.experimental import pallas as pl
from jax.experimental.pallas import tpu as pltpu


def _tap_range(k_idx, stride, pad, dil, in_len, out_len):
    """Static bookkeeping for one transposed-conv tap along one spatial dim.

    Input index i scatters to output index o = i*stride - pad + k_idx*dil.
    Writing o = q*stride + r, a whole tap lands in a single phase r with
    q = i + floor(c/stride), c = k_idx*dil - pad.
    Returns (phase r, i_start, q_start, count) as Python ints.
    """
    c = k_idx * dil - pad
    r = c % stride
    f = c // stride                       # floor div (correct for negative c)
    i_min = max(0, -f)
    q_max = (out_len - 1 - r) // stride
    i_max = min(in_len - 1, q_max - f)
    n = i_max - i_min + 1
    return r, i_min, i_min + f, max(n, 0)


def upconv_bn_prelu_kernel(x_ref, w_ref, scale_ref, shift_ref, alpha_ref,
                           o_ref, acc_ref, *, K, stride, pad, dil,
                           H, W, H_out, W_out):
    """One batch element of ConvTranspose2d + folded BN + PReLU.

    x_ref     : (1, H*W, Cin)            bf16, pre-flattened spatial dims
    w_ref     : (K, K, Cin, Cout)        bf16 taps (w[ky,kx] == torch W[:,:,ky,kx])
    scale_ref : (1, Cout) f32            folded BN scale  = gamma/sqrt(var+eps)
    shift_ref : (1, Cout) f32            folded BN shift  = beta - mean*scale
    alpha_ref : (1, Cout) f32            PReLU slope (broadcast)
    o_ref     : (1, s*s, Hq, Wq, Cout)   phase-separated output
    acc_ref   : (s*s, Hq, Wq, Cout) f32  VMEM accumulator scratch
    """
    Cin = x_ref.shape[-1]
    Cout = o_ref.shape[-1]

    # f32 accumulator lives in VMEM scratch; o_ref is written once at the end.
    acc_ref[...] = jnp.zeros_like(acc_ref)

    xm = x_ref[0]                                    # (H*W, Cin) bf16, reused by all taps

    for ky in range(K):
        ry, iy0, qy0, nh = _tap_range(ky, stride, pad, dil, H, H_out)
        if nh <= 0:
            continue
        for kx in range(K):
            rx, ix0, qx0, nw = _tap_range(kx, stride, pad, dil, W, W_out)
            if nw <= 0:
                continue
            # Single MXU-shaped matmul per tap: (H*W, Cin) x (Cin, Cout) -> f32.
            m = jnp.dot(xm, w_ref[ky, kx],
                        preferred_element_type=jnp.float32)
            m = m.reshape(H, W, Cout)
            p = ry * stride + rx                     # output phase of this tap
            cur = acc_ref[p, qy0:qy0 + nh, qx0:qx0 + nw, :]
            acc_ref[p, qy0:qy0 + nh, qx0:qx0 + nw, :] = (
                cur + m[iy0:iy0 + nh, ix0:ix0 + nw, :])

    # Fused epilogue in f32: BatchNorm (eval mode, folded) then PReLU.
    y = acc_ref[...] * scale_ref[...] + shift_ref[...]
    y = jnp.maximum(y, 0.0) + alpha_ref[...] * jnp.minimum(y, 0.0)
    o_ref[0] = y.astype(o_ref.dtype)


@functools.partial(jax.jit, static_argnames=("stride", "dilation"))
def upconv_block_forward(x_nchw, params, *, stride, dilation=1):
    """UpConvBlock forward.  I/O is NCHW like PyTorch."""
    w = params["w"]                                  # (K, K, Cin, Cout)
    K, _, Cin, Cout = w.shape
    pad = (K - 1) // 2 * dilation
    N, C, H, W = x_nchw.shape
    assert C == Cin
    s = stride
    H_out = (H - 1) * s - 2 * pad + dilation * (K - 1) + 1
    W_out = (W - 1) * s - 2 * pad + dilation * (K - 1) + 1
    Hq = -(-H_out // s)                              # phase grid size (ceil)
    Wq = -(-W_out // s)

    # Fold BN (running stats) into per-channel scale/shift; PReLU single slope.
    scale = (params["gamma"] * lax.rsqrt(params["var"] + params["eps"])
             ).astype(jnp.float32).reshape(1, Cout)
    shift = (params["beta"].astype(jnp.float32)
             - params["mean"].astype(jnp.float32) * scale[0]).reshape(1, Cout)
    alpha = jnp.broadcast_to(params["alpha"].astype(jnp.float32),
                             (Cout,)).reshape(1, Cout)

    # bf16 into the MXU; spatial dims pre-flattened (free XLA reshape).
    x_flat = jnp.transpose(x_nchw, (0, 2, 3, 1)).astype(jnp.bfloat16)
    x_flat = x_flat.reshape(N, H * W, Cin)
    w_bf = w.astype(jnp.bfloat16)

    kernel = functools.partial(
        upconv_bn_prelu_kernel, K=K, stride=s, pad=pad, dil=dilation,
        H=H, W=W, H_out=H_out, W_out=W_out)

    y_ph = pl.pallas_call(
        kernel,
        out_shape=jax.ShapeDtypeStruct((N, s * s, Hq, Wq, Cout), jnp.float32),
        grid=(N,),
        in_specs=[
            pl.BlockSpec((1, H * W, Cin), lambda n: (n, 0, 0)),
            pl.BlockSpec((K, K, Cin, Cout), lambda n: (0, 0, 0, 0)),
            pl.BlockSpec((1, Cout), lambda n: (0, 0)),
            pl.BlockSpec((1, Cout), lambda n: (0, 0)),
            pl.BlockSpec((1, Cout), lambda n: (0, 0)),
        ],
        out_specs=pl.BlockSpec((1, s * s, Hq, Wq, Cout),
                               lambda n: (n, 0, 0, 0, 0)),
        scratch_shapes=[pltpu.VMEM((s * s, Hq, Wq, Cout), jnp.float32)],
        compiler_params=pltpu.CompilerParams(
            dimension_semantics=("parallel",),
            vmem_limit_bytes=48 * 1024 * 1024),
    )(x_flat, w_bf, scale, shift, alpha)

    # Un-interleave phases (glue, fused with the NCHW transpose by XLA):
    # out[n, qy*s+ry, qx*s+rx, c] = y_ph[n, ry*s+rx, qy, qx, c]
    y = y_ph.reshape(N, s, s, Hq, Wq, Cout)
    y = jnp.transpose(y, (0, 3, 1, 4, 2, 5)).reshape(N, Hq * s, Wq * s, Cout)
    y = y[:, :H_out, :W_out, :]
    return jnp.transpose(y, (0, 3, 1, 2))            # NHWC -> NCHW


# ----------------------------------------------------------------------------
# Pure-JAX reference (lax.conv_general_dilated) for correctness check.
# Uses the same bf16-quantized inputs so only accumulation order differs.
# ----------------------------------------------------------------------------
def upconv_block_ref(x_nchw, params, *, stride, dilation=1):
    w = params["w"].astype(jnp.bfloat16).astype(jnp.float32)
    K, _, _, Cout = w.shape
    pad = (K - 1) // 2 * dilation
    pe = dilation * (K - 1) - pad
    x = jnp.transpose(x_nchw, (0, 2, 3, 1)).astype(jnp.bfloat16).astype(jnp.float32)
    w_conv = w[::-1, ::-1, :, :]                     # flipped taps == forward conv
    y = lax.conv_general_dilated(
        x, w_conv, window_strides=(1, 1),
        padding=[(pe, pe), (pe, pe)],
        lhs_dilation=(stride, stride),
        rhs_dilation=(dilation, dilation),
        dimension_numbers=("NHWC", "HWIO", "NHWC"))
    scale = params["gamma"] * lax.rsqrt(params["var"] + params["eps"])
    shift = params["beta"] - params["mean"] * scale
    y = y * scale + shift
    y = jnp.maximum(y, 0.0) + params["alpha"] * jnp.minimum(y, 0.0)
    return jnp.transpose(y, (0, 3, 1, 2))


if __name__ == "__main__":
    # Canonical learned 2x upsampler: kernel_size=4, stride=2 -> pad=1.
    N, Cin, H, W = 2, 8, 16, 16
    Cout, K, stride = 16, 4, 2

    key = jax.random.PRNGKey(0)
    kx_, kw_, kg, kb, km, kv = jax.random.split(key, 6)
    x = jax.random.normal(kx_, (N, Cin, H, W), jnp.float32)
    bound = 1.0 / ((Cin * K * K) ** 0.5)
    params = {
        # w[ky, kx, cin, cout] == torch ConvTranspose2d weight[cin, cout, ky, kx]
        "w": jax.random.uniform(kw_, (K, K, Cin, Cout), jnp.float32, -bound, bound),
        "gamma": jax.random.uniform(kg, (Cout,), jnp.float32, 0.5, 1.5),
        "beta": 0.1 * jax.random.normal(kb, (Cout,), jnp.float32),
        "mean": 0.1 * jax.random.normal(km, (Cout,), jnp.float32),
        "var": jax.random.uniform(kv, (Cout,), jnp.float32, 0.5, 1.5),
        "eps": 1e-5,
        "alpha": jnp.float32(0.25),                  # PReLU default slope
    }

    out = upconv_block_forward(x, params, stride=stride)
    out = jax.block_until_ready(out)

    pad = (K - 1) // 2
    H_out = (H - 1) * stride - 2 * pad + (K - 1) + 1
    assert out.shape == (N, Cout, H_out, H_out), out.shape

    ref = jax.block_until_ready(upconv_block_ref(x, params, stride=stride))
    if not jnp.allclose(out, ref, rtol=2e-3, atol=2e-3):
        err = float(jnp.max(jnp.abs(out - ref)))
        raise AssertionError(f"Pallas UpConvBlock mismatch, max abs err {err}")

    print("KERNEL_OK")
</pallas_src>

<mosaic_0001>
module attributes {stable_mosaic.version = 11 : i64} {
  func.func @upconv_bn_prelu_kernel(%arg0: i32, %arg1: memref<1x256x8xbf16, #tpu.memory_space<vmem>>, %arg2: memref<4x4x8x16xbf16, #tpu.memory_space<vmem>>, %arg3: memref<1x16xf32, #tpu.memory_space<vmem>>, %arg4: memref<1x16xf32, #tpu.memory_space<vmem>>, %arg5: memref<1x16xf32, #tpu.memory_space<vmem>>, %arg6: memref<1x4x16x16x16xf32, #tpu.memory_space<vmem>>, %arg7: memref<4x16x16x16xf32, #tpu.memory_space<vmem>>) attributes {dimension_semantics = [#tpu.dimension_semantics<parallel>], iteration_bounds = array<i64: 2>, scalar_prefetch = 0 : i64, scratch_operands = 1 : i64, tpu.core_type = #tpu.core_type<tc>, window_params = [{transform_indices = @transform_0, window_bounds = array<i64: 1, 256, 8>}, {pipeline_mode = #tpu.pipeline_mode<synchronous>, transform_indices = @transform_1, window_bounds = array<i64: 4, 4, 8, 16>}, {pipeline_mode = #tpu.pipeline_mode<synchronous>, transform_indices = @transform_2, window_bounds = array<i64: 1, 16>}, {pipeline_mode = #tpu.pipeline_mode<synchronous>, transform_indices = @transform_3, window_bounds = array<i64: 1, 16>}, {pipeline_mode = #tpu.pipeline_mode<synchronous>, transform_indices = @transform_4, window_bounds = array<i64: 1, 16>}, {transform_indices = @transform_5, window_bounds = array<i64: 1, 4, 16, 16, 16>}]} {
    %cst = arith.constant 0.000000e+00 : f32
    %0 = vector.broadcast %cst : f32 to vector<4x16x16x16xf32>
    %c0 = arith.constant 0 : index
    %c0_0 = arith.constant 0 : index
    %c0_1 = arith.constant 0 : index
    %c0_2 = arith.constant 0 : index
    %1 = vector.load %arg7[%c0, %c0_0, %c0_1, %c0_2] : memref<4x16x16x16xf32, #tpu.memory_space<vmem>>, vector<4x16x16x16xf32>
    tpu.vector_store %arg7[%c0, %c0_0, %c0_1, %c0_2], %0 {strides = array<i32>} : memref<4x16x16x16xf32, #tpu.memory_space<vmem>>, vector<4x16x16x16xf32>,
    %c0_3 = arith.constant 0 : index
    %c0_4 = arith.constant 0 : index
    %c0_5 = arith.constant 0 : index
    %2 = vector.load %arg1[%c0_3, %c0_4, %c0_5] : memref<1x256x8xbf16, #tpu.memory_space<vmem>>, vector<1x256x8xbf16>
    %3 = vector.shape_cast %2 : vector<1x256x8xbf16> to vector<256x8xbf16>
    %c0_6 = arith.constant 0 : index
    %c0_7 = arith.constant 0 : index
    %c0_8 = arith.constant 0 : index
    %c0_9 = arith.constant 0 : index
    %4 = vector.load %arg2[%c0_6, %c0_7, %c0_8, %c0_9] : memref<4x4x8x16xbf16, #tpu.memory_space<vmem>>, vector<1x1x8x16xbf16>
    %5 = vector.shape_cast %4 : vector<1x1x8x16xbf16> to vector<8x16xbf16>
    %cst_10 = arith.constant dense<0.000000e+00> : vector<256x16xf32>
    %6 = tpu.matmul %3, %5, %cst_10 {dimension_numbers = #tpu.dot_dimension_numbers<[1], [0], [0], [1], [0, 0, 1, 1], [], []>} : vector<256x8xbf16>, vector<8x16xbf16>, vector<256x16xf32> -> vector<256x16xf32>
    %7 = vector.shape_cast %6 : vector<256x16xf32> to vector<16x16x16xf32>
    %c3 = arith.constant 3 : index
    %c0_11 = arith.constant 0 : index
    %c0_12 = arith.constant 0 : index
    %c0_13 = arith.constant 0 : index
    %8 = vector.load %arg7[%c3, %c0_11, %c0_12, %c0_13] : memref<4x16x16x16xf32, #tpu.memory_space<vmem>>, vector<1x15x15x16xf32>
    %9 = vector.shape_cast %8 : vector<1x15x15x16xf32> to vector<15x15x16xf32>
    %10 = vector.extract_strided_slice %7 {offsets = [1, 1, 0], sizes = [15, 15, 16], strides = [1, 1, 1]} : vector<16x16x16xf32> to vector<15x15x16xf32>
    %11 = arith.addf %9, %10 : vector<15x15x16xf32>
    %c3_14 = arith.constant 3 : index
    %c0_15 = arith.constant 0 : index
    %c0_16 = arith.constant 0 : index
    %c0_17 = arith.constant 0 : index
    %12 = vector.load %arg7[%c3_14, %c0_15, %c0_16, %c0_17] : memref<4x16x16x16xf32, #tpu.memory_space<vmem>>, vector<1x15x15x16xf32>
    %13 = vector.shape_cast %12 : vector<1x15x15x16xf32> to vector<15x15x16xf32>
    %14 = vector.shape_cast %11 : vector<15x15x16xf32> to vector<1x15x15x16xf32>
    tpu.vector_store %arg7[%c3_14, %c0_15, %c0_16, %c0_17], %14 {strides = array<i32>} : memref<4x16x16x16xf32, #tpu.memory_space<vmem>>, vector<1x15x15x16xf32>,
    %c0_18 = arith.constant 0 : index
    %c1 = arith.constant 1 : index
    %c0_19 = arith.constant 0 : index
    %c0_20 = arith.constant 0 : index
    %15 = vector.load %arg2[%c0_18, %c1, %c0_19, %c0_20] : memref<4x4x8x16xbf16, #tpu.memory_space<vmem>>, vector<1x1x8x16xbf16>
    %16 = vector.shape_cast %15 : vector<1x1x8x16xbf16> to vector<8x16xbf16>
    %cst_21 = arith.constant dense<0.000000e+00> : vector<256x16xf32>
    %17 = tpu.matmul %3, %16, %cst_21 {dimension_numbers = #tpu.dot_dimension_numbers<[1], [0], [0], [1], [0, 0, 1, 1], [], []>} : vector<256x8xbf16>, vector<8x16xbf16>, vector<256x16xf32> -> vector<256x16xf32>
    %18 = vector.shape_cast %17 : vector<256x16xf32> to vector<16x16x16xf32>
    %c2 = arith.constant 2 : index
    %c0_22 = arith.constant 0 : index
    %c0_23 = arith.constant 0 : index
    %c0_24 = arith.constant 0 : index
    %19 = vector.load %arg7[%c2, %c0_22, %c0_23, %c0_24] : memref<4x16x16x16xf32, #tpu.memory_space<vmem>>, vector<1x15x16x16xf32>
    %20 = vector.shape_cast %19 : vector<1x15x16x16xf32> to vector<15x16x16xf32>
    %21 = vector.extract_strided_slice %18 {offsets = [1, 0, 0], sizes = [15, 16, 16], strides = [1, 1, 1]} : vector<16x16x16xf32> to vector<15x16x16xf32>
    %22 = arith.addf %20, %21 : vector<15x16x16xf32>
    %c2_25 = arith.constant 2 : index
    %c0_26 = arith.constant 0 : index
    %c0_27 = arith.constant 0 : index
    %c0_28 = arith.constant 0 : index
    %23 = vector.load %arg7[%c2_25, %c0_26, %c0_27, %c0_28] : memref<4x16x16x16xf32, #tpu.memory_space<vmem>>, vector<1x15x16x16xf32>
    %24 = vector.shape_cast %23 : vector<1x15x16x16xf32> to vector<15x16x16xf32>
    %25 = vector.shape_cast %22 : vector<15x16x16xf32> to vector<1x15x16x16xf32>
    tpu.vector_store %arg7[%c2_25, %c0_26, %c0_27, %c0_28], %25 {strides = array<i32>} : memref<4x16x16x16xf32, #tpu.memory_space<vmem>>, vector<1x15x16x16xf32>,
    %c0_29 = arith.constant 0 : index
    %c2_30 = arith.constant 2 : index
    %c0_31 = arith.constant 0 : index
    %c0_32 = arith.constant 0 : index
    %26 = vector.load %arg2[%c0_29, %c2_30, %c0_31, %c0_32] : memref<4x4x8x16xbf16, #tpu.memory_space<vmem>>, vector<1x1x8x16xbf16>
    %27 = vector.shape_cast %26 : vector<1x1x8x16xbf16> to vector<8x16xbf16>
    %cst_33 = arith.constant dense<0.000000e+00> : vector<256x16xf32>
    %28 = tpu.matmul %3, %27, %cst_33 {dimension_numbers = #tpu.dot_dimension_numbers<[1], [0], [0], [1], [0, 0, 1, 1], [], []>} : vector<256x8xbf16>, vector<8x16xbf16>, vector<256x16xf32> -> vector<256x16xf32>
    %29 = vector.shape_cast %28 : vector<256x16xf32> to vector<16x16x16xf32>
    %c3_34 = arith.constant 3 : index
    %c0_35 = arith.constant 0 : index
    %c0_36 = arith.constant 0 : index
    %c0_37 = arith.constant 0 : index
    %30 = vector.load %arg7[%c3_34, %c0_35, %c0_36, %c0_37] : memref<4x16x16x16xf32, #tpu.memory_space<vmem>>, vector<1x15x16x16xf32>
    %31 = vector.shape_cast %30 : vector<1x15x16x16xf32> to vector<15x16x16xf32>
    %32 = vector.extract_strided_slice %29 {offsets = [1, 0, 0], sizes = [15, 16, 16], strides = [1, 1, 1]} : vector<16x16x16xf32> to vector<15x16x16xf32>
    %33 = arith.addf %31, %32 : vector<15x16x16xf32>
    %c3_38 = arith.constant 3 : index
    %c0_39 = arith.constant 0 : index
    %c0_40 = arith.constant 0 : index
    %c0_41 = arith.constant 0 : index
    %34 = vector.load %arg7[%c3_38, %c0_39, %c0_40, %c0_41] : memref<4x16x16x16xf32, #tpu.memory_space<vmem>>, vector<1x15x16x16xf32>
    %35 = vector.shape_cast %34 : vector<1x15x16x16xf32> to vector<15x16x16xf32>
    %36 = vector.shape_cast %33 : vector<15x16x16xf32> to vector<1x15x16x16xf32>
    tpu.vector_store %arg7[%c3_38, %c0_39, %c0_40, %c0_41], %36 {strides = array<i32>} : memref<4x16x16x16xf32, #tpu.memory_space<vmem>>, vector<1x15x16x16xf32>,
    %c0_42 = arith.constant 0 : index
    %c3_43 = arith.constant 3 : index
    %c0_44 = arith.constant 0 : index
    %c0_45 = arith.constant 0 : index
    %37 = vector.load %arg2[%c0_42, %c3_43, %c0_44, %c0_45] : memref<4x4x8x16xbf16, #tpu.memory_space<vmem>>, vector<1x1x8x16xbf16>
    %38 = vector.shape_cast %37 : vector<1x1x8x16xbf16> to vector<8x16xbf16>
    %cst_46 = arith.constant dense<0.000000e+00> : vector<256x16xf32>
    %39 = tpu.matmul %3, %38, %cst_46 {dimension_numbers = #tpu.dot_dimension_numbers<[1], [0], [0], [1], [0, 0, 1, 1], [], []>} : vector<256x8xbf16>, vector<8x16xbf16>, vector<256x16xf32> -> vector<256x16xf32>
    %40 = vector.shape_cast %39 : vector<256x16xf32> to vector<16x16x16xf32>
    %c2_47 = arith.constant 2 : index
    %c0_48 = arith.constant 0 : index
    %c1_49 = arith.constant 1 : index
    %c0_50 = arith.constant 0 : index
    %41 = vector.load %arg7[%c2_47, %c0_48, %c1_49, %c0_50] : memref<4x16x16x16xf32, #tpu.memory_space<vmem>>, vector<1x15x15x16xf32>
    %42 = vector.shape_cast %41 : vector<1x15x15x16xf32> to vector<15x15x16xf32>
    %43 = vector.extract_strided_slice %40 {offsets = [1, 0, 0], sizes = [15, 15, 16], strides = [1, 1, 1]} : vector<16x16x16xf32> to vector<15x15x16xf32>
    %44 = arith.addf %42, %43 : vector<15x15x16xf32>
    %c2_51 = arith.constant 2 : index
    %c0_52 = arith.constant 0 : index
    %c1_53 = arith.constant 1 : index
    %c0_54 = arith.constant 0 : index
    %45 = vector.load %arg7[%c2_51, %c0_52, %c1_53, %c0_54] : memref<4x16x16x16xf32, #tpu.memory_space<vmem>>, vector<1x15x15x16xf32>
    %46 = vector.shape_cast %45 : vector<1x15x15x16xf32> to vector<15x15x16xf32>
    %47 = vector.shape_cast %44 : vector<15x15x16xf32> to vector<1x15x15x16xf32>
    tpu.vector_store %arg7[%c2_51, %c0_52, %c1_53, %c0_54], %47 {strides = array<i32>} : memref<4x16x16x16xf32, #tpu.memory_space<vmem>>, vector<1x15x15x16xf32>,
    %c1_55 = arith.constant 1 : index
    %c0_56 = arith.constant 0 : index
    %c0_57 = arith.constant 0 : index
    %c0_58 = arith.constant 0 : index
    %48 = vector.load %arg2[%c1_55, %c0_56, %c0_57, %c0_58] : memref<4x4x8x16xbf16, #tpu.memory_space<vmem>>, vector<1x1x8x16xbf16>
    %49 = vector.shape_cast %48 : vector<1x1x8x16xbf16> to vector<8x16xbf16>
    %cst_59 = arith.constant dense<0.000000e+00> : vector<256x16xf32>
    %50 = tpu.matmul %3, %49, %cst_59 {dimension_numbers = #tpu.dot_dimension_numbers<[1], [0], [0], [1], [0, 0, 1, 1], [], []>} : vector<256x8xbf16>, vector<8x16xbf16>, vector<256x16xf32> -> vector<256x16xf32>
    %51 = vector.shape_cast %50 : vector<256x16xf32> to vector<16x16x16xf32>
    %c1_60 = arith.constant 1 : index
    %c0_61 = arith.constant 0 : index
    %c0_62 = arith.constant 0 : index
    %c0_63 = arith.constant 0 : index
    %52 = vector.load %arg7[%c1_60, %c0_61, %c0_62, %c0_63] : memref<4x16x16x16xf32, #tpu.memory_space<vmem>>, vector<1x16x15x16xf32>
    %53 = vector.shape_cast %52 : vector<1x16x15x16xf32> to vector<16x15x16xf32>
    %54 = vector.extract_strided_slice %51 {offsets = [0, 1, 0], sizes = [16, 15, 16], strides = [1, 1, 1]} : vector<16x16x16xf32> to vector<16x15x16xf32>
    %55 = arith.addf %53, %54 : vector<16x15x16xf32>
    %c1_64 = arith.constant 1 : index
    %c0_65 = arith.constant 0 : index
    %c0_66 = arith.constant 0 : index
    %c0_67 = arith.constant 0 : index
    %56 = vector.load %arg7[%c1_64, %c0_65, %c0_66, %c0_67] : memref<4x16x16x16xf32, #tpu.memory_space<vmem>>, vector<1x16x15x16xf32>
    %57 = vector.shape_cast %56 : vector<1x16x15x16xf32> to vector<16x15x16xf32>
    %58 = vector.shape_cast %55 : vector<16x15x16xf32> to vector<1x16x15x16xf32>
    tpu.vector_store %arg7[%c1_64, %c0_65, %c0_66, %c0_67], %58 {strides = array<i32>} : memref<4x16x16x16xf32, #tpu.memory_space<vmem>>, vector<1x16x15x16xf32>,
    %c1_68 = arith.constant 1 : index
    %c1_69 = arith.constant 1 : index
    %c0_70 = arith.constant 0 : index
    %c0_71 = arith.constant 0 : index
    %59 = vector.load %arg2[%c1_68, %c1_69, %c0_70, %c0_71] : memref<4x4x8x16xbf16, #tpu.memory_space<vmem>>, vector<1x1x8x16xbf16>
    %60 = vector.shape_cast %59 : vector<1x1x8x16xbf16> to vector<8x16xbf16>
    %cst_72 = arith.constant dense<0.000000e+00> : vector<256x16xf32>
    %61 = tpu.matmul %3, %60, %cst_72 {dimension_numbers = #tpu.dot_dimension_numbers<[1], [0], [0], [1], [0, 0, 1, 1], [], []>} : vector<256x8xbf16>, vector<8x16xbf16>, vector<256x16xf32> -> vector<256x16xf32>
    %62 = vector.shape_cast %61 : vector<256x16xf32> to vector<16x16x16xf32>
    %c0_73 = arith.constant 0 : index
    %c0_74 = arith.constant 0 : index
    %c0_75 = arith.constant 0 : index
    %c0_76 = arith.constant 0 : index
    %63 = vector.load %arg7[%c0_73, %c0_74, %c0_75, %c0_76] : memref<4x16x16x16xf32, #tpu.memory_space<vmem>>, vector<1x16x16x16xf32>
    %64 = vector.shape_cast %63 : vector<1x16x16x16xf32> to vector<16x16x16xf32>
    %65 = arith.addf %64, %62 : vector<16x16x16xf32>
    %c0_77 = arith.constant 0 : index
    %c0_78 = arith.constant 0 : index
    %c0_79 = arith.constant 0 : index
    %c0_80 = arith.constant 0 : index
    %66 = vector.load %arg7[%c0_77, %c0_78, %c0_79, %c0_80] : memref<4x16x16x16xf32, #tpu.memory_space<vmem>>, vector<1x16x16x16xf32>
    %67 = vector.shape_cast %66 : vector<1x16x16x16xf32> to vector<16x16x16xf32>
    %68 = vector.shape_cast %65 : vector<16x16x16xf32> to vector<1x16x16x16xf32>
    tpu.vector_store %arg7[%c0_77, %c0_78, %c0_79, %c0_80], %68 {strides = array<i32>} : memref<4x16x16x16xf32, #tpu.memory_space<vmem>>, vector<1x16x16x16xf32>,
    %c1_81 = arith.constant 1 : index
    %c2_82 = arith.constant 2 : index
    %c0_83 = arith.constant 0 : index
    %c0_84 = arith.constant 0 : index
    %69 = vector.load %arg2[%c1_81, %c2_82, %c0_83, %c0_84] : memref<4x4x8x16xbf16, #tpu.memory_space<vmem>>, vector<1x1x8x16xbf16>
    %70 = vector.shape_cast %69 : vector<1x1x8x16xbf16> to vector<8x16xbf16>
    %cst_85 = arith.constant dense<0.000000e+00> : vector<256x16xf32>
    %71 = tpu.matmul %3, %70, %cst_85 {dimension_numbers = #tpu.dot_dimension_numbers<[1], [0], [0], [1], [0, 0, 1, 1], [], []>} : vector<256x8xbf16>, vector<8x16xbf16>, vector<256x16xf32> -> vector<256x16xf32>
    %72 = vector.shape_cast %71 : vector<256x16xf32> to vector<16x16x16xf32>
    %c1_86 = arith.constant 1 : index
    %c0_87 = arith.constant 0 : index
    %c0_88 = arith.constant 0 : index
    %c0_89 = arith.constant 0 : index
    %73 = vector.load %arg7[%c1_86, %c0_87, %c0_88, %c0_89] : memref<4x16x16x16xf32, #tpu.memory_space<vmem>>, vector<1x16x16x16xf32>
    %74 = vector.shape_cast %73 : vector<1x16x16x16xf32> to vector<16x16x16xf32>
    %75 = arith.addf %74, %72 : vector<16x16x16xf32>
    %c1_90 = arith.constant 1 : index
    %c0_91 = arith.constant 0 : index
    %c0_92 = arith.constant 0 : index
    %c0_93 = arith.constant 0 : index
    %76 = vector.load %arg7[%c1_90, %c0_91, %c0_92, %c0_93] : memref<4x16x16x16xf32, #tpu.memory_space<vmem>>, vector<1x16x16x16xf32>
    %77 = vector.shape_cast %76 : vector<1x16x16x16xf32> to vector<16x16x16xf32>
    %78 = vector.shape_cast %75 : vector<16x16x16xf32> to vector<1x16x16x16xf32>
    tpu.vector_store %arg7[%c1_90, %c0_91, %c0_92, %c0_93], %78 {strides = array<i32>} : memref<4x16x16x16xf32, #tpu.memory_space<vmem>>, vector<1x16x16x16xf32>,
    %c1_94 = arith.constant 1 : index
    %c3_95 = arith.constant 3 : index
    %c0_96 = arith.constant 0 : index
    %c0_97 = arith.constant 0 : index
    %79 = vector.load %arg2[%c1_94, %c3_95, %c0_96, %c0_97] : memref<4x4x8x16xbf16, #tpu.memory_space<vmem>>, vector<1x1x8x16xbf16>
    %80 = vector.shape_cast %79 : vector<1x1x8x16xbf16> to vector<8x16xbf16>
    %cst_98 = arith.constant dense<0.000000e+00> : vector<256x16xf32>
    %81 = tpu.matmul %3, %80, %cst_98 {dimension_numbers = #tpu.dot_dimension_numbers<[1], [0], [0], [1], [0, 0, 1, 1], [], []>} : vector<256x8xbf16>, vector<8x16xbf16>, vector<256x16xf32> -> vector<256x16xf32>
    %82 = vector.shape_cast %81 : vector<256x16xf32> to vector<16x16x16xf32>
    %c0_99 = arith.constant 0 : index
    %c0_100 = arith.constant 0 : index
    %c1_101 = arith.constant 1 : index
    %c0_102 = arith.constant 0 : index
    %83 = vector.load %arg7[%c0_99, %c0_100, %c1_101, %c0_102] : memref<4x16x16x16xf32, #tpu.memory_space<vmem>>, vector<1x16x15x16xf32>
    %84 = vector.shape_cast %83 : vector<1x16x15x16xf32> to vector<16x15x16xf32>
    %85 = vector.extract_strided_slice %82 {offsets = [0, 0, 0], sizes = [16, 15, 16], strides = [1, 1, 1]} : vector<16x16x16xf32> to vector<16x15x16xf32>
    %86 = arith.addf %84, %85 : vector<16x15x16xf32>
    %c0_103 = arith.constant 0 : index
    %c0_104 = arith.constant 0 : index
    %c1_105 = arith.constant 1 : index
    %c0_106 = arith.constant 0 : index
    %87 = vector.load %arg7[%c0_103, %c0_104, %c1_105, %c0_106] : memref<4x16x16x16xf32, #tpu.memory_space<vmem>>, vector<1x16x15x16xf32>
    %88 = vector.shape_cast %87 : vector<1x16x15x16xf32> to vector<16x15x16xf32>
    %89 = vector.shape_cast %86 : vector<16x15x16xf32> to vector<1x16x15x16xf32>
    tpu.vector_store %arg7[%c0_103, %c0_104, %c1_105, %c0_106], %89 {strides = array<i32>} : memref<4x16x16x16xf32, #tpu.memory_space<vmem>>, vector<1x16x15x16xf32>,
    %c2_107 = arith.constant 2 : index
    %c0_108 = arith.constant 0 : index
    %c0_109 = arith.constant 0 : index
    %c0_110 = arith.constant 0 : index
    %90 = vector.load %arg2[%c2_107, %c0_108, %c0_109, %c0_110] : memref<4x4x8x16xbf16, #tpu.memory_space<vmem>>, vector<1x1x8x16xbf16>
    %91 = vector.shape_cast %90 : vector<1x1x8x16xbf16> to vector<8x16xbf16>
    %cst_111 = arith.constant dense<0.000000e+00> : vector<256x16xf32>
    %92 = tpu.matmul %3, %91, %cst_111 {dimension_numbers = #tpu.dot_dimension_numbers<[1], [0], [0], [1], [0, 0, 1, 1], [], []>} : vector<256x8xbf16>, vector<8x16xbf16>, vector<256x16xf32> -> vector<256x16xf32>
    %93 = vector.shape_cast %92 : vector<256x16xf32> to vector<16x16x16xf32>
    %c3_112 = arith.constant 3 : index
    %c0_113 = arith.constant 0 : index
    %c0_114 = arith.constant 0 : index
    %c0_115 = arith.constant 0 : index
    %94 = vector.load %arg7[%c3_112, %c0_113, %c0_114, %c0_115] : memref<4x16x16x16xf32, #tpu.memory_space<vmem>>, vector<1x16x15x16xf32>
    %95 = vector.shape_cast %94 : vector<1x16x15x16xf32> to vector<16x15x16xf32>
    %96 = vector.extract_strided_slice %93 {offsets = [0, 1, 0], sizes = [16, 15, 16], strides = [1, 1, 1]} : vector<16x16x16xf32> to vector<16x15x16xf32>
    %97 = arith.addf %95, %96 : vector<16x15x16xf32>
    %c3_116 = arith.constant 3 : index
    %c0_117 = arith.constant 0 : index
    %c0_118 = arith.constant 0 : index
    %c0_119 = arith.constant 0 : index
    %98 = vector.load %arg7[%c3_116, %c0_117, %c0_118, %c0_119] : memref<4x16x16x16xf32, #tpu.memory_space<vmem>>, vector<1x16x15x16xf32>
    %99 = vector.shape_cast %98 : vector<1x16x15x16xf32> to vector<16x15x16xf32>
    %100 = vector.shape_cast %97 : vector<16x15x16xf32> to vector<1x16x15x16xf32>
    tpu.vector_store %arg7[%c3_116, %c0_117, %c0_118, %c0_119], %100 {strides = array<i32>} : memref<4x16x16x16xf32, #tpu.memory_space<vmem>>, vector<1x16x15x16xf32>,
    %c2_120 = arith.constant 2 : index
    %c1_121 = arith.constant 1 : index
    %c0_122 = arith.constant 0 : index
    %c0_123 = arith.constant 0 : index
    %101 = vector.load %arg2[%c2_120, %c1_121, %c0_122, %c0_123] : memref<4x4x8x16xbf16, #tpu.memory_space<vmem>>, vector<1x1x8x16xbf16>
    %102 = vector.shape_cast %101 : vector<1x1x8x16xbf16> to vector<8x16xbf16>
    %cst_124 = arith.constant dense<0.000000e+00> : vector<256x16xf32>
    %103 = tpu.matmul %3, %102, %cst_124 {dimension_numbers = #tpu.dot_dimension_numbers<[1], [0], [0], [1], [0, 0, 1, 1], [], []>} : vector<256x8xbf16>, vector<8x16xbf16>, vector<256x16xf32> -> vector<256x16xf32>
    %104 = vector.shape_cast %103 : vector<256x16xf32> to vector<16x16x16xf32>
    %c2_125 = arith.constant 2 : index
    %c0_126 = arith.constant 0 : index
    %c0_127 = arith.constant 0 : index
    %c0_128 = arith.constant 0 : index
    %105 = vector.load %arg7[%c2_125, %c0_126, %c0_127, %c0_128] : memref<4x16x16x16xf32, #tpu.memory_space<vmem>>, vector<1x16x16x16xf32>
    %106 = vector.shape_cast %105 : vector<1x16x16x16xf32> to vector<16x16x16xf32>
    %107 = arith.addf %106, %104 : vector<16x16x16xf32>
    %c2_129 = arith.constant 2 : index
    %c0_130 = arith.constant 0 : index
    %c0_131 = arith.constant 0 : index
    %c0_132 = arith.constant 0 : index
    %108 = vector.load %arg7[%c2_129, %c0_130, %c0_131, %c0_132] : memref<4x16x16x16xf32, #tpu.memory_space<vmem>>, vector<1x16x16x16xf32>
    %109 = vector.shape_cast %108 : vector<1x16x16x16xf32> to vector<16x16x16xf32>
    %110 = vector.shape_cast %107 : vector<16x16x16xf32> to vector<1x16x16x16xf32>
    tpu.vector_store %arg7[%c2_129, %c0_130, %c0_131, %c0_132], %110 {strides = array<i32>} : memref<4x16x16x16xf32, #tpu.memory_space<vmem>>, vector<1x16x16x16xf32>,
    %c2_133 = arith.constant 2 : index
    %c2_134 = arith.constant 2 : index
    %c0_135 = arith.constant 0 : index
    %c0_136 = arith.constant 0 : index
    %111 = vector.load %arg2[%c2_133, %c2_134, %c0_135, %c0_136] : memref<4x4x8x16xbf16, #tpu.memory_space<vmem>>, vector<1x1x8x16xbf16>
    %112 = vector.shape_cast %111 : vector<1x1x8x16xbf16> to vector<8x16xbf16>
    %cst_137 = arith.constant dense<0.000000e+00> : vector<256x16xf32>
    %113 = tpu.matmul %3, %112, %cst_137 {dimension_numbers = #tpu.dot_dimension_numbers<[1], [0], [0], [1], [0, 0, 1, 1], [], []>} : vector<256x8xbf16>, vector<8x16xbf16>, vector<256x16xf32> -> vector<256x16xf32>
    %114 = vector.shape_cast %113 : vector<256x16xf32> to vector<16x16x16xf32>
    %c3_138 = arith.constant 3 : index
    %c0_139 = arith.constant 0 : index
    %c0_140 = arith.constant 0 : index
    %c0_141 = arith.constant 0 : index
    %115 = vector.load %arg7[%c3_138, %c0_139, %c0_140, %c0_141] : memref<4x16x16x16xf32, #tpu.memory_space<vmem>>, vector<1x16x16x16xf32>
    %116 = vector.shape_cast %115 : vector<1x16x16x16xf32> to vector<16x16x16xf32>
    %117 = arith.addf %116, %114 : vector<16x16x16xf32>
    %c3_142 = arith.constant 3 : index
    %c0_143 = arith.constant 0 : index
    %c0_144 = arith.constant 0 : index
    %c0_145 = arith.constant 0 : index
    %118 = vector.load %arg7[%c3_142, %c0_143, %c0_144, %c0_145] : memref<4x16x16x16xf32, #tpu.memory_space<vmem>>, vector<1x16x16x16xf32>
    %119 = vector.shape_cast %118 : vector<1x16x16x16xf32> to vector<16x16x16xf32>
    %120 = vector.shape_cast %117 : vector<16x16x16xf32> to vector<1x16x16x16xf32>
    tpu.vector_store %arg7[%c3_142, %c0_143, %c0_144, %c0_145], %120 {strides = array<i32>} : memref<4x16x16x16xf32, #tpu.memory_space<vmem>>, vector<1x16x16x16xf32>,
    %c2_146 = arith.constant 2 : index
    %c3_147 = arith.constant 3 : index
    %c0_148 = arith.constant 0 : index
    %c0_149 = arith.constant 0 : index
    %121 = vector.load %arg2[%c2_146, %c3_147, %c0_148, %c0_149] : memref<4x4x8x16xbf16, #tpu.memory_space<vmem>>, vector<1x1x8x16xbf16>
    %122 = vector.shape_cast %121 : vector<1x1x8x16xbf16> to vector<8x16xbf16>
    %cst_150 = arith.constant dense<0.000000e+00> : vector<256x16xf32>
    %123 = tpu.matmul %3, %122, %cst_150 {dimension_numbers = #tpu.dot_dimension_numbers<[1], [0], [0], [1], [0, 0, 1, 1], [], []>} : vector<256x8xbf16>, vector<8x16xbf16>, vector<256x16xf32> -> vector<256x16xf32>
    %124 = vector.shape_cast %123 : vector<256x16xf32> to vector<16x16x16xf32>
    %c2_151 = arith.constant 2 : index
    %c0_152 = arith.constant 0 : index
    %c1_153 = arith.constant 1 : index
    %c0_154 = arith.constant 0 : index
    %125 = vector.load %arg7[%c2_151, %c0_152, %c1_153, %c0_154] : memref<4x16x16x16xf32, #tpu.memory_space<vmem>>, vector<1x16x15x16xf32>
    %126 = vector.shape_cast %125 : vector<1x16x15x16xf32> to vector<16x15x16xf32>
    %127 = vector.extract_strided_slice %124 {offsets = [0, 0, 0], sizes = [16, 15, 16], strides = [1, 1, 1]} : vector<16x16x16xf32> to vector<16x15x16xf32>
    %128 = arith.addf %126, %127 : vector<16x15x16xf32>
    %c2_155 = arith.constant 2 : index
    %c0_156 = arith.constant 0 : index
    %c1_157 = arith.constant 1 : index
    %c0_158 = arith.constant 0 : index
    %129 = vector.load %arg7[%c2_155, %c0_156, %c1_157, %c0_158] : memref<4x16x16x16xf32, #tpu.memory_space<vmem>>, vector<1x16x15x16xf32>
    %130 = vector.shape_cast %129 : vector<1x16x15x16xf32> to vector<16x15x16xf32>
    %131 = vector.shape_cast %128 : vector<16x15x16xf32> to vector<1x16x15x16xf32>
    tpu.vector_store %arg7[%c2_155, %c0_156, %c1_157, %c0_158], %131 {strides = array<i32>} : memref<4x16x16x16xf32, #tpu.memory_space<vmem>>, vector<1x16x15x16xf32>,
    %c3_159 = arith.constant 3 : index
    %c0_160 = arith.constant 0 : index
    %c0_161 = arith.constant 0 : index
    %c0_162 = arith.constant 0 : index
    %132 = vector.load %arg2[%c3_159, %c0_160, %c0_161, %c0_162] : memref<4x4x8x16xbf16, #tpu.memory_space<vmem>>, vector<1x1x8x16xbf16>
    %133 = vector.shape_cast %132 : vector<1x1x8x16xbf16> to vector<8x16xbf16>
    %cst_163 = arith.constant dense<0.000000e+00> : vector<256x16xf32>
    %134 = tpu.matmul %3, %133, %cst_163 {dimension_numbers = #tpu.dot_dimension_numbers<[1], [0], [0], [1], [0, 0, 1, 1], [], []>} : vector<256x8xbf16>, vector<8x16xbf16>, vector<256x16xf32> -> vector<256x16xf32>
    %135 = vector.shape_cast %134 : vector<256x16xf32> to vector<16x16x16xf32>
    %c1_164 = arith.constant 1 : index
    %c1_165 = arith.constant 1 : index
    %c0_166 = arith.constant 0 : index
    %c0_167 = arith.constant 0 : index
    %136 = vector.load %arg7[%c1_164, %c1_165, %c0_166, %c0_167] : memref<4x16x16x16xf32, #tpu.memory_space<vmem>>, vector<1x15x15x16xf32>
    %137 = vector.shape_cast %136 : vector<1x15x15x16xf32> to vector<15x15x16xf32>
    %138 = vector.extract_strided_slice %135 {offsets = [0, 1, 0], sizes = [15, 15, 16], strides = [1, 1, 1]} : vector<16x16x16xf32> to vector<15x15x16xf32>
    %139 = arith.addf %137, %138 : vector<15x15x16xf32>
    %c1_168 = arith.constant 1 : index
    %c1_169 = arith.constant 1 : index
    %c0_170 = arith.constant 0 : index
    %c0_171 = arith.constant 0 : index
    %140 = vector.load %arg7[%c1_168, %c1_169, %c0_170, %c0_171] : memref<4x16x16x16xf32, #tpu.memory_space<vmem>>, vector<1x15x15x16xf32>
    %141 = vector.shape_cast %140 : vector<1x15x15x16xf32> to vector<15x15x16xf32>
    %142 = vector.shape_cast %139 : vector<15x15x16xf32> to vector<1x15x15x16xf32>
    tpu.vector_store %arg7[%c1_168, %c1_169, %c0_170, %c0_171], %142 {strides = array<i32>} : memref<4x16x16x16xf32, #tpu.memory_space<vmem>>, vector<1x15x15x16xf32>,
    %c3_172 = arith.constant 3 : index
    %c1_173 = arith.constant 1 : index
    %c0_174 = arith.constant 0 : index
    %c0_175 = arith.constant 0 : index
    %143 = vector.load %arg2[%c3_172, %c1_173, %c0_174, %c0_175] : memref<4x4x8x16xbf16, #tpu.memory_space<vmem>>, vector<1x1x8x16xbf16>
    %144 = vector.shape_cast %143 : vector<1x1x8x16xbf16> to vector<8x16xbf16>
    %cst_176 = arith.constant dense<0.000000e+00> : vector<256x16xf32>
    %145 = tpu.matmul %3, %144, %cst_176 {dimension_numbers = #tpu.dot_dimension_numbers<[1], [0], [0], [1], [0, 0, 1, 1], [], []>} : vector<256x8xbf16>, vector<8x16xbf16>, vector<256x16xf32> -> vector<256x16xf32>
    %146 = vector.shape_cast %145 : vector<256x16xf32> to vector<16x16x16xf32>
    %c0_177 = arith.constant 0 : index
    %c1_178 = arith.constant 1 : index
    %c0_179 = arith.constant 0 : index
    %c0_180 = arith.constant 0 : index
    %147 = vector.load %arg7[%c0_177, %c1_178, %c0_179, %c0_180] : memref<4x16x16x16xf32, #tpu.memory_space<vmem>>, vector<1x15x16x16xf32>
    %148 = vector.shape_cast %147 : vector<1x15x16x16xf32> to vector<15x16x16xf32>
    %149 = vector.extract_strided_slice %146 {offsets = [0, 0, 0], sizes = [15, 16, 16], strides = [1, 1, 1]} : vector<16x16x16xf32> to vector<15x16x16xf32>
    %150 = arith.addf %148, %149 : vector<15x16x16xf32>
    %c0_181 = arith.constant 0 : index
    %c1_182 = arith.constant 1 : index
    %c0_183 = arith.constant 0 : index
    %c0_184 = arith.constant 0 : index
    %151 = vector.load %arg7[%c0_181, %c1_182, %c0_183, %c0_184] : memref<4x16x16x16xf32, #tpu.memory_space<vmem>>, vector<1x15x16x16xf32>
    %152 = vector.shape_cast %151 : vector<1x15x16x16xf32> to vector<15x16x16xf32>
    %153 = vector.shape_cast %150 : vector<15x16x16xf32> to vector<1x15x16x16xf32>
    tpu.vector_store %arg7[%c0_181, %c1_182, %c0_183, %c0_184], %153 {strides = array<i32>} : memref<4x16x16x16xf32, #tpu.memory_space<vmem>>, vector<1x15x16x16xf32>,
    %c3_185 = arith.constant 3 : index
    %c2_186 = arith.constant 2 : index
    %c0_187 = arith.constant 0 : index
    %c0_188 = arith.constant 0 : index
    %154 = vector.load %arg2[%c3_185, %c2_186, %c0_187, %c0_188] : memref<4x4x8x16xbf16, #tpu.memory_space<vmem>>, vector<1x1x8x16xbf16>
    %155 = vector.shape_cast %154 : vector<1x1x8x16xbf16> to vector<8x16xbf16>
    %cst_189 = arith.constant dense<0.000000e+00> : vector<256x16xf32>
    %156 = tpu.matmul %3, %155, %cst_189 {dimension_numbers = #tpu.dot_dimension_numbers<[1], [0], [0], [1], [0, 0, 1, 1], [], []>} : vector<256x8xbf16>, vector<8x16xbf16>, vector<256x16xf32> -> vector<256x16xf32>
    %157 = vector.shape_cast %156 : vector<256x16xf32> to vector<16x16x16xf32>
    %c1_190 = arith.constant 1 : index
    %c1_191 = arith.constant 1 : index
    %c0_192 = arith.constant 0 : index
    %c0_193 = arith.constant 0 : index
    %158 = vector.load %arg7[%c1_190, %c1_191, %c0_192, %c0_193] : memref<4x16x16x16xf32, #tpu.memory_space<vmem>>, vector<1x15x16x16xf32>
    %159 = vector.shape_cast %158 : vector<1x15x16x16xf32> to vector<15x16x16xf32>
    %160 = vector.extract_strided_slice %157 {offsets = [0, 0, 0], sizes = [15, 16, 16], strides = [1, 1, 1]} : vector<16x16x16xf32> to vector<15x16x16xf32>
    %161 = arith.addf %159, %160 : vector<15x16x16xf32>
    %c1_194 = arith.constant 1 : index
    %c1_195 = arith.constant 1 : index
    %c0_196 = arith.constant 0 : index
    %c0_197 = arith.constant 0 : index
    %162 = vector.load %arg7[%c1_194, %c1_195, %c0_196, %c0_197] : memref<4x16x16x16xf32, #tpu.memory_space<vmem>>, vector<1x15x16x16xf32>
    %163 = vector.shape_cast %162 : vector<1x15x16x16xf32> to vector<15x16x16xf32>
    %164 = vector.shape_cast %161 : vector<15x16x16xf32> to vector<1x15x16x16xf32>
    tpu.vector_store %arg7[%c1_194, %c1_195, %c0_196, %c0_197], %164 {strides = array<i32>} : memref<4x16x16x16xf32, #tpu.memory_space<vmem>>, vector<1x15x16x16xf32>,
    %c3_198 = arith.constant 3 : index
    %c3_199 = arith.constant 3 : index
    %c0_200 = arith.constant 0 : index
    %c0_201 = arith.constant 0 : index
    %165 = vector.load %arg2[%c3_198, %c3_199, %c0_200, %c0_201] : memref<4x4x8x16xbf16, #tpu.memory_space<vmem>>, vector<1x1x8x16xbf16>
    %166 = vector.shape_cast %165 : vector<1x1x8x16xbf16> to vector<8x16xbf16>
    %cst_202 = arith.constant dense<0.000000e+00> : vector<256x16xf32>
    %167 = tpu.matmul %3, %166, %cst_202 {dimension_numbers = #tpu.dot_dimension_numbers<[1], [0], [0], [1], [0, 0, 1, 1], [], []>} : vector<256x8xbf16>, vector<8x16xbf16>, vector<256x16xf32> -> vector<256x16xf32>
    %168 = vector.shape_cast %167 : vector<256x16xf32> to vector<16x16x16xf32>
    %c0_203 = arith.constant 0 : index
    %c1_204 = arith.constant 1 : index
    %c1_205 = arith.constant 1 : index
    %c0_206 = arith.constant 0 : index
    %169 = vector.load %arg7[%c0_203, %c1_204, %c1_205, %c0_206] : memref<4x16x16x16xf32, #tpu.memory_space<vmem>>, vector<1x15x15x16xf32>
    %170 = vector.shape_cast %169 : vector<1x15x15x16xf32> to vector<15x15x16xf32>
    %171 = vector.extract_strided_slice %168 {offsets = [0, 0, 0], sizes = [15, 15, 16], strides = [1, 1, 1]} : vector<16x16x16xf32> to vector<15x15x16xf32>
    %172 = arith.addf %170, %171 : vector<15x15x16xf32>
    %c0_207 = arith.constant 0 : index
    %c1_208 = arith.constant 1 : index
    %c1_209 = arith.constant 1 : index
    %c0_210 = arith.constant 0 : index
    %173 = vector.load %arg7[%c0_207, %c1_208, %c1_209, %c0_210] : memref<4x16x16x16xf32, #tpu.memory_space<vmem>>, vector<1x15x15x16xf32>
    %174 = vector.shape_cast %173 : vector<1x15x15x16xf32> to vector<15x15x16xf32>
    %175 = vector.shape_cast %172 : vector<15x15x16xf32> to vector<1x15x15x16xf32>
    tpu.vector_store %arg7[%c0_207, %c1_208, %c1_209, %c0_210], %175 {strides = array<i32>} : memref<4x16x16x16xf32, #tpu.memory_space<vmem>>, vector<1x15x15x16xf32>,
    %c0_211 = arith.constant 0 : index
    %c0_212 = arith.constant 0 : index
    %c0_213 = arith.constant 0 : index
    %c0_214 = arith.constant 0 : index
    %176 = vector.load %arg7[%c0_211, %c0_212, %c0_213, %c0_214] : memref<4x16x16x16xf32, #tpu.memory_space<vmem>>, vector<4x16x16x16xf32>
    %c0_215 = arith.constant 0 : index
    %c0_216 = arith.constant 0 : index
    %177 = vector.load %arg3[%c0_215, %c0_216] : memref<1x16xf32, #tpu.memory_space<vmem>>, vector<1x16xf32>
    %178 = vector.shape_cast %177 : vector<1x16xf32> to vector<1x1x1x16xf32>
    %179 = vector.broadcast %178 : vector<1x1x1x16xf32> to vector<4x16x16x16xf32>
    %180 = arith.mulf %176, %179 : vector<4x16x16x16xf32>
    %c0_217 = arith.constant 0 : index
    %c0_218 = arith.constant 0 : index
    %181 = vector.load %arg4[%c0_217, %c0_218] : memref<1x16xf32, #tpu.memory_space<vmem>>, vector<1x16xf32>
    %182 = vector.shape_cast %181 : vector<1x16xf32> to vector<1x1x1x16xf32>
    %183 = vector.broadcast %182 : vector<1x1x1x16xf32> to vector<4x16x16x16xf32>
    %184 = arith.addf %180, %183 : vector<4x16x16x16xf32>
    %cst_219 = arith.constant 0.000000e+00 : f32
    %185 = vector.broadcast %cst_219 : f32 to vector<4x16x16x16xf32>
    %186 = arith.maximumf %184, %185 : vector<4x16x16x16xf32>
    %c0_220 = arith.constant 0 : index
    %c0_221 = arith.constant 0 : index
    %187 = vector.load %arg5[%c0_220, %c0_221] : memref<1x16xf32, #tpu.memory_space<vmem>>, vector<1x16xf32>
    %cst_222 = arith.constant 0.000000e+00 : f32
    %188 = vector.broadcast %cst_222 : f32 to vector<4x16x16x16xf32>
    %189 = arith.minimumf %184, %188 : vector<4x16x16x16xf32>
    %190 = vector.shape_cast %187 : vector<1x16xf32> to vector<1x1x1x16xf32>
    %191 = vector.broadcast %190 : vector<1x1x1x16xf32> to vector<4x16x16x16xf32>
    %192 = arith.mulf %191, %189 : vector<4x16x16x16xf32>
    %193 = arith.addf %186, %192 : vector<4x16x16x16xf32>
    %c0_223 = arith.constant 0 : index
    %c0_224 = arith.constant 0 : index
    %c0_225 = arith.constant 0 : index
    %c0_226 = arith.constant 0 : index
    %c0_227 = arith.constant 0 : index
    %194 = vector.load %arg6[%c0_223, %c0_224, %c0_225, %c0_226, %c0_227] : memref<1x4x16x16x16xf32, #tpu.memory_space<vmem>>, vector<1x4x16x16x16xf32>
    %195 = vector.shape_cast %194 : vector<1x4x16x16x16xf32> to vector<4x16x16x16xf32>
    %196 = vector.shape_cast %193 : vector<4x16x16x16xf32> to vector<1x4x16x16x16xf32>
    tpu.vector_store %arg6[%c0_223, %c0_224, %c0_225, %c0_226, %c0_227], %196 {strides = array<i32>} : memref<1x4x16x16x16xf32, #tpu.memory_space<vmem>>, vector<1x4x16x16x16xf32>,
    return
  }
  func.func @transform_0(%arg0: i32) -> (i32, i32, i32) {
    %c0_i32 = arith.constant 0 : i32
    %c0_i32_0 = arith.constant 0 : i32
    %c0_i32_1 = arith.constant 0 : i32
    return %arg0, %c0_i32, %c0_i32_0 : i32, i32, i32
  }
  func.func @transform_1(%arg0: i32) -> (i32, i32, i32, i32) {
    %c0_i32 = arith.constant 0 : i32
    %c0_i32_0 = arith.constant 0 : i32
    %c0_i32_1 = arith.constant 0 : i32
    %c0_i32_2 = arith.constant 0 : i32
    %c0_i32_3 = arith.constant 0 : i32
    return %c0_i32, %c0_i32_0, %c0_i32_1, %c0_i32_2 : i32, i32, i32, i32
  }
  func.func @transform_2(%arg0: i32) -> (i32, i32) {
    %c0_i32 = arith.constant 0 : i32
    %c0_i32_0 = arith.constant 0 : i32
    %c0_i32_1 = arith.constant 0 : i32
    return %c0_i32, %c0_i32_0 : i32, i32
  }
  func.func @transform_3(%arg0: i32) -> (i32, i32) {
    %c0_i32 = arith.constant 0 : i32
    %c0_i32_0 = arith.constant 0 : i32
    %c0_i32_1 = arith.constant 0 : i32
    return %c0_i32, %c0_i32_0 : i32, i32
  }
  func.func @transform_4(%arg0: i32) -> (i32, i32) {
    %c0_i32 = arith.constant 0 : i32
    %c0_i32_0 = arith.constant 0 : i32
    %c0_i32_1 = arith.constant 0 : i32
    return %c0_i32, %c0_i32_0 : i32, i32
  }
  func.func @transform_5(%arg0: i32) -> (i32, i32, i32, i32, i32) {
    %c0_i32 = arith.constant 0 : i32
    %c0_i32_0 = arith.constant 0 : i32
    %c0_i32_1 = arith.constant 0 : i32
    %c0_i32_2 = arith.constant 0 : i32
    %c0_i32_3 = arith.constant 0 : i32
    return %arg0, %c0_i32, %c0_i32_0, %c0_i32_1, %c0_i32_2 : i32, i32, i32, i32, i32
  }
}

</mosaic_0001>

<llo_original>
// kernel: upconv_block_forward.1
$region0: #{upconv_block_forward.1}
  #allocation0 [shape = 'u32[]', space=smem, size = 0x4, offset = 0x4, fixed_abs, tag = 'smem constant byte address 0x4 - core index']
  #allocation1 [shape = 'u32[144,128]{1,0:T(1,128)}', space=vmem, size = 0x12000, scoped, tag = 'internal scratch']
  #allocation2 [shape = 'f32[4,16,16,16]{3,2,1,0:T(8,128)}', space=vmem, size = 0x80000, scoped, tag = 'scratch operand']
  %s0 = inlined_call_operand.vmem [shape: bf16[2,256,8], index: 0, kind: input, shape index: {}]
  %s1 = inlined_call_operand.vmem [shape: bf16[4,4,8,16], index: 1, kind: input, shape index: {}]
  %s2 = inlined_call_operand.vmem [shape: f32[1,16], index: 2, kind: input, shape index: {}]
  %s3 = inlined_call_operand.vmem [shape: f32[1,16], index: 3, kind: input, shape index: {}]
  %s4 = inlined_call_operand.vmem [shape: f32[1,16], index: 4, kind: input, shape index: {}]
  %s5 = inlined_call_operand.vmem [shape: f32[2,4,16,16,16], index: 5, kind: output, shape index: {}]
  %s6 = sld [smem:[#allocation0]]
  $region53: #{upconv_block_forward.1} parent=0
    _
  %s8 = ssub.s32 1, %s6
  %s9 = scalar_select 0, %s8, %s6
  loop: start=0, step=1, limit=4
  $region2: #{upconv_block_forward.1} parent=0 // loop_pre_header
    _
  $region3: #{upconv_block_forward.1} parent=0 // loop_header
    %s11 = sphi 0, %s15
    %p12 = scmp.ge.s32.totalorder %s11, 4
    %s21 = sphi 0, %s23
    %s24 = sphi 0, %s21
    %s25 = sphi 0, %s24
    %s41 = sphi 0, %s25
    %s45 = sphi 0, %s45
    %s47 = sphi 0, %s45
    %s48 = sphi 0, %s47
    %s62 = sphi 0, %s48
    %s66 = sphi 0, %s66
    %s68 = sphi 0, %s66
    %s69 = sphi 0, %s68
    %s83 = sphi 0, %s69
    %s87 = sphi 0, %s87
    %s89 = sphi 0, %s87
    %s90 = sphi 0, %s89
    %s104 = sphi 0, %s90
    %s108 = sphi 0, %s108
    %s110 = sphi 0, %s108
    %s111 = sphi 0, %s110
    %s125 = sphi 0, %s111
    %s131 = sphi 0, %s133
    %s134 = sphi 0, %s131
    %s135 = sphi 0, %s134
    %s151 = sphi 0, %s135
  $region4: #{upconv_block_forward.1} parent=0 // loop_header_branch
    %14 = sbr.rel (%p12) target = $region8
  $region5: #{upconv_block_forward.1} parent=0 // loop_body
    %s16 = ssub.s32 %s11, 1
    %s17 = ssub.s32 %s11, 2
    %s18 = sadd.s32 %s11, 1
    %s19 = ssub.s32 %s11, %s18
    %p20 = scmp.eq.s32.totalorder %s19, 0
    %s22 = sadd.s32 %s21, 1
    %s23 = scalar_select %p20, %s21, %s22
    %p26 = pneg %p20
    %p27 = scmp.eq.s32.totalorder %s11, 1
    %p28 = por %p26, %p27
    %p29 = scmp.ne.s32.totalorder %s21, %s24
    %p30 = scmp.eq.s32.totalorder %s11, 0
    %p31 = por %p29, %p30
    %p32 = scmp.ne.s32.totalorder %s21, %s24
    %p33 = scmp.eq.s32.totalorder %s16, 1
    %p34 = por %p32, %p33
    %p35 = scmp.ne.s32.totalorder %s24, %s25
    %p36 = scmp.eq.s32.totalorder %s16, 0
    %p37 = por %p35, %p36
    %p38 = scmp.ne.s32.totalorder %s24, %s25
    %p39 = scmp.eq.s32.totalorder %s17, 1
    %p40 = por %p38, %p39
    %p42 = scmp.ne.s32.totalorder %s25, %s41
    %p43 = scmp.eq.s32.totalorder %s17, 0
    %p44 = por %p42, %p43
    %s46 = sadd.s32 %s45, 1
    %p49 = scmp.eq.s32.totalorder %s11, 1
    %p50 = scmp.ne.s32.totalorder %s45, %s47
    %p51 = scmp.eq.s32.totalorder %s11, 0
    %p52 = por %p50, %p51
    %p53 = scmp.ne.s32.totalorder %s45, %s47
    %p54 = scmp.eq.s32.totalorder %s16, 1
    %p55 = por %p53, %p54
    %p56 = scmp.ne.s32.totalorder %s47, %s48
    %p57 = scmp.eq.s32.totalorder %s16, 0
    %p58 = por %p56, %p57
    %p59 = scmp.ne.s32.totalorder %s47, %s48
    %p60 = scmp.eq.s32.totalorder %s17, 1
    %p61 = por %p59, %p60
    %p63 = scmp.ne.s32.totalorder %s48, %s62
    %p64 = scmp.eq.s32.totalorder %s17, 0
    %p65 = por %p63, %p64
    %s67 = sadd.s32 %s66, 1
    %p70 = scmp.eq.s32.totalorder %s11, 1
    %p71 = scmp.ne.s32.totalorder %s66, %s68
    %p72 = scmp.eq.s32.totalorder %s11, 0
    %p73 = por %p71, %p72
    %p74 = scmp.ne.s32.totalorder %s66, %s68
    %p75 = scmp.eq.s32.totalorder %s16, 1
    %p76 = por %p74, %p75
    %p77 = scmp.ne.s32.totalorder %s68, %s69
    %p78 = scmp.eq.s32.totalorder %s16, 0
    %p79 = por %p77, %p78
    %p80 = scmp.ne.s32.totalorder %s68, %s69
    %p81 = scmp.eq.s32.totalorder %s17, 1
    %p82 = por %p80, %p81
    %p84 = scmp.ne.s32.totalorder %s69, %s83
    %p85 = scmp.eq.s32.totalorder %s17, 0
    %p86 = por %p84, %p85
    %s88 = sadd.s32 %s87, 1
    %p91 = scmp.eq.s32.totalorder %s11, 1
    %p92 = scmp.ne.s32.totalorder %s87, %s89
    %p93 = scmp.eq.s32.totalorder %s11, 0
    %p94 = por %p92, %p93
    %p95 = scmp.ne.s32.totalorder %s87, %s89
    %p96 = scmp.eq.s32.totalorder %s16, 1
    %p97 = por %p95, %p96
    %p98 = scmp.ne.s32.totalorder %s89, %s90
    %p99 = scmp.eq.s32.totalorder %s16, 0
    %p100 = por %p98, %p99
    %p101 = scmp.ne.s32.totalorder %s89, %s90
    %p102 = scmp.eq.s32.totalorder %s17, 1
    %p103 = por %p101, %p102
    %p105 = scmp.ne.s32.totalorder %s90, %s104
    %p106 = scmp.eq.s32.totalorder %s17, 0
    %p107 = por %p105, %p106
    %s109 = sadd.s32 %s108, 1
    %p112 = scmp.eq.s32.totalorder %s11, 1
    %p113 = scmp.ne.s32.totalorder %s108, %s110
    %p114 = scmp.eq.s32.totalorder %s11, 0
    %p115 = por %p113, %p114
    %p116 = scmp.ne.s32.totalorder %s108, %s110
    %p117 = scmp.eq.s32.totalorder %s16, 1
    %p118 = por %p116, %p117
    %p119 = scmp.ne.s32.totalorder %s110, %s111
    %p120 = scmp.eq.s32.totalorder %s16, 0
    %p121 = por %p119, %p120
    %p122 = scmp.ne.s32.totalorder %s110, %s111
    %p123 = scmp.eq.s32.totalorder %s17, 1
    %p124 = por %p122, %p123
    %p126 = scmp.ne.s32.totalorder %s111, %s125
    %p127 = scmp.eq.s32.totalorder %s17, 0
    %p128 = por %p126, %p127
    %s129 = ssub.s32 %s11, %s18
    %p130 = scmp.eq.s32.totalorder %s129, 0
    %s132 = sadd.s32 %s131, 1
    %s133 = scalar_select %p130, %s131, %s132
    %p136 = pneg %p130
    %p137 = scmp.eq.s32.totalorder %s11, 1
    %p138 = por %p136, %p137
    %p139 = scmp.ne.s32.totalorder %s131, %s134
    %p140 = scmp.eq.s32.totalorder %s11, 0
    %p141 = por %p139, %p140
    %p142 = scmp.ne.s32.totalorder %s131, %s134
    %p143 = scmp.eq.s32.totalorder %s16, 1
    %p144 = por %p142, %p143
    %p145 = scmp.ne.s32.totalorder %s134, %s135
    %p146 = scmp.eq.s32.totalorder %s16, 0
    %p147 = por %p145, %p146
    %p148 = scmp.ne.s32.totalorder %s134, %s135
    %p149 = scmp.eq.s32.totalorder %s17, 1
    %p150 = por %p148, %p149
    %p152 = scmp.ne.s32.totalorder %s135, %s151
    %p153 = scmp.eq.s32.totalorder %s17, 0
    %p154 = por %p152, %p153
    %p155 = scmp.le.s32.totalorder 1, %s11
    %p156 = scmp.lt.s32.totalorder %s11, 3
    %p157 = pnand %p155, %p156
    %p158 = pneg %p157
    // Predicated region
    $region9: #{upconv_block_forward.1} parent=5 // pred_check
      _
    $region10: #{upconv_block_forward.1} parent=5 // pred_check_branch
      %160 = sbr.rel (%p157) target = $region12
    $region11: #{upconv_block_forward.1} parent=5 // pred_region
      %s161 = ssub.s32 %s11, 1
      // Predicated region
      $region13: #{upconv_block_forward.1} parent=11 // pred_check
        %p162 = pneg %p58
      $region14: #{upconv_block_forward.1} parent=11 // pred_check_branch
        %164 = sbr.rel (%p162) target = $region16
      $region15: #{upconv_block_forward.1} parent=11 // pred_region
        _
      $region16: #{upconv_block_forward.1} parent=11 // pred_fallthru
        _
      // Predicated region
      $region17: #{upconv_block_forward.1} parent=11 // pred_check
        %p165 = pneg %p79
      $region18: #{upconv_block_forward.1} parent=11 // pred_check_branch
        %167 = sbr.rel (%p165) target = $region20
      $region19: #{upconv_block_forward.1} parent=11 // pred_region
        _
      $region20: #{upconv_block_forward.1} parent=11 // pred_fallthru
        _
      // Predicated region
      $region21: #{upconv_block_forward.1} parent=11 // pred_check
        %p168 = pneg %p100
      $region22: #{upconv_block_forward.1} parent=11 // pred_check_branch
        %170 = sbr.rel (%p168) target = $region24
      $region23: #{upconv_block_forward.1} parent=11 // pred_region
        _
      $region24: #{upconv_block_forward.1} parent=11 // pred_fallthru
        _
      // Predicated region
      $region25: #{upconv_block_forward.1} parent=11 // pred_check
        %p171 = pneg %p121
      $region26: #{upconv_block_forward.1} parent=11 // pred_check_branch
        %173 = sbr.rel (%p171) target = $region28
      $region27: #{upconv_block_forward.1} parent=11 // pred_region
        _
      $region28: #{upconv_block_forward.1} parent=11 // pred_fallthru
        _
    $region12: #{upconv_block_forward.1} parent=5 // pred_fallthru
      _
    %p174 = scmp.lt.s32.totalorder %s11, 2
    // Predicated region
    $region29: #{upconv_block_forward.1} parent=5 // pred_check
      %p175 = pneg %p174
    $region30: #{upconv_block_forward.1} parent=5 // pred_check_branch
      %177 = sbr.rel (%p175) target = $region32
    $region31: #{upconv_block_forward.1} parent=5 // pred_region
      // Predicated region
      $region33: #{upconv_block_forward.1} parent=31 // pred_check
        %p178 = pneg %p31
      $region34: #{upconv_block_forward.1} parent=31 // pred_check_branch
        %180 = sbr.rel (%p178) target = $region36
      $region35: #{upconv_block_forward.1} parent=31 // pred_region
        %p181 = scmp.lt.s32.totalorder %s11, 1
        %s182 = scalar_select %p181, %s11, 1
        %s183 = smul.addr %s182, 32
        %s184 = smul.addr %s183, 4
        %s185 = scalar_lea.vmem %s0, %s184
      $region36: #{upconv_block_forward.1} parent=31 // pred_fallthru
        _
    $region32: #{upconv_block_forward.1} parent=5 // pred_fallthru
      _
    %p186 = scmp.le.s32.totalorder 1, %s11
    %p187 = scmp.lt.s32.totalorder %s11, 3
    %p188 = pnand %p186, %p187
    %p189 = pneg %p188
    // Predicated region
    $region37: #{upconv_block_forward.1} parent=5 // pred_check
      _
    $region38: #{upconv_block_forward.1} parent=5 // pred_check_branch
      %191 = sbr.rel (%p188) target = $region40
    $region39: #{upconv_block_forward.1} parent=5 // pred_region
      %s192 = ssub.s32 %s11, 1
      %p193 = scmp.lt.s32.totalorder %s16, 1
      %s194 = scalar_select %p193, %s16, 1
      %s195 = smul.addr %s194, 32
      %s196 = smul.addr %s195, 4
      %s197 = scalar_lea.vmem %s0, %s196
      %p198 = pneg %p37
      %p199 = pneg %p34
      %p200 = pneg %p58
      %p201 = pneg %p55
      %p202 = pneg %p79
      %p203 = pneg %p76
      %p204 = pneg %p100
      %p205 = pneg %p97
      %p206 = pneg %p121
      %p207 = pneg %p118
      %p208 = pneg %p147
      %p209 = pneg %p144
      %p210 = scmp.lt.s32.totalorder %s16, 1
      %s211 = scalar_select %p210, %s16, 1
      %s212 = smul.addr %s211, 128
      %s213 = smul.addr %s212, 8
      %s214 = scalar_lea.vmem %s5, %s213
      %p215 = scmp.lt.s32.totalorder %s16, 1
      %s216 = scalar_select %p215, %s16, 1
      %s217 = smul.addr %s216, 32
      %s218 = smul.addr %s217, 4
      %s219 = scalar_lea.vmem %s0, %s218
      %p220 = scmp.lt.s32.totalorder %s16, 1
      %s221 = scalar_select %p220, %s16, 1
      %s222 = smul.addr %s221, 128
      %s223 = smul.addr %s222, 8
      %s224 = scalar_lea.vmem %s5, %s223
      %vm226 = vcmask 130048
      %227 = vst.msk [vmem:[#allocation2] sm:$0xff] %vm226, 0.0
      %228 = vst.msk [vmem:[#allocation2 + $0x8] sm:$0xff] %vm226, 0.0
      %229 = vst.msk [vmem:[#allocation2 + $0x10] sm:$0xff] %vm226, 0.0
      %230 = vst.msk [vmem:[#allocation2 + $0x18] sm:$0xff] %vm226, 0.0
      %231 = vst.msk [vmem:[#allocation2 + $0x20] sm:$0xff] %vm226, 0.0
      %232 = vst.msk [vmem:[#allocation2 + $0x28] sm:$0xff] %vm226, 0.0
      %233 = vst.msk [vmem:[#allocation2 + $0x30] sm:$0xff] %vm226, 0.0
      %234 = vst.msk [vmem:[#allocation2 + $0x38] sm:$0xff] %vm226, 0.0
      %235 = vst.msk [vmem:[#allocation2 + $0x40] sm:$0xff] %vm226, 0.0
      %236 = vst.msk [vmem:[#allocation2 + $0x48] sm:$0xff] %vm226, 0.0
      %237 = vst.msk [vmem:[#allocation2 + $0x50] sm:$0xff] %vm226, 0.0
      %238 = vst.msk [vmem:[#allocation2 + $0x58] sm:$0xff] %vm226, 0.0
      %239 = vst.msk [vmem:[#allocation2 + $0x60] sm:$0xff] %vm226, 0.0
      %240 = vst.msk [vmem:[#allocation2 + $0x68] sm:$0xff] %vm226, 0.0
      %241 = vst.msk [vmem:[#allocation2 + $0x70] sm:$0xff] %vm226, 0.0
      %242 = vst.msk [vmem:[#allocation2 + $0x78] sm:$0xff] %vm226, 0.0
      %243 = vst.msk [vmem:[#allocation2 + $0x80] sm:$0xff] %vm226, 0.0
      %244 = vst.msk [vmem:[#allocation2 + $0x88] sm:$0xff] %vm226, 0.0
      %245 = vst.msk [vmem:[#allocation2 + $0x90] sm:$0xff] %vm226, 0.0
      %246 = vst.msk [vmem:[#allocation2 + $0x98] sm:$0xff] %vm226, 0.0
      %247 = vst.msk [vmem:[#allocation2 + $0xa0] sm:$0xff] %vm226, 0.0
      %248 = vst.msk [vmem:[#allocation2 + $0xa8] sm:$0xff] %vm226, 0.0
      %249 = vst.msk [vmem:[#allocation2 + $0xb0] sm:$0xff] %vm226, 0.0
      %250 = vst.msk [vmem:[#allocation2 + $0xb8] sm:$0xff] %vm226, 0.0
      %251 = vst.msk [vmem:[#allocation2 + $0xc0] sm:$0xff] %vm226, 0.0
      %252 = vst.msk [vmem:[#allocation2 + $0xc8] sm:$0xff] %vm226, 0.0
      %253 = vst.msk [vmem:[#allocation2 + $0xd0] sm:$0xff] %vm226, 0.0
      %254 = vst.msk [vmem:[#allocation2 + $0xd8] sm:$0xff] %vm226, 0.0
      %255 = vst.msk [vmem:[#allocation2 + $0xe0] sm:$0xff] %vm226, 0.0
      %256 = vst.msk [vmem:[#allocation2 + $0xe8] sm:$0xff] %vm226, 0.0
      %257 = vst.msk [vmem:[#allocation2 + $0xf0] sm:$0xff] %vm226, 0.0
      %258 = vst.msk [vmem:[#allocation2 + $0xf8] sm:$0xff] %vm226, 0.0
      %259 = vst.msk [vmem:[#allocation2 + $0x100] sm:$0xff] %vm226, 0.0
      %260 = vst.msk [vmem:[#allocation2 + $0x108] sm:$0xff] %vm226, 0.0
      %261 = vst.msk [vmem:[#allocation2 + $0x110] sm:$0xff] %vm226, 0.0
      %262 = vst.msk [vmem:[#allocation2 + $0x118] sm:$0xff] %vm226, 0.0
      %263 = vst.msk [vmem:[#allocation2 + $0x120] sm:$0xff] %vm226, 0.0
      %264 = vst.msk [vmem:[#allocation2 + $0x128] sm:$0xff] %vm226, 0.0
      %265 = vst.msk [vmem:[#allocation2 + $0x130] sm:$0xff] %vm226, 0.0
      %266 = vst.msk [vmem:[#allocation2 + $0x138] sm:$0xff] %vm226, 0.0
      %267 = vst.msk [vmem:[#allocation2 + $0x140] sm:$0xff] %vm226, 0.0
      %268 = vst.msk [vmem:[#allocation2 + $0x148] sm:$0xff] %vm226, 0.0
      %269 = vst.msk [vmem:[#allocation2 + $0x150] sm:$0xff] %vm226, 0.0
      %270 = vst.msk [vmem:[#allocation2 + $0x158] sm:$0xff] %vm226, 0.0
      %271 = vst.msk [vmem:[#allocation2 + $0x160] sm:$0xff] %vm226, 0.0
      %272 = vst.msk [vmem:[#allocation2 + $0x168] sm:$0xff] %vm226, 0.0
      %273 = vst.msk [vmem:[#allocation2 + $0x170] sm:$0xff] %vm226, 0.0
      %274 = vst.msk [vmem:[#allocation2 + $0x178] sm:$0xff] %vm226, 0.0
      %275 = vst.msk [vmem:[#allocation2 + $0x180] sm:$0xff] %vm226, 0.0
      %276 = vst.msk [vmem:[#allocation2 + $0x188] sm:$0xff] %vm226, 0.0
      %277 = vst.msk [vmem:[#allocation2 + $0x190] sm:$0xff] %vm226, 0.0
      %278 = vst.msk [vmem:[#allocation2 + $0x198] sm:$0xff] %vm226, 0.0
      %279 = vst.msk [vmem:[#allocation2 + $0x1a0] sm:$0xff] %vm226, 0.0
      %280 = vst.msk [vmem:[#allocation2 + $0x1a8] sm:$0xff] %vm226, 0.0
      %281 = vst.msk [vmem:[#allocation2 + $0x1b0] sm:$0xff] %vm226, 0.0
      %282 = vst.msk [vmem:[#allocation2 + $0x1b8] sm:$0xff] %vm226, 0.0
      %283 = vst.msk [vmem:[#allocation2 + $0x1c0] sm:$0xff] %vm226, 0.0
      %284 = vst.msk [vmem:[#allocation2 + $0x1c8] sm:$0xff] %vm226, 0.0
      %285 = vst.msk [vmem:[#allocation2 + $0x1d0] sm:$0xff] %vm226, 0.0
      %286 = vst.msk [vmem:[#allocation2 + $0x1d8] sm:$0xff] %vm226, 0.0
      %287 = vst.msk [vmem:[#allocation2 + $0x1e0] sm:$0xff] %vm226, 0.0
      %288 = vst.msk [vmem:[#allocation2 + $0x1e8] sm:$0xff] %vm226, 0.0
      %289 = vst.msk [vmem:[#allocation2 + $0x1f0] sm:$0xff] %vm226, 0.0
      %290 = vst.msk [vmem:[#allocation2 + $0x1f8] sm:$0xff] %vm226, 0.0
      %291 = vst.msk [vmem:[#allocation2 + $0x200] sm:$0xff] %vm226, 0.0
      %292 = vst.msk [vmem:[#allocation2 + $0x208] sm:$0xff] %vm226, 0.0
      %293 = vst.msk [vmem:[#allocation2 + $0x210] sm:$0xff] %vm226, 0.0
      %294 = vst.msk [vmem:[#allocation2 + $0x218] sm:$0xff] %vm226, 0.0
      %295 = vst.msk [vmem:[#allocation2 + $0x220] sm:$0xff] %vm226, 0.0
      %296 = vst.msk [vmem:[#allocation2 + $0x228] sm:$0xff] %vm226, 0.0
      %297 = vst.msk [vmem:[#allocation2 + $0x230] sm:$0xff] %vm226, 0.0
      %298 = vst.msk [vmem:[#allocation2 + $0x238] sm:$0xff] %vm226, 0.0
      %299 = vst.msk [vmem:[#allocation2 + $0x240] sm:$0xff] %vm226, 0.0
      %300 = vst.msk [vmem:[#allocation2 + $0x248] sm:$0xff] %vm226, 0.0
      %301 = vst.msk [vmem:[#allocation2 + $0x250] sm:$0xff] %vm226, 0.0
      %302 = vst.msk [vmem:[#allocation2 + $0x258] sm:$0xff] %vm226, 0.0
      %303 = vst.msk [vmem:[#allocation2 + $0x260] sm:$0xff] %vm226, 0.0
      %304 = vst.msk [vmem:[#allocation2 + $0x268] sm:$0xff] %vm226, 0.0
      %305 = vst.msk [vmem:[#allocation2 + $0x270] sm:$0xff] %vm226, 0.0
      %306 = vst.msk [vmem:[#allocation2 + $0x278] sm:$0xff] %vm226, 0.0
      %307 = vst.msk [vmem:[#allocation2 + $0x280] sm:$0xff] %vm226, 0.0
      %308 = vst.msk [vmem:[#allocation2 + $0x288] sm:$0xff] %vm226, 0.0
      %309 = vst.msk [vmem:[#allocation2 + $0x290] sm:$0xff] %vm226, 0.0
      %310 = vst.msk [vmem:[#allocation2 + $0x298] sm:$0xff] %vm226, 0.0
      %311 = vst.msk [vmem:[#allocation2 + $0x2a0] sm:$0xff] %vm226, 0.0
      %312 = vst.msk [vmem:[#allocation2 + $0x2a8] sm:$0xff] %vm226, 0.0
      %313 = vst.msk [vmem:[#allocation2 + $0x2b0] sm:$0xff] %vm226, 0.0
      %314 = vst.msk [vmem:[#allocation2 + $0x2b8] sm:$0xff] %vm226, 0.0
      %315 = vst.msk [vmem:[#allocation2 + $0x2c0] sm:$0xff] %vm226, 0.0
      %316 = vst.msk [vmem:[#allocation2 + $0x2c8] sm:$0xff] %vm226, 0.0
      %317 = vst.msk [vmem:[#allocation2 + $0x2d0] sm:$0xff] %vm226, 0.0
      %318 = vst.msk [vmem:[#allocation2 + $0x2d8] sm:$0xff] %vm226, 0.0
      %319 = vst.msk [vmem:[#allocation2 + $0x2e0] sm:$0xff] %vm226, 0.0
      %320 = vst.msk [vmem:[#allocation2 + $0x2e8] sm:$0xff] %vm226, 0.0
      %321 = vst.msk [vmem:[#allocation2 + $0x2f0] sm:$0xff] %vm226, 0.0
      %322 = vst.msk [vmem:[#allocation2 + $0x2f8] sm:$0xff] %vm226, 0.0
      %323 = vst.msk [vmem:[#allocation2 + $0x300] sm:$0xff] %vm226, 0.0
      %324 = vst.msk [vmem:[#allocation2 + $0x308] sm:$0xff] %vm226, 0.0
      %325 = vst.msk [vmem:[#allocation2 + $0x310] sm:$0xff] %vm226, 0.0
      %326 = vst.msk [vmem:[#allocation2 + $0x318] sm:$0xff] %vm226, 0.0
      %327 = vst.msk [vmem:[#allocation2 + $0x320] sm:$0xff] %vm226, 0.0
      %328 = vst.msk [vmem:[#allocation2 + $0x328] sm:$0xff] %vm226, 0.0
      %329 = vst.msk [vmem:[#allocation2 + $0x330] sm:$0xff] %vm226, 0.0
      %330 = vst.msk [vmem:[#allocation2 + $0x338] sm:$0xff] %vm226, 0.0
      %331 = vst.msk [vmem:[#allocation2 + $0x340] sm:$0xff] %vm226, 0.0
      %332 = vst.msk [vmem:[#allocation2 + $0x348] sm:$0xff] %vm226, 0.0
      %333 = vst.msk [vmem:[#allocation2 + $0x350] sm:$0xff] %vm226, 0.0
      %334 = vst.msk [vmem:[#allocation2 + $0x358] sm:$0xff] %vm226, 0.0
      %335 = vst.msk [vmem:[#allocation2 + $0x360] sm:$0xff] %vm226, 0.0
      %336 = vst.msk [vmem:[#allocation2 + $0x368] sm:$0xff] %vm226, 0.0
      %337 = vst.msk [vmem:[#allocation2 + $0x370] sm:$0xff] %vm226, 0.0
      %338 = vst.msk [vmem:[#allocation2 + $0x378] sm:$0xff] %vm226, 0.0
      %339 = vst.msk [vmem:[#allocation2 + $0x380] sm:$0xff] %vm226, 0.0
      %340 = vst.msk [vmem:[#allocation2 + $0x388] sm:$0xff] %vm226, 0.0
      %341 = vst.msk [vmem:[#allocation2 + $0x390] sm:$0xff] %vm226, 0.0
      %342 = vst.msk [vmem:[#allocation2 + $0x398] sm:$0xff] %vm226, 0.0
      %343 = vst.msk [vmem:[#allocation2 + $0x3a0] sm:$0xff] %vm226, 0.0
      %344 = vst.msk [vmem:[#allocation2 + $0x3a8] sm:$0xff] %vm226, 0.0
      %345 = vst.msk [vmem:[#allocation2 + $0x3b0] sm:$0xff] %vm226, 0.0
      %346 = vst.msk [vmem:[#allocation2 + $0x3b8] sm:$0xff] %vm226, 0.0
      %347 = vst.msk [vmem:[#allocation2 + $0x3c0] sm:$0xff] %vm226, 0.0
      %348 = vst.msk [vmem:[#allocation2 + $0x3c8] sm:$0xff] %vm226, 0.0
      %349 = vst.msk [vmem:[#allocation2 + $0x3d0] sm:$0xff] %vm226, 0.0
      %350 = vst.msk [vmem:[#allocation2 + $0x3d8] sm:$0xff] %vm226, 0.0
      %351 = vst.msk [vmem:[#allocation2 + $0x3e0] sm:$0xff] %vm226, 0.0
      %352 = vst.msk [vmem:[#allocation2 + $0x3e8] sm:$0xff] %vm226, 0.0
      %353 = vst.msk [vmem:[#allocation2 + $0x3f0] sm:$0xff] %vm226, 0.0
      %354 = vst.msk [vmem:[#allocation2 + $0x3f8] sm:$0xff] %vm226, 0.0
      %v355 = vld [vmem:[%s219] sm:$0xf]
      %v356 = vld [vmem:[%s219 + $0x4] sm:$0xf]
      %v357 = vld [vmem:[%s219 + $0x8] sm:$0xf]
      %v358 = vld [vmem:[%s219 + $0xc] sm:$0xf]
      %v359 = vld [vmem:[%s219 + $0x10] sm:$0xf]
      %v360 = vld [vmem:[%s219 + $0x14] sm:$0xf]
      %v361 = vld [vmem:[%s219 + $0x18] sm:$0xf]
      %v362 = vld [vmem:[%s219 + $0x1c] sm:$0xf]
      %v363 = vld [vmem:[%s219 + $0x20] sm:$0xf]
      %v364 = vld [vmem:[%s219 + $0x24] sm:$0xf]
      %v365 = vld [vmem:[%s219 + $0x28] sm:$0xf]
      %v366 = vld [vmem:[%s219 + $0x2c] sm:$0xf]
      %v367 = vld [vmem:[%s219 + $0x30] sm:$0xf]
      %v368 = vld [vmem:[%s219 + $0x34] sm:$0xf]
      %v369 = vld [vmem:[%s219 + $0x38] sm:$0xf]
      %v370 = vld [vmem:[%s219 + $0x3c] sm:$0xf]
      %v371 = vld [vmem:[%s219 + $0x40] sm:$0xf]
      %v372 = vld [vmem:[%s219 + $0x44] sm:$0xf]
      %v373 = vld [vmem:[%s219 + $0x48] sm:$0xf]
      %v374 = vld [vmem:[%s219 + $0x4c] sm:$0xf]
      %v375 = vld [vmem:[%s219 + $0x50] sm:$0xf]
      %v376 = vld [vmem:[%s219 + $0x54] sm:$0xf]
      %v377 = vld [vmem:[%s219 + $0x58] sm:$0xf]
      %v378 = vld [vmem:[%s219 + $0x5c] sm:$0xf]
      %v379 = vld [vmem:[%s219 + $0x60] sm:$0xf]
      %v380 = vld [vmem:[%s219 + $0x64] sm:$0xf]
      %v381 = vld [vmem:[%s219 + $0x68] sm:$0xf]
      %v382 = vld [vmem:[%s219 + $0x6c] sm:$0xf]
      %v383 = vld [vmem:[%s219 + $0x70] sm:$0xf]
      %v384 = vld [vmem:[%s219 + $0x74] sm:$0xf]
      %v385 = vld [vmem:[%s219 + $0x78] sm:$0xf]
      %v386 = vld [vmem:[%s219 + $0x7c] sm:$0xf]
      %v387 = vld [vmem:[%s1] sm:$0xf]
      %v420 = vunpack.c.l.b16 %v355
      %v421 = vunpack.c.l.b16 %v356
      %v422 = vunpack.c.l.b16 %v357
      %v423 = vunpack.c.l.b16 %v358
      %v424 = vunpack.c.l.b16 %v359
      %v425 = vunpack.c.l.b16 %v360
      %v426 = vunpack.c.l.b16 %v361
      %v427 = vunpack.c.l.b16 %v362
      %v428 = vunpack.c.l.b16 %v363
      %v429 = vunpack.c.l.b16 %v364
      %v430 = vunpack.c.l.b16 %v365
      %v431 = vunpack.c.l.b16 %v366
      %v432 = vunpack.c.l.b16 %v367
      %v433 = vunpack.c.l.b16 %v368
      %v434 = vunpack.c.l.b16 %v369
      %v435 = vunpack.c.l.b16 %v370
      %v436 = vunpack.c.l.b16 %v371
      %v437 = vunpack.c.l.b16 %v372
      %v438 = vunpack.c.l.b16 %v373
      %v439 = vunpack.c.l.b16 %v374
      %v440 = vunpack.c.l.b16 %v375
      %v441 = vunpack.c.l.b16 %v376
      %v442 = vunpack.c.l.b16 %v377
      %v443 = vunpack.c.l.b16 %v378
      %v444 = vunpack.c.l.b16 %v379
      %v445 = vunpack.c.l.b16 %v380
      %v446 = vunpack.c.l.b16 %v381
      %v447 = vunpack.c.l.b16 %v382
      %v448 = vunpack.c.l.b16 %v383
      %v449 = vunpack.c.l.b16 %v384
      %v450 = vunpack.c.l.b16 %v385
      %v451 = vunpack.c.l.b16 %v386
      %v452 = vpack.c.b16 %v421, %v420
      %v453 = vpack.c.b16 %v423, %v422
      %v454 = vpack.c.b16 %v425, %v424
      %v455 = vpack.c.b16 %v427, %v426
      %v456 = vpack.c.b16 %v429, %v428
      %v457 = vpack.c.b16 %v431, %v430
      %v458 = vpack.c.b16 %v433, %v432
      %v459 = vpack.c.b16 %v435, %v434
      %v460 = vpack.c.b16 %v437, %v436
      %v461 = vpack.c.b16 %v439, %v438
      %v462 = vpack.c.b16 %v441, %v440
      %v463 = vpack.c.b16 %v443, %v442
      %v464 = vpack.c.b16 %v445, %v444
      %v465 = vpack.c.b16 %v447, %v446
      %v466 = vpack.c.b16 %v449, %v448
      %v467 = vpack.c.b16 %v451, %v450
      %vm468 = vcmask 64512
      %v470 = vsel %vm468, %v452, 0
      %v473 = vsel %vm468, %v453, 0
      %v476 = vsel %vm468, %v454, 0
      %v479 = vsel %vm468, %v455, 0
      %v482 = vsel %vm468, %v456, 0
      %v485 = vsel %vm468, %v457, 0
      %v488 = vsel %vm468, %v458, 0
      %v491 = vsel %vm468, %v459, 0
      %v494 = vsel %vm468, %v460, 0
      %v497 = vsel %vm468, %v461, 0
      %v500 = vsel %vm468, %v462, 0
      %v503 = vsel %vm468, %v463, 0
      %v506 = vsel %vm468, %v464, 0
      %v509 = vsel %vm468, %v465, 0
      %v512 = vsel %vm468, %v466, 0
      %v515 = vsel %vm468, %v467, 0
      %vm517 = vcmask 1043456
      %v519 = vsel %vm517, %v387, 0
      %521 = vmatprep.subr.bf16.mxu0 0
      %522 = vmatpush1.bf16.msra.mxu0 0
      %523 = vmatprep.subr.bf16.mxu0 0
      %524 = vmatpush1.bf16.msra.mxu0 0
      %525 = vmatprep.subr.bf16.mxu0 0
      %526 = vmatpush1.bf16.msra.mxu0 0
      %527 = vmatprep.subr.bf16.mxu0 0
      %528 = vmatpush1.bf16.msra.mxu0 0
      %529 = vmatprep.subr.bf16.mxu0 0
      %530 = vmatpush1.bf16.msra.mxu0 0
      %531 = vmatprep.subr.bf16.mxu0 0
      %532 = vmatpush1.bf16.msra.mxu0 0
      %533 = vmatprep.subr.bf16.mxu0 0
      %534 = vmatpush1.bf16.msra.mxu0 0
      %535 = vmatprep.subr.bf16.mxu0 0
      %536 = vmatpush1.bf16.msra.mxu0 %v519
      %537 = vmatprep.subr.bf16.mxu0 0
      %538 = vmatpush2.bf16.msra.mxu0 0
      %539 = vmatprep.subr.bf16.mxu0 0
      %540 = vmatpush2.bf16.msra.mxu0 0
      %541 = vmatprep.subr.bf16.mxu0 0
      %542 = vmatpush2.bf16.msra.mxu0 0
      %543 = vmatprep.subr.bf16.mxu0 0
      %544 = vmatpush2.bf16.msra.mxu0 0
      %545 = vmatprep.subr.bf16.mxu0 0
      %546 = vmatpush2.bf16.msra.mxu0 0
      %547 = vmatprep.subr.bf16.mxu0 0
      %548 = vmatpush2.bf16.msra.mxu0 0
      %549 = vmatprep.subr.bf16.mxu0 0
      %550 = vmatpush2.bf16.msra.mxu0 0
      %551 = vmatprep.subr.bf16.mxu0 0
      %552 = vmatpush2.bf16.msra.mxu0 0
      %553 = vmatprep.mubr.bf16.mxu0 0
      %554 = vmatmul.mubr.bf16.gmra.mxu0 %v470
      %v555 = vpop.f32.mrf.mxu0
      %v556 = vpop.f32.mrf.mxu0
      %v557 = vpop.f32.mrf.mxu0
      %v558 = vpop.f32.mrf.mxu0
      %559 = vmatprep.mubr.bf16.mxu0 0
      %560 = vmatmul.mubr.bf16.gmra.mxu0 %v473
      %v561 = vpop.f32.mrf.mxu0
      %v562 = vadd.f32 0.0, %v561
      %v563 = vpop.f32.mrf.mxu0
      %v564 = vpop.f32.mrf.mxu0
      %v565 = vadd.f32 0.0, %v564
      %v566 = vpop.f32.mrf.mxu0
      %567 = vmatprep.mubr.bf16.mxu0 0
      %568 = vmatmul.mubr.bf16.gmra.mxu0 %v476
      %v569 = vpop.f32.mrf.mxu0
      %v570 = vadd.f32 0.0, %v569
      %v571 = vpop.f32.mrf.mxu0
      %v572 = vpop.f32.mrf.mxu0
      %v573 = vadd.f32 0.0, %v572
      %v574 = vpop.f32.mrf.mxu0
      %575 = vmatprep.mubr.bf16.mxu0 0
      %576 = vmatmul.mubr.bf16.gmra.mxu0 %v479
      %v577 = vpop.f32.mrf.mxu0
      %v578 = vadd.f32 0.0, %v577
      %v579 = vpop.f32.mrf.mxu0
      %v580 = vpop.f32.mrf.mxu0
      %v581 = vadd.f32 0.0, %v580
      %v582 = vpop.f32.mrf.mxu0
      %583 = vmatprep.mubr.bf16.mxu0 0
      %584 = vmatmul.mubr.bf16.gmra.mxu0 %v482
      %v585 = vpop.f32.mrf.mxu0
      %v586 = vadd.f32 0.0, %v585
      %v587 = vpop.f32.mrf.mxu0
      %v588 = vpop.f32.mrf.mxu0
      %v589 = vadd.f32 0.0, %v588
      %v590 = vpop.f32.mrf.mxu0
      %591 = vmatprep.mubr.bf16.mxu0 0
      %592 = vmatmul.mubr.bf16.gmra.mxu0 %v485
      %v593 = vpop.f32.mrf.mxu0
      %v594 = vadd.f32 0.0, %v593
      %v595 = vpop.f32.mrf.mxu0
      %v596 = vpop.f32.mrf.mxu0
      %v597 = vadd.f32 0.0, %v596
      %v598 = vpop.f32.mrf.mxu0
      %599 = vmatprep.mubr.bf16.mxu0 0
      %600 = vmatmul.mubr.bf16.gmra.mxu0 %v488
      %v601 = vpop.f32.mrf.mxu0
      %v602 = vadd.f32 0.0, %v601
      %v603 = vpop.f32.mrf.mxu0
      %v604 = vpop.f32.mrf.mxu0
      %v605 = vadd.f32 0.0, %v604
      %v606 = vpop.f32.mrf.mxu0
      %607 = vmatprep.mubr.bf16.mxu0 0
      %608 = vmatmul.mubr.bf16.gmra.mxu0 %v491
      %v609 = vpop.f32.mrf.mxu0
      %v610 = vadd.f32 0.0, %v609
      %v611 = vpop.f32.mrf.mxu0
      %v612 = vpop.f32.mrf.mxu0
      %v613 = vadd.f32 0.0, %v612
      %v614 = vpop.f32.mrf.mxu0
      %615 = vmatprep.mubr.bf16.mxu0 0
      %616 = vmatmul.mubr.bf16.gmra.mxu0 %v494
      %v617 = vpop.f32.mrf.mxu0
      %v618 = vadd.f32 0.0, %v617
      %v619 = vpop.f32.mrf.mxu0
      %v620 = vpop.f32.mrf.mxu0
      %v621 = vadd.f32 0.0, %v620
      %v622 = vpop.f32.mrf.mxu0
      %623 = vmatprep.mubr.bf16.mxu0 0
      %624 = vmatmul.mubr.bf16.gmra.mxu0 %v497
      %v625 = vpop.f32.mrf.mxu0
      %v626 = vadd.f32 0.0, %v625
      %v627 = vpop.f32.mrf.mxu0
      %v628 = vpop.f32.mrf.mxu0
      %v629 = vadd.f32 0.0, %v628
      %v630 = vpop.f32.mrf.mxu0
      %631 = vmatprep.mubr.bf16.mxu0 0
      %632 = vmatmul.mubr.bf16.gmra.mxu0 %v500
      %v633 = vpop.f32.mrf.mxu0
      %v634 = vadd.f32 0.0, %v633
      %v635 = vpop.f32.mrf.mxu0
      %v636 = vpop.f32.mrf.mxu0
      %v637 = vadd.f32 0.0, %v636
      %v638 = vpop.f32.mrf.mxu0
      %639 = vmatprep.mubr.bf16.mxu0 0
      %640 = vmatmul.mubr.bf16.gmra.mxu0 %v503
      %v641 = vpop.f32.mrf.mxu0
      %v642 = vadd.f32 0.0, %v641
      %v643 = vpop.f32.mrf.mxu0
      %v644 = vpop.f32.mrf.mxu0
      %v645 = vadd.f32 0.0, %v644
      %v646 = vpop.f32.mrf.mxu0
      %647 = vmatprep.mubr.bf16.mxu0 0
      %648 = vmatmul.mubr.bf16.gmra.mxu0 %v506
      %v649 = vpop.f32.mrf.mxu0
      %v650 = vadd.f32 0.0, %v649
      %v651 = vpop.f32.mrf.mxu0
      %v652 = vpop.f32.mrf.mxu0
      %v653 = vadd.f32 0.0, %v652
      %v654 = vpop.f32.mrf.mxu0
      %655 = vmatprep.mubr.bf16.mxu0 0
      %656 = vmatmul.mubr.bf16.gmra.mxu0 %v509
      %v657 = vpop.f32.mrf.mxu0
      %v658 = vadd.f32 0.0, %v657
      %v659 = vpop.f32.mrf.mxu0
      %v660 = vpop.f32.mrf.mxu0
      %v661 = vadd.f32 0.0, %v660
      %v662 = vpop.f32.mrf.mxu0
      %663 = vmatprep.mubr.bf16.mxu0 0
      %664 = vmatmul.mubr.bf16.gmra.mxu0 %v512
      %v665 = vpop.f32.mrf.mxu0
      %v666 = vadd.f32 0.0, %v665
      %v667 = vpop.f32.mrf.mxu0
      %v668 = vpop.f32.mrf.mxu0
      %v669 = vadd.f32 0.0, %v668
      %v670 = vpop.f32.mrf.mxu0
      %671 = vmatprep.mubr.bf16.mxu0 0
      %672 = vmatmul.mubr.bf16.gmra.mxu0 %v515
      %v673 = vpop.f32.mrf.mxu0
      %v674 = vadd.f32 0.0, %v673
      %v675 = vpop.f32.mrf.mxu0
      %v676 = vpop.f32.mrf.mxu0
      %v677 = vadd.f32 0.0, %v676
      %v678 = vpop.f32.mrf.mxu0
      %679 = vdwg.mxu0
      %s680 = scalar_lea.vmem [#allocation2], 768
      %v681 = vld [vmem:[%s680] sm:$0xff]
      %v682 = vld [vmem:[%s680 + $0x8] sm:$0x7f]
      %v683 = vld [vmem:[%s680 + $0x10] sm:$0xff]
      %v684 = vld [vmem:[%s680 + $0x18] sm:$0x7f]
      %v685 = vld [vmem:[%s680 + $0x20] sm:$0xff]
      %v686 = vld [vmem:[%s680 + $0x28] sm:$0x7f]
      %v687 = vld [vmem:[%s680 + $0x30] sm:$0xff]
      %v688 = vld [vmem:[%s680 + $0x38] sm:$0x7f]
      %v689 = vld [vmem:[%s680 + $0x40] sm:$0xff]
      %v690 = vld [vmem:[%s680 + $0x48] sm:$0x7f]
      %v691 = vld [vmem:[%s680 + $0x50] sm:$0xff]
      %v692 = vld [vmem:[%s680 + $0x58] sm:$0x7f]
      %v693 = vld [vmem:[%s680 + $0x60] sm:$0xff]
      %v694 = vld [vmem:[%s680 + $0x68] sm:$0x7f]
      %v695 = vld [vmem:[%s680 + $0x70] sm:$0xff]
      %v696 = vld [vmem:[%s680 + $0x78] sm:$0x7f]
      %v697 = vld [vmem:[%s680 + $0x80] sm:$0xff]
      %v698 = vld [vmem:[%s680 + $0x88] sm:$0x7f]
      %v699 = vld [vmem:[%s680 + $0x90] sm:$0xff]
      %v700 = vld [vmem:[%s680 + $0x98] sm:$0x7f]
      %v701 = vld [vmem:[%s680 + $0xa0] sm:$0xff]
      %v702 = vld [vmem:[%s680 + $0xa8] sm:$0x7f]
      %v703 = vld [vmem:[%s680 + $0xb0] sm:$0xff]
      %v704 = vld [vmem:[%s680 + $0xb8] sm:$0x7f]
      %v705 = vld [vmem:[%s680 + $0xc0] sm:$0xff]
      %v706 = vld [vmem:[%s680 + $0xc8] sm:$0x7f]
      %v707 = vld [vmem:[%s680 + $0xd0] sm:$0xff]
      %v708 = vld [vmem:[%s680 + $0xd8] sm:$0x7f]
      %v709 = vld [vmem:[%s680 + $0xe0] sm:$0xff]
      %v710 = vld [vmem:[%s680 + $0xe8] sm:$0x7f]
      %vm741 = vcmask 1046528
      %v742 = vrot.slane %v562, 1
      %v743 = vrot.slane %v565, 1
      %v744 = vsel %vm741, %v742, %v743
      %v745 = vrot.slane %v570, 1
      %v746 = vrot.slane %v573, 1
      %v747 = vsel %vm741, %v745, %v746
      %v748 = vrot.slane %v578, 1
      %v749 = vrot.slane %v581, 1
      %v750 = vsel %vm741, %v748, %v749
      %v751 = vrot.slane %v586, 1
      %v752 = vrot.slane %v589, 1
      %v753 = vsel %vm741, %v751, %v752
      %v754 = vrot.slane %v594, 1
      %v755 = vrot.slane %v597, 1
      %v756 = vsel %vm741, %v754, %v755
      %v757 = vrot.slane %v602, 1
      %v758 = vrot.slane %v605, 1
      %v759 = vsel %vm741, %v757, %v758
      %v760 = vrot.slane %v610, 1
      %v761 = vrot.slane %v613, 1
      %v762 = vsel %vm741, %v760, %v761
      %v763 = vrot.slane %v618, 1
      %v764 = vrot.slane %v621, 1
      %v765 = vsel %vm741, %v763, %v764
      %v766 = vrot.slane %v626, 1
      %v767 = vrot.slane %v629, 1
      %v768 = vsel %vm741, %v766, %v767
      %v769 = vrot.slane %v634, 1
      %v770 = vrot.slane %v637, 1
      %v771 = vsel %vm741, %v769, %v770
      %v772 = vrot.slane %v642, 1
      %v773 = vrot.slane %v645, 1
      %v774 = vsel %vm741, %v772, %v773
      %v775 = vrot.slane %v650, 1
      %v776 = vrot.slane %v653, 1
      %v777 = vsel %vm741, %v775, %v776
      %v778 = vrot.slane %v658, 1
      %v779 = vrot.slane %v661, 1
      %v780 = vsel %vm741, %v778, %v779
      %v781 = vrot.slane %v666, 1
      %v782 = vrot.slane %v669, 1
      %v783 = vsel %vm741, %v781, %v782
      %v784 = vrot.slane %v674, 1
      %v785 = vrot.slane %v677, 1
      %v786 = vsel %vm741, %v784, %v785
      %v817 = vadd.f32 %v681, %v744
      %v818 = vadd.f32 %v682, %v743
      %v819 = vadd.f32 %v683, %v747
      %v820 = vadd.f32 %v684, %v746
      %v821 = vadd.f32 %v685, %v750
      %v822 = vadd.f32 %v686, %v749
      %v823 = vadd.f32 %v687, %v753
      %v824 = vadd.f32 %v688, %v752
      %v825 = vadd.f32 %v689, %v756
      %v826 = vadd.f32 %v690, %v755
      %v827 = vadd.f32 %v691, %v759
      %v828 = vadd.f32 %v692, %v758
      %v829 = vadd.f32 %v693, %v762
      %v830 = vadd.f32 %v694, %v761
      %v831 = vadd.f32 %v695, %v765
      %v832 = vadd.f32 %v696, %v764
      %v833 = vadd.f32 %v697, %v768
      %v834 = vadd.f32 %v698, %v767
      %v835 = vadd.f32 %v699, %v771
      %v836 = vadd.f32 %v700, %v770
      %v837 = vadd.f32 %v701, %v774
      %v838 = vadd.f32 %v702, %v773
      %v839 = vadd.f32 %v703, %v777
      %v840 = vadd.f32 %v704, %v776
      %v841 = vadd.f32 %v705, %v780
      %v842 = vadd.f32 %v706, %v779
      %v843 = vadd.f32 %v707, %v783
      %v844 = vadd.f32 %v708, %v782
      %v845 = vadd.f32 %v709, %v786
      %v846 = vadd.f32 %v710, %v785
      %847 = vst.msk [vmem:[%s680] sm:$0xff] %vm226, %v817
      %vm848 = vcmask 129024
      %849 = vst.msk [vmem:[%s680 + $0x8] sm:$0x7f] %vm848, %v818
      %850 = vst.msk [vmem:[%s680 + $0x10] sm:$0xff] %vm226, %v819
      %851 = vst.msk [vmem:[%s680 + $0x18] sm:$0x7f] %vm848, %v820
      %852 = vst.msk [vmem:[%s680 + $0x20] sm:$0xff] %vm226, %v821
      %853 = vst.msk [vmem:[%s680 + $0x28] sm:$0x7f] %vm848, %v822
      %854 = vst.msk [vmem:[%s680 + $0x30] sm:$0xff] %vm226, %v823
      %855 = vst.msk [vmem:[%s680 + $0x38] sm:$0x7f] %vm848, %v824
      %856 = vst.msk [vmem:[%s680 + $0x40] sm:$0xff] %vm226, %v825
      %857 = vst.msk [vmem:[%s680 + $0x48] sm:$0x7f] %vm848, %v826
      %858 = vst.msk [vmem:[%s680 + $0x50] sm:$0xff] %vm226, %v827
      %859 = vst.msk [vmem:[%s680 + $0x58] sm:$0x7f] %vm848, %v828
      %860 = vst.msk [vmem:[%s680 + $0x60] sm:$0xff] %vm226, %v829
      %861 = vst.msk [vmem:[%s680 + $0x68] sm:$0x7f] %vm848, %v830
      %862 = vst.msk [vmem:[%s680 + $0x70] sm:$0xff] %vm226, %v831
      %863 = vst.msk [vmem:[%s680 + $0x78] sm:$0x7f] %vm848, %v832
      %864 = vst.msk [vmem:[%s680 + $0x80] sm:$0xff] %vm226, %v833
      %865 = vst.msk [vmem:[%s680 + $0x88] sm:$0x7f] %vm848, %v834
      %866 = vst.msk [vmem:[%s680 + $0x90] sm:$0xff] %vm226, %v835
      %867 = vst.msk [vmem:[%s680 + $0x98] sm:$0x7f] %vm848, %v836
      %868 = vst.msk [vmem:[%s680 + $0xa0] sm:$0xff] %vm226, %v837
      %869 = vst.msk [vmem:[%s680 + $0xa8] sm:$0x7f] %vm848, %v838
      %870 = vst.msk [vmem:[%s680 + $0xb0] sm:$0xff] %vm226, %v839
      %871 = vst.msk [vmem:[%s680 + $0xb8] sm:$0x7f] %vm848, %v840
      %872 = vst.msk [vmem:[%s680 + $0xc0] sm:$0xff] %vm226, %v841
      %873 = vst.msk [vmem:[%s680 + $0xc8] sm:$0x7f] %vm848, %v842
      %874 = vst.msk [vmem:[%s680 + $0xd0] sm:$0xff] %vm226, %v843
      %875 = vst.msk [vmem:[%s680 + $0xd8] sm:$0x7f] %vm848, %v844
      %876 = vst.msk [vmem:[%s680 + $0xe0] sm:$0xff] %vm226, %v845
      %877 = vst.msk [vmem:[%s680 + $0xe8] sm:$0x7f] %vm848, %v846
      %s878 = scalar_lea.vmem %s1, 4
      %v879 = vld [vmem:[%s878] sm:$0xf]
      %v881 = vsel %vm517, %v879, 0
      %883 = vmatprep.subr.bf16.mxu0 0
      %884 = vmatpush1.bf16.msra.mxu0 0
      %885 = vmatprep.subr.bf16.mxu0 0
      %886 = vmatpush1.bf16.msra.mxu0 0
      %887 = vmatprep.subr.bf16.mxu0 0
      %888 = vmatpush1.bf16.msra.mxu0 0
      %889 = vmatprep.subr.bf16.mxu0 0
      %890 = vmatpush1.bf16.msra.mxu0 0
      %891 = vmatprep.subr.bf16.mxu0 0
      %892 = vmatpush1.bf16.msra.mxu0 0
      %893 = vmatprep.subr.bf16.mxu0 0
      %894 = vmatpush1.bf16.msra.mxu0 0
      %895 = vmatprep.subr.bf16.mxu0 0
      %896 = vmatpush1.bf16.msra.mxu0 0
      %897 = vmatprep.subr.bf16.mxu0 0
      %898 = vmatpush1.bf16.msra.mxu0 %v881
      %899 = vmatprep.subr.bf16.mxu0 0
      %900 = vmatpush2.bf16.msra.mxu0 0
      %901 = vmatprep.subr.bf16.mxu0 0
      %902 = vmatpush2.bf16.msra.mxu0 0
      %903 = vmatprep.subr.bf16.mxu0 0
      %904 = vmatpush2.bf16.msra.mxu0 0
      %905 = vmatprep.subr.bf16.mxu0 0
      %906 = vmatpush2.bf16.msra.mxu0 0
      %907 = vmatprep.subr.bf16.mxu0 0
      %908 = vmatpush2.bf16.msra.mxu0 0
      %909 = vmatprep.subr.bf16.mxu0 0
      %910 = vmatpush2.bf16.msra.mxu0 0
      %911 = vmatprep.subr.bf16.mxu0 0
      %912 = vmatpush2.bf16.msra.mxu0 0
      %913 = vmatprep.subr.bf16.mxu0 0
      %914 = vmatpush2.bf16.msra.mxu0 0
      %915 = vmatprep.mubr.bf16.mxu0 0
      %916 = vmatmul.mubr.bf16.gmra.mxu0 %v470
      %v917 = vpop.f32.mrf.mxu0
      %v918 = vpop.f32.mrf.mxu0
      %v919 = vpop.f32.mrf.mxu0
      %v920 = vpop.f32.mrf.mxu0
      %921 = vmatprep.mubr.bf16.mxu0 0
      %922 = vmatmul.mubr.bf16.gmra.mxu0 %v473
      %v923 = vpop.f32.mrf.mxu0
      %v924 = vadd.f32 0.0, %v923
      %v925 = vpop.f32.mrf.mxu0
      %v926 = vpop.f32.mrf.mxu0
      %v927 = vadd.f32 0.0, %v926
      %v928 = vpop.f32.mrf.mxu0
      %929 = vmatprep.mubr.bf16.mxu0 0
      %930 = vmatmul.mubr.bf16.gmra.mxu0 %v476
      %v931 = vpop.f32.mrf.mxu0
      %v932 = vadd.f32 0.0, %v931
      %v933 = vpop.f32.mrf.mxu0
      %v934 = vpop.f32.mrf.mxu0
      %v935 = vadd.f32 0.0, %v934
      %v936 = vpop.f32.mrf.mxu0
      %937 = vmatprep.mubr.bf16.mxu0 0
      %938 = vmatmul.mubr.bf16.gmra.mxu0 %v479
      %v939 = vpop.f32.mrf.mxu0
      %v940 = vadd.f32 0.0, %v939
      %v941 = vpop.f32.mrf.mxu0
      %v942 = vpop.f32.mrf.mxu0
      %v943 = vadd.f32 0.0, %v942
      %v944 = vpop.f32.mrf.mxu0
      %945 = vmatprep.mubr.bf16.mxu0 0
      %946 = vmatmul.mubr.bf16.gmra.mxu0 %v482
      %v947 = vpop.f32.mrf.mxu0
      %v948 = vadd.f32 0.0, %v947
      %v949 = vpop.f32.mrf.mxu0
      %v950 = vpop.f32.mrf.mxu0
      %v951 = vadd.f32 0.0, %v950
      %v952 = vpop.f32.mrf.mxu0
      %953 = vmatprep.mubr.bf16.mxu0 0
      %954 = vmatmul.mubr.bf16.gmra.mxu0 %v485
      %v955 = vpop.f32.mrf.mxu0
      %v956 = vadd.f32 0.0, %v955
      %v957 = vpop.f32.mrf.mxu0
      %v958 = vpop.f32.mrf.mxu0
      %v959 = vadd.f32 0.0, %v958
      %v960 = vpop.f32.mrf.mxu0
      %961 = vmatprep.mubr.bf16.mxu0 0
      %962 = vmatmul.mubr.bf16.gmra.mxu0 %v488
      %v963 = vpop.f32.mrf.mxu0
      %v964 = vadd.f32 0.0, %v963
      %v965 = vpop.f32.mrf.mxu0
      %v966 = vpop.f32.mrf.mxu0
      %v967 = vadd.f32 0.0, %v966
      %v968 = vpop.f32.mrf.mxu0
      %969 = vmatprep.mubr.bf16.mxu0 0
      %970 = vmatmul.mubr.bf16.gmra.mxu0 %v491
      %v971 = vpop.f32.mrf.mxu0
      %v972 = vadd.f32 0.0, %v971
      %v973 = vpop.f32.mrf.mxu0
      %v974 = vpop.f32.mrf.mxu0
      %v975 = vadd.f32 0.0, %v974
      %v976 = vpop.f32.mrf.mxu0
      %977 = vmatprep.mubr.bf16.mxu0 0
      %978 = vmatmul.mubr.bf16.gmra.mxu0 %v494
      %v979 = vpop.f32.mrf.mxu0
      %v980 = vadd.f32 0.0, %v979
      %v981 = vpop.f32.mrf.mxu0
      %v982 = vpop.f32.mrf.mxu0
      %v983 = vadd.f32 0.0, %v982
      %v984 = vpop.f32.mrf.mxu0
      %985 = vmatprep.mubr.bf16.mxu0 0
      %986 = vmatmul.mubr.bf16.gmra.mxu0 %v497
      %v987 = vpop.f32.mrf.mxu0
      %v988 = vadd.f32 0.0, %v987
      %v989 = vpop.f32.mrf.mxu0
      %v990 = vpop.f32.mrf.mxu0
      %v991 = vadd.f32 0.0, %v990
      %v992 = vpop.f32.mrf.mxu0
      %993 = vmatprep.mubr.bf16.mxu0 0
      %994 = vmatmul.mubr.bf16.gmra.mxu0 %v500
      %v995 = vpop.f32.mrf.mxu0
      %v996 = vadd.f32 0.0, %v995
      %v997 = vpop.f32.mrf.mxu0
      %v998 = vpop.f32.mrf.mxu0
      %v999 = vadd.f32 0.0, %v998
      %v1000 = vpop.f32.mrf.mxu0
      %1001 = vmatprep.mubr.bf16.mxu0 0
      %1002 = vmatmul.mubr.bf16.gmra.mxu0 %v503
      %v1003 = vpop.f32.mrf.mxu0
      %v1004 = vadd.f32 0.0, %v1003
      %v1005 = vpop.f32.mrf.mxu0
      %v1006 = vpop.f32.mrf.mxu0
      %v1007 = vadd.f32 0.0, %v1006
      %v1008 = vpop.f32.mrf.mxu0
      %1009 = vmatprep.mubr.bf16.mxu0 0
      %1010 = vmatmul.mubr.bf16.gmra.mxu0 %v506
      %v1011 = vpop.f32.mrf.mxu0
      %v1012 = vadd.f32 0.0, %v1011
      %v1013 = vpop.f32.mrf.mxu0
      %v1014 = vpop.f32.mrf.mxu0
      %v1015 = vadd.f32 0.0, %v1014
      %v1016 = vpop.f32.mrf.mxu0
      %1017 = vmatprep.mubr.bf16.mxu0 0
      %1018 = vmatmul.mubr.bf16.gmra.mxu0 %v509
      %v1019 = vpop.f32.mrf.mxu0
      %v1020 = vadd.f32 0.0, %v1019
      %v1021 = vpop.f32.mrf.mxu0
      %v1022 = vpop.f32.mrf.mxu0
      %v1023 = vadd.f32 0.0, %v1022
      %v1024 = vpop.f32.mrf.mxu0
      %1025 = vmatprep.mubr.bf16.mxu0 0
      %1026 = vmatmul.mubr.bf16.gmra.mxu0 %v512
      %v1027 = vpop.f32.mrf.mxu0
      %v1028 = vadd.f32 0.0, %v1027
      %v1029 = vpop.f32.mrf.mxu0
      %v1030 = vpop.f32.mrf.mxu0
      %v1031 = vadd.f32 0.0, %v1030
      %v1032 = vpop.f32.mrf.mxu0
      %1033 = vmatprep.mubr.bf16.mxu0 0
      %1034 = vmatmul.mubr.bf16.gmra.mxu0 %v515
      %v1035 = vpop.f32.mrf.mxu0
      %v1036 = vadd.f32 0.0, %v1035
      %v1037 = vpop.f32.mrf.mxu0
      %v1038 = vpop.f32.mrf.mxu0
      %v1039 = vadd.f32 0.0, %v1038
      %v1040 = vpop.f32.mrf.mxu0
      %1041 = vdwg.mxu0
      %s1042 = scalar_lea.vmem [#allocation2], 512
      %v1043 = vld [vmem:[%s1042] sm:$0xff]
      %v1044 = vld [vmem:[%s1042 + $0x8] sm:$0xff]
      %v1045 = vld [vmem:[%s1042 + $0x10] sm:$0xff]
      %v1046 = vld [vmem:[%s1042 + $0x18] sm:$0xff]
      %v1047 = vld [vmem:[%s1042 + $0x20] sm:$0xff]
      %v1048 = vld [vmem:[%s1042 + $0x28] sm:$0xff]
      %v1049 = vld [vmem:[%s1042 + $0x30] sm:$0xff]
      %v1050 = vld [vmem:[%s1042 + $0x38] sm:$0xff]
      %v1051 = vld [vmem:[%s1042 + $0x40] sm:$0xff]
      %v1052 = vld [vmem:[%s1042 + $0x48] sm:$0xff]
      %v1053 = vld [vmem:[%s1042 + $0x50] sm:$0xff]
      %v1054 = vld [vmem:[%s1042 + $0x58] sm:$0xff]
      %v1055 = vld [vmem:[%s1042 + $0x60] sm:$0xff]
      %v1056 = vld [vmem:[%s1042 + $0x68] sm:$0xff]
      %v1057 = vld [vmem:[%s1042 + $0x70] sm:$0xff]
      %v1058 = vld [vmem:[%s1042 + $0x78] sm:$0xff]
      %v1059 = vld [vmem:[%s1042 + $0x80] sm:$0xff]
      %v1060 = vld [vmem:[%s1042 + $0x88] sm:$0xff]
      %v1061 = vld [vmem:[%s1042 + $0x90] sm:$0xff]
      %v1062 = vld [vmem:[%s1042 + $0x98] sm:$0xff]
      %v1063 = vld [vmem:[%s1042 + $0xa0] sm:$0xff]
      %v1064 = vld [vmem:[%s1042 + $0xa8] sm:$0xff]
      %v1065 = vld [vmem:[%s1042 + $0xb0] sm:$0xff]
      %v1066 = vld [vmem:[%s1042 + $0xb8] sm:$0xff]
      %v1067 = vld [vmem:[%s1042 + $0xc0] sm:$0xff]
      %v1068 = vld [vmem:[%s1042 + $0xc8] sm:$0xff]
      %v1069 = vld [vmem:[%s1042 + $0xd0] sm:$0xff]
      %v1070 = vld [vmem:[%s1042 + $0xd8] sm:$0xff]
      %v1071 = vld [vmem:[%s1042 + $0xe0] sm:$0xff]
      %v1072 = vld [vmem:[%s1042 + $0xe8] sm:$0xff]
      %v1073 = vadd.f32 %v1043, %v924
      %v1074 = vadd.f32 %v1044, %v927
      %v1075 = vadd.f32 %v1045, %v932
      %v1076 = vadd.f32 %v1046, %v935
      %v1077 = vadd.f32 %v1047, %v940
      %v1078 = vadd.f32 %v1048, %v943
      %v1079 = vadd.f32 %v1049, %v948
      %v1080 = vadd.f32 %v1050, %v951
      %v1081 = vadd.f32 %v1051, %v956
      %v1082 = vadd.f32 %v1052, %v959
      %v1083 = vadd.f32 %v1053, %v964
      %v1084 = vadd.f32 %v1054, %v967
      %v1085 = vadd.f32 %v1055, %v972
      %v1086 = vadd.f32 %v1056, %v975
      %v1087 = vadd.f32 %v1057, %v980
      %v1088 = vadd.f32 %v1058, %v983
      %v1089 = vadd.f32 %v1059, %v988
      %v1090 = vadd.f32 %v1060, %v991
      %v1091 = vadd.f32 %v1061, %v996
      %v1092 = vadd.f32 %v1062, %v999
      %v1093 = vadd.f32 %v1063, %v1004
      %v1094 = vadd.f32 %v1064, %v1007
      %v1095 = vadd.f32 %v1065, %v1012
      %v1096 = vadd.f32 %v1066, %v1015
      %v1097 = vadd.f32 %v1067, %v1020
      %v1098 = vadd.f32 %v1068, %v1023
      %v1099 = vadd.f32 %v1069, %v1028
      %v1100 = vadd.f32 %v1070, %v1031
      %v1101 = vadd.f32 %v1071, %v1036
      %v1102 = vadd.f32 %v1072, %v1039
      %1103 = vst.msk [vmem:[%s1042] sm:$0xff] %vm226, %v1073
      %1104 = vst.msk [vmem:[%s1042 + $0x8] sm:$0xff] %vm226, %v1074
      %1105 = vst.msk [vmem:[%s1042 + $0x10] sm:$0xff] %vm226, %v1075
      %1106 = vst.msk [vmem:[%s1042 + $0x18] sm:$0xff] %vm226, %v1076
      %1107 = vst.msk [vmem:[%s1042 + $0x20] sm:$0xff] %vm226, %v1077
      %1108 = vst.msk [vmem:[%s1042 + $0x28] sm:$0xff] %vm226, %v1078
      %1109 = vst.msk [vmem:[%s1042 + $0x30] sm:$0xff] %vm226, %v1079
      %1110 = vst.msk [vmem:[%s1042 + $0x38] sm:$0xff] %vm226, %v1080
      %1111 = vst.msk [vmem:[%s1042 + $0x40] sm:$0xff] %vm226, %v1081
      %1112 = vst.msk [vmem:[%s1042 + $0x48] sm:$0xff] %vm226, %v1082
      %1113 = vst.msk [vmem:[%s1042 + $0x50] sm:$0xff] %vm226, %v1083
      %1114 = vst.msk [vmem:[%s1042 + $0x58] sm:$0xff] %vm226, %v1084
      %1115 = vst.msk [vmem:[%s1042 + $0x60] sm:$0xff] %vm226, %v1085
      %1116 = vst.msk [vmem:[%s1042 + $0x68] sm:$0xff] %vm226, %v1086
      %1117 = vst.msk [vmem:[%s1042 + $0x70] sm:$0xff] %vm226, %v1087
      %1118 = vst.msk [vmem:[%s1042 + $0x78] sm:$0xff] %vm226, %v1088
      %1119 = vst.msk [vmem:[%s1042 + $0x80] sm:$0xff] %vm226, %v1089
      %1120 = vst.msk [vmem:[%s1042 + $0x88] sm:$0xff] %vm226, %v1090
      %1121 = vst.msk [vmem:[%s1042 + $0x90] sm:$0xff] %vm226, %v1091
      %1122 = vst.msk [vmem:[%s1042 + $0x98] sm:$0xff] %vm226, %v1092
      %1123 = vst.msk [vmem:[%s1042 + $0xa0] sm:$0xff] %vm226, %v1093
      %1124 = vst.msk [vmem:[%s1042 + $0xa8] sm:$0xff] %vm226, %v1094
      %1125 = vst.msk [vmem:[%s1042 + $0xb0] sm:$0xff] %vm226, %v1095
      %1126 = vst.msk [vmem:[%s1042 + $0xb8] sm:$0xff] %vm226, %v1096
      %1127 = vst.msk [vmem:[%s1042 + $0xc0] sm:$0xff] %vm226, %v1097
      %1128 = vst.msk [vmem:[%s1042 + $0xc8] sm:$0xff] %vm226, %v1098
      %1129 = vst.msk [vmem:[%s1042 + $0xd0] sm:$0xff] %vm226, %v1099
      %1130 = vst.msk [vmem:[%s1042 + $0xd8] sm:$0xff] %vm226, %v1100
      %1131 = vst.msk [vmem:[%s1042 + $0xe0] sm:$0xff] %vm226, %v1101
      %1132 = vst.msk [vmem:[%s1042 + $0xe8] sm:$0xff] %vm226, %v1102
      %s1133 = scalar_lea.vmem %s1, 8
      %v1134 = vld [vmem:[%s1133] sm:$0xf]
      %v1136 = vsel %vm517, %v1134, 0
      %1138 = vmatprep.subr.bf16.mxu0 0
      %1139 = vmatpush1.bf16.msra.mxu0 0
      %1140 = vmatprep.subr.bf16.mxu0 0
      %1141 = vmatpush1.bf16.msra.mxu0 0
      %1142 = vmatprep.subr.bf16.mxu0 0
      %1143 = vmatpush1.bf16.msra.mxu0 0
      %1144 = vmatprep.subr.bf16.mxu0 0
      %1145 = vmatpush1.bf16.msra.mxu0 0
      %1146 = vmatprep.subr.bf16.mxu0 0
      %1147 = vmatpush1.bf16.msra.mxu0 0
      %1148 = vmatprep.subr.bf16.mxu0 0
      %1149 = vmatpush1.bf16.msra.mxu0 0
      %1150 = vmatprep.subr.bf16.mxu0 0
      %1151 = vmatpush1.bf16.msra.mxu0 0
      %1152 = vmatprep.subr.bf16.mxu0 0
      %1153 = vmatpush1.bf16.msra.mxu0 %v1136
      %1154 = vmatprep.subr.bf16.mxu0 0
      %1155 = vmatpush2.bf16.msra.mxu0 0
      %1156 = vmatprep.subr.bf16.mxu0 0
      %1157 = vmatpush2.bf16.msra.mxu0 0
      %1158 = vmatprep.subr.bf16.mxu0 0
      %1159 = vmatpush2.bf16.msra.mxu0 0
      %1160 = vmatprep.subr.bf16.mxu0 0
      %1161 = vmatpush2.bf16.msra.mxu0 0
      %1162 = vmatprep.subr.bf16.mxu0 0
      %1163 = vmatpush2.bf16.msra.mxu0 0
      %1164 = vmatprep.subr.bf16.mxu0 0
      %1165 = vmatpush2.bf16.msra.mxu0 0
      %1166 = vmatprep.subr.bf16.mxu0 0
      %1167 = vmatpush2.bf16.msra.mxu0 0
      %1168 = vmatprep.subr.bf16.mxu0 0
      %1169 = vmatpush2.bf16.msra.mxu0 0
      %1170 = vmatprep.mubr.bf16.mxu0 0
      %1171 = vmatmul.mubr.bf16.gmra.mxu0 %v470
      %v1172 = vpop.f32.mrf.mxu0
      %v1173 = vpop.f32.mrf.mxu0
      %v1174 = vpop.f32.mrf.mxu0
      %v1175 = vpop.f32.mrf.mxu0
      %1176 = vmatprep.mubr.bf16.mxu0 0
      %1177 = vmatmul.mubr.bf16.gmra.mxu0 %v473
      %v1178 = vpop.f32.mrf.mxu0
      %v1179 = vadd.f32 0.0, %v1178
      %v1180 = vpop.f32.mrf.mxu0
      %v1181 = vpop.f32.mrf.mxu0
      %v1182 = vadd.f32 0.0, %v1181
      %v1183 = vpop.f32.mrf.mxu0
      %1184 = vmatprep.mubr.bf16.mxu0 0
      %1185 = vmatmul.mubr.bf16.gmra.mxu0 %v476
      %v1186 = vpop.f32.mrf.mxu0
      %v1187 = vadd.f32 0.0, %v1186
      %v1188 = vpop.f32.mrf.mxu0
      %v1189 = vpop.f32.mrf.mxu0
      %v1190 = vadd.f32 0.0, %v1189
      %v1191 = vpop.f32.mrf.mxu0
      %1192 = vmatprep.mubr.bf16.mxu0 0
      %1193 = vmatmul.mubr.bf16.gmra.mxu0 %v479
      %v1194 = vpop.f32.mrf.mxu0
      %v1195 = vadd.f32 0.0, %v1194
      %v1196 = vpop.f32.mrf.mxu0
      %v1197 = vpop.f32.mrf.mxu0
      %v1198 = vadd.f32 0.0, %v1197
      %v1199 = vpop.f32.mrf.mxu0
      %1200 = vmatprep.mubr.bf16.mxu0 0
      %1201 = vmatmul.mubr.bf16.gmra.mxu0 %v482
      %v1202 = vpop.f32.mrf.mxu0
      %v1203 = vadd.f32 0.0, %v1202
      %v1204 = vpop.f32.mrf.mxu0
      %v1205 = vpop.f32.mrf.mxu0
      %v1206 = vadd.f32 0.0, %v1205
      %v1207 = vpop.f32.mrf.mxu0
      %1208 = vmatprep.mubr.bf16.mxu0 0
      %1209 = vmatmul.mubr.bf16.gmra.mxu0 %v485
      %v1210 = vpop.f32.mrf.mxu0
      %v1211 = vadd.f32 0.0, %v1210
      %v1212 = vpop.f32.mrf.mxu0
      %v1213 = vpop.f32.mrf.mxu0
      %v1214 = vadd.f32 0.0, %v1213
      %v1215 = vpop.f32.mrf.mxu0
      %1216 = vmatprep.mubr.bf16.mxu0 0
      %1217 = vmatmul.mubr.bf16.gmra.mxu0 %v488
      %v1218 = vpop.f32.mrf.mxu0
      %v1219 = vadd.f32 0.0, %v1218
      %v1220 = vpop.f32.mrf.mxu0
      %v1221 = vpop.f32.mrf.mxu0
      %v1222 = vadd.f32 0.0, %v1221
      %v1223 = vpop.f32.mrf.mxu0
      %1224 = vmatprep.mubr.bf16.mxu0 0
      %1225 = vmatmul.mubr.bf16.gmra.mxu0 %v491
      %v1226 = vpop.f32.mrf.mxu0
      %v1227 = vadd.f32 0.0, %v1226
      %v1228 = vpop.f32.mrf.mxu0
      %v1229 = vpop.f32.mrf.mxu0
      %v1230 = vadd.f32 0.0, %v1229
      %v1231 = vpop.f32.mrf.mxu0
      %1232 = vmatprep.mubr.bf16.mxu0 0
      %1233 = vmatmul.mubr.bf16.gmra.mxu0 %v494
      %v1234 = vpop.f32.mrf.mxu0
      %v1235 = vadd.f32 0.0, %v1234
      %v1236 = vpop.f32.mrf.mxu0
      %v1237 = vpop.f32.mrf.mxu0
      %v1238 = vadd.f32 0.0, %v1237
      %v1239 = vpop.f32.mrf.mxu0
      %1240 = vmatprep.mubr.bf16.mxu0 0
      %1241 = vmatmul.mubr.bf16.gmra.mxu0 %v497
      %v1242 = vpop.f32.mrf.mxu0
      %v1243 = vadd.f32 0.0, %v1242
      %v1244 = vpop.f32.mrf.mxu0
      %v1245 = vpop.f32.mrf.mxu0
      %v1246 = vadd.f32 0.0, %v1245
      %v1247 = vpop.f32.mrf.mxu0
      %1248 = vmatprep.mubr.bf16.mxu0 0
      %1249 = vmatmul.mubr.bf16.gmra.mxu0 %v500
      %v1250 = vpop.f32.mrf.mxu0
      %v1251 = vadd.f32 0.0, %v1250
      %v1252 = vpop.f32.mrf.mxu0
      %v1253 = vpop.f32.mrf.mxu0
      %v1254 = vadd.f32 0.0, %v1253
      %v1255 = vpop.f32.mrf.mxu0
      %1256 = vmatprep.mubr.bf16.mxu0 0
      %1257 = vmatmul.mubr.bf16.gmra.mxu0 %v503
      %v1258 = vpop.f32.mrf.mxu0
      %v1259 = vadd.f32 0.0, %v1258
      %v1260 = vpop.f32.mrf.mxu0
      %v1261 = vpop.f32.mrf.mxu0
      %v1262 = vadd.f32 0.0, %v1261
      %v1263 = vpop.f32.mrf.mxu0
      %1264 = vmatprep.mubr.bf16.mxu0 0
      %1265 = vmatmul.mubr.bf16.gmra.mxu0 %v506
      %v1266 = vpop.f32.mrf.mxu0
      %v1267 = vadd.f32 0.0, %v1266
      %v1268 = vpop.f32.mrf.mxu0
      %v1269 = vpop.f32.mrf.mxu0
      %v1270 = vadd.f32 0.0, %v1269
      %v1271 = vpop.f32.mrf.mxu0
      %1272 = vmatprep.mubr.bf16.mxu0 0
      %1273 = vmatmul.mubr.bf16.gmra.mxu0 %v509
      %v1274 = vpop.f32.mrf.mxu0
      %v1275 = vadd.f32 0.0, %v1274
      %v1276 = vpop.f32.mrf.mxu0
      %v1277 = vpop.f32.mrf.mxu0
      %v1278 = vadd.f32 0.0, %v1277
      %v1279 = vpop.f32.mrf.mxu0
      %1280 = vmatprep.mubr.bf16.mxu0 0
      %1281 = vmatmul.mubr.bf16.gmra.mxu0 %v512
      %v1282 = vpop.f32.mrf.mxu0
      %v1283 = vadd.f32 0.0, %v1282
      %v1284 = vpop.f32.mrf.mxu0
      %v1285 = vpop.f32.mrf.mxu0
      %v1286 = vadd.f32 0.0, %v1285
      %v1287 = vpop.f32.mrf.mxu0
      %1288 = vmatprep.mubr.bf16.mxu0 0
      %1289 = vmatmul.mubr.bf16.gmra.mxu0 %v515
      %v1290 = vpop.f32.mrf.mxu0
      %v1291 = vadd.f32 0.0, %v1290
      %v1292 = vpop.f32.mrf.mxu0
      %v1293 = vpop.f32.mrf.mxu0
      %v1294 = vadd.f32 0.0, %v1293
      %v1295 = vpop.f32.mrf.mxu0
      %1296 = vdwg.mxu0
      %v1297 = vld [vmem:[%s680] sm:$0xff]
      %v1298 = vld [vmem:[%s680 + $0x8] sm:$0xff]
      %v1299 = vld [vmem:[%s680 + $0x10] sm:$0xff]
      %v1300 = vld [vmem:[%s680 + $0x18] sm:$0xff]
      %v1301 = vld [vmem:[%s680 + $0x20] sm:$0xff]
      %v1302 = vld [vmem:[%s680 + $0x28] sm:$0xff]
      %v1303 = vld [vmem:[%s680 + $0x30] sm:$0xff]
      %v1304 = vld [vmem:[%s680 + $0x38] sm:$0xff]
      %v1305 = vld [vmem:[%s680 + $0x40] sm:$0xff]
      %v1306 = vld [vmem:[%s680 + $0x48] sm:$0xff]
      %v1307 = vld [vmem:[%s680 + $0x50] sm:$0xff]
      %v1308 = vld [vmem:[%s680 + $0x58] sm:$0xff]
      %v1309 = vld [vmem:[%s680 + $0x60] sm:$0xff]
      %v1310 = vld [vmem:[%s680 + $0x68] sm:$0xff]
      %v1311 = vld [vmem:[%s680 + $0x70] sm:$0xff]
      %v1312 = vld [vmem:[%s680 + $0x78] sm:$0xff]
      %v1313 = vld [vmem:[%s680 + $0x80] sm:$0xff]
      %v1314 = vld [vmem:[%s680 + $0x88] sm:$0xff]
      %v1315 = vld [vmem:[%s680 + $0x90] sm:$0xff]
      %v1316 = vld [vmem:[%s680 + $0x98] sm:$0xff]
      %v1317 = vld [vmem:[%s680 + $0xa0] sm:$0xff]
      %v1318 = vld [vmem:[%s680 + $0xa8] sm:$0xff]
      %v1319 = vld [vmem:[%s680 + $0xb0] sm:$0xff]
      %v1320 = vld [vmem:[%s680 + $0xb8] sm:$0xff]
      %v1321 = vld [vmem:[%s680 + $0xc0] sm:$0xff]
      %v1322 = vld [vmem:[%s680 + $0xc8] sm:$0xff]
      %v1323 = vld [vmem:[%s680 + $0xd0] sm:$0xff]
      %v1324 = vld [vmem:[%s680 + $0xd8] sm:$0xff]
      %v1325 = vld [vmem:[%s680 + $0xe0] sm:$0xff]
      %v1326 = vld [vmem:[%s680 + $0xe8] sm:$0xff]
      %v1327 = vadd.f32 %v1297, %v1179
      %v1328 = vadd.f32 %v1298, %v1182
      %v1329 = vadd.f32 %v1299, %v1187
      %v1330 = vadd.f32 %v1300, %v1190
      %v1331 = vadd.f32 %v1301, %v1195
      %v1332 = vadd.f32 %v1302, %v1198
      %v1333 = vadd.f32 %v1303, %v1203
      %v1334 = vadd.f32 %v1304, %v1206
      %v1335 = vadd.f32 %v1305, %v1211
      %v1336 = vadd.f32 %v1306, %v1214
      %v1337 = vadd.f32 %v1307, %v1219
      %v1338 = vadd.f32 %v1308, %v1222
      %v1339 = vadd.f32 %v1309, %v1227
      %v1340 = vadd.f32 %v1310, %v1230
      %v1341 = vadd.f32 %v1311, %v1235
      %v1342 = vadd.f32 %v1312, %v1238
      %v1343 = vadd.f32 %v1313, %v1243
      %v1344 = vadd.f32 %v1314, %v1246
      %v1345 = vadd.f32 %v1315, %v1251
      %v1346 = vadd.f32 %v1316, %v1254
      %v1347 = vadd.f32 %v1317, %v1259
      %v1348 = vadd.f32 %v1318, %v1262
      %v1349 = vadd.f32 %v1319, %v1267
      %v1350 = vadd.f32 %v1320, %v1270
      %v1351 = vadd.f32 %v1321, %v1275
      %v1352 = vadd.f32 %v1322, %v1278
      %v1353 = vadd.f32 %v1323, %v1283
      %v1354 = vadd.f32 %v1324, %v1286
      %v1355 = vadd.f32 %v1325, %v1291
      %v1356 = vadd.f32 %v1326, %v1294
      %1357 = vst.msk [vmem:[%s680] sm:$0xff] %vm226, %v1327
      %1358 = vst.msk [vmem:[%s680 + $0x8] sm:$0xff] %vm226, %v1328
      %1359 = vst.msk [vmem:[%s680 + $0x10] sm:$0xff] %vm226, %v1329
      %1360 = vst.msk [vmem:[%s680 + $0x18] sm:$0xff] %vm226, %v1330
      %1361 = vst.msk [vmem:[%s680 + $0x20] sm:$0xff] %vm226, %v1331
      %1362 = vst.msk [vmem:[%s680 + $0x28] sm:$0xff] %vm226, %v1332
      %1363 = vst.msk [vmem:[%s680 + $0x30] sm:$0xff] %vm226, %v1333
      %1364 = vst.msk [vmem:[%s680 + $0x38] sm:$0xff] %vm226, %v1334
      %1365 = vst.msk [vmem:[%s680 + $0x40] sm:$0xff] %vm226, %v1335
      %1366 = vst.msk [vmem:[%s680 + $0x48] sm:$0xff] %vm226, %v1336
      %1367 = vst.msk [vmem:[%s680 + $0x50] sm:$0xff] %vm226, %v1337
      %1368 = vst.msk [vmem:[%s680 + $0x58] sm:$0xff] %vm226, %v1338
      %1369 = vst.msk [vmem:[%s680 + $0x60] sm:$0xff] %vm226, %v1339
      %1370 = vst.msk [vmem:[%s680 + $0x68] sm:$0xff] %vm226, %v1340
      %1371 = vst.msk [vmem:[%s680 + $0x70] sm:$0xff] %vm226, %v1341
      %1372 = vst.msk [vmem:[%s680 + $0x78] sm:$0xff] %vm226, %v1342
      %1373 = vst.msk [vmem:[%s680 + $0x80] sm:$0xff] %vm226, %v1343
      %1374 = vst.msk [vmem:[%s680 + $0x88] sm:$0xff] %vm226, %v1344
      %1375 = vst.msk [vmem:[%s680 + $0x90] sm:$0xff] %vm226, %v1345
      %1376 = vst.msk [vmem:[%s680 + $0x98] sm:$0xff] %vm226, %v1346
      %1377 = vst.msk [vmem:[%s680 + $0xa0] sm:$0xff] %vm226, %v1347
      %1378 = vst.msk [vmem:[%s680 + $0xa8] sm:$0xff] %vm226, %v1348
      %1379 = vst.msk [vmem:[%s680 + $0xb0] sm:$0xff] %vm226, %v1349
      %1380 = vst.msk [vmem:[%s680 + $0xb8] sm:$0xff] %vm226, %v1350
      %1381 = vst.msk [vmem:[%s680 + $0xc0] sm:$0xff] %vm226, %v1351
      %1382 = vst.msk [vmem:[%s680 + $0xc8] sm:$0xff] %vm226, %v1352
      %1383 = vst.msk [vmem:[%s680 + $0xd0] sm:$0xff] %vm226, %v1353
      %1384 = vst.msk [vmem:[%s680 + $0xd8] sm:$0xff] %vm226, %v1354
      %1385 = vst.msk [vmem:[%s680 + $0xe0] sm:$0xff] %vm226, %v1355
      %1386 = vst.msk [vmem:[%s680 + $0xe8] sm:$0xff] %vm226, %v1356
      %s1387 = scalar_lea.vmem %s1, 12
      %v1388 = vld [vmem:[%s1387] sm:$0xf]
      %v1390 = vsel %vm517, %v1388, 0
      %1392 = vmatprep.subr.bf16.mxu0 0
      %1393 = vmatpush1.bf16.msra.mxu0 0
      %1394 = vmatprep.subr.bf16.mxu0 0
      %1395 = vmatpush1.bf16.msra.mxu0 0
      %1396 = vmatprep.subr.bf16.mxu0 0
      %1397 = vmatpush1.bf16.msra.mxu0 0
      %1398 = vmatprep.subr.bf16.mxu0 0
      %1399 = vmatpush1.bf16.msra.mxu0 0
      %1400 = vmatprep.subr.bf16.mxu0 0
      %1401 = vmatpush1.bf16.msra.mxu0 0
      %1402 = vmatprep.subr.bf16.mxu0 0
      %1403 = vmatpush1.bf16.msra.mxu0 0
      %1404 = vmatprep.subr.bf16.mxu0 0
      %1405 = vmatpush1.bf16.msra.mxu0 0
      %1406 = vmatprep.subr.bf16.mxu0 0
      %1407 = vmatpush1.bf16.msra.mxu0 %v1390
      %1408 = vmatprep.subr.bf16.mxu0 0
      %1409 = vmatpush2.bf16.msra.mxu0 0
      %1410 = vmatprep.subr.bf16.mxu0 0
      %1411 = vmatpush2.bf16.msra.mxu0 0
      %1412 = vmatprep.subr.bf16.mxu0 0
      %1413 = vmatpush2.bf16.msra.mxu0 0
      %1414 = vmatprep.subr.bf16.mxu0 0
      %1415 = vmatpush2.bf16.msra.mxu0 0
      %1416 = vmatprep.subr.bf16.mxu0 0
      %1417 = vmatpush2.bf16.msra.mxu0 0
      %1418 = vmatprep.subr.bf16.mxu0 0
      %1419 = vmatpush2.bf16.msra.mxu0 0
      %1420 = vmatprep.subr.bf16.mxu0 0
      %1421 = vmatpush2.bf16.msra.mxu0 0
      %1422 = vmatprep.subr.bf16.mxu0 0
      %1423 = vmatpush2.bf16.msra.mxu0 0
      %1424 = vmatprep.mubr.bf16.mxu0 0
      %1425 = vmatmul.mubr.bf16.gmra.mxu0 %v470
      %v1426 = vpop.f32.mrf.mxu0
      %v1427 = vpop.f32.mrf.mxu0
      %v1428 = vpop.f32.mrf.mxu0
      %v1429 = vpop.f32.mrf.mxu0
      %1430 = vmatprep.mubr.bf16.mxu0 0
      %1431 = vmatmul.mubr.bf16.gmra.mxu0 %v473
      %v1432 = vpop.f32.mrf.mxu0
      %v1433 = vadd.f32 0.0, %v1432
      %v1434 = vpop.f32.mrf.mxu0
      %v1435 = vpop.f32.mrf.mxu0
      %v1436 = vadd.f32 0.0, %v1435
      %v1437 = vpop.f32.mrf.mxu0
      %1438 = vmatprep.mubr.bf16.mxu0 0
      %1439 = vmatmul.mubr.bf16.gmra.mxu0 %v476
      %v1440 = vpop.f32.mrf.mxu0
      %v1441 = vadd.f32 0.0, %v1440
      %v1442 = vpop.f32.mrf.mxu0
      %v1443 = vpop.f32.mrf.mxu0
      %v1444 = vadd.f32 0.0, %v1443
      %v1445 = vpop.f32.mrf.mxu0
      %1446 = vmatprep.mubr.bf16.mxu0 0
      %1447 = vmatmul.mubr.bf16.gmra.mxu0 %v479
      %v1448 = vpop.f32.mrf.mxu0
      %v1449 = vadd.f32 0.0, %v1448
      %v1450 = vpop.f32.mrf.mxu0
      %v1451 = vpop.f32.mrf.mxu0
      %v1452 = vadd.f32 0.0, %v1451
      %v1453 = vpop.f32.mrf.mxu0
      %1454 = vmatprep.mubr.bf16.mxu0 0
      %1455 = vmatmul.mubr.bf16.gmra.mxu0 %v482
      %v1456 = vpop.f32.mrf.mxu0
      %v1457 = vadd.f32 0.0, %v1456
      %v1458 = vpop.f32.mrf.mxu0
      %v1459 = vpop.f32.mrf.mxu0
      %v1460 = vadd.f32 0.0, %v1459
      %v1461 = vpop.f32.mrf.mxu0
      %1462 = vmatprep.mubr.bf16.mxu0 0
      %1463 = vmatmul.mubr.bf16.gmra.mxu0 %v485
      %v1464 = vpop.f32.mrf.mxu0
      %v1465 = vadd.f32 0.0, %v1464
      %v1466 = vpop.f32.mrf.mxu0
      %v1467 = vpop.f32.mrf.mxu0
      %v1468 = vadd.f32 0.0, %v1467
      %v1469 = vpop.f32.mrf.mxu0
      %1470 = vmatprep.mubr.bf16.mxu0 0
      %1471 = vmatmul.mubr.bf16.gmra.mxu0 %v488
      %v1472 = vpop.f32.mrf.mxu0
      %v1473 = vadd.f32 0.0, %v1472
      %v1474 = vpop.f32.mrf.mxu0
      %v1475 = vpop.f32.mrf.mxu0
      %v1476 = vadd.f32 0.0, %v1475
      %v1477 = vpop.f32.mrf.mxu0
      %1478 = vmatprep.mubr.bf16.mxu0 0
      %1479 = vmatmul.mubr.bf16.gmra.mxu0 %v491
      %v1480 = vpop.f32.mrf.mxu0
      %v1481 = vadd.f32 0.0, %v1480
      %v1482 = vpop.f32.mrf.mxu0
      %v1483 = vpop.f32.mrf.mxu0
      %v1484 = vadd.f32 0.0, %v1483
      %v1485 = vpop.f32.mrf.mxu0
      %1486 = vmatprep.mubr.bf16.mxu0 0
      %1487 = vmatmul.mubr.bf16.gmra.mxu0 %v494
      %v1488 = vpop.f32.mrf.mxu0
      %v1489 = vadd.f32 0.0, %v1488
      %v1490 = vpop.f32.mrf.mxu0
      %v1491 = vpop.f32.mrf.mxu0
      %v1492 = vadd.f32 0.0, %v1491
      %v1493 = vpop.f32.mrf.mxu0
      %1494 = vmatprep.mubr.bf16.mxu0 0
      %1495 = vmatmul.mubr.bf16.gmra.mxu0 %v497
      %v1496 = vpop.f32.mrf.mxu0
      %v1497 = vadd.f32 0.0, %v1496
      %v1498 = vpop.f32.mrf.mxu0
      %v1499 = vpop.f32.mrf.mxu0
      %v1500 = vadd.f32 0.0, %v1499
      %v1501 = vpop.f32.mrf.mxu0
      %1502 = vmatprep.mubr.bf16.mxu0 0
      %1503 = vmatmul.mubr.bf16.gmra.mxu0 %v500
      %v1504 = vpop.f32.mrf.mxu0
      %v1505 = vadd.f32 0.0, %v1504
      %v1506 = vpop.f32.mrf.mxu0
      %v1507 = vpop.f32.mrf.mxu0
      %v1508 = vadd.f32 0.0, %v1507
      %v1509 = vpop.f32.mrf.mxu0
      %1510 = vmatprep.mubr.bf16.mxu0 0
      %1511 = vmatmul.mubr.bf16.gmra.mxu0 %v503
      %v1512 = vpop.f32.mrf.mxu0
      %v1513 = vadd.f32 0.0, %v1512
      %v1514 = vpop.f32.mrf.mxu0
      %v1515 = vpop.f32.mrf.mxu0
      %v1516 = vadd.f32 0.0, %v1515
      %v1517 = vpop.f32.mrf.mxu0
      %1518 = vmatprep.mubr.bf16.mxu0 0
      %1519 = vmatmul.mubr.bf16.gmra.mxu0 %v506
      %v1520 = vpop.f32.mrf.mxu0
      %v1521 = vadd.f32 0.0, %v1520
      %v1522 = vpop.f32.mrf.mxu0
      %v1523 = vpop.f32.mrf.mxu0
      %v1524 = vadd.f32 0.0, %v1523
      %v1525 = vpop.f32.mrf.mxu0
      %1526 = vmatprep.mubr.bf16.mxu0 0
      %1527 = vmatmul.mubr.bf16.gmra.mxu0 %v509
      %v1528 = vpop.f32.mrf.mxu0
      %v1529 = vadd.f32 0.0, %v1528
      %v1530 = vpop.f32.mrf.mxu0
      %v1531 = vpop.f32.mrf.mxu0
      %v1532 = vadd.f32 0.0, %v1531
      %v1533 = vpop.f32.mrf.mxu0
      %1534 = vmatprep.mubr.bf16.mxu0 0
      %1535 = vmatmul.mubr.bf16.gmra.mxu0 %v512
      %v1536 = vpop.f32.mrf.mxu0
      %v1537 = vadd.f32 0.0, %v1536
      %v1538 = vpop.f32.mrf.mxu0
      %v1539 = vpop.f32.mrf.mxu0
      %v1540 = vadd.f32 0.0, %v1539
      %v1541 = vpop.f32.mrf.mxu0
      %1542 = vmatprep.mubr.bf16.mxu0 0
      %1543 = vmatmul.mubr.bf16.gmra.mxu0 %v515
      %v1544 = vpop.f32.mrf.mxu0
      %v1545 = vadd.f32 0.0, %v1544
      %v1546 = vpop.f32.mrf.mxu0
      %v1547 = vpop.f32.mrf.mxu0
      %v1548 = vadd.f32 0.0, %v1547
      %v1549 = vpop.f32.mrf.mxu0
      %1550 = vdwg.mxu0
      %v1551 = vld [vmem:[%s1042 + $0x1] sm:$0xff]
      %v1552 = vld [vmem:[%s1042 + $0x9] sm:$0x7f]
      %v1553 = vld [vmem:[%s1042 + $0x11] sm:$0xff]
      %v1554 = vld [vmem:[%s1042 + $0x19] sm:$0x7f]
      %v1555 = vld [vmem:[%s1042 + $0x21] sm:$0xff]
      %v1556 = vld [vmem:[%s1042 + $0x29] sm:$0x7f]
      %v1557 = vld [vmem:[%s1042 + $0x31] sm:$0xff]
      %v1558 = vld [vmem:[%s1042 + $0x39] sm:$0x7f]
      %v1559 = vld [vmem:[%s1042 + $0x41] sm:$0xff]
      %v1560 = vld [vmem:[%s1042 + $0x49] sm:$0x7f]
      %v1561 = vld [vmem:[%s1042 + $0x51] sm:$0xff]
      %v1562 = vld [vmem:[%s1042 + $0x59] sm:$0x7f]
      %v1563 = vld [vmem:[%s1042 + $0x61] sm:$0xff]
      %v1564 = vld [vmem:[%s1042 + $0x69] sm:$0x7f]
      %v1565 = vld [vmem:[%s1042 + $0x71] sm:$0xff]
      %v1566 = vld [vmem:[%s1042 + $0x79] sm:$0x7f]
      %v1567 = vld [vmem:[%s1042 + $0x81] sm:$0xff]
      %v1568 = vld [vmem:[%s1042 + $0x89] sm:$0x7f]
      %v1569 = vld [vmem:[%s1042 + $0x91] sm:$0xff]
      %v1570 = vld [vmem:[%s1042 + $0x99] sm:$0x7f]
      %v1571 = vld [vmem:[%s1042 + $0xa1] sm:$0xff]
      %v1572 = vld [vmem:[%s1042 + $0xa9] sm:$0x7f]
      %v1573 = vld [vmem:[%s1042 + $0xb1] sm:$0xff]
      %v1574 = vld [vmem:[%s1042 + $0xb9] sm:$0x7f]
      %v1575 = vld [vmem:[%s1042 + $0xc1] sm:$0xff]
      %v1576 = vld [vmem:[%s1042 + $0xc9] sm:$0x7f]
      %v1577 = vld [vmem:[%s1042 + $0xd1] sm:$0xff]
      %v1578 = vld [vmem:[%s1042 + $0xd9] sm:$0x7f]
      %v1579 = vld [vmem:[%s1042 + $0xe1] sm:$0xff]
      %v1580 = vld [vmem:[%s1042 + $0xe9] sm:$0x7f]
      %v1581 = vadd.f32 %v1551, %v1433
      %v1582 = vadd.f32 %v1552, %v1436
      %v1583 = vadd.f32 %v1553, %v1441
      %v1584 = vadd.f32 %v1554, %v1444
      %v1585 = vadd.f32 %v1555, %v1449
      %v1586 = vadd.f32 %v1556, %v1452
      %v1587 = vadd.f32 %v1557, %v1457
      %v1588 = vadd.f32 %v1558, %v1460
      %v1589 = vadd.f32 %v1559, %v1465
      %v1590 = vadd.f32 %v1560, %v1468
      %v1591 = vadd.f32 %v1561, %v1473
      %v1592 = vadd.f32 %v1562, %v1476
      %v1593 = vadd.f32 %v1563, %v1481
      %v1594 = vadd.f32 %v1564, %v1484
      %v1595 = vadd.f32 %v1565, %v1489
      %v1596 = vadd.f32 %v1566, %v1492
      %v1597 = vadd.f32 %v1567, %v1497
      %v1598 = vadd.f32 %v1568, %v1500
      %v1599 = vadd.f32 %v1569, %v1505
      %v1600 = vadd.f32 %v1570, %v1508
      %v1601 = vadd.f32 %v1571, %v1513
      %v1602 = vadd.f32 %v1572, %v1516
      %v1603 = vadd.f32 %v1573, %v1521
      %v1604 = vadd.f32 %v1574, %v1524
      %v1605 = vadd.f32 %v1575, %v1529
      %v1606 = vadd.f32 %v1576, %v1532
      %v1607 = vadd.f32 %v1577, %v1537
      %v1608 = vadd.f32 %v1578, %v1540
      %v1609 = vadd.f32 %v1579, %v1545
      %v1610 = vadd.f32 %v1580, %v1548
      %1611 = vst.msk [vmem:[%s1042 + $0x1] sm:$0xff] %vm226, %v1581
      %1612 = vst.msk [vmem:[%s1042 + $0x9] sm:$0x7f] %vm848, %v1582
      %1613 = vst.msk [vmem:[%s1042 + $0x11] sm:$0xff] %vm226, %v1583
      %1614 = vst.msk [vmem:[%s1042 + $0x19] sm:$0x7f] %vm848, %v1584
      %1615 = vst.msk [vmem:[%s1042 + $0x21] sm:$0xff] %vm226, %v1585
      %1616 = vst.msk [vmem:[%s1042 + $0x29] sm:$0x7f] %vm848, %v1586
      %1617 = vst.msk [vmem:[%s1042 + $0x31] sm:$0xff] %vm226, %v1587
      %1618 = vst.msk [vmem:[%s1042 + $0x39] sm:$0x7f] %vm848, %v1588
      %1619 = vst.msk [vmem:[%s1042 + $0x41] sm:$0xff] %vm226, %v1589
      %1620 = vst.msk [vmem:[%s1042 + $0x49] sm:$0x7f] %vm848, %v1590
      %1621 = vst.msk [vmem:[%s1042 + $0x51] sm:$0xff] %vm226, %v1591
      %1622 = vst.msk [vmem:[%s1042 + $0x59] sm:$0x7f] %vm848, %v1592
      %1623 = vst.msk [vmem:[%s1042 + $0x61] sm:$0xff] %vm226, %v1593
      %1624 = vst.msk [vmem:[%s1042 + $0x69] sm:$0x7f] %vm848, %v1594
      %1625 = vst.msk [vmem:[%s1042 + $0x71] sm:$0xff] %vm226, %v1595
      %1626 = vst.msk [vmem:[%s1042 + $0x79] sm:$0x7f] %vm848, %v1596
      %1627 = vst.msk [vmem:[%s1042 + $0x81] sm:$0xff] %vm226, %v1597
      %1628 = vst.msk [vmem:[%s1042 + $0x89] sm:$0x7f] %vm848, %v1598
      %1629 = vst.msk [vmem:[%s1042 + $0x91] sm:$0xff] %vm226, %v1599
      %1630 = vst.msk [vmem:[%s1042 + $0x99] sm:$0x7f] %vm848, %v1600
      %1631 = vst.msk [vmem:[%s1042 + $0xa1] sm:$0xff] %vm226, %v1601
      %1632 = vst.msk [vmem:[%s1042 + $0xa9] sm:$0x7f] %vm848, %v1602
      %1633 = vst.msk [vmem:[%s1042 + $0xb1] sm:$0xff] %vm226, %v1603
      %1634 = vst.msk [vmem:[%s1042 + $0xb9] sm:$0x7f] %vm848, %v1604
      %1635 = vst.msk [vmem:[%s1042 + $0xc1] sm:$0xff] %vm226, %v1605
      %1636 = vst.msk [vmem:[%s1042 + $0xc9] sm:$0x7f] %vm848, %v1606
      %1637 = vst.msk [vmem:[%s1042 + $0xd1] sm:$0xff] %vm226, %v1607
      %1638 = vst.msk [vmem:[%s1042 + $0xd9] sm:$0x7f] %vm848, %v1608
      %1639 = vst.msk [vmem:[%s1042 + $0xe1] sm:$0xff] %vm226, %v1609
      %1640 = vst.msk [vmem:[%s1042 + $0xe9] sm:$0x7f] %vm848, %v1610
      %s1641 = scalar_lea.vmem %s1, 16
      %v1642 = vld [vmem:[%s1641] sm:$0xf]
      %v1644 = vsel %vm517, %v1642, 0
      %1646 = vmatprep.subr.bf16.mxu0 0
      %1647 = vmatpush1.bf16.msra.mxu0 0
      %1648 = vmatprep.subr.bf16.mxu0 0
      %1649 = vmatpush1.bf16.msra.mxu0 0
      %1650 = vmatprep.subr.bf16.mxu0 0
      %1651 = vmatpush1.bf16.msra.mxu0 0
      %1652 = vmatprep.subr.bf16.mxu0 0
      %1653 = vmatpush1.bf16.msra.mxu0 0
      %1654 = vmatprep.subr.bf16.mxu0 0
      %1655 = vmatpush1.bf16.msra.mxu0 0
      %1656 = vmatprep.subr.bf16.mxu0 0
      %1657 = vmatpush1.bf16.msra.mxu0 0
      %1658 = vmatprep.subr.bf16.mxu0 0
      %1659 = vmatpush1.bf16.msra.mxu0 0
      %1660 = vmatprep.subr.bf16.mxu0 0
      %1661 = vmatpush1.bf16.msra.mxu0 %v1644
      %1662 = vmatprep.subr.bf16.mxu0 0
      %1663 = vmatpush2.bf16.msra.mxu0 0
      %1664 = vmatprep.subr.bf16.mxu0 0
      %1665 = vmatpush2.bf16.msra.mxu0 0
      %1666 = vmatprep.subr.bf16.mxu0 0
      %1667 = vmatpush2.bf16.msra.mxu0 0
      %1668 = vmatprep.subr.bf16.mxu0 0
      %1669 = vmatpush2.bf16.msra.mxu0 0
      %1670 = vmatprep.subr.bf16.mxu0 0
      %1671 = vmatpush2.bf16.msra.mxu0 0
      %1672 = vmatprep.subr.bf16.mxu0 0
      %1673 = vmatpush2.bf16.msra.mxu0 0
      %1674 = vmatprep.subr.bf16.mxu0 0
      %1675 = vmatpush2.bf16.msra.mxu0 0
      %1676 = vmatprep.subr.bf16.mxu0 0
      %1677 = vmatpush2.bf16.msra.mxu0 0
      %1678 = vmatprep.mubr.bf16.mxu0 0
      %1679 = vmatmul.mubr.bf16.gmra.mxu0 %v470
      %v1680 = vpop.f32.mrf.mxu0
      %v1681 = vadd.f32 0.0, %v1680
      %v1682 = vpop.f32.mrf.mxu0
      %v1683 = vpop.f32.mrf.mxu0
      %v1684 = vadd.f32 0.0, %v1683
      %v1685 = vpop.f32.mrf.mxu0
      %1686 = vmatprep.mubr.bf16.mxu0 0
      %1687 = vmatmul.mubr.bf16.gmra.mxu0 %v473
      %v1688 = vpop.f32.mrf.mxu0
      %v1689 = vadd.f32 0.0, %v1688
      %v1690 = vpop.f32.mrf.mxu0
      %v1691 = vpop.f32.mrf.mxu0
      %v1692 = vadd.f32 0.0, %v1691
      %v1693 = vpop.f32.mrf.mxu0
      %1694 = vmatprep.mubr.bf16.mxu0 0
      %1695 = vmatmul.mubr.bf16.gmra.mxu0 %v476
      %v1696 = vpop.f32.mrf.mxu0
      %v1697 = vadd.f32 0.0, %v1696
      %v1698 = vpop.f32.mrf.mxu0
      %v1699 = vpop.f32.mrf.mxu0
      %v1700 = vadd.f32 0.0, %v1699
      %v1701 = vpop.f32.mrf.mxu0
      %1702 = vmatprep.mubr.bf16.mxu0 0
      %1703 = vmatmul.mubr.bf16.gmra.mxu0 %v479
      %v1704 = vpop.f32.mrf.mxu0
      %v1705 = vadd.f32 0.0, %v1704
      %v1706 = vpop.f32.mrf.mxu0
      %v1707 = vpop.f32.mrf.mxu0
      %v1708 = vadd.f32 0.0, %v1707
      %v1709 = vpop.f32.mrf.mxu0
      %1710 = vmatprep.mubr.bf16.mxu0 0
      %1711 = vmatmul.mubr.bf16.gmra.mxu0 %v482
      %v1712 = vpop.f32.mrf.mxu0
      %v1713 = vadd.f32 0.0, %v1712
      %v1714 = vpop.f32.mrf.mxu0
      %v1715 = vpop.f32.mrf.mxu0
      %v1716 = vadd.f32 0.0, %v1715
      %v1717 = vpop.f32.mrf.mxu0
      %1718 = vmatprep.mubr.bf16.mxu0 0
      %1719 = vmatmul.mubr.bf16.gmra.mxu0 %v485
      %v1720 = vpop.f32.mrf.mxu0
      %v1721 = vadd.f32 0.0, %v1720
      %v1722 = vpop.f32.mrf.mxu0
      %v1723 = vpop.f32.mrf.mxu0
      %v1724 = vadd.f32 0.0, %v1723
      %v1725 = vpop.f32.mrf.mxu0
      %1726 = vmatprep.mubr.bf16.mxu0 0
      %1727 = vmatmul.mubr.bf16.gmra.mxu0 %v488
      %v1728 = vpop.f32.mrf.mxu0
      %v1729 = vadd.f32 0.0, %v1728
      %v1730 = vpop.f32.mrf.mxu0
      %v1731 = vpop.f32.mrf.mxu0
      %v1732 = vadd.f32 0.0, %v1731
      %v1733 = vpop.f32.mrf.mxu0
      %1734 = vmatprep.mubr.bf16.mxu0 0
      %1735 = vmatmul.mubr.bf16.gmra.mxu0 %v491
      %v1736 = vpop.f32.mrf.mxu0
      %v1737 = vadd.f32 0.0, %v1736
      %v1738 = vpop.f32.mrf.mxu0
      %v1739 = vpop.f32.mrf.mxu0
      %v1740 = vadd.f32 0.0, %v1739
      %v1741 = vpop.f32.mrf.mxu0
      %1742 = vmatprep.mubr.bf16.mxu0 0
      %1743 = vmatmul.mubr.bf16.gmra.mxu0 %v494
      %v1744 = vpop.f32.mrf.mxu0
      %v1745 = vadd.f32 0.0, %v1744
      %v1746 = vpop.f32.mrf.mxu0
      %v1747 = vpop.f32.mrf.mxu0
      %v1748 = vadd.f32 0.0, %v1747
      %v1749 = vpop.f32.mrf.mxu0
      %1750 = vmatprep.mubr.bf16.mxu0 0
      %1751 = vmatmul.mubr.bf16.gmra.mxu0 %v497
      %v1752 = vpop.f32.mrf.mxu0
      %v1753 = vadd.f32 0.0, %v1752
      %v1754 = vpop.f32.mrf.mxu0
      %v1755 = vpop.f32.mrf.mxu0
      %v1756 = vadd.f32 0.0, %v1755
      %v1757 = vpop.f32.mrf.mxu0
      %1758 = vmatprep.mubr.bf16.mxu0 0
      %1759 = vmatmul.mubr.bf16.gmra.mxu0 %v500
      %v1760 = vpop.f32.mrf.mxu0
      %v1761 = vadd.f32 0.0, %v1760
      %v1762 = vpop.f32.mrf.mxu0
      %v1763 = vpop.f32.mrf.mxu0
      %v1764 = vadd.f32 0.0, %v1763
      %v1765 = vpop.f32.mrf.mxu0
      %1766 = vmatprep.mubr.bf16.mxu0 0
      %1767 = vmatmul.mubr.bf16.gmra.mxu0 %v503
      %v1768 = vpop.f32.mrf.mxu0
      %v1769 = vadd.f32 0.0, %v1768
      %v1770 = vpop.f32.mrf.mxu0
      %v1771 = vpop.f32.mrf.mxu0
      %v1772 = vadd.f32 0.0, %v1771
      %v1773 = vpop.f32.mrf.mxu0
      %1774 = vmatprep.mubr.bf16.mxu0 0
      %1775 = vmatmul.mubr.bf16.gmra.mxu0 %v506
      %v1776 = vpop.f32.mrf.mxu0
      %v1777 = vadd.f32 0.0, %v1776
      %v1778 = vpop.f32.mrf.mxu0
      %v1779 = vpop.f32.mrf.mxu0
      %v1780 = vadd.f32 0.0, %v1779
      %v1781 = vpop.f32.mrf.mxu0
      %1782 = vmatprep.mubr.bf16.mxu0 0
      %1783 = vmatmul.mubr.bf16.gmra.mxu0 %v509
      %v1784 = vpop.f32.mrf.mxu0
      %v1785 = vadd.f32 0.0, %v1784
      %v1786 = vpop.f32.mrf.mxu0
      %v1787 = vpop.f32.mrf.mxu0
      %v1788 = vadd.f32 0.0, %v1787
      %v1789 = vpop.f32.mrf.mxu0
      %1790 = vmatprep.mubr.bf16.mxu0 0
      %1791 = vmatmul.mubr.bf16.gmra.mxu0 %v512
      %v1792 = vpop.f32.mrf.mxu0
      %v1793 = vadd.f32 0.0, %v1792
      %v1794 = vpop.f32.mrf.mxu0
      %v1795 = vpop.f32.mrf.mxu0
      %v1796 = vadd.f32 0.0, %v1795
      %v1797 = vpop.f32.mrf.mxu0
      %1798 = vmatprep.mubr.bf16.mxu0 0
      %1799 = vmatmul.mubr.bf16.gmra.mxu0 %v515
      %v1800 = vpop.f32.mrf.mxu0
      %v1801 = vadd.f32 0.0, %v1800
      %v1802 = vpop.f32.mrf.mxu0
      %v1803 = vpop.f32.mrf.mxu0
      %v1804 = vadd.f32 0.0, %v1803
      %v1805 = vpop.f32.mrf.mxu0
      %1806 = vdwg.mxu0
      %s1807 = scalar_lea.vmem [#allocation2], 256
      %v1808 = vld [vmem:[%s1807] sm:$0xff]
      %v1809 = vld [vmem:[%s1807 + $0x8] sm:$0x7f]
      %v1810 = vld [vmem:[%s1807 + $0x10] sm:$0xff]
      %v1811 = vld [vmem:[%s1807 + $0x18] sm:$0x7f]
      %v1812 = vld [vmem:[%s1807 + $0x20] sm:$0xff]
      %v1813 = vld [vmem:[%s1807 + $0x28] sm:$0x7f]
      %v1814 = vld [vmem:[%s1807 + $0x30] sm:$0xff]
      %v1815 = vld [vmem:[%s1807 + $0x38] sm:$0x7f]
      %v1816 = vld [vmem:[%s1807 + $0x40] sm:$0xff]
      %v1817 = vld [vmem:[%s1807 + $0x48] sm:$0x7f]
      %v1818 = vld [vmem:[%s1807 + $0x50] sm:$0xff]
      %v1819 = vld [vmem:[%s1807 + $0x58] sm:$0x7f]
      %v1820 = vld [vmem:[%s1807 + $0x60] sm:$0xff]
      %v1821 = vld [vmem:[%s1807 + $0x68] sm:$0x7f]
      %v1822 = vld [vmem:[%s1807 + $0x70] sm:$0xff]
      %v1823 = vld [vmem:[%s1807 + $0x78] sm:$0x7f]
      %v1824 = vld [vmem:[%s1807 + $0x80] sm:$0xff]
      %v1825 = vld [vmem:[%s1807 + $0x88] sm:$0x7f]
      %v1826 = vld [vmem:[%s1807 + $0x90] sm:$0xff]
      %v1827 = vld [vmem:[%s1807 + $0x98] sm:$0x7f]
      %v1828 = vld [vmem:[%s1807 + $0xa0] sm:$0xff]
      %v1829 = vld [vmem:[%s1807 + $0xa8] sm:$0x7f]
      %v1830 = vld [vmem:[%s1807 + $0xb0] sm:$0xff]
      %v1831 = vld [vmem:[%s1807 + $0xb8] sm:$0x7f]
      %v1832 = vld [vmem:[%s1807 + $0xc0] sm:$0xff]
      %v1833 = vld [vmem:[%s1807 + $0xc8] sm:$0x7f]
      %v1834 = vld [vmem:[%s1807 + $0xd0] sm:$0xff]
      %v1835 = vld [vmem:[%s1807 + $0xd8] sm:$0x7f]
      %v1836 = vld [vmem:[%s1807 + $0xe0] sm:$0xff]
      %v1837 = vld [vmem:[%s1807 + $0xe8] sm:$0x7f]
      %v1838 = vld [vmem:[%s1807 + $0xf0] sm:$0xff]
      %v1839 = vld [vmem:[%s1807 + $0xf8] sm:$0x7f]
      %v1872 = vrot.slane %v1681, 1
      %v1873 = vrot.slane %v1684, 1
      %v1874 = vsel %vm741, %v1872, %v1873
      %v1875 = vrot.slane %v1689, 1
      %v1876 = vrot.slane %v1692, 1
      %v1877 = vsel %vm741, %v1875, %v1876
      %v1878 = vrot.slane %v1697, 1
      %v1879 = vrot.slane %v1700, 1
      %v1880 = vsel %vm741, %v1878, %v1879
      %v1881 = vrot.slane %v1705, 1
      %v1882 = vrot.slane %v1708, 1
      %v1883 = vsel %vm741, %v1881, %v1882
      %v1884 = vrot.slane %v1713, 1
      %v1885 = vrot.slane %v1716, 1
      %v1886 = vsel %vm741, %v1884, %v1885
      %v1887 = vrot.slane %v1721, 1
      %v1888 = vrot.slane %v1724, 1
      %v1889 = vsel %vm741, %v1887, %v1888
      %v1890 = vrot.slane %v1729, 1
      %v1891 = vrot.slane %v1732, 1
      %v1892 = vsel %vm741, %v1890, %v1891
      %v1893 = vrot.slane %v1737, 1
      %v1894 = vrot.slane %v1740, 1
      %v1895 = vsel %vm741, %v1893, %v1894
      %v1896 = vrot.slane %v1745, 1
      %v1897 = vrot.slane %v1748, 1
      %v1898 = vsel %vm741, %v1896, %v1897
      %v1899 = vrot.slane %v1753, 1
      %v1900 = vrot.slane %v1756, 1
      %v1901 = vsel %vm741, %v1899, %v1900
      %v1902 = vrot.slane %v1761, 1
      %v1903 = vrot.slane %v1764, 1
      %v1904 = vsel %vm741, %v1902, %v1903
      %v1905 = vrot.slane %v1769, 1
      %v1906 = vrot.slane %v1772, 1
      %v1907 = vsel %vm741, %v1905, %v1906
      %v1908 = vrot.slane %v1777, 1
      %v1909 = vrot.slane %v1780, 1
      %v1910 = vsel %vm741, %v1908, %v1909
      %v1911 = vrot.slane %v1785, 1
      %v1912 = vrot.slane %v1788, 1
      %v1913 = vsel %vm741, %v1911, %v1912
      %v1914 = vrot.slane %v1793, 1
      %v1915 = vrot.slane %v1796, 1
      %v1916 = vsel %vm741, %v1914, %v1915
      %v1917 = vrot.slane %v1801, 1
      %v1918 = vrot.slane %v1804, 1
      %v1919 = vsel %vm741, %v1917, %v1918
      %v1952 = vadd.f32 %v1808, %v1874
      %v1953 = vadd.f32 %v1809, %v1873
      %v1954 = vadd.f32 %v1810, %v1877
      %v1955 = vadd.f32 %v1811, %v1876
      %v1956 = vadd.f32 %v1812, %v1880
      %v1957 = vadd.f32 %v1813, %v1879
      %v1958 = vadd.f32 %v1814, %v1883
      %v1959 = vadd.f32 %v1815, %v1882
      %v1960 = vadd.f32 %v1816, %v1886
      %v1961 = vadd.f32 %v1817, %v1885
      %v1962 = vadd.f32 %v1818, %v1889
      %v1963 = vadd.f32 %v1819, %v1888
      %v1964 = vadd.f32 %v1820, %v1892
      %v1965 = vadd.f32 %v1821, %v1891
      %v1966 = vadd.f32 %v1822, %v1895
      %v1967 = vadd.f32 %v1823, %v1894
      %v1968 = vadd.f32 %v1824, %v1898
      %v1969 = vadd.f32 %v1825, %v1897
      %v1970 = vadd.f32 %v1826, %v1901
      %v1971 = vadd.f32 %v1827, %v1900
      %v1972 = vadd.f32 %v1828, %v1904
      %v1973 = vadd.f32 %v1829, %v1903
      %v1974 = vadd.f32 %v1830, %v1907
      %v1975 = vadd.f32 %v1831, %v1906
      %v1976 = vadd.f32 %v1832, %v1910
      %v1977 = vadd.f32 %v1833, %v1909
      %v1978 = vadd.f32 %v1834, %v1913
      %v1979 = vadd.f32 %v1835, %v1912
      %v1980 = vadd.f32 %v1836, %v1916
      %v1981 = vadd.f32 %v1837, %v1915
      %v1982 = vadd.f32 %v1838, %v1919
      %v1983 = vadd.f32 %v1839, %v1918
      %1984 = vst.msk [vmem:[%s1807] sm:$0xff] %vm226, %v1952
      %1985 = vst.msk [vmem:[%s1807 + $0x8] sm:$0x7f] %vm848, %v1953
      %1986 = vst.msk [vmem:[%s1807 + $0x10] sm:$0xff] %vm226, %v1954
      %1987 = vst.msk [vmem:[%s1807 + $0x18] sm:$0x7f] %vm848, %v1955
      %1988 = vst.msk [vmem:[%s1807 + $0x20] sm:$0xff] %vm226, %v1956
      %1989 = vst.msk [vmem:[%s1807 + $0x28] sm:$0x7f] %vm848, %v1957
      %1990 = vst.msk [vmem:[%s1807 + $0x30] sm:$0xff] %vm226, %v1958
      %1991 = vst.msk [vmem:[%s1807 + $0x38] sm:$0x7f] %vm848, %v1959
      %1992 = vst.msk [vmem:[%s1807 + $0x40] sm:$0xff] %vm226, %v1960
      %1993 = vst.msk [vmem:[%s1807 + $0x48] sm:$0x7f] %vm848, %v1961
      %1994 = vst.msk [vmem:[%s1807 + $0x50] sm:$0xff] %vm226, %v1962
      %1995 = vst.msk [vmem:[%s1807 + $0x58] sm:$0x7f] %vm848, %v1963
      %1996 = vst.msk [vmem:[%s1807 + $0x60] sm:$0xff] %vm226, %v1964
      %1997 = vst.msk [vmem:[%s1807 + $0x68] sm:$0x7f] %vm848, %v1965
      %1998 = vst.msk [vmem:[%s1807 + $0x70] sm:$0xff] %vm226, %v1966
      %1999 = vst.msk [vmem:[%s1807 + $0x78] sm:$0x7f] %vm848, %v1967
      %2000 = vst.msk [vmem:[%s1807 + $0x80] sm:$0xff] %vm226, %v1968
      %2001 = vst.msk [vmem:[%s1807 + $0x88] sm:$0x7f] %vm848, %v1969
      %2002 = vst.msk [vmem:[%s1807 + $0x90] sm:$0xff] %vm226, %v1970
      %2003 = vst.msk [vmem:[%s1807 + $0x98] sm:$0x7f] %vm848, %v1971
      %2004 = vst.msk [vmem:[%s1807 + $0xa0] sm:$0xff] %vm226, %v1972
      %2005 = vst.msk [vmem:[%s1807 + $0xa8] sm:$0x7f] %vm848, %v1973
      %2006 = vst.msk [vmem:[%s1807 + $0xb0] sm:$0xff] %vm226, %v1974
      %2007 = vst.msk [vmem:[%s1807 + $0xb8] sm:$0x7f] %vm848, %v1975
      %2008 = vst.msk [vmem:[%s1807 + $0xc0] sm:$0xff] %vm226, %v1976
      %2009 = vst.msk [vmem:[%s1807 + $0xc8] sm:$0x7f] %vm848, %v1977
      %2010 = vst.msk [vmem:[%s1807 + $0xd0] sm:$0xff] %vm226, %v1978
      %2011 = vst.msk [vmem:[%s1807 + $0xd8] sm:$0x7f] %vm848, %v1979
      %2012 = vst.msk [vmem:[%s1807 + $0xe0] sm:$0xff] %vm226, %v1980
      %2013 = vst.msk [vmem:[%s1807 + $0xe8] sm:$0x7f] %vm848, %v1981
      %2014 = vst.msk [vmem:[%s1807 + $0xf0] sm:$0xff] %vm226, %v1982
      %2015 = vst.msk [vmem:[%s1807 + $0xf8] sm:$0x7f] %vm848, %v1983
      %s2016 = scalar_lea.vmem %s1, 20
      %v2017 = vld [vmem:[%s2016] sm:$0xf]
      %v2019 = vsel %vm517, %v2017, 0
      %2021 = vmatprep.subr.bf16.mxu0 0
      %2022 = vmatpush1.bf16.msra.mxu0 0
      %2023 = vmatprep.subr.bf16.mxu0 0
      %2024 = vmatpush1.bf16.msra.mxu0 0
      %2025 = vmatprep.subr.bf16.mxu0 0
      %2026 = vmatpush1.bf16.msra.mxu0 0
      %2027 = vmatprep.subr.bf16.mxu0 0
      %2028 = vmatpush1.bf16.msra.mxu0 0
      %2029 = vmatprep.subr.bf16.mxu0 0
      %2030 = vmatpush1.bf16.msra.mxu0 0
      %2031 = vmatprep.subr.bf16.mxu0 0
      %2032 = vmatpush1.bf16.msra.mxu0 0
      %2033 = vmatprep.subr.bf16.mxu0 0
      %2034 = vmatpush1.bf16.msra.mxu0 0
      %2035 = vmatprep.subr.bf16.mxu0 0
      %2036 = vmatpush1.bf16.msra.mxu0 %v2019
      %2037 = vmatprep.subr.bf16.mxu0 0
      %2038 = vmatpush2.bf16.msra.mxu0 0
      %2039 = vmatprep.subr.bf16.mxu0 0
      %2040 = vmatpush2.bf16.msra.mxu0 0
      %2041 = vmatprep.subr.bf16.mxu0 0
      %2042 = vmatpush2.bf16.msra.mxu0 0
      %2043 = vmatprep.subr.bf16.mxu0 0
      %2044 = vmatpush2.bf16.msra.mxu0 0
      %2045 = vmatprep.subr.bf16.mxu0 0
      %2046 = vmatpush2.bf16.msra.mxu0 0
      %2047 = vmatprep.subr.bf16.mxu0 0
      %2048 = vmatpush2.bf16.msra.mxu0 0
      %2049 = vmatprep.subr.bf16.mxu0 0
      %2050 = vmatpush2.bf16.msra.mxu0 0
      %2051 = vmatprep.subr.bf16.mxu0 0
      %2052 = vmatpush2.bf16.msra.mxu0 0
      %2053 = vmatprep.mubr.bf16.mxu0 0
      %2054 = vmatmul.mubr.bf16.gmra.mxu0 %v470
      %v2055 = vpop.f32.mrf.mxu0
      %v2056 = vadd.f32 0.0, %v2055
      %v2057 = vpop.f32.mrf.mxu0
      %v2058 = vpop.f32.mrf.mxu0
      %v2059 = vadd.f32 0.0, %v2058
      %v2060 = vpop.f32.mrf.mxu0
      %2061 = vmatprep.mubr.bf16.mxu0 0
      %2062 = vmatmul.mubr.bf16.gmra.mxu0 %v473
      %v2063 = vpop.f32.mrf.mxu0
      %v2064 = vadd.f32 0.0, %v2063
      %v2065 = vpop.f32.mrf.mxu0
      %v2066 = vpop.f32.mrf.mxu0
      %v2067 = vadd.f32 0.0, %v2066
      %v2068 = vpop.f32.mrf.mxu0
      %2069 = vmatprep.mubr.bf16.mxu0 0
      %2070 = vmatmul.mubr.bf16.gmra.mxu0 %v476
      %v2071 = vpop.f32.mrf.mxu0
      %v2072 = vadd.f32 0.0, %v2071
      %v2073 = vpop.f32.mrf.mxu0
      %v2074 = vpop.f32.mrf.mxu0
      %v2075 = vadd.f32 0.0, %v2074
      %v2076 = vpop.f32.mrf.mxu0
      %2077 = vmatprep.mubr.bf16.mxu0 0
      %2078 = vmatmul.mubr.bf16.gmra.mxu0 %v479
      %v2079 = vpop.f32.mrf.mxu0
      %v2080 = vadd.f32 0.0, %v2079
      %v2081 = vpop.f32.mrf.mxu0
      %v2082 = vpop.f32.mrf.mxu0
      %v2083 = vadd.f32 0.0, %v2082
      %v2084 = vpop.f32.mrf.mxu0
      %2085 = vmatprep.mubr.bf16.mxu0 0
      %2086 = vmatmul.mubr.bf16.gmra.mxu0 %v482
      %v2087 = vpop.f32.mrf.mxu0
      %v2088 = vadd.f32 0.0, %v2087
      %v2089 = vpop.f32.mrf.mxu0
      %v2090 = vpop.f32.mrf.mxu0
      %v2091 = vadd.f32 0.0, %v2090
      %v2092 = vpop.f32.mrf.mxu0
      %2093 = vmatprep.mubr.bf16.mxu0 0
      %2094 = vmatmul.mubr.bf16.gmra.mxu0 %v485
      %v2095 = vpop.f32.mrf.mxu0
      %v2096 = vadd.f32 0.0, %v2095
      %v2097 = vpop.f32.mrf.mxu0
      %v2098 = vpop.f32.mrf.mxu0
      %v2099 = vadd.f32 0.0, %v2098
      %v2100 = vpop.f32.mrf.mxu0
      %2101 = vmatprep.mubr.bf16.mxu0 0
      %2102 = vmatmul.mubr.bf16.gmra.mxu0 %v488
      %v2103 = vpop.f32.mrf.mxu0
      %v2104 = vadd.f32 0.0, %v2103
      %v2105 = vpop.f32.mrf.mxu0
      %v2106 = vpop.f32.mrf.mxu0
      %v2107 = vadd.f32 0.0, %v2106
      %v2108 = vpop.f32.mrf.mxu0
      %2109 = vmatprep.mubr.bf16.mxu0 0
      %2110 = vmatmul.mubr.bf16.gmra.mxu0 %v491
      %v2111 = vpop.f32.mrf.mxu0
      %v2112 = vadd.f32 0.0, %v2111
      %v2113 = vpop.f32.mrf.mxu0
      %v2114 = vpop.f32.mrf.mxu0
      %v2115 = vadd.f32 0.0, %v2114
      %v2116 = vpop.f32.mrf.mxu0
      %2117 = vmatprep.mubr.bf16.mxu0 0
      %2118 = vmatmul.mubr.bf16.gmra.mxu0 %v494
      %v2119 = vpop.f32.mrf.mxu0
      %v2120 = vadd.f32 0.0, %v2119
      %v2121 = vpop.f32.mrf.mxu0
      %v2122 = vpop.f32.mrf.mxu0
      %v2123 = vadd.f32 0.0, %v2122
      %v2124 = vpop.f32.mrf.mxu0
      %2125 = vmatprep.mubr.bf16.mxu0 0
      %2126 = vmatmul.mubr.bf16.gmra.mxu0 %v497
      %v2127 = vpop.f32.mrf.mxu0
      %v2128 = vadd.f32 0.0, %v2127
      %v2129 = vpop.f32.mrf.mxu0
      %v2130 = vpop.f32.mrf.mxu0
      %v2131 = vadd.f32 0.0, %v2130
      %v2132 = vpop.f32.mrf.mxu0
      %2133 = vmatprep.mubr.bf16.mxu0 0
      %2134 = vmatmul.mubr.bf16.gmra.mxu0 %v500
      %v2135 = vpop.f32.mrf.mxu0
      %v2136 = vadd.f32 0.0, %v2135
      %v2137 = vpop.f32.mrf.mxu0
      %v2138 = vpop.f32.mrf.mxu0
      %v2139 = vadd.f32 0.0, %v2138
      %v2140 = vpop.f32.mrf.mxu0
      %2141 = vmatprep.mubr.bf16.mxu0 0
      %2142 = vmatmul.mubr.bf16.gmra.mxu0 %v503
      %v2143 = vpop.f32.mrf.mxu0
      %v2144 = vadd.f32 0.0, %v2143
      %v2145 = vpop.f32.mrf.mxu0
      %v2146 = vpop.f32.mrf.mxu0
      %v2147 = vadd.f32 0.0, %v2146
      %v2148 = vpop.f32.mrf.mxu0
      %2149 = vmatprep.mubr.bf16.mxu0 0
      %2150 = vmatmul.mubr.bf16.gmra.mxu0 %v506
      %v2151 = vpop.f32.mrf.mxu0
      %v2152 = vadd.f32 0.0, %v2151
      %v2153 = vpop.f32.mrf.mxu0
      %v2154 = vpop.f32.mrf.mxu0
      %v2155 = vadd.f32 0.0, %v2154
      %v2156 = vpop.f32.mrf.mxu0
      %2157 = vmatprep.mubr.bf16.mxu0 0
      %2158 = vmatmul.mubr.bf16.gmra.mxu0 %v509
      %v2159 = vpop.f32.mrf.mxu0
      %v2160 = vadd.f32 0.0, %v2159
      %v2161 = vpop.f32.mrf.mxu0
      %v2162 = vpop.f32.mrf.mxu0
      %v2163 = vadd.f32 0.0, %v2162
      %v2164 = vpop.f32.mrf.mxu0
      %2165 = vmatprep.mubr.bf16.mxu0 0
      %2166 = vmatmul.mubr.bf16.gmra.mxu0 %v512
      %v2167 = vpop.f32.mrf.mxu0
      %v2168 = vadd.f32 0.0, %v2167
      %v2169 = vpop.f32.mrf.mxu0
      %v2170 = vpop.f32.mrf.mxu0
      %v2171 = vadd.f32 0.0, %v2170
      %v2172 = vpop.f32.mrf.mxu0
      %2173 = vmatprep.mubr.bf16.mxu0 0
      %2174 = vmatmul.mubr.bf16.gmra.mxu0 %v515
      %v2175 = vpop.f32.mrf.mxu0
      %v2176 = vadd.f32 0.0, %v2175
      %v2177 = vpop.f32.mrf.mxu0
      %v2178 = vpop.f32.mrf.mxu0
      %v2179 = vadd.f32 0.0, %v2178
      %v2180 = vpop.f32.mrf.mxu0
      %2181 = vdwg.mxu0
      %v2182 = vld [vmem:[#allocation2] sm:$0xff]
      %v2183 = vld [vmem:[#allocation2 + $0x8] sm:$0xff]
      %v2184 = vld [vmem:[#allocation2 + $0x10] sm:$0xff]
      %v2185 = vld [vmem:[#allocation2 + $0x18] sm:$0xff]
      %v2186 = vld [vmem:[#allocation2 + $0x20] sm:$0xff]
      %v2187 = vld [vmem:[#allocation2 + $0x28] sm:$0xff]
      %v2188 = vld [vmem:[#allocation2 + $0x30] sm:$0xff]
      %v2189 = vld [vmem:[#allocation2 + $0x38] sm:$0xff]
      %v2190 = vld [vmem:[#allocation2 + $0x40] sm:$0xff]
      %v2191 = vld [vmem:[#allocation2 + $0x48] sm:$0xff]
      %v2192 = vld [vmem:[#allocation2 + $0x50] sm:$0xff]
      %v2193 = vld [vmem:[#allocation2 + $0x58] sm:$0xff]
      %v2194 = vld [vmem:[#allocation2 + $0x60] sm:$0xff]
      %v2195 = vld [vmem:[#allocation2 + $0x68] sm:$0xff]
      %v2196 = vld [vmem:[#allocation2 + $0x70] sm:$0xff]
      %v2197 = vld [vmem:[#allocation2 + $0x78] sm:$0xff]
      %v2198 = vld [vmem:[#allocation2 + $0x80] sm:$0xff]
      %v2199 = vld [vmem:[#allocation2 + $0x88] sm:$0xff]
      %v2200 = vld [vmem:[#allocation2 + $0x90] sm:$0xff]
      %v2201 = vld [vmem:[#allocation2 + $0x98] sm:$0xff]
      %v2202 = vld [vmem:[#allocation2 + $0xa0] sm:$0xff]
      %v2203 = vld [vmem:[#allocation2 + $0xa8] sm:$0xff]
      %v2204 = vld [vmem:[#allocation2 + $0xb0] sm:$0xff]
      %v2205 = vld [vmem:[#allocation2 + $0xb8] sm:$0xff]
      %v2206 = vld [vmem:[#allocation2 + $0xc0] sm:$0xff]
      %v2207 = vld [vmem:[#allocation2 + $0xc8] sm:$0xff]
      %v2208 = vld [vmem:[#allocation2 + $0xd0] sm:$0xff]
      %v2209 = vld [vmem:[#allocation2 + $0xd8] sm:$0xff]
      %v2210 = vld [vmem:[#allocation2 + $0xe0] sm:$0xff]
      %v2211 = vld [vmem:[#allocation2 + $0xe8] sm:$0xff]
      %v2212 = vld [vmem:[#allocation2 + $0xf0] sm:$0xff]
      %v2213 = vld [vmem:[#allocation2 + $0xf8] sm:$0xff]
      %v2214 = vadd.f32 %v2182, %v2056
      %v2215 = vadd.f32 %v2183, %v2059
      %v2216 = vadd.f32 %v2184, %v2064
      %v2217 = vadd.f32 %v2185, %v2067
      %v2218 = vadd.f32 %v2186, %v2072
      %v2219 = vadd.f32 %v2187, %v2075
      %v2220 = vadd.f32 %v2188, %v2080
      %v2221 = vadd.f32 %v2189, %v2083
      %v2222 = vadd.f32 %v2190, %v2088
      %v2223 = vadd.f32 %v2191, %v2091
      %v2224 = vadd.f32 %v2192, %v2096
      %v2225 = vadd.f32 %v2193, %v2099
      %v2226 = vadd.f32 %v2194, %v2104
      %v2227 = vadd.f32 %v2195, %v2107
      %v2228 = vadd.f32 %v2196, %v2112
      %v2229 = vadd.f32 %v2197, %v2115
      %v2230 = vadd.f32 %v2198, %v2120
      %v2231 = vadd.f32 %v2199, %v2123
      %v2232 = vadd.f32 %v2200, %v2128
      %v2233 = vadd.f32 %v2201, %v2131
      %v2234 = vadd.f32 %v2202, %v2136
      %v2235 = vadd.f32 %v2203, %v2139
      %v2236 = vadd.f32 %v2204, %v2144
      %v2237 = vadd.f32 %v2205, %v2147
      %v2238 = vadd.f32 %v2206, %v2152
      %v2239 = vadd.f32 %v2207, %v2155
      %v2240 = vadd.f32 %v2208, %v2160
      %v2241 = vadd.f32 %v2209, %v2163
      %v2242 = vadd.f32 %v2210, %v2168
      %v2243 = vadd.f32 %v2211, %v2171
      %v2244 = vadd.f32 %v2212, %v2176
      %v2245 = vadd.f32 %v2213, %v2179
      %2246 = vst.msk [vmem:[#allocation2] sm:$0xff] %vm226, %v2214
      %2247 = vst.msk [vmem:[#allocation2 + $0x8] sm:$0xff] %vm226, %v2215
      %2248 = vst.msk [vmem:[#allocation2 + $0x10] sm:$0xff] %vm226, %v2216
      %2249 = vst.msk [vmem:[#allocation2 + $0x18] sm:$0xff] %vm226, %v2217
      %2250 = vst.msk [vmem:[#allocation2 + $0x20] sm:$0xff] %vm226, %v2218
      %2251 = vst.msk [vmem:[#allocation2 + $0x28] sm:$0xff] %vm226, %v2219
      %2252 = vst.msk [vmem:[#allocation2 + $0x30] sm:$0xff] %vm226, %v2220
      %2253 = vst.msk [vmem:[#allocation2 + $0x38] sm:$0xff] %vm226, %v2221
      %2254 = vst.msk [vmem:[#allocation2 + $0x40] sm:$0xff] %vm226, %v2222
      %2255 = vst.msk [vmem:[#allocation2 + $0x48] sm:$0xff] %vm226, %v2223
      %2256 = vst.msk [vmem:[#allocation2 + $0x50] sm:$0xff] %vm226, %v2224
      %2257 = vst.msk [vmem:[#allocation2 + $0x58] sm:$0xff] %vm226, %v2225
      %2258 = vst.msk [vmem:[#allocation2 + $0x60] sm:$0xff] %vm226, %v2226
      %2259 = vst.msk [vmem:[#allocation2 + $0x68] sm:$0xff] %vm226, %v2227
      %2260 = vst.msk [vmem:[#allocation2 + $0x70] sm:$0xff] %vm226, %v2228
      %2261 = vst.msk [vmem:[#allocation2 + $0x78] sm:$0xff] %vm226, %v2229
      %2262 = vst.msk [vmem:[#allocation2 + $0x80] sm:$0xff] %vm226, %v2230
      %2263 = vst.msk [vmem:[#allocation2 + $0x88] sm:$0xff] %vm226, %v2231
      %2264 = vst.msk [vmem:[#allocation2 + $0x90] sm:$0xff] %vm226, %v2232
      %2265 = vst.msk [vmem:[#allocation2 + $0x98] sm:$0xff] %vm226, %v2233
      %2266 = vst.msk [vmem:[#allocation2 + $0xa0] sm:$0xff] %vm226, %v2234
      %2267 = vst.msk [vmem:[#allocation2 + $0xa8] sm:$0xff] %vm226, %v2235
      %2268 = vst.msk [vmem:[#allocation2 + $0xb0] sm:$0xff] %vm226, %v2236
      %2269 = vst.msk [vmem:[#allocation2 + $0xb8] sm:$0xff] %vm226, %v2237
      %2270 = vst.msk [vmem:[#allocation2 + $0xc0] sm:$0xff] %vm226, %v2238
      %2271 = vst.msk [vmem:[#allocation2 + $0xc8] sm:$0xff] %vm226, %v2239
      %2272 = vst.msk [vmem:[#allocation2 + $0xd0] sm:$0xff] %vm226, %v2240
      %2273 = vst.msk [vmem:[#allocation2 + $0xd8] sm:$0xff] %vm226, %v2241
      %2274 = vst.msk [vmem:[#allocation2 + $0xe0] sm:$0xff] %vm226, %v2242
      %2275 = vst.msk [vmem:[#allocation2 + $0xe8] sm:$0xff] %vm226, %v2243
      %2276 = vst.msk [vmem:[#allocation2 + $0xf0] sm:$0xff] %vm226, %v2244
      %2277 = vst.msk [vmem:[#allocation2 + $0xf8] sm:$0xff] %vm226, %v2245
      %s2278 = scalar_lea.vmem %s1, 24
      %v2279 = vld [vmem:[%s2278] sm:$0xf]
      %v2281 = vsel %vm517, %v2279, 0
      %2283 = vmatprep.subr.bf16.mxu0 0
      %2284 = vmatpush1.bf16.msra.mxu0 0
      %2285 = vmatprep.subr.bf16.mxu0 0
      %2286 = vmatpush1.bf16.msra.mxu0 0
      %2287 = vmatprep.subr.bf16.mxu0 0
      %2288 = vmatpush1.bf16.msra.mxu0 0
      %2289 = vmatprep.subr.bf16.mxu0 0
      %2290 = vmatpush1.bf16.msra.mxu0 0
      %2291 = vmatprep.subr.bf16.mxu0 0
      %2292 = vmatpush1.bf16.msra.mxu0 0
      %2293 = vmatprep.subr.bf16.mxu0 0
      %2294 = vmatpush1.bf16.msra.mxu0 0
      %2295 = vmatprep.subr.bf16.mxu0 0
      %2296 = vmatpush1.bf16.msra.mxu0 0
      %2297 = vmatprep.subr.bf16.mxu0 0
      %2298 = vmatpush1.bf16.msra.mxu0 %v2281
      %2299 = vmatprep.subr.bf16.mxu0 0
      %2300 = vmatpush2.bf16.msra.mxu0 0
      %2301 = vmatprep.subr.bf16.mxu0 0
      %2302 = vmatpush2.bf16.msra.mxu0 0
      %2303 = vmatprep.subr.bf16.mxu0 0
      %2304 = vmatpush2.bf16.msra.mxu0 0
      %2305 = vmatprep.subr.bf16.mxu0 0
      %2306 = vmatpush2.bf16.msra.mxu0 0
      %2307 = vmatprep.subr.bf16.mxu0 0
      %2308 = vmatpush2.bf16.msra.mxu0 0
      %2309 = vmatprep.subr.bf16.mxu0 0
      %2310 = vmatpush2.bf16.msra.mxu0 0
      %2311 = vmatprep.subr.bf16.mxu0 0
      %2312 = vmatpush2.bf16.msra.mxu0 0
      %2313 = vmatprep.subr.bf16.mxu0 0
      %2314 = vmatpush2.bf16.msra.mxu0 0
      %2315 = vmatprep.mubr.bf16.mxu0 0
      %2316 = vmatmul.mubr.bf16.gmra.mxu0 %v470
      %v2317 = vpop.f32.mrf.mxu0
      %v2318 = vadd.f32 0.0, %v2317
      %v2319 = vpop.f32.mrf.mxu0
      %v2320 = vpop.f32.mrf.mxu0
      %v2321 = vadd.f32 0.0, %v2320
      %v2322 = vpop.f32.mrf.mxu0
      %2323 = vmatprep.mubr.bf16.mxu0 0
      %2324 = vmatmul.mubr.bf16.gmra.mxu0 %v473
      %v2325 = vpop.f32.mrf.mxu0
      %v2326 = vadd.f32 0.0, %v2325
      %v2327 = vpop.f32.mrf.mxu0
      %v2328 = vpop.f32.mrf.mxu0
      %v2329 = vadd.f32 0.0, %v2328
      %v2330 = vpop.f32.mrf.mxu0
      %2331 = vmatprep.mubr.bf16.mxu0 0
      %2332 = vmatmul.mubr.bf16.gmra.mxu0 %v476
      %v2333 = vpop.f32.mrf.mxu0
      %v2334 = vadd.f32 0.0, %v2333
      %v2335 = vpop.f32.mrf.mxu0
      %v2336 = vpop.f32.mrf.mxu0
      %v2337 = vadd.f32 0.0, %v2336
      %v2338 = vpop.f32.mrf.mxu0
      %2339 = vmatprep.mubr.bf16.mxu0 0
      %2340 = vmatmul.mubr.bf16.gmra.mxu0 %v479
      %v2341 = vpop.f32.mrf.mxu0
      %v2342 = vadd.f32 0.0, %v2341
      %v2343 = vpop.f32.mrf.mxu0
      %v2344 = vpop.f32.mrf.mxu0
      %v2345 = vadd.f32 0.0, %v2344
      %v2346 = vpop.f32.mrf.mxu0
      %2347 = vmatprep.mubr.bf16.mxu0 0
      %2348 = vmatmul.mubr.bf16.gmra.mxu0 %v482
      %v2349 = vpop.f32.mrf.mxu0
      %v2350 = vadd.f32 0.0, %v2349
      %v2351 = vpop.f32.mrf.mxu0
      %v2352 = vpop.f32.mrf.mxu0
      %v2353 = vadd.f32 0.0, %v2352
      %v2354 = vpop.f32.mrf.mxu0
      %2355 = vmatprep.mubr.bf16.mxu0 0
      %2356 = vmatmul.mubr.bf16.gmra.mxu0 %v485
      %v2357 = vpop.f32.mrf.mxu0
      %v2358 = vadd.f32 0.0, %v2357
      %v2359 = vpop.f32.mrf.mxu0
      %v2360 = vpop.f32.mrf.mxu0
      %v2361 = vadd.f32 0.0, %v2360
      %v2362 = vpop.f32.mrf.mxu0
      %2363 = vmatprep.mubr.bf16.mxu0 0
      %2364 = vmatmul.mubr.bf16.gmra.mxu0 %v488
      %v2365 = vpop.f32.mrf.mxu0
      %v2366 = vadd.f32 0.0, %v2365
      %v2367 = vpop.f32.mrf.mxu0
      %v2368 = vpop.f32.mrf.mxu0
      %v2369 = vadd.f32 0.0, %v2368
      %v2370 = vpop.f32.mrf.mxu0
      %2371 = vmatprep.mubr.bf16.mxu0 0
      %2372 = vmatmul.mubr.bf16.gmra.mxu0 %v491
      %v2373 = vpop.f32.mrf.mxu0
      %v2374 = vadd.f32 0.0, %v2373
      %v2375 = vpop.f32.mrf.mxu0
      %v2376 = vpop.f32.mrf.mxu0
      %v2377 = vadd.f32 0.0, %v2376
      %v2378 = vpop.f32.mrf.mxu0
      %2379 = vmatprep.mubr.bf16.mxu0 0
      %2380 = vmatmul.mubr.bf16.gmra.mxu0 %v494
      %v2381 = vpop.f32.mrf.mxu0
      %v2382 = vadd.f32 0.0, %v2381
      %v2383 = vpop.f32.mrf.mxu0
      %v2384 = vpop.f32.mrf.mxu0
      %v2385 = vadd.f32 0.0, %v2384
      %v2386 = vpop.f32.mrf.mxu0
      %2387 = vmatprep.mubr.bf16.mxu0 0
      %2388 = vmatmul.mubr.bf16.gmra.mxu0 %v497
      %v2389 = vpop.f32.mrf.mxu0
      %v2390 = vadd.f32 0.0, %v2389
      %v2391 = vpop.f32.mrf.mxu0
      %v2392 = vpop.f32.mrf.mxu0
      %v2393 = vadd.f32 0.0, %v2392
      %v2394 = vpop.f32.mrf.mxu0
      %2395 = vmatprep.mubr.bf16.mxu0 0
      %2396 = vmatmul.mubr.bf16.gmra.mxu0 %v500
      %v2397 = vpop.f32.mrf.mxu0
      %v2398 = vadd.f32 0.0, %v2397
      %v2399 = vpop.f32.mrf.mxu0
      %v2400 = vpop.f32.mrf.mxu0
      %v2401 = vadd.f32 0.0, %v2400
      %v2402 = vpop.f32.mrf.mxu0
      %2403 = vmatprep.mubr.bf16.mxu0 0
      %2404 = vmatmul.mubr.bf16.gmra.mxu0 %v503
      %v2405 = vpop.f32.mrf.mxu0
      %v2406 = vadd.f32 0.0, %v2405
      %v2407 = vpop.f32.mrf.mxu0
      %v2408 = vpop.f32.mrf.mxu0
      %v2409 = vadd.f32 0.0, %v2408
      %v2410 = vpop.f32.mrf.mxu0
      %2411 = vmatprep.mubr.bf16.mxu0 0
      %2412 = vmatmul.mubr.bf16.gmra.mxu0 %v506
      %v2413 = vpop.f32.mrf.mxu0
      %v2414 = vadd.f32 0.0, %v2413
      %v2415 = vpop.f32.mrf.mxu0
      %v2416 = vpop.f32.mrf.mxu0
      %v2417 = vadd.f32 0.0, %v2416
      %v2418 = vpop.f32.mrf.mxu0
      %2419 = vmatprep.mubr.bf16.mxu0 0
      %2420 = vmatmul.mubr.bf16.gmra.mxu0 %v509
      %v2421 = vpop.f32.mrf.mxu0
      %v2422 = vadd.f32 0.0, %v2421
      %v2423 = vpop.f32.mrf.mxu0
      %v2424 = vpop.f32.mrf.mxu0
      %v2425 = vadd.f32 0.0, %v2424
      %v2426 = vpop.f32.mrf.mxu0
      %2427 = vmatprep.mubr.bf16.mxu0 0
      %2428 = vmatmul.mubr.bf16.gmra.mxu0 %v512
      %v2429 = vpop.f32.mrf.mxu0
      %v2430 = vadd.f32 0.0, %v2429
      %v2431 = vpop.f32.mrf.mxu0
      %v2432 = vpop.f32.mrf.mxu0
      %v2433 = vadd.f32 0.0, %v2432
      %v2434 = vpop.f32.mrf.mxu0
      %2435 = vmatprep.mubr.bf16.mxu0 0
      %2436 = vmatmul.mubr.bf16.gmra.mxu0 %v515
      %v2437 = vpop.f32.mrf.mxu0
      %v2438 = vadd.f32 0.0, %v2437
      %v2439 = vpop.f32.mrf.mxu0
      %v2440 = vpop.f32.mrf.mxu0
      %v2441 = vadd.f32 0.0, %v2440
      %v2442 = vpop.f32.mrf.mxu0
      %2443 = vdwg.mxu0
      %v2444 = vld [vmem:[%s1807] sm:$0xff]
      %v2445 = vld [vmem:[%s1807 + $0x8] sm:$0xff]
      %v2446 = vld [vmem:[%s1807 + $0x10] sm:$0xff]
      %v2447 = vld [vmem:[%s1807 + $0x18] sm:$0xff]
      %v2448 = vld [vmem:[%s1807 + $0x20] sm:$0xff]
      %v2449 = vld [vmem:[%s1807 + $0x28] sm:$0xff]
      %v2450 = vld [vmem:[%s1807 + $0x30] sm:$0xff]
      %v2451 = vld [vmem:[%s1807 + $0x38] sm:$0xff]
      %v2452 = vld [vmem:[%s1807 + $0x40] sm:$0xff]
      %v2453 = vld [vmem:[%s1807 + $0x48] sm:$0xff]
      %v2454 = vld [vmem:[%s1807 + $0x50] sm:$0xff]
      %v2455 = vld [vmem:[%s1807 + $0x58] sm:$0xff]
      %v2456 = vld [vmem:[%s1807 + $0x60] sm:$0xff]
      %v2457 = vld [vmem:[%s1807 + $0x68] sm:$0xff]
      %v2458 = vld [vmem:[%s1807 + $0x70] sm:$0xff]
      %v2459 = vld [vmem:[%s1807 + $0x78] sm:$0xff]
      %v2460 = vld [vmem:[%s1807 + $0x80] sm:$0xff]
      %v2461 = vld [vmem:[%s1807 + $0x88] sm:$0xff]
      %v2462 = vld [vmem:[%s1807 + $0x90] sm:$0xff]
      %v2463 = vld [vmem:[%s1807 + $0x98] sm:$0xff]
      %v2464 = vld [vmem:[%s1807 + $0xa0] sm:$0xff]
      %v2465 = vld [vmem:[%s1807 + $0xa8] sm:$0xff]
      %v2466 = vld [vmem:[%s1807 + $0xb0] sm:$0xff]
      %v2467 = vld [vmem:[%s1807 + $0xb8] sm:$0xff]
      %v2468 = vld [vmem:[%s1807 + $0xc0] sm:$0xff]
      %v2469 = vld [vmem:[%s1807 + $0xc8] sm:$0xff]
      %v2470 = vld [vmem:[%s1807 + $0xd0] sm:$0xff]
      %v2471 = vld [vmem:[%s1807 + $0xd8] sm:$0xff]
      %v2472 = vld [vmem:[%s1807 + $0xe0] sm:$0xff]
      %v2473 = vld [vmem:[%s1807 + $0xe8] sm:$0xff]
      %v2474 = vld [vmem:[%s1807 + $0xf0] sm:$0xff]
      %v2475 = vld [vmem:[%s1807 + $0xf8] sm:$0xff]
      %v2476 = vadd.f32 %v2444, %v2318
      %v2477 = vadd.f32 %v2445, %v2321
      %v2478 = vadd.f32 %v2446, %v2326
      %v2479 = vadd.f32 %v2447, %v2329
      %v2480 = vadd.f32 %v2448, %v2334
      %v2481 = vadd.f32 %v2449, %v2337
      %v2482 = vadd.f32 %v2450, %v2342
      %v2483 = vadd.f32 %v2451, %v2345
      %v2484 = vadd.f32 %v2452, %v2350
      %v2485 = vadd.f32 %v2453, %v2353
      %v2486 = vadd.f32 %v2454, %v2358
      %v2487 = vadd.f32 %v2455, %v2361
      %v2488 = vadd.f32 %v2456, %v2366
      %v2489 = vadd.f32 %v2457, %v2369
      %v2490 = vadd.f32 %v2458, %v2374
      %v2491 = vadd.f32 %v2459, %v2377
      %v2492 = vadd.f32 %v2460, %v2382
      %v2493 = vadd.f32 %v2461, %v2385
      %v2494 = vadd.f32 %v2462, %v2390
      %v2495 = vadd.f32 %v2463, %v2393
      %v2496 = vadd.f32 %v2464, %v2398
      %v2497 = vadd.f32 %v2465, %v2401
      %v2498 = vadd.f32 %v2466, %v2406
      %v2499 = vadd.f32 %v2467, %v2409
      %v2500 = vadd.f32 %v2468, %v2414
      %v2501 = vadd.f32 %v2469, %v2417
      %v2502 = vadd.f32 %v2470, %v2422
      %v2503 = vadd.f32 %v2471, %v2425
      %v2504 = vadd.f32 %v2472, %v2430
      %v2505 = vadd.f32 %v2473, %v2433
      %v2506 = vadd.f32 %v2474, %v2438
      %v2507 = vadd.f32 %v2475, %v2441
      %2508 = vst.msk [vmem:[%s1807] sm:$0xff] %vm226, %v2476
      %2509 = vst.msk [vmem:[%s1807 + $0x8] sm:$0xff] %vm226, %v2477
      %2510 = vst.msk [vmem:[%s1807 + $0x10] sm:$0xff] %vm226, %v2478
      %2511 = vst.msk [vmem:[%s1807 + $0x18] sm:$0xff] %vm226, %v2479
      %2512 = vst.msk [vmem:[%s1807 + $0x20] sm:$0xff] %vm226, %v2480
      %2513 = vst.msk [vmem:[%s1807 + $0x28] sm:$0xff] %vm226, %v2481
      %2514 = vst.msk [vmem:[%s1807 + $0x30] sm:$0xff] %vm226, %v2482
      %2515 = vst.msk [vmem:[%s1807 + $0x38] sm:$0xff] %vm226, %v2483
      %2516 = vst.msk [vmem:[%s1807 + $0x40] sm:$0xff] %vm226, %v2484
      %2517 = vst.msk [vmem:[%s1807 + $0x48] sm:$0xff] %vm226, %v2485
      %2518 = vst.msk [vmem:[%s1807 + $0x50] sm:$0xff] %vm226, %v2486
      %2519 = vst.msk [vmem:[%s1807 + $0x58] sm:$0xff] %vm226, %v2487
      %2520 = vst.msk [vmem:[%s1807 + $0x60] sm:$0xff] %vm226, %v2488
      %2521 = vst.msk [vmem:[%s1807 + $0x68] sm:$0xff] %vm226, %v2489
      %2522 = vst.msk [vmem:[%s1807 + $0x70] sm:$0xff] %vm226, %v2490
      %2523 = vst.msk [vmem:[%s1807 + $0x78] sm:$0xff] %vm226, %v2491
      %2524 = vst.msk [vmem:[%s1807 + $0x80] sm:$0xff] %vm226, %v2492
      %2525 = vst.msk [vmem:[%s1807 + $0x88] sm:$0xff] %vm226, %v2493
      %2526 = vst.msk [vmem:[%s1807 + $0x90] sm:$0xff] %vm226, %v2494
      %2527 = vst.msk [vmem:[%s1807 + $0x98] sm:$0xff] %vm226, %v2495
      %2528 = vst.msk [vmem:[%s1807 + $0xa0] sm:$0xff] %vm226, %v2496
      %2529 = vst.msk [vmem:[%s1807 + $0xa8] sm:$0xff] %vm226, %v2497
      %2530 = vst.msk [vmem:[%s1807 + $0xb0] sm:$0xff] %vm226, %v2498
      %2531 = vst.msk [vmem:[%s1807 + $0xb8] sm:$0xff] %vm226, %v2499
      %2532 = vst.msk [vmem:[%s1807 + $0xc0] sm:$0xff] %vm226, %v2500
      %2533 = vst.msk [vmem:[%s1807 + $0xc8] sm:$0xff] %vm226, %v2501
      %2534 = vst.msk [vmem:[%s1807 + $0xd0] sm:$0xff] %vm226, %v2502
      %2535 = vst.msk [vmem:[%s1807 + $0xd8] sm:$0xff] %vm226, %v2503
      %2536 = vst.msk [vmem:[%s1807 + $0xe0] sm:$0xff] %vm226, %v2504
      %2537 = vst.msk [vmem:[%s1807 + $0xe8] sm:$0xff] %vm226, %v2505
      %2538 = vst.msk [vmem:[%s1807 + $0xf0] sm:$0xff] %vm226, %v2506
      %2539 = vst.msk [vmem:[%s1807 + $0xf8] sm:$0xff] %vm226, %v2507
      %s2540 = scalar_lea.vmem %s1, 28
      %v2541 = vld [vmem:[%s2540] sm:$0xf]
      %v2543 = vsel %vm517, %v2541, 0
      %2545 = vmatprep.subr.bf16.mxu0 0
      %2546 = vmatpush1.bf16.msra.mxu0 0
      %2547 = vmatprep.subr.bf16.mxu0 0
      %2548 = vmatpush1.bf16.msra.mxu0 0
      %2549 = vmatprep.subr.bf16.mxu0 0
      %2550 = vmatpush1.bf16.msra.mxu0 0
      %2551 = vmatprep.subr.bf16.mxu0 0
      %2552 = vmatpush1.bf16.msra.mxu0 0
      %2553 = vmatprep.subr.bf16.mxu0 0
      %2554 = vmatpush1.bf16.msra.mxu0 0
      %2555 = vmatprep.subr.bf16.mxu0 0
      %2556 = vmatpush1.bf16.msra.mxu0 0
      %2557 = vmatprep.subr.bf16.mxu0 0
      %2558 = vmatpush1.bf16.msra.mxu0 0
      %2559 = vmatprep.subr.bf16.mxu0 0
      %2560 = vmatpush1.bf16.msra.mxu0 %v2543
      %2561 = vmatprep.subr.bf16.mxu0 0
      %2562 = vmatpush2.bf16.msra.mxu0 0
      %2563 = vmatprep.subr.bf16.mxu0 0
      %2564 = vmatpush2.bf16.msra.mxu0 0
      %2565 = vmatprep.subr.bf16.mxu0 0
      %2566 = vmatpush2.bf16.msra.mxu0 0
      %2567 = vmatprep.subr.bf16.mxu0 0
      %2568 = vmatpush2.bf16.msra.mxu0 0
      %2569 = vmatprep.subr.bf16.mxu0 0
      %2570 = vmatpush2.bf16.msra.mxu0 0
      %2571 = vmatprep.subr.bf16.mxu0 0
      %2572 = vmatpush2.bf16.msra.mxu0 0
      %2573 = vmatprep.subr.bf16.mxu0 0
      %2574 = vmatpush2.bf16.msra.mxu0 0
      %2575 = vmatprep.subr.bf16.mxu0 0
      %2576 = vmatpush2.bf16.msra.mxu0 0
      %2577 = vmatprep.mubr.bf16.mxu0 0
      %2578 = vmatmul.mubr.bf16.gmra.mxu0 %v470
      %v2579 = vpop.f32.mrf.mxu0
      %v2580 = vadd.f32 0.0, %v2579
      %v2581 = vpop.f32.mrf.mxu0
      %v2582 = vpop.f32.mrf.mxu0
      %v2583 = vadd.f32 0.0, %v2582
      %v2584 = vpop.f32.mrf.mxu0
      %2585 = vmatprep.mubr.bf16.mxu0 0
      %2586 = vmatmul.mubr.bf16.gmra.mxu0 %v473
      %v2587 = vpop.f32.mrf.mxu0
      %v2588 = vadd.f32 0.0, %v2587
      %v2589 = vpop.f32.mrf.mxu0
      %v2590 = vpop.f32.mrf.mxu0
      %v2591 = vadd.f32 0.0, %v2590
      %v2592 = vpop.f32.mrf.mxu0
      %2593 = vmatprep.mubr.bf16.mxu0 0
      %2594 = vmatmul.mubr.bf16.gmra.mxu0 %v476
      %v2595 = vpop.f32.mrf.mxu0
      %v2596 = vadd.f32 0.0, %v2595
      %v2597 = vpop.f32.mrf.mxu0
      %v2598 = vpop.f32.mrf.mxu0
      %v2599 = vadd.f32 0.0, %v2598
      %v2600 = vpop.f32.mrf.mxu0
      %2601 = vmatprep.mubr.bf16.mxu0 0
      %2602 = vmatmul.mubr.bf16.gmra.mxu0 %v479
      %v2603 = vpop.f32.mrf.mxu0
      %v2604 = vadd.f32 0.0, %v2603
      %v2605 = vpop.f32.mrf.mxu0
      %v2606 = vpop.f32.mrf.mxu0
      %v2607 = vadd.f32 0.0, %v2606
      %v2608 = vpop.f32.mrf.mxu0
      %2609 = vmatprep.mubr.bf16.mxu0 0
      %2610 = vmatmul.mubr.bf16.gmra.mxu0 %v482
      %v2611 = vpop.f32.mrf.mxu0
      %v2612 = vadd.f32 0.0, %v2611
      %v2613 = vpop.f32.mrf.mxu0
      %v2614 = vpop.f32.mrf.mxu0
      %v2615 = vadd.f32 0.0, %v2614
      %v2616 = vpop.f32.mrf.mxu0
      %2617 = vmatprep.mubr.bf16.mxu0 0
      %2618 = vmatmul.mubr.bf16.gmra.mxu0 %v485
      %v2619 = vpop.f32.mrf.mxu0
      %v2620 = vadd.f32 0.0, %v2619
      %v2621 = vpop.f32.mrf.mxu0
      %v2622 = vpop.f32.mrf.mxu0
      %v2623 = vadd.f32 0.0, %v2622
      %v2624 = vpop.f32.mrf.mxu0
      %2625 = vmatprep.mubr.bf16.mxu0 0
      %2626 = vmatmul.mubr.bf16.gmra.mxu0 %v488
      %v2627 = vpop.f32.mrf.mxu0
      %v2628 = vadd.f32 0.0, %v2627
      %v2629 = vpop.f32.mrf.mxu0
      %v2630 = vpop.f32.mrf.mxu0
      %v2631 = vadd.f32 0.0, %v2630
      %v2632 = vpop.f32.mrf.mxu0
      %2633 = vmatprep.mubr.bf16.mxu0 0
      %2634 = vmatmul.mubr.bf16.gmra.mxu0 %v491
      %v2635 = vpop.f32.mrf.mxu0
      %v2636 = vadd.f32 0.0, %v2635
      %v2637 = vpop.f32.mrf.mxu0
      %v2638 = vpop.f32.mrf.mxu0
      %v2639 = vadd.f32 0.0, %v2638
      %v2640 = vpop.f32.mrf.mxu0
      %2641 = vmatprep.mubr.bf16.mxu0 0
      %2642 = vmatmul.mubr.bf16.gmra.mxu0 %v494
      %v2643 = vpop.f32.mrf.mxu0
      %v2644 = vadd.f32 0.0, %v2643
      %v2645 = vpop.f32.mrf.mxu0
      %v2646 = vpop.f32.mrf.mxu0
      %v2647 = vadd.f32 0.0, %v2646
      %v2648 = vpop.f32.mrf.mxu0
      %2649 = vmatprep.mubr.bf16.mxu0 0
      %2650 = vmatmul.mubr.bf16.gmra.mxu0 %v497
      %v2651 = vpop.f32.mrf.mxu0
      %v2652 = vadd.f32 0.0, %v2651
      %v2653 = vpop.f32.mrf.mxu0
      %v2654 = vpop.f32.mrf.mxu0
      %v2655 = vadd.f32 0.0, %v2654
      %v2656 = vpop.f32.mrf.mxu0
      %2657 = vmatprep.mubr.bf16.mxu0 0
      %2658 = vmatmul.mubr.bf16.gmra.mxu0 %v500
      %v2659 = vpop.f32.mrf.mxu0
      %v2660 = vadd.f32 0.0, %v2659
      %v2661 = vpop.f32.mrf.mxu0
      %v2662 = vpop.f32.mrf.mxu0
      %v2663 = vadd.f32 0.0, %v2662
      %v2664 = vpop.f32.mrf.mxu0
      %2665 = vmatprep.mubr.bf16.mxu0 0
      %2666 = vmatmul.mubr.bf16.gmra.mxu0 %v503
      %v2667 = vpop.f32.mrf.mxu0
      %v2668 = vadd.f32 0.0, %v2667
      %v2669 = vpop.f32.mrf.mxu0
      %v2670 = vpop.f32.mrf.mxu0
      %v2671 = vadd.f32 0.0, %v2670
      %v2672 = vpop.f32.mrf.mxu0
      %2673 = vmatprep.mubr.bf16.mxu0 0
      %2674 = vmatmul.mubr.bf16.gmra.mxu0 %v506
      %v2675 = vpop.f32.mrf.mxu0
      %v2676 = vadd.f32 0.0, %v2675
      %v2677 = vpop.f32.mrf.mxu0
      %v2678 = vpop.f32.mrf.mxu0
      %v2679 = vadd.f32 0.0, %v2678
      %v2680 = vpop.f32.mrf.mxu0
      %2681 = vmatprep.mubr.bf16.mxu0 0
      %2682 = vmatmul.mubr.bf16.gmra.mxu0 %v509
      %v2683 = vpop.f32.mrf.mxu0
      %v2684 = vadd.f32 0.0, %v2683
      %v2685 = vpop.f32.mrf.mxu0
      %v2686 = vpop.f32.mrf.mxu0
      %v2687 = vadd.f32 0.0, %v2686
      %v2688 = vpop.f32.mrf.mxu0
      %2689 = vmatprep.mubr.bf16.mxu0 0
      %2690 = vmatmul.mubr.bf16.gmra.mxu0 %v512
      %v2691 = vpop.f32.mrf.mxu0
      %v2692 = vadd.f32 0.0, %v2691
      %v2693 = vpop.f32.mrf.mxu0
      %v2694 = vpop.f32.mrf.mxu0
      %v2695 = vadd.f32 0.0, %v2694
      %v2696 = vpop.f32.mrf.mxu0
      %2697 = vmatprep.mubr.bf16.mxu0 0
      %2698 = vmatmul.mubr.bf16.gmra.mxu0 %v515
      %v2699 = vpop.f32.mrf.mxu0
      %v2700 = vadd.f32 0.0, %v2699
      %v2701 = vpop.f32.mrf.mxu0
      %v2702 = vpop.f32.mrf.mxu0
      %v2703 = vadd.f32 0.0, %v2702
      %v2704 = vpop.f32.mrf.mxu0
      %2705 = vdwg.mxu0
      %v2706 = vld [vmem:[#allocation2 + $0x1] sm:$0xff]
      %v2707 = vld [vmem:[#allocation2 + $0x9] sm:$0x7f]
      %v2708 = vld [vmem:[#allocation2 + $0x11] sm:$0xff]
      %v2709 = vld [vmem:[#allocation2 + $0x19] sm:$0x7f]
      %v2710 = vld [vmem:[#allocation2 + $0x21] sm:$0xff]
      %v2711 = vld [vmem:[#allocation2 + $0x29] sm:$0x7f]
      %v2712 = vld [vmem:[#allocation2 + $0x31] sm:$0xff]
      %v2713 = vld [vmem:[#allocation2 + $0x39] sm:$0x7f]
      %v2714 = vld [vmem:[#allocation2 + $0x41] sm:$0xff]
      %v2715 = vld [vmem:[#allocation2 + $0x49] sm:$0x7f]
      %v2716 = vld [vmem:[#allocation2 + $0x51] sm:$0xff]
      %v2717 = vld [vmem:[#allocation2 + $0x59] sm:$0x7f]
      %v2718 = vld [vmem:[#allocation2 + $0x61] sm:$0xff]
      %v2719 = vld [vmem:[#allocation2 + $0x69] sm:$0x7f]
      %v2720 = vld [vmem:[#allocation2 + $0x71] sm:$0xff]
      %v2721 = vld [vmem:[#allocation2 + $0x79] sm:$0x7f]
      %v2722 = vld [vmem:[#allocation2 + $0x81] sm:$0xff]
      %v2723 = vld [vmem:[#allocation2 + $0x89] sm:$0x7f]
      %v2724 = vld [vmem:[#allocation2 + $0x91] sm:$0xff]
      %v2725 = vld [vmem:[#allocation2 + $0x99] sm:$0x7f]
      %v2726 = vld [vmem:[#allocation2 + $0xa1] sm:$0xff]
      %v2727 = vld [vmem:[#allocation2 + $0xa9] sm:$0x7f]
      %v2728 = vld [vmem:[#allocation2 + $0xb1] sm:$0xff]
      %v2729 = vld [vmem:[#allocation2 + $0xb9] sm:$0x7f]
      %v2730 = vld [vmem:[#allocation2 + $0xc1] sm:$0xff]
      %v2731 = vld [vmem:[#allocation2 + $0xc9] sm:$0x7f]
      %v2732 = vld [vmem:[#allocation2 + $0xd1] sm:$0xff]
      %v2733 = vld [vmem:[#allocation2 + $0xd9] sm:$0x7f]
      %v2734 = vld [vmem:[#allocation2 + $0xe1] sm:$0xff]
      %v2735 = vld [vmem:[#allocation2 + $0xe9] sm:$0x7f]
      %v2736 = vld [vmem:[#allocation2 + $0xf1] sm:$0xff]
      %v2737 = vld [vmem:[#allocation2 + $0xf9] sm:$0x7f]
      %v2738 = vadd.f32 %v2706, %v2580
      %v2739 = vadd.f32 %v2707, %v2583
      %v2740 = vadd.f32 %v2708, %v2588
      %v2741 = vadd.f32 %v2709, %v2591
      %v2742 = vadd.f32 %v2710, %v2596
      %v2743 = vadd.f32 %v2711, %v2599
      %v2744 = vadd.f32 %v2712, %v2604
      %v2745 = vadd.f32 %v2713, %v2607
      %v2746 = vadd.f32 %v2714, %v2612
      %v2747 = vadd.f32 %v2715, %v2615
      %v2748 = vadd.f32 %v2716, %v2620
      %v2749 = vadd.f32 %v2717, %v2623
      %v2750 = vadd.f32 %v2718, %v2628
      %v2751 = vadd.f32 %v2719, %v2631
      %v2752 = vadd.f32 %v2720, %v2636
      %v2753 = vadd.f32 %v2721, %v2639
      %v2754 = vadd.f32 %v2722, %v2644
      %v2755 = vadd.f32 %v2723, %v2647
      %v2756 = vadd.f32 %v2724, %v2652
      %v2757 = vadd.f32 %v2725, %v2655
      %v2758 = vadd.f32 %v2726, %v2660
      %v2759 = vadd.f32 %v2727, %v2663
      %v2760 = vadd.f32 %v2728, %v2668
      %v2761 = vadd.f32 %v2729, %v2671
      %v2762 = vadd.f32 %v2730, %v2676
      %v2763 = vadd.f32 %v2731, %v2679
      %v2764 = vadd.f32 %v2732, %v2684
      %v2765 = vadd.f32 %v2733, %v2687
      %v2766 = vadd.f32 %v2734, %v2692
      %v2767 = vadd.f32 %v2735, %v2695
      %v2768 = vadd.f32 %v2736, %v2700
      %v2769 = vadd.f32 %v2737, %v2703
      %2770 = vst.msk [vmem:[#allocation2 + $0x1] sm:$0xff] %vm226, %v2738
      %2771 = vst.msk [vmem:[#allocation2 + $0x9] sm:$0x7f] %vm848, %v2739
      %2772 = vst.msk [vmem:[#allocation2 + $0x11] sm:$0xff] %vm226, %v2740
      %2773 = vst.msk [vmem:[#allocation2 + $0x19] sm:$0x7f] %vm848, %v2741
      %2774 = vst.msk [vmem:[#allocation2 + $0x21] sm:$0xff] %vm226, %v2742
      %2775 = vst.msk [vmem:[#allocation2 + $0x29] sm:$0x7f] %vm848, %v2743
      %2776 = vst.msk [vmem:[#allocation2 + $0x31] sm:$0xff] %vm226, %v2744
      %2777 = vst.msk [vmem:[#allocation2 + $0x39] sm:$0x7f] %vm848, %v2745
      %2778 = vst.msk [vmem:[#allocation2 + $0x41] sm:$0xff] %vm226, %v2746
      %2779 = vst.msk [vmem:[#allocation2 + $0x49] sm:$0x7f] %vm848, %v2747
      %2780 = vst.msk [vmem:[#allocation2 + $0x51] sm:$0xff] %vm226, %v2748
      %2781 = vst.msk [vmem:[#allocation2 + $0x59] sm:$0x7f] %vm848, %v2749
      %2782 = vst.msk [vmem:[#allocation2 + $0x61] sm:$0xff] %vm226, %v2750
      %2783 = vst.msk [vmem:[#allocation2 + $0x69] sm:$0x7f] %vm848, %v2751
      %2784 = vst.msk [vmem:[#allocation2 + $0x71] sm:$0xff] %vm226, %v2752
      %2785 = vst.msk [vmem:[#allocation2 + $0x79] sm:$0x7f] %vm848, %v2753
      %2786 = vst.msk [vmem:[#allocation2 + $0x81] sm:$0xff] %vm226, %v2754
      %2787 = vst.msk [vmem:[#allocation2 + $0x89] sm:$0x7f] %vm848, %v2755
      %2788 = vst.msk [vmem:[#allocation2 + $0x91] sm:$0xff] %vm226, %v2756
      %2789 = vst.msk [vmem:[#allocation2 + $0x99] sm:$0x7f] %vm848, %v2757
      %2790 = vst.msk [vmem:[#allocation2 + $0xa1] sm:$0xff] %vm226, %v2758
      %2791 = vst.msk [vmem:[#allocation2 + $0xa9] sm:$0x7f] %vm848, %v2759
      %2792 = vst.msk [vmem:[#allocation2 + $0xb1] sm:$0xff] %vm226, %v2760
      %2793 = vst.msk [vmem:[#allocation2 + $0xb9] sm:$0x7f] %vm848, %v2761
      %2794 = vst.msk [vmem:[#allocation2 + $0xc1] sm:$0xff] %vm226, %v2762
      %2795 = vst.msk [vmem:[#allocation2 + $0xc9] sm:$0x7f] %vm848, %v2763
      %2796 = vst.msk [vmem:[#allocation2 + $0xd1] sm:$0xff] %vm226, %v2764
      %2797 = vst.msk [vmem:[#allocation2 + $0xd9] sm:$0x7f] %vm848, %v2765
      %2798 = vst.msk [vmem:[#allocation2 + $0xe1] sm:$0xff] %vm226, %v2766
      %2799 = vst.msk [vmem:[#allocation2 + $0xe9] sm:$0x7f] %vm848, %v2767
      %2800 = vst.msk [vmem:[#allocation2 + $0xf1] sm:$0xff] %vm226, %v2768
      %2801 = vst.msk [vmem:[#allocation2 + $0xf9] sm:$0x7f] %vm848, %v2769
      %s2802 = scalar_lea.vmem %s1, 32
      %v2803 = vld [vmem:[%s2802] sm:$0xf]
      %v2805 = vsel %vm517, %v2803, 0
      %2807 = vmatprep.subr.bf16.mxu0 0
      %2808 = vmatpush1.bf16.msra.mxu0 0
      %2809 = vmatprep.subr.bf16.mxu0 0
      %2810 = vmatpush1.bf16.msra.mxu0 0
      %2811 = vmatprep.subr.bf16.mxu0 0
      %2812 = vmatpush1.bf16.msra.mxu0 0
      %2813 = vmatprep.subr.bf16.mxu0 0
      %2814 = vmatpush1.bf16.msra.mxu0 0
      %2815 = vmatprep.subr.bf16.mxu0 0
      %2816 = vmatpush1.bf16.msra.mxu0 0
      %2817 = vmatprep.subr.bf16.mxu0 0
      %2818 = vmatpush1.bf16.msra.mxu0 0
      %2819 = vmatprep.subr.bf16.mxu0 0
      %2820 = vmatpush1.bf16.msra.mxu0 0
      %2821 = vmatprep.subr.bf16.mxu0 0
      %2822 = vmatpush1.bf16.msra.mxu0 %v2805
      %2823 = vmatprep.subr.bf16.mxu0 0
      %2824 = vmatpush2.bf16.msra.mxu0 0
      %2825 = vmatprep.subr.bf16.mxu0 0
      %2826 = vmatpush2.bf16.msra.mxu0 0
      %2827 = vmatprep.subr.bf16.mxu0 0
      %2828 = vmatpush2.bf16.msra.mxu0 0
      %2829 = vmatprep.subr.bf16.mxu0 0
      %2830 = vmatpush2.bf16.msra.mxu0 0
      %2831 = vmatprep.subr.bf16.mxu0 0
      %2832 = vmatpush2.bf16.msra.mxu0 0
      %2833 = vmatprep.subr.bf16.mxu0 0
      %2834 = vmatpush2.bf16.msra.mxu0 0
      %2835 = vmatprep.subr.bf16.mxu0 0
      %2836 = vmatpush2.bf16.msra.mxu0 0
      %2837 = vmatprep.subr.bf16.mxu0 0
      %2838 = vmatpush2.bf16.msra.mxu0 0
      %2839 = vmatprep.mubr.bf16.mxu0 0
      %2840 = vmatmul.mubr.bf16.gmra.mxu0 %v470
      %v2841 = vpop.f32.mrf.mxu0
      %v2842 = vadd.f32 0.0, %v2841
      %v2843 = vpop.f32.mrf.mxu0
      %v2844 = vpop.f32.mrf.mxu0
      %v2845 = vadd.f32 0.0, %v2844
      %v2846 = vpop.f32.mrf.mxu0
      %2847 = vmatprep.mubr.bf16.mxu0 0
      %2848 = vmatmul.mubr.bf16.gmra.mxu0 %v473
      %v2849 = vpop.f32.mrf.mxu0
      %v2850 = vadd.f32 0.0, %v2849
      %v2851 = vpop.f32.mrf.mxu0
      %v2852 = vpop.f32.mrf.mxu0
      %v2853 = vadd.f32 0.0, %v2852
      %v2854 = vpop.f32.mrf.mxu0
      %2855 = vmatprep.mubr.bf16.mxu0 0
      %2856 = vmatmul.mubr.bf16.gmra.mxu0 %v476
      %v2857 = vpop.f32.mrf.mxu0
      %v2858 = vadd.f32 0.0, %v2857
      %v2859 = vpop.f32.mrf.mxu0
      %v2860 = vpop.f32.mrf.mxu0
      %v2861 = vadd.f32 0.0, %v2860
      %v2862 = vpop.f32.mrf.mxu0
      %2863 = vmatprep.mubr.bf16.mxu0 0
      %2864 = vmatmul.mubr.bf16.gmra.mxu0 %v479
      %v2865 = vpop.f32.mrf.mxu0
      %v2866 = vadd.f32 0.0, %v2865
      %v2867 = vpop.f32.mrf.mxu0
      %v2868 = vpop.f32.mrf.mxu0
      %v2869 = vadd.f32 0.0, %v2868
      %v2870 = vpop.f32.mrf.mxu0
      %2871 = vmatprep.mubr.bf16.mxu0 0
      %2872 = vmatmul.mubr.bf16.gmra.mxu0 %v482
      %v2873 = vpop.f32.mrf.mxu0
      %v2874 = vadd.f32 0.0, %v2873
      %v2875 = vpop.f32.mrf.mxu0
      %v2876 = vpop.f32.mrf.mxu0
      %v2877 = vadd.f32 0.0, %v2876
      %v2878 = vpop.f32.mrf.mxu0
      %2879 = vmatprep.mubr.bf16.mxu0 0
      %2880 = vmatmul.mubr.bf16.gmra.mxu0 %v485
      %v2881 = vpop.f32.mrf.mxu0
      %v2882 = vadd.f32 0.0, %v2881
      %v2883 = vpop.f32.mrf.mxu0
      %v2884 = vpop.f32.mrf.mxu0
      %v2885 = vadd.f32 0.0, %v2884
      %v2886 = vpop.f32.mrf.mxu0
      %2887 = vmatprep.mubr.bf16.mxu0 0
      %2888 = vmatmul.mubr.bf16.gmra.mxu0 %v488
      %v2889 = vpop.f32.mrf.mxu0
      %v2890 = vadd.f32 0.0, %v2889
      %v2891 = vpop.f32.mrf.mxu0
      %v2892 = vpop.f32.mrf.mxu0
      %v2893 = vadd.f32 0.0, %v2892
      %v2894 = vpop.f32.mrf.mxu0
      %2895 = vmatprep.mubr.bf16.mxu0 0
      %2896 = vmatmul.mubr.bf16.gmra.mxu0 %v491
      %v2897 = vpop.f32.mrf.mxu0
      %v2898 = vadd.f32 0.0, %v2897
      %v2899 = vpop.f32.mrf.mxu0
      %v2900 = vpop.f32.mrf.mxu0
      %v2901 = vadd.f32 0.0, %v2900
      %v2902 = vpop.f32.mrf.mxu0
      %2903 = vmatprep.mubr.bf16.mxu0 0
      %2904 = vmatmul.mubr.bf16.gmra.mxu0 %v494
      %v2905 = vpop.f32.mrf.mxu0
      %v2906 = vadd.f32 0.0, %v2905
      %v2907 = vpop.f32.mrf.mxu0
      %v2908 = vpop.f32.mrf.mxu0
      %v2909 = vadd.f32 0.0, %v2908
      %v2910 = vpop.f32.mrf.mxu0
      %2911 = vmatprep.mubr.bf16.mxu0 0
      %2912 = vmatmul.mubr.bf16.gmra.mxu0 %v497
      %v2913 = vpop.f32.mrf.mxu0
      %v2914 = vadd.f32 0.0, %v2913
      %v2915 = vpop.f32.mrf.mxu0
      %v2916 = vpop.f32.mrf.mxu0
      %v2917 = vadd.f32 0.0, %v2916
      %v2918 = vpop.f32.mrf.mxu0
      %2919 = vmatprep.mubr.bf16.mxu0 0
      %2920 = vmatmul.mubr.bf16.gmra.mxu0 %v500
      %v2921 = vpop.f32.mrf.mxu0
      %v2922 = vadd.f32 0.0, %v2921
      %v2923 = vpop.f32.mrf.mxu0
      %v2924 = vpop.f32.mrf.mxu0
      %v2925 = vadd.f32 0.0, %v2924
      %v2926 = vpop.f32.mrf.mxu0
      %2927 = vmatprep.mubr.bf16.mxu0 0
      %2928 = vmatmul.mubr.bf16.gmra.mxu0 %v503
      %v2929 = vpop.f32.mrf.mxu0
      %v2930 = vadd.f32 0.0, %v2929
      %v2931 = vpop.f32.mrf.mxu0
      %v2932 = vpop.f32.mrf.mxu0
      %v2933 = vadd.f32 0.0, %v2932
      %v2934 = vpop.f32.mrf.mxu0
      %2935 = vmatprep.mubr.bf16.mxu0 0
      %2936 = vmatmul.mubr.bf16.gmra.mxu0 %v506
      %v2937 = vpop.f32.mrf.mxu0
      %v2938 = vadd.f32 0.0, %v2937
      %v2939 = vpop.f32.mrf.mxu0
      %v2940 = vpop.f32.mrf.mxu0
      %v2941 = vadd.f32 0.0, %v2940
      %v2942 = vpop.f32.mrf.mxu0
      %2943 = vmatprep.mubr.bf16.mxu0 0
      %2944 = vmatmul.mubr.bf16.gmra.mxu0 %v509
      %v2945 = vpop.f32.mrf.mxu0
      %v2946 = vadd.f32 0.0, %v2945
      %v2947 = vpop.f32.mrf.mxu0
      %v2948 = vpop.f32.mrf.mxu0
      %v2949 = vadd.f32 0.0, %v2948
      %v2950 = vpop.f32.mrf.mxu0
      %2951 = vmatprep.mubr.bf16.mxu0 0
      %2952 = vmatmul.mubr.bf16.gmra.mxu0 %v512
      %v2953 = vpop.f32.mrf.mxu0
      %v2954 = vadd.f32 0.0, %v2953
      %v2955 = vpop.f32.mrf.mxu0
      %v2956 = vpop.f32.mrf.mxu0
      %v2957 = vadd.f32 0.0, %v2956
      %v2958 = vpop.f32.mrf.mxu0
      %2959 = vmatprep.mubr.bf16.mxu0 0
      %2960 = vmatmul.mubr.bf16.gmra.mxu0 %v515
      %v2961 = vpop.f32.mrf.mxu0
      %v2962 = vadd.f32 0.0, %v2961
      %v2963 = vpop.f32.mrf.mxu0
      %v2964 = vpop.f32.mrf.mxu0
      %v2965 = vadd.f32 0.0, %v2964
      %v2966 = vpop.f32.mrf.mxu0
      %2967 = vdwg.mxu0
      %v2968 = vld [vmem:[%s680] sm:$0xff]
      %v2969 = vld [vmem:[%s680 + $0x8] sm:$0x7f]
      %v2970 = vld [vmem:[%s680 + $0x10] sm:$0xff]
      %v2971 = vld [vmem:[%s680 + $0x18] sm:$0x7f]
      %v2972 = vld [vmem:[%s680 + $0x20] sm:$0xff]
      %v2973 = vld [vmem:[%s680 + $0x28] sm:$0x7f]
      %v2974 = vld [vmem:[%s680 + $0x30] sm:$0xff]
      %v2975 = vld [vmem:[%s680 + $0x38] sm:$0x7f]
      %v2976 = vld [vmem:[%s680 + $0x40] sm:$0xff]
      %v2977 = vld [vmem:[%s680 + $0x48] sm:$0x7f]
      %v2978 = vld [vmem:[%s680 + $0x50] sm:$0xff]
      %v2979 = vld [vmem:[%s680 + $0x58] sm:$0x7f]
      %v2980 = vld [vmem:[%s680 + $0x60] sm:$0xff]
      %v2981 = vld [vmem:[%s680 + $0x68] sm:$0x7f]
      %v2982 = vld [vmem:[%s680 + $0x70] sm:$0xff]
      %v2983 = vld [vmem:[%s680 + $0x78] sm:$0x7f]
      %v2984 = vld [vmem:[%s680 + $0x80] sm:$0xff]
      %v2985 = vld [vmem:[%s680 + $0x88] sm:$0x7f]
      %v2986 = vld [vmem:[%s680 + $0x90] sm:$0xff]
      %v2987 = vld [vmem:[%s680 + $0x98] sm:$0x7f]
      %v2988 = vld [vmem:[%s680 + $0xa0] sm:$0xff]
      %v2989 = vld [vmem:[%s680 + $0xa8] sm:$0x7f]
      %v2990 = vld [vmem:[%s680 + $0xb0] sm:$0xff]
      %v2991 = vld [vmem:[%s680 + $0xb8] sm:$0x7f]
      %v2992 = vld [vmem:[%s680 + $0xc0] sm:$0xff]
      %v2993 = vld [vmem:[%s680 + $0xc8] sm:$0x7f]
      %v2994 = vld [vmem:[%s680 + $0xd0] sm:$0xff]
      %v2995 = vld [vmem:[%s680 + $0xd8] sm:$0x7f]
      %v2996 = vld [vmem:[%s680 + $0xe0] sm:$0xff]
      %v2997 = vld [vmem:[%s680 + $0xe8] sm:$0x7f]
      %v2998 = vld [vmem:[%s680 + $0xf0] sm:$0xff]
      %v2999 = vld [vmem:[%s680 + $0xf8] sm:$0x7f]
      %v3032 = vrot.slane %v2842, 1
      %v3033 = vrot.slane %v2845, 1
      %v3034 = vsel %vm741, %v3032, %v3033
      %v3035 = vrot.slane %v2850, 1
      %v3036 = vrot.slane %v2853, 1
      %v3037 = vsel %vm741, %v3035, %v3036
      %v3038 = vrot.slane %v2858, 1
      %v3039 = vrot.slane %v2861, 1
      %v3040 = vsel %vm741, %v3038, %v3039
      %v3041 = vrot.slane %v2866, 1
      %v3042 = vrot.slane %v2869, 1
      %v3043 = vsel %vm741, %v3041, %v3042
      %v3044 = vrot.slane %v2874, 1
      %v3045 = vrot.slane %v2877, 1
      %v3046 = vsel %vm741, %v3044, %v3045
      %v3047 = vrot.slane %v2882, 1
      %v3048 = vrot.slane %v2885, 1
      %v3049 = vsel %vm741, %v3047, %v3048
      %v3050 = vrot.slane %v2890, 1
      %v3051 = vrot.slane %v2893, 1
      %v3052 = vsel %vm741, %v3050, %v3051
      %v3053 = vrot.slane %v2898, 1
      %v3054 = vrot.slane %v2901, 1
      %v3055 = vsel %vm741, %v3053, %v3054
      %v3056 = vrot.slane %v2906, 1
      %v3057 = vrot.slane %v2909, 1
      %v3058 = vsel %vm741, %v3056, %v3057
      %v3059 = vrot.slane %v2914, 1
      %v3060 = vrot.slane %v2917, 1
      %v3061 = vsel %vm741, %v3059, %v3060
      %v3062 = vrot.slane %v2922, 1
      %v3063 = vrot.slane %v2925, 1
      %v3064 = vsel %vm741, %v3062, %v3063
      %v3065 = vrot.slane %v2930, 1
      %v3066 = vrot.slane %v2933, 1
      %v3067 = vsel %vm741, %v3065, %v3066
      %v3068 = vrot.slane %v2938, 1
      %v3069 = vrot.slane %v2941, 1
      %v3070 = vsel %vm741, %v3068, %v3069
      %v3071 = vrot.slane %v2946, 1
      %v3072 = vrot.slane %v2949, 1
      %v3073 = vsel %vm741, %v3071, %v3072
      %v3074 = vrot.slane %v2954, 1
      %v3075 = vrot.slane %v2957, 1
      %v3076 = vsel %vm741, %v3074, %v3075
      %v3077 = vrot.slane %v2962, 1
      %v3078 = vrot.slane %v2965, 1
      %v3079 = vsel %vm741, %v3077, %v3078
      %v3112 = vadd.f32 %v2968, %v3034
      %v3113 = vadd.f32 %v2969, %v3033
      %v3114 = vadd.f32 %v2970, %v3037
      %v3115 = vadd.f32 %v2971, %v3036
      %v3116 = vadd.f32 %v2972, %v3040
      %v3117 = vadd.f32 %v2973, %v3039
      %v3118 = vadd.f32 %v2974, %v3043
      %v3119 = vadd.f32 %v2975, %v3042
      %v3120 = vadd.f32 %v2976, %v3046
      %v3121 = vadd.f32 %v2977, %v3045
      %v3122 = vadd.f32 %v2978, %v3049
      %v3123 = vadd.f32 %v2979, %v3048
      %v3124 = vadd.f32 %v2980, %v3052
      %v3125 = vadd.f32 %v2981, %v3051
      %v3126 = vadd.f32 %v2982, %v3055
      %v3127 = vadd.f32 %v2983, %v3054
      %v3128 = vadd.f32 %v2984, %v3058
      %v3129 = vadd.f32 %v2985, %v3057
      %v3130 = vadd.f32 %v2986, %v3061
      %v3131 = vadd.f32 %v2987, %v3060
      %v3132 = vadd.f32 %v2988, %v3064
      %v3133 = vadd.f32 %v2989, %v3063
      %v3134 = vadd.f32 %v2990, %v3067
      %v3135 = vadd.f32 %v2991, %v3066
      %v3136 = vadd.f32 %v2992, %v3070
      %v3137 = vadd.f32 %v2993, %v3069
      %v3138 = vadd.f32 %v2994, %v3073
      %v3139 = vadd.f32 %v2995, %v3072
      %v3140 = vadd.f32 %v2996, %v3076
      %v3141 = vadd.f32 %v2997, %v3075
      %v3142 = vadd.f32 %v2998, %v3079
      %v3143 = vadd.f32 %v2999, %v3078
      %3144 = vst.msk [vmem:[%s680] sm:$0xff] %vm226, %v3112
      %3145 = vst.msk [vmem:[%s680 + $0x8] sm:$0x7f] %vm848, %v3113
      %3146 = vst.msk [vmem:[%s680 + $0x10] sm:$0xff] %vm226, %v3114
      %3147 = vst.msk [vmem:[%s680 + $0x18] sm:$0x7f] %vm848, %v3115
      %3148 = vst.msk [vmem:[%s680 + $0x20] sm:$0xff] %vm226, %v3116
      %3149 = vst.msk [vmem:[%s680 + $0x28] sm:$0x7f] %vm848, %v3117
      %3150 = vst.msk [vmem:[%s680 + $0x30] sm:$0xff] %vm226, %v3118
      %3151 = vst.msk [vmem:[%s680 + $0x38] sm:$0x7f] %vm848, %v3119
      %3152 = vst.msk [vmem:[%s680 + $0x40] sm:$0xff] %vm226, %v3120
      %3153 = vst.msk [vmem:[%s680 + $0x48] sm:$0x7f] %vm848, %v3121
      %3154 = vst.msk [vmem:[%s680 + $0x50] sm:$0xff] %vm226, %v3122
      %3155 = vst.msk [vmem:[%s680 + $0x58] sm:$0x7f] %vm848, %v3123
      %3156 = vst.msk [vmem:[%s680 + $0x60] sm:$0xff] %vm226, %v3124
      %3157 = vst.msk [vmem:[%s680 + $0x68] sm:$0x7f] %vm848, %v3125
      %3158 = vst.msk [vmem:[%s680 + $0x70] sm:$0xff] %vm226, %v3126
      %3159 = vst.msk [vmem:[%s680 + $0x78] sm:$0x7f] %vm848, %v3127
      %3160 = vst.msk [vmem:[%s680 + $0x80] sm:$0xff] %vm226, %v3128
      %3161 = vst.msk [vmem:[%s680 + $0x88] sm:$0x7f] %vm848, %v3129
      %3162 = vst.msk [vmem:[%s680 + $0x90] sm:$0xff] %vm226, %v3130
      %3163 = vst.msk [vmem:[%s680 + $0x98] sm:$0x7f] %vm848, %v3131
      %3164 = vst.msk [vmem:[%s680 + $0xa0] sm:$0xff] %vm226, %v3132
      %3165 = vst.msk [vmem:[%s680 + $0xa8] sm:$0x7f] %vm848, %v3133
      %3166 = vst.msk [vmem:[%s680 + $0xb0] sm:$0xff] %vm226, %v3134
      %3167 = vst.msk [vmem:[%s680 + $0xb8] sm:$0x7f] %vm848, %v3135
      %3168 = vst.msk [vmem:[%s680 + $0xc0] sm:$0xff] %vm226, %v3136
      %3169 = vst.msk [vmem:[%s680 + $0xc8] sm:$0x7f] %vm848, %v3137
      %3170 = vst.msk [vmem:[%s680 + $0xd0] sm:$0xff] %vm226, %v3138
      %3171 = vst.msk [vmem:[%s680 + $0xd8] sm:$0x7f] %vm848, %v3139
      %3172 = vst.msk [vmem:[%s680 + $0xe0] sm:$0xff] %vm226, %v3140
      %3173 = vst.msk [vmem:[%s680 + $0xe8] sm:$0x7f] %vm848, %v3141
      %3174 = vst.msk [vmem:[%s680 + $0xf0] sm:$0xff] %vm226, %v3142
      %3175 = vst.msk [vmem:[%s680 + $0xf8] sm:$0x7f] %vm848, %v3143
      %s3176 = scalar_lea.vmem %s1, 36
      %v3177 = vld [vmem:[%s3176] sm:$0xf]
      %v3179 = vsel %vm517, %v3177, 0
      %3181 = vmatprep.subr.bf16.mxu0 0
      %3182 = vmatpush1.bf16.msra.mxu0 0
      %3183 = vmatprep.subr.bf16.mxu0 0
      %3184 = vmatpush1.bf16.msra.mxu0 0
      %3185 = vmatprep.subr.bf16.mxu0 0
      %3186 = vmatpush1.bf16.msra.mxu0 0
      %3187 = vmatprep.subr.bf16.mxu0 0
      %3188 = vmatpush1.bf16.msra.mxu0 0
      %3189 = vmatprep.subr.bf16.mxu0 0
      %3190 = vmatpush1.bf16.msra.mxu0 0
      %3191 = vmatprep.subr.bf16.mxu0 0
      %3192 = vmatpush1.bf16.msra.mxu0 0
      %3193 = vmatprep.subr.bf16.mxu0 0
      %3194 = vmatpush1.bf16.msra.mxu0 0
      %3195 = vmatprep.subr.bf16.mxu0 0
      %3196 = vmatpush1.bf16.msra.mxu0 %v3179
      %3197 = vmatprep.subr.bf16.mxu0 0
      %3198 = vmatpush2.bf16.msra.mxu0 0
      %3199 = vmatprep.subr.bf16.mxu0 0
      %3200 = vmatpush2.bf16.msra.mxu0 0
      %3201 = vmatprep.subr.bf16.mxu0 0
      %3202 = vmatpush2.bf16.msra.mxu0 0
      %3203 = vmatprep.subr.bf16.mxu0 0
      %3204 = vmatpush2.bf16.msra.mxu0 0
      %3205 = vmatprep.subr.bf16.mxu0 0
      %3206 = vmatpush2.bf16.msra.mxu0 0
      %3207 = vmatprep.subr.bf16.mxu0 0
      %3208 = vmatpush2.bf16.msra.mxu0 0
      %3209 = vmatprep.subr.bf16.mxu0 0
      %3210 = vmatpush2.bf16.msra.mxu0 0
      %3211 = vmatprep.subr.bf16.mxu0 0
      %3212 = vmatpush2.bf16.msra.mxu0 0
      %3213 = vmatprep.mubr.bf16.mxu0 0
      %3214 = vmatmul.mubr.bf16.gmra.mxu0 %v470
      %v3215 = vpop.f32.mrf.mxu0
      %v3216 = vadd.f32 0.0, %v3215
      %v3217 = vpop.f32.mrf.mxu0
      %v3218 = vpop.f32.mrf.mxu0
      %v3219 = vadd.f32 0.0, %v3218
      %v3220 = vpop.f32.mrf.mxu0
      %3221 = vmatprep.mubr.bf16.mxu0 0
      %3222 = vmatmul.mubr.bf16.gmra.mxu0 %v473
      %v3223 = vpop.f32.mrf.mxu0
      %v3224 = vadd.f32 0.0, %v3223
      %v3225 = vpop.f32.mrf.mxu0
      %v3226 = vpop.f32.mrf.mxu0
      %v3227 = vadd.f32 0.0, %v3226
      %v3228 = vpop.f32.mrf.mxu0
      %3229 = vmatprep.mubr.bf16.mxu0 0
      %3230 = vmatmul.mubr.bf16.gmra.mxu0 %v476
      %v3231 = vpop.f32.mrf.mxu0
      %v3232 = vadd.f32 0.0, %v3231
      %v3233 = vpop.f32.mrf.mxu0
      %v3234 = vpop.f32.mrf.mxu0
      %v3235 = vadd.f32 0.0, %v3234
      %v3236 = vpop.f32.mrf.mxu0
      %3237 = vmatprep.mubr.bf16.mxu0 0
      %3238 = vmatmul.mubr.bf16.gmra.mxu0 %v479
      %v3239 = vpop.f32.mrf.mxu0
      %v3240 = vadd.f32 0.0, %v3239
      %v3241 = vpop.f32.mrf.mxu0
      %v3242 = vpop.f32.mrf.mxu0
      %v3243 = vadd.f32 0.0, %v3242
      %v3244 = vpop.f32.mrf.mxu0
      %3245 = vmatprep.mubr.bf16.mxu0 0
      %3246 = vmatmul.mubr.bf16.gmra.mxu0 %v482
      %v3247 = vpop.f32.mrf.mxu0
      %v3248 = vadd.f32 0.0, %v3247
      %v3249 = vpop.f32.mrf.mxu0
      %v3250 = vpop.f32.mrf.mxu0
      %v3251 = vadd.f32 0.0, %v3250
      %v3252 = vpop.f32.mrf.mxu0
      %3253 = vmatprep.mubr.bf16.mxu0 0
      %3254 = vmatmul.mubr.bf16.gmra.mxu0 %v485
      %v3255 = vpop.f32.mrf.mxu0
      %v3256 = vadd.f32 0.0, %v3255
      %v3257 = vpop.f32.mrf.mxu0
      %v3258 = vpop.f32.mrf.mxu0
      %v3259 = vadd.f32 0.0, %v3258
      %v3260 = vpop.f32.mrf.mxu0
      %3261 = vmatprep.mubr.bf16.mxu0 0
      %3262 = vmatmul.mubr.bf16.gmra.mxu0 %v488
      %v3263 = vpop.f32.mrf.mxu0
      %v3264 = vadd.f32 0.0, %v3263
      %v3265 = vpop.f32.mrf.mxu0
      %v3266 = vpop.f32.mrf.mxu0
      %v3267 = vadd.f32 0.0, %v3266
      %v3268 = vpop.f32.mrf.mxu0
      %3269 = vmatprep.mubr.bf16.mxu0 0
      %3270 = vmatmul.mubr.bf16.gmra.mxu0 %v491
      %v3271 = vpop.f32.mrf.mxu0
      %v3272 = vadd.f32 0.0, %v3271
      %v3273 = vpop.f32.mrf.mxu0
      %v3274 = vpop.f32.mrf.mxu0
      %v3275 = vadd.f32 0.0, %v3274
      %v3276 = vpop.f32.mrf.mxu0
      %3277 = vmatprep.mubr.bf16.mxu0 0
      %3278 = vmatmul.mubr.bf16.gmra.mxu0 %v494
      %v3279 = vpop.f32.mrf.mxu0
      %v3280 = vadd.f32 0.0, %v3279
      %v3281 = vpop.f32.mrf.mxu0
      %v3282 = vpop.f32.mrf.mxu0
      %v3283 = vadd.f32 0.0, %v3282
      %v3284 = vpop.f32.mrf.mxu0
      %3285 = vmatprep.mubr.bf16.mxu0 0
      %3286 = vmatmul.mubr.bf16.gmra.mxu0 %v497
      %v3287 = vpop.f32.mrf.mxu0
      %v3288 = vadd.f32 0.0, %v3287
      %v3289 = vpop.f32.mrf.mxu0
      %v3290 = vpop.f32.mrf.mxu0
      %v3291 = vadd.f32 0.0, %v3290
      %v3292 = vpop.f32.mrf.mxu0
      %3293 = vmatprep.mubr.bf16.mxu0 0
      %3294 = vmatmul.mubr.bf16.gmra.mxu0 %v500
      %v3295 = vpop.f32.mrf.mxu0
      %v3296 = vadd.f32 0.0, %v3295
      %v3297 = vpop.f32.mrf.mxu0
      %v3298 = vpop.f32.mrf.mxu0
      %v3299 = vadd.f32 0.0, %v3298
      %v3300 = vpop.f32.mrf.mxu0
      %3301 = vmatprep.mubr.bf16.mxu0 0
      %3302 = vmatmul.mubr.bf16.gmra.mxu0 %v503
      %v3303 = vpop.f32.mrf.mxu0
      %v3304 = vadd.f32 0.0, %v3303
      %v3305 = vpop.f32.mrf.mxu0
      %v3306 = vpop.f32.mrf.mxu0
      %v3307 = vadd.f32 0.0, %v3306
      %v3308 = vpop.f32.mrf.mxu0
      %3309 = vmatprep.mubr.bf16.mxu0 0
      %3310 = vmatmul.mubr.bf16.gmra.mxu0 %v506
      %v3311 = vpop.f32.mrf.mxu0
      %v3312 = vadd.f32 0.0, %v3311
      %v3313 = vpop.f32.mrf.mxu0
      %v3314 = vpop.f32.mrf.mxu0
      %v3315 = vadd.f32 0.0, %v3314
      %v3316 = vpop.f32.mrf.mxu0
      %3317 = vmatprep.mubr.bf16.mxu0 0
      %3318 = vmatmul.mubr.bf16.gmra.mxu0 %v509
      %v3319 = vpop.f32.mrf.mxu0
      %v3320 = vadd.f32 0.0, %v3319
      %v3321 = vpop.f32.mrf.mxu0
      %v3322 = vpop.f32.mrf.mxu0
      %v3323 = vadd.f32 0.0, %v3322
      %v3324 = vpop.f32.mrf.mxu0
      %3325 = vmatprep.mubr.bf16.mxu0 0
      %3326 = vmatmul.mubr.bf16.gmra.mxu0 %v512
      %v3327 = vpop.f32.mrf.mxu0
      %v3328 = vadd.f32 0.0, %v3327
      %v3329 = vpop.f32.mrf.mxu0
      %v3330 = vpop.f32.mrf.mxu0
      %v3331 = vadd.f32 0.0, %v3330
      %v3332 = vpop.f32.mrf.mxu0
      %3333 = vmatprep.mubr.bf16.mxu0 0
      %3334 = vmatmul.mubr.bf16.gmra.mxu0 %v515
      %v3335 = vpop.f32.mrf.mxu0
      %v3336 = vadd.f32 0.0, %v3335
      %v3337 = vpop.f32.mrf.mxu0
      %v3338 = vpop.f32.mrf.mxu0
      %v3339 = vadd.f32 0.0, %v3338
      %v3340 = vpop.f32.mrf.mxu0
      %3341 = vdwg.mxu0
      %v3342 = vld [vmem:[%s1042] sm:$0xff]
      %v3343 = vld [vmem:[%s1042 + $0x8] sm:$0xff]
      %v3344 = vld [vmem:[%s1042 + $0x10] sm:$0xff]
      %v3345 = vld [vmem:[%s1042 + $0x18] sm:$0xff]
      %v3346 = vld [vmem:[%s1042 + $0x20] sm:$0xff]
      %v3347 = vld [vmem:[%s1042 + $0x28] sm:$0xff]
      %v3348 = vld [vmem:[%s1042 + $0x30] sm:$0xff]
      %v3349 = vld [vmem:[%s1042 + $0x38] sm:$0xff]
      %v3350 = vld [vmem:[%s1042 + $0x40] sm:$0xff]
      %v3351 = vld [vmem:[%s1042 + $0x48] sm:$0xff]
      %v3352 = vld [vmem:[%s1042 + $0x50] sm:$0xff]
      %v3353 = vld [vmem:[%s1042 + $0x58] sm:$0xff]
      %v3354 = vld [vmem:[%s1042 + $0x60] sm:$0xff]
      %v3355 = vld [vmem:[%s1042 + $0x68] sm:$0xff]
      %v3356 = vld [vmem:[%s1042 + $0x70] sm:$0xff]
      %v3357 = vld [vmem:[%s1042 + $0x78] sm:$0xff]
      %v3358 = vld [vmem:[%s1042 + $0x80] sm:$0xff]
      %v3359 = vld [vmem:[%s1042 + $0x88] sm:$0xff]
      %v3360 = vld [vmem:[%s1042 + $0x90] sm:$0xff]
      %v3361 = vld [vmem:[%s1042 + $0x98] sm:$0xff]
      %v3362 = vld [vmem:[%s1042 + $0xa0] sm:$0xff]
      %v3363 = vld [vmem:[%s1042 + $0xa8] sm:$0xff]
      %v3364 = vld [vmem:[%s1042 + $0xb0] sm:$0xff]
      %v3365 = vld [vmem:[%s1042 + $0xb8] sm:$0xff]
      %v3366 = vld [vmem:[%s1042 + $0xc0] sm:$0xff]
      %v3367 = vld [vmem:[%s1042 + $0xc8] sm:$0xff]
      %v3368 = vld [vmem:[%s1042 + $0xd0] sm:$0xff]
      %v3369 = vld [vmem:[%s1042 + $0xd8] sm:$0xff]
      %v3370 = vld [vmem:[%s1042 + $0xe0] sm:$0xff]
      %v3371 = vld [vmem:[%s1042 + $0xe8] sm:$0xff]
      %v3372 = vld [vmem:[%s1042 + $0xf0] sm:$0xff]
      %v3373 = vld [vmem:[%s1042 + $0xf8] sm:$0xff]
      %v3374 = vadd.f32 %v3342, %v3216
      %v3375 = vadd.f32 %v3343, %v3219
      %v3376 = vadd.f32 %v3344, %v3224
      %v3377 = vadd.f32 %v3345, %v3227
      %v3378 = vadd.f32 %v3346, %v3232
      %v3379 = vadd.f32 %v3347, %v3235
      %v3380 = vadd.f32 %v3348, %v3240
      %v3381 = vadd.f32 %v3349, %v3243
      %v3382 = vadd.f32 %v3350, %v3248
      %v3383 = vadd.f32 %v3351, %v3251
      %v3384 = vadd.f32 %v3352, %v3256
      %v3385 = vadd.f32 %v3353, %v3259
      %v3386 = vadd.f32 %v3354, %v3264
      %v3387 = vadd.f32 %v3355, %v3267
      %v3388 = vadd.f32 %v3356, %v3272
      %v3389 = vadd.f32 %v3357, %v3275
      %v3390 = vadd.f32 %v3358, %v3280
      %v3391 = vadd.f32 %v3359, %v3283
      %v3392 = vadd.f32 %v3360, %v3288
      %v3393 = vadd.f32 %v3361, %v3291
      %v3394 = vadd.f32 %v3362, %v3296
      %v3395 = vadd.f32 %v3363, %v3299
      %v3396 = vadd.f32 %v3364, %v3304
      %v3397 = vadd.f32 %v3365, %v3307
      %v3398 = vadd.f32 %v3366, %v3312
      %v3399 = vadd.f32 %v3367, %v3315
      %v3400 = vadd.f32 %v3368, %v3320
      %v3401 = vadd.f32 %v3369, %v3323
      %v3402 = vadd.f32 %v3370, %v3328
      %v3403 = vadd.f32 %v3371, %v3331
      %v3404 = vadd.f32 %v3372, %v3336
      %v3405 = vadd.f32 %v3373, %v3339
      %3406 = vst.msk [vmem:[%s1042] sm:$0xff] %vm226, %v3374
      %3407 = vst.msk [vmem:[%s1042 + $0x8] sm:$0xff] %vm226, %v3375
      %3408 = vst.msk [vmem:[%s1042 + $0x10] sm:$0xff] %vm226, %v3376
      %3409 = vst.msk [vmem:[%s1042 + $0x18] sm:$0xff] %vm226, %v3377
      %3410 = vst.msk [vmem:[%s1042 + $0x20] sm:$0xff] %vm226, %v3378
      %3411 = vst.msk [vmem:[%s1042 + $0x28] sm:$0xff] %vm226, %v3379
      %3412 = vst.msk [vmem:[%s1042 + $0x30] sm:$0xff] %vm226, %v3380
      %3413 = vst.msk [vmem:[%s1042 + $0x38] sm:$0xff] %vm226, %v3381
      %3414 = vst.msk [vmem:[%s1042 + $0x40] sm:$0xff] %vm226, %v3382
      %3415 = vst.msk [vmem:[%s1042 + $0x48] sm:$0xff] %vm226, %v3383
      %3416 = vst.msk [vmem:[%s1042 + $0x50] sm:$0xff] %vm226, %v3384
      %3417 = vst.msk [vmem:[%s1042 + $0x58] sm:$0xff] %vm226, %v3385
      %3418 = vst.msk [vmem:[%s1042 + $0x60] sm:$0xff] %vm226, %v3386
      %3419 = vst.msk [vmem:[%s1042 + $0x68] sm:$0xff] %vm226, %v3387
      %3420 = vst.msk [vmem:[%s1042 + $0x70] sm:$0xff] %vm226, %v3388
      %3421 = vst.msk [vmem:[%s1042 + $0x78] sm:$0xff] %vm226, %v3389
      %3422 = vst.msk [vmem:[%s1042 + $0x80] sm:$0xff] %vm226, %v3390
      %3423 = vst.msk [vmem:[%s1042 + $0x88] sm:$0xff] %vm226, %v3391
      %3424 = vst.msk [vmem:[%s1042 + $0x90] sm:$0xff] %vm226, %v3392
      %3425 = vst.msk [vmem:[%s1042 + $0x98] sm:$0xff] %vm226, %v3393
      %3426 = vst.msk [vmem:[%s1042 + $0xa0] sm:$0xff] %vm226, %v3394
      %3427 = vst.msk [vmem:[%s1042 + $0xa8] sm:$0xff] %vm226, %v3395
      %3428 = vst.msk [vmem:[%s1042 + $0xb0] sm:$0xff] %vm226, %v3396
      %3429 = vst.msk [vmem:[%s1042 + $0xb8] sm:$0xff] %vm226, %v3397
      %3430 = vst.msk [vmem:[%s1042 + $0xc0] sm:$0xff] %vm226, %v3398
      %3431 = vst.msk [vmem:[%s1042 + $0xc8] sm:$0xff] %vm226, %v3399
      %3432 = vst.msk [vmem:[%s1042 + $0xd0] sm:$0xff] %vm226, %v3400
      %3433 = vst.msk [vmem:[%s1042 + $0xd8] sm:$0xff] %vm226, %v3401
      %3434 = vst.msk [vmem:[%s1042 + $0xe0] sm:$0xff] %vm226, %v3402
      %3435 = vst.msk [vmem:[%s1042 + $0xe8] sm:$0xff] %vm226, %v3403
      %3436 = vst.msk [vmem:[%s1042 + $0xf0] sm:$0xff] %vm226, %v3404
      %3437 = vst.msk [vmem:[%s1042 + $0xf8] sm:$0xff] %vm226, %v3405
      %s3438 = scalar_lea.vmem %s1, 40
      %v3439 = vld [vmem:[%s3438] sm:$0xf]
      %v3441 = vsel %vm517, %v3439, 0
      %3443 = vmatprep.subr.bf16.mxu0 0
      %3444 = vmatpush1.bf16.msra.mxu0 0
      %3445 = vmatprep.subr.bf16.mxu0 0
      %3446 = vmatpush1.bf16.msra.mxu0 0
      %3447 = vmatprep.subr.bf16.mxu0 0
      %3448 = vmatpush1.bf16.msra.mxu0 0
      %3449 = vmatprep.subr.bf16.mxu0 0
      %3450 = vmatpush1.bf16.msra.mxu0 0
      %3451 = vmatprep.subr.bf16.mxu0 0
      %3452 = vmatpush1.bf16.msra.mxu0 0
      %3453 = vmatprep.subr.bf16.mxu0 0
      %3454 = vmatpush1.bf16.msra.mxu0 0
      %3455 = vmatprep.subr.bf16.mxu0 0
      %3456 = vmatpush1.bf16.msra.mxu0 0
      %3457 = vmatprep.subr.bf16.mxu0 0
      %3458 = vmatpush1.bf16.msra.mxu0 %v3441
      %3459 = vmatprep.subr.bf16.mxu0 0
      %3460 = vmatpush2.bf16.msra.mxu0 0
      %3461 = vmatprep.subr.bf16.mxu0 0
      %3462 = vmatpush2.bf16.msra.mxu0 0
      %3463 = vmatprep.subr.bf16.mxu0 0
      %3464 = vmatpush2.bf16.msra.mxu0 0
      %3465 = vmatprep.subr.bf16.mxu0 0
      %3466 = vmatpush2.bf16.msra.mxu0 0
      %3467 = vmatprep.subr.bf16.mxu0 0
      %3468 = vmatpush2.bf16.msra.mxu0 0
      %3469 = vmatprep.subr.bf16.mxu0 0
      %3470 = vmatpush2.bf16.msra.mxu0 0
      %3471 = vmatprep.subr.bf16.mxu0 0
      %3472 = vmatpush2.bf16.msra.mxu0 0
      %3473 = vmatprep.subr.bf16.mxu0 0
      %3474 = vmatpush2.bf16.msra.mxu0 0
      %3475 = vmatprep.mubr.bf16.mxu0 0
      %3476 = vmatmul.mubr.bf16.gmra.mxu0 %v470
      %v3477 = vpop.f32.mrf.mxu0
      %v3478 = vadd.f32 0.0, %v3477
      %v3479 = vpop.f32.mrf.mxu0
      %v3480 = vpop.f32.mrf.mxu0
      %v3481 = vadd.f32 0.0, %v3480
      %v3482 = vpop.f32.mrf.mxu0
      %3483 = vmatprep.mubr.bf16.mxu0 0
      %3484 = vmatmul.mubr.bf16.gmra.mxu0 %v473
      %v3485 = vpop.f32.mrf.mxu0
      %v3486 = vadd.f32 0.0, %v3485
      %v3487 = vpop.f32.mrf.mxu0
      %v3488 = vpop.f32.mrf.mxu0
      %v3489 = vadd.f32 0.0, %v3488
      %v3490 = vpop.f32.mrf.mxu0
      %3491 = vmatprep.mubr.bf16.mxu0 0
      %3492 = vmatmul.mubr.bf16.gmra.mxu0 %v476
      %v3493 = vpop.f32.mrf.mxu0
      %v3494 = vadd.f32 0.0, %v3493
      %v3495 = vpop.f32.mrf.mxu0
      %v3496 = vpop.f32.mrf.mxu0
      %v3497 = vadd.f32 0.0, %v3496
      %v3498 = vpop.f32.mrf.mxu0
      %3499 = vmatprep.mubr.bf16.mxu0 0
      %3500 = vmatmul.mubr.bf16.gmra.mxu0 %v479
      %v3501 = vpop.f32.mrf.mxu0
      %v3502 = vadd.f32 0.0, %v3501
      %v3503 = vpop.f32.mrf.mxu0
      %v3504 = vpop.f32.mrf.mxu0
      %v3505 = vadd.f32 0.0, %v3504
      %v3506 = vpop.f32.mrf.mxu0
      %3507 = vmatprep.mubr.bf16.mxu0 0
      %3508 = vmatmul.mubr.bf16.gmra.mxu0 %v482
      %v3509 = vpop.f32.mrf.mxu0
      %v3510 = vadd.f32 0.0, %v3509
      %v3511 = vpop.f32.mrf.mxu0
      %v3512 = vpop.f32.mrf.mxu0
      %v3513 = vadd.f32 0.0, %v3512
      %v3514 = vpop.f32.mrf.mxu0
      %3515 = vmatprep.mubr.bf16.mxu0 0
      %3516 = vmatmul.mubr.bf16.gmra.mxu0 %v485
      %v3517 = vpop.f32.mrf.mxu0
      %v3518 = vadd.f32 0.0, %v3517
      %v3519 = vpop.f32.mrf.mxu0
      %v3520 = vpop.f32.mrf.mxu0
      %v3521 = vadd.f32 0.0, %v3520
      %v3522 = vpop.f32.mrf.mxu0
      %3523 = vmatprep.mubr.bf16.mxu0 0
      %3524 = vmatmul.mubr.bf16.gmra.mxu0 %v488
      %v3525 = vpop.f32.mrf.mxu0
      %v3526 = vadd.f32 0.0, %v3525
      %v3527 = vpop.f32.mrf.mxu0
      %v3528 = vpop.f32.mrf.mxu0
      %v3529 = vadd.f32 0.0, %v3528
      %v3530 = vpop.f32.mrf.mxu0
      %3531 = vmatprep.mubr.bf16.mxu0 0
      %3532 = vmatmul.mubr.bf16.gmra.mxu0 %v491
      %v3533 = vpop.f32.mrf.mxu0
      %v3534 = vadd.f32 0.0, %v3533
      %v3535 = vpop.f32.mrf.mxu0
      %v3536 = vpop.f32.mrf.mxu0
      %v3537 = vadd.f32 0.0, %v3536
      %v3538 = vpop.f32.mrf.mxu0
      %3539 = vmatprep.mubr.bf16.mxu0 0
      %3540 = vmatmul.mubr.bf16.gmra.mxu0 %v494
      %v3541 = vpop.f32.mrf.mxu0
      %v3542 = vadd.f32 0.0, %v3541
      %v3543 = vpop.f32.mrf.mxu0
      %v3544 = vpop.f32.mrf.mxu0
      %v3545 = vadd.f32 0.0, %v3544
      %v3546 = vpop.f32.mrf.mxu0
      %3547 = vmatprep.mubr.bf16.mxu0 0
      %3548 = vmatmul.mubr.bf16.gmra.mxu0 %v497
      %v3549 = vpop.f32.mrf.mxu0
      %v3550 = vadd.f32 0.0, %v3549
      %v3551 = vpop.f32.mrf.mxu0
      %v3552 = vpop.f32.mrf.mxu0
      %v3553 = vadd.f32 0.0, %v3552
      %v3554 = vpop.f32.mrf.mxu0
      %3555 = vmatprep.mubr.bf16.mxu0 0
      %3556 = vmatmul.mubr.bf16.gmra.mxu0 %v500
      %v3557 = vpop.f32.mrf.mxu0
      %v3558 = vadd.f32 0.0, %v3557
      %v3559 = vpop.f32.mrf.mxu0
      %v3560 = vpop.f32.mrf.mxu0
      %v3561 = vadd.f32 0.0, %v3560
      %v3562 = vpop.f32.mrf.mxu0
      %3563 = vmatprep.mubr.bf16.mxu0 0
      %3564 = vmatmul.mubr.bf16.gmra.mxu0 %v503
      %v3565 = vpop.f32.mrf.mxu0
      %v3566 = vadd.f32 0.0, %v3565
      %v3567 = vpop.f32.mrf.mxu0
      %v3568 = vpop.f32.mrf.mxu0
      %v3569 = vadd.f32 0.0, %v3568
      %v3570 = vpop.f32.mrf.mxu0
      %3571 = vmatprep.mubr.bf16.mxu0 0
      %3572 = vmatmul.mubr.bf16.gmra.mxu0 %v506
      %v3573 = vpop.f32.mrf.mxu0
      %v3574 = vadd.f32 0.0, %v3573
      %v3575 = vpop.f32.mrf.mxu0
      %v3576 = vpop.f32.mrf.mxu0
      %v3577 = vadd.f32 0.0, %v3576
      %v3578 = vpop.f32.mrf.mxu0
      %3579 = vmatprep.mubr.bf16.mxu0 0
      %3580 = vmatmul.mubr.bf16.gmra.mxu0 %v509
      %v3581 = vpop.f32.mrf.mxu0
      %v3582 = vadd.f32 0.0, %v3581
      %v3583 = vpop.f32.mrf.mxu0
      %v3584 = vpop.f32.mrf.mxu0
      %v3585 = vadd.f32 0.0, %v3584
      %v3586 = vpop.f32.mrf.mxu0
      %3587 = vmatprep.mubr.bf16.mxu0 0
      %3588 = vmatmul.mubr.bf16.gmra.mxu0 %v512
      %v3589 = vpop.f32.mrf.mxu0
      %v3590 = vadd.f32 0.0, %v3589
      %v3591 = vpop.f32.mrf.mxu0
      %v3592 = vpop.f32.mrf.mxu0
      %v3593 = vadd.f32 0.0, %v3592
      %v3594 = vpop.f32.mrf.mxu0
      %3595 = vmatprep.mubr.bf16.mxu0 0
      %3596 = vmatmul.mubr.bf16.gmra.mxu0 %v515
      %v3597 = vpop.f32.mrf.mxu0
      %v3598 = vadd.f32 0.0, %v3597
      %v3599 = vpop.f32.mrf.mxu0
      %v3600 = vpop.f32.mrf.mxu0
      %v3601 = vadd.f32 0.0, %v3600
      %v3602 = vpop.f32.mrf.mxu0
      %3603 = vdwg.mxu0
      %v3604 = vld [vmem:[%s680] sm:$0xff]
      %v3605 = vld [vmem:[%s680 + $0x8] sm:$0xff]
      %v3606 = vld [vmem:[%s680 + $0x10] sm:$0xff]
      %v3607 = vld [vmem:[%s680 + $0x18] sm:$0xff]
      %v3608 = vld [vmem:[%s680 + $0x20] sm:$0xff]
      %v3609 = vld [vmem:[%s680 + $0x28] sm:$0xff]
      %v3610 = vld [vmem:[%s680 + $0x30] sm:$0xff]
      %v3611 = vld [vmem:[%s680 + $0x38] sm:$0xff]
      %v3612 = vld [vmem:[%s680 + $0x40] sm:$0xff]
      %v3613 = vld [vmem:[%s680 + $0x48] sm:$0xff]
      %v3614 = vld [vmem:[%s680 + $0x50] sm:$0xff]
      %v3615 = vld [vmem:[%s680 + $0x58] sm:$0xff]
      %v3616 = vld [vmem:[%s680 + $0x60] sm:$0xff]
      %v3617 = vld [vmem:[%s680 + $0x68] sm:$0xff]
      %v3618 = vld [vmem:[%s680 + $0x70] sm:$0xff]
      %v3619 = vld [vmem:[%s680 + $0x78] sm:$0xff]
      %v3620 = vld [vmem:[%s680 + $0x80] sm:$0xff]
      %v3621 = vld [vmem:[%s680 + $0x88] sm:$0xff]
      %v3622 = vld [vmem:[%s680 + $0x90] sm:$0xff]
      %v3623 = vld [vmem:[%s680 + $0x98] sm:$0xff]
      %v3624 = vld [vmem:[%s680 + $0xa0] sm:$0xff]
      %v3625 = vld [vmem:[%s680 + $0xa8] sm:$0xff]
      %v3626 = vld [vmem:[%s680 + $0xb0] sm:$0xff]
      %v3627 = vld [vmem:[%s680 + $0xb8] sm:$0xff]
      %v3628 = vld [vmem:[%s680 + $0xc0] sm:$0xff]
      %v3629 = vld [vmem:[%s680 + $0xc8] sm:$0xff]
      %v3630 = vld [vmem:[%s680 + $0xd0] sm:$0xff]
      %v3631 = vld [vmem:[%s680 + $0xd8] sm:$0xff]
      %v3632 = vld [vmem:[%s680 + $0xe0] sm:$0xff]
      %v3633 = vld [vmem:[%s680 + $0xe8] sm:$0xff]
      %v3634 = vld [vmem:[%s680 + $0xf0] sm:$0xff]
      %v3635 = vld [vmem:[%s680 + $0xf8] sm:$0xff]
      %v3636 = vadd.f32 %v3604, %v3478
      %v3637 = vadd.f32 %v3605, %v3481
      %v3638 = vadd.f32 %v3606, %v3486
      %v3639 = vadd.f32 %v3607, %v3489
      %v3640 = vadd.f32 %v3608, %v3494
      %v3641 = vadd.f32 %v3609, %v3497
      %v3642 = vadd.f32 %v3610, %v3502
      %v3643 = vadd.f32 %v3611, %v3505
      %v3644 = vadd.f32 %v3612, %v3510
      %v3645 = vadd.f32 %v3613, %v3513
      %v3646 = vadd.f32 %v3614, %v3518
      %v3647 = vadd.f32 %v3615, %v3521
      %v3648 = vadd.f32 %v3616, %v3526
      %v3649 = vadd.f32 %v3617, %v3529
      %v3650 = vadd.f32 %v3618, %v3534
      %v3651 = vadd.f32 %v3619, %v3537
      %v3652 = vadd.f32 %v3620, %v3542
      %v3653 = vadd.f32 %v3621, %v3545
      %v3654 = vadd.f32 %v3622, %v3550
      %v3655 = vadd.f32 %v3623, %v3553
      %v3656 = vadd.f32 %v3624, %v3558
      %v3657 = vadd.f32 %v3625, %v3561
      %v3658 = vadd.f32 %v3626, %v3566
      %v3659 = vadd.f32 %v3627, %v3569
      %v3660 = vadd.f32 %v3628, %v3574
      %v3661 = vadd.f32 %v3629, %v3577
      %v3662 = vadd.f32 %v3630, %v3582
      %v3663 = vadd.f32 %v3631, %v3585
      %v3664 = vadd.f32 %v3632, %v3590
      %v3665 = vadd.f32 %v3633, %v3593
      %v3666 = vadd.f32 %v3634, %v3598
      %v3667 = vadd.f32 %v3635, %v3601
      %3668 = vst.msk [vmem:[%s680] sm:$0xff] %vm226, %v3636
      %3669 = vst.msk [vmem:[%s680 + $0x8] sm:$0xff] %vm226, %v3637
      %3670 = vst.msk [vmem:[%s680 + $0x10] sm:$0xff] %vm226, %v3638
      %3671 = vst.msk [vmem:[%s680 + $0x18] sm:$0xff] %vm226, %v3639
      %3672 = vst.msk [vmem:[%s680 + $0x20] sm:$0xff] %vm226, %v3640
      %3673 = vst.msk [vmem:[%s680 + $0x28] sm:$0xff] %vm226, %v3641
      %3674 = vst.msk [vmem:[%s680 + $0x30] sm:$0xff] %vm226, %v3642
      %3675 = vst.msk [vmem:[%s680 + $0x38] sm:$0xff] %vm226, %v3643
      %3676 = vst.msk [vmem:[%s680 + $0x40] sm:$0xff] %vm226, %v3644
      %3677 = vst.msk [vmem:[%s680 + $0x48] sm:$0xff] %vm226, %v3645
      %3678 = vst.msk [vmem:[%s680 + $0x50] sm:$0xff] %vm226, %v3646
      %3679 = vst.msk [vmem:[%s680 + $0x58] sm:$0xff] %vm226, %v3647
      %3680 = vst.msk [vmem:[%s680 + $0x60] sm:$0xff] %vm226, %v3648
      %3681 = vst.msk [vmem:[%s680 + $0x68] sm:$0xff] %vm226, %v3649
      %3682 = vst.msk [vmem:[%s680 + $0x70] sm:$0xff] %vm226, %v3650
      %3683 = vst.msk [vmem:[%s680 + $0x78] sm:$0xff] %vm226, %v3651
      %3684 = vst.msk [vmem:[%s680 + $0x80] sm:$0xff] %vm226, %v3652
      %3685 = vst.msk [vmem:[%s680 + $0x88] sm:$0xff] %vm226, %v3653
      %3686 = vst.msk [vmem:[%s680 + $0x90] sm:$0xff] %vm226, %v3654
      %3687 = vst.msk [vmem:[%s680 + $0x98] sm:$0xff] %vm226, %v3655
      %3688 = vst.msk [vmem:[%s680 + $0xa0] sm:$0xff] %vm226, %v3656
      %3689 = vst.msk [vmem:[%s680 + $0xa8] sm:$0xff] %vm226, %v3657
      %3690 = vst.msk [vmem:[%s680 + $0xb0] sm:$0xff] %vm226, %v3658
      %3691 = vst.msk [vmem:[%s680 + $0xb8] sm:$0xff] %vm226, %v3659
      %3692 = vst.msk [vmem:[%s680 + $0xc0] sm:$0xff] %vm226, %v3660
      %3693 = vst.msk [vmem:[%s680 + $0xc8] sm:$0xff] %vm226, %v3661
      %3694 = vst.msk [vmem:[%s680 + $0xd0] sm:$0xff] %vm226, %v3662
      %3695 = vst.msk [vmem:[%s680 + $0xd8] sm:$0xff] %vm226, %v3663
      %3696 = vst.msk [vmem:[%s680 + $0xe0] sm:$0xff] %vm226, %v3664
      %3697 = vst.msk [vmem:[%s680 + $0xe8] sm:$0xff] %vm226, %v3665
      %3698 = vst.msk [vmem:[%s680 + $0xf0] sm:$0xff] %vm226, %v3666
      %3699 = vst.msk [vmem:[%s680 + $0xf8] sm:$0xff] %vm226, %v3667
      %s3700 = scalar_lea.vmem %s1, 44
      %v3701 = vld [vmem:[%s3700] sm:$0xf]
      %v3703 = vsel %vm517, %v3701, 0
      %3705 = vmatprep.subr.bf16.mxu0 0
      %3706 = vmatpush1.bf16.msra.mxu0 0
      %3707 = vmatprep.subr.bf16.mxu0 0
      %3708 = vmatpush1.bf16.msra.mxu0 0
      %3709 = vmatprep.subr.bf16.mxu0 0
      %3710 = vmatpush1.bf16.msra.mxu0 0
      %3711 = vmatprep.subr.bf16.mxu0 0
      %3712 = vmatpush1.bf16.msra.mxu0 0
      %3713 = vmatprep.subr.bf16.mxu0 0
      %3714 = vmatpush1.bf16.msra.mxu0 0
      %3715 = vmatprep.subr.bf16.mxu0 0
      %3716 = vmatpush1.bf16.msra.mxu0 0
      %3717 = vmatprep.subr.bf16.mxu0 0
      %3718 = vmatpush1.bf16.msra.mxu0 0
      %3719 = vmatprep.subr.bf16.mxu0 0
      %3720 = vmatpush1.bf16.msra.mxu0 %v3703
      %3721 = vmatprep.subr.bf16.mxu0 0
      %3722 = vmatpush2.bf16.msra.mxu0 0
      %3723 = vmatprep.subr.bf16.mxu0 0
      %3724 = vmatpush2.bf16.msra.mxu0 0
      %3725 = vmatprep.subr.bf16.mxu0 0
      %3726 = vmatpush2.bf16.msra.mxu0 0
      %3727 = vmatprep.subr.bf16.mxu0 0
      %3728 = vmatpush2.bf16.msra.mxu0 0
      %3729 = vmatprep.subr.bf16.mxu0 0
      %3730 = vmatpush2.bf16.msra.mxu0 0
      %3731 = vmatprep.subr.bf16.mxu0 0
      %3732 = vmatpush2.bf16.msra.mxu0 0
      %3733 = vmatprep.subr.bf16.mxu0 0
      %3734 = vmatpush2.bf16.msra.mxu0 0
      %3735 = vmatprep.subr.bf16.mxu0 0
      %3736 = vmatpush2.bf16.msra.mxu0 0
      %3737 = vmatprep.mubr.bf16.mxu0 0
      %3738 = vmatmul.mubr.bf16.gmra.mxu0 %v470
      %v3739 = vpop.f32.mrf.mxu0
      %v3740 = vadd.f32 0.0, %v3739
      %v3741 = vpop.f32.mrf.mxu0
      %v3742 = vpop.f32.mrf.mxu0
      %v3743 = vadd.f32 0.0, %v3742
      %v3744 = vpop.f32.mrf.mxu0
      %3745 = vmatprep.mubr.bf16.mxu0 0
      %3746 = vmatmul.mubr.bf16.gmra.mxu0 %v473
      %v3747 = vpop.f32.mrf.mxu0
      %v3748 = vadd.f32 0.0, %v3747
      %v3749 = vpop.f32.mrf.mxu0
      %v3750 = vpop.f32.mrf.mxu0
      %v3751 = vadd.f32 0.0, %v3750
      %v3752 = vpop.f32.mrf.mxu0
      %3753 = vmatprep.mubr.bf16.mxu0 0
      %3754 = vmatmul.mubr.bf16.gmra.mxu0 %v476
      %v3755 = vpop.f32.mrf.mxu0
      %v3756 = vadd.f32 0.0, %v3755
      %v3757 = vpop.f32.mrf.mxu0
      %v3758 = vpop.f32.mrf.mxu0
      %v3759 = vadd.f32 0.0, %v3758
      %v3760 = vpop.f32.mrf.mxu0
      %3761 = vmatprep.mubr.bf16.mxu0 0
      %3762 = vmatmul.mubr.bf16.gmra.mxu0 %v479
      %v3763 = vpop.f32.mrf.mxu0
      %v3764 = vadd.f32 0.0, %v3763
      %v3765 = vpop.f32.mrf.mxu0
      %v3766 = vpop.f32.mrf.mxu0
      %v3767 = vadd.f32 0.0, %v3766
      %v3768 = vpop.f32.mrf.mxu0
      %3769 = vmatprep.mubr.bf16.mxu0 0
      %3770 = vmatmul.mubr.bf16.gmra.mxu0 %v482
      %v3771 = vpop.f32.mrf.mxu0
      %v3772 = vadd.f32 0.0, %v3771
      %v3773 = vpop.f32.mrf.mxu0
      %v3774 = vpop.f32.mrf.mxu0
      %v3775 = vadd.f32 0.0, %v3774
      %v3776 = vpop.f32.mrf.mxu0
      %3777 = vmatprep.mubr.bf16.mxu0 0
      %3778 = vmatmul.mubr.bf16.gmra.mxu0 %v485
      %v3779 = vpop.f32.mrf.mxu0
      %v3780 = vadd.f32 0.0, %v3779
      %v3781 = vpop.f32.mrf.mxu0
      %v3782 = vpop.f32.mrf.mxu0
      %v3783 = vadd.f32 0.0, %v3782
      %v3784 = vpop.f32.mrf.mxu0
      %3785 = vmatprep.mubr.bf16.mxu0 0
      %3786 = vmatmul.mubr.bf16.gmra.mxu0 %v488
      %v3787 = vpop.f32.mrf.mxu0
      %v3788 = vadd.f32 0.0, %v3787
      %v3789 = vpop.f32.mrf.mxu0
      %v3790 = vpop.f32.mrf.mxu0
      %v3791 = vadd.f32 0.0, %v3790
      %v3792 = vpop.f32.mrf.mxu0
      %3793 = vmatprep.mubr.bf16.mxu0 0
      %3794 = vmatmul.mubr.bf16.gmra.mxu0 %v491
      %v3795 = vpop.f32.mrf.mxu0
      %v3796 = vadd.f32 0.0, %v3795
      %v3797 = vpop.f32.mrf.mxu0
      %v3798 = vpop.f32.mrf.mxu0
      %v3799 = vadd.f32 0.0, %v3798
      %v3800 = vpop.f32.mrf.mxu0
      %3801 = vmatprep.mubr.bf16.mxu0 0
      %3802 = vmatmul.mubr.bf16.gmra.mxu0 %v494
      %v3803 = vpop.f32.mrf.mxu0
      %v3804 = vadd.f32 0.0, %v3803
      %v3805 = vpop.f32.mrf.mxu0
      %v3806 = vpop.f32.mrf.mxu0
      %v3807 = vadd.f32 0.0, %v3806
      %v3808 = vpop.f32.mrf.mxu0
      %3809 = vmatprep.mubr.bf16.mxu0 0
      %3810 = vmatmul.mubr.bf16.gmra.mxu0 %v497
      %v3811 = vpop.f32.mrf.mxu0
      %v3812 = vadd.f32 0.0, %v3811
      %v3813 = vpop.f32.mrf.mxu0
      %v3814 = vpop.f32.mrf.mxu0
      %v3815 = vadd.f32 0.0, %v3814
      %v3816 = vpop.f32.mrf.mxu0
      %3817 = vmatprep.mubr.bf16.mxu0 0
      %3818 = vmatmul.mubr.bf16.gmra.mxu0 %v500
      %v3819 = vpop.f32.mrf.mxu0
      %v3820 = vadd.f32 0.0, %v3819
      %v3821 = vpop.f32.mrf.mxu0
      %v3822 = vpop.f32.mrf.mxu0
      %v3823 = vadd.f32 0.0, %v3822
      %v3824 = vpop.f32.mrf.mxu0
      %3825 = vmatprep.mubr.bf16.mxu0 0
      %3826 = vmatmul.mubr.bf16.gmra.mxu0 %v503
      %v3827 = vpop.f32.mrf.mxu0
      %v3828 = vadd.f32 0.0, %v3827
      %v3829 = vpop.f32.mrf.mxu0
      %v3830 = vpop.f32.mrf.mxu0
      %v3831 = vadd.f32 0.0, %v3830
      %v3832 = vpop.f32.mrf.mxu0
      %3833 = vmatprep.mubr.bf16.mxu0 0
      %3834 = vmatmul.mubr.bf16.gmra.mxu0 %v506
      %v3835 = vpop.f32.mrf.mxu0
      %v3836 = vadd.f32 0.0, %v3835
      %v3837 = vpop.f32.mrf.mxu0
      %v3838 = vpop.f32.mrf.mxu0
      %v3839 = vadd.f32 0.0, %v3838
      %v3840 = vpop.f32.mrf.mxu0
      %3841 = vmatprep.mubr.bf16.mxu0 0
      %3842 = vmatmul.mubr.bf16.gmra.mxu0 %v509
      %v3843 = vpop.f32.mrf.mxu0
      %v3844 = vadd.f32 0.0, %v3843
      %v3845 = vpop.f32.mrf.mxu0
      %v3846 = vpop.f32.mrf.mxu0
      %v3847 = vadd.f32 0.0, %v3846
      %v3848 = vpop.f32.mrf.mxu0
      %3849 = vmatprep.mubr.bf16.mxu0 0
      %3850 = vmatmul.mubr.bf16.gmra.mxu0 %v512
      %v3851 = vpop.f32.mrf.mxu0
      %v3852 = vadd.f32 0.0, %v3851
      %v3853 = vpop.f32.mrf.mxu0
      %v3854 = vpop.f32.mrf.mxu0
      %v3855 = vadd.f32 0.0, %v3854
      %v3856 = vpop.f32.mrf.mxu0
      %3857 = vmatprep.mubr.bf16.mxu0 0
      %3858 = vmatmul.mubr.bf16.gmra.mxu0 %v515
      %v3859 = vpop.f32.mrf.mxu0
      %v3860 = vadd.f32 0.0, %v3859
      %v3861 = vpop.f32.mrf.mxu0
      %v3862 = vpop.f32.mrf.mxu0
      %v3863 = vadd.f32 0.0, %v3862
      %v3864 = vpop.f32.mrf.mxu0
      %3865 = vdwg.mxu0
      %v3866 = vld [vmem:[%s1042 + $0x1] sm:$0xff]
      %v3867 = vld [vmem:[%s1042 + $0x9] sm:$0x7f]
      %v3868 = vld [vmem:[%s1042 + $0x11] sm:$0xff]
      %v3869 = vld [vmem:[%s1042 + $0x19] sm:$0x7f]
      %v3870 = vld [vmem:[%s1042 + $0x21] sm:$0xff]
      %v3871 = vld [vmem:[%s1042 + $0x29] sm:$0x7f]
      %v3872 = vld [vmem:[%s1042 + $0x31] sm:$0xff]
      %v3873 = vld [vmem:[%s1042 + $0x39] sm:$0x7f]
      %v3874 = vld [vmem:[%s1042 + $0x41] sm:$0xff]
      %v3875 = vld [vmem:[%s1042 + $0x49] sm:$0x7f]
      %v3876 = vld [vmem:[%s1042 + $0x51] sm:$0xff]
      %v3877 = vld [vmem:[%s1042 + $0x59] sm:$0x7f]
      %v3878 = vld [vmem:[%s1042 + $0x61] sm:$0xff]
      %v3879 = vld [vmem:[%s1042 + $0x69] sm:$0x7f]
      %v3880 = vld [vmem:[%s1042 + $0x71] sm:$0xff]
      %v3881 = vld [vmem:[%s1042 + $0x79] sm:$0x7f]
      %v3882 = vld [vmem:[%s1042 + $0x81] sm:$0xff]
      %v3883 = vld [vmem:[%s1042 + $0x89] sm:$0x7f]
      %v3884 = vld [vmem:[%s1042 + $0x91] sm:$0xff]
      %v3885 = vld [vmem:[%s1042 + $0x99] sm:$0x7f]
      %v3886 = vld [vmem:[%s1042 + $0xa1] sm:$0xff]
      %v3887 = vld [vmem:[%s1042 + $0xa9] sm:$0x7f]
      %v3888 = vld [vmem:[%s1042 + $0xb1] sm:$0xff]
      %v3889 = vld [vmem:[%s1042 + $0xb9] sm:$0x7f]
      %v3890 = vld [vmem:[%s1042 + $0xc1] sm:$0xff]
      %v3891 = vld [vmem:[%s1042 + $0xc9] sm:$0x7f]
      %v3892 = vld [vmem:[%s1042 + $0xd1] sm:$0xff]
      %v3893 = vld [vmem:[%s1042 + $0xd9] sm:$0x7f]
      %v3894 = vld [vmem:[%s1042 + $0xe1] sm:$0xff]
      %v3895 = vld [vmem:[%s1042 + $0xe9] sm:$0x7f]
      %v3896 = vld [vmem:[%s1042 + $0xf1] sm:$0xff]
      %v3897 = vld [vmem:[%s1042 + $0xf9] sm:$0x7f]
      %v3898 = vadd.f32 %v3866, %v3740
      %v3899 = vadd.f32 %v3867, %v3743
      %v3900 = vadd.f32 %v3868, %v3748
      %v3901 = vadd.f32 %v3869, %v3751
      %v3902 = vadd.f32 %v3870, %v3756
      %v3903 = vadd.f32 %v3871, %v3759
      %v3904 = vadd.f32 %v3872, %v3764
      %v3905 = vadd.f32 %v3873, %v3767
      %v3906 = vadd.f32 %v3874, %v3772
      %v3907 = vadd.f32 %v3875, %v3775
      %v3908 = vadd.f32 %v3876, %v3780
      %v3909 = vadd.f32 %v3877, %v3783
      %v3910 = vadd.f32 %v3878, %v3788
      %v3911 = vadd.f32 %v3879, %v3791
      %v3912 = vadd.f32 %v3880, %v3796
      %v3913 = vadd.f32 %v3881, %v3799
      %v3914 = vadd.f32 %v3882, %v3804
      %v3915 = vadd.f32 %v3883, %v3807
      %v3916 = vadd.f32 %v3884, %v3812
      %v3917 = vadd.f32 %v3885, %v3815
      %v3918 = vadd.f32 %v3886, %v3820
      %v3919 = vadd.f32 %v3887, %v3823
      %v3920 = vadd.f32 %v3888, %v3828
      %v3921 = vadd.f32 %v3889, %v3831
      %v3922 = vadd.f32 %v3890, %v3836
      %v3923 = vadd.f32 %v3891, %v3839
      %v3924 = vadd.f32 %v3892, %v3844
      %v3925 = vadd.f32 %v3893, %v3847
      %v3926 = vadd.f32 %v3894, %v3852
      %v3927 = vadd.f32 %v3895, %v3855
      %v3928 = vadd.f32 %v3896, %v3860
      %v3929 = vadd.f32 %v3897, %v3863
      %3930 = vst.msk [vmem:[%s1042 + $0x1] sm:$0xff] %vm226, %v3898
      %3931 = vst.msk [vmem:[%s1042 + $0x9] sm:$0x7f] %vm848, %v3899
      %3932 = vst.msk [vmem:[%s1042 + $0x11] sm:$0xff] %vm226, %v3900
      %3933 = vst.msk [vmem:[%s1042 + $0x19] sm:$0x7f] %vm848, %v3901
      %3934 = vst.msk [vmem:[%s1042 + $0x21] sm:$0xff] %vm226, %v3902
      %3935 = vst.msk [vmem:[%s1042 + $0x29] sm:$0x7f] %vm848, %v3903
      %3936 = vst.msk [vmem:[%s1042 + $0x31] sm:$0xff] %vm226, %v3904
      %3937 = vst.msk [vmem:[%s1042 + $0x39] sm:$0x7f] %vm848, %v3905
      %3938 = vst.msk [vmem:[%s1042 + $0x41] sm:$0xff] %vm226, %v3906
      %3939 = vst.msk [vmem:[%s1042 + $0x49] sm:$0x7f] %vm848, %v3907
      %3940 = vst.msk [vmem:[%s1042 + $0x51] sm:$0xff] %vm226, %v3908
      %3941 = vst.msk [vmem:[%s1042 + $0x59] sm:$0x7f] %vm848, %v3909
      %3942 = vst.msk [vmem:[%s1042 + $0x61] sm:$0xff] %vm226, %v3910
      %3943 = vst.msk [vmem:[%s1042 + $0x69] sm:$0x7f] %vm848, %v3911
      %3944 = vst.msk [vmem:[%s1042 + $0x71] sm:$0xff] %vm226, %v3912
      %3945 = vst.msk [vmem:[%s1042 + $0x79] sm:$0x7f] %vm848, %v3913
      %3946 = vst.msk [vmem:[%s1042 + $0x81] sm:$0xff] %vm226, %v3914
      %3947 = vst.msk [vmem:[%s1042 + $0x89] sm:$0x7f] %vm848, %v3915
      %3948 = vst.msk [vmem:[%s1042 + $0x91] sm:$0xff] %vm226, %v3916
      %3949 = vst.msk [vmem:[%s1042 + $0x99] sm:$0x7f] %vm848, %v3917
      %3950 = vst.msk [vmem:[%s1042 + $0xa1] sm:$0xff] %vm226, %v3918
      %3951 = vst.msk [vmem:[%s1042 + $0xa9] sm:$0x7f] %vm848, %v3919
      %3952 = vst.msk [vmem:[%s1042 + $0xb1] sm:$0xff] %vm226, %v3920
      %3953 = vst.msk [vmem:[%s1042 + $0xb9] sm:$0x7f] %vm848, %v3921
      %3954 = vst.msk [vmem:[%s1042 + $0xc1] sm:$0xff] %vm226, %v3922
      %3955 = vst.msk [vmem:[%s1042 + $0xc9] sm:$0x7f] %vm848, %v3923
      %3956 = vst.msk [vmem:[%s1042 + $0xd1] sm:$0xff] %vm226, %v3924
      %3957 = vst.msk [vmem:[%s1042 + $0xd9] sm:$0x7f] %vm848, %v3925
      %3958 = vst.msk [vmem:[%s1042 + $0xe1] sm:$0xff] %vm226, %v3926
      %3959 = vst.msk [vmem:[%s1042 + $0xe9] sm:$0x7f] %vm848, %v3927
      %3960 = vst.msk [vmem:[%s1042 + $0xf1] sm:$0xff] %vm226, %v3928
      %3961 = vst.msk [vmem:[%s1042 + $0xf9] sm:$0x7f] %vm848, %v3929
      %s3962 = scalar_lea.vmem %s1, 48
      %v3963 = vld [vmem:[%s3962] sm:$0xf]
      %v3965 = vsel %vm517, %v3963, 0
      %3967 = vmatprep.subr.bf16.mxu0 0
      %3968 = vmatpush1.bf16.msra.mxu0 0
      %3969 = vmatprep.subr.bf16.mxu0 0
      %3970 = vmatpush1.bf16.msra.mxu0 0
      %3971 = vmatprep.subr.bf16.mxu0 0
      %3972 = vmatpush1.bf16.msra.mxu0 0
      %3973 = vmatprep.subr.bf16.mxu0 0
      %3974 = vmatpush1.bf16.msra.mxu0 0
      %3975 = vmatprep.subr.bf16.mxu0 0
      %3976 = vmatpush1.bf16.msra.mxu0 0
      %3977 = vmatprep.subr.bf16.mxu0 0
      %3978 = vmatpush1.bf16.msra.mxu0 0
      %3979 = vmatprep.subr.bf16.mxu0 0
      %3980 = vmatpush1.bf16.msra.mxu0 0
      %3981 = vmatprep.subr.bf16.mxu0 0
      %3982 = vmatpush1.bf16.msra.mxu0 %v3965
      %3983 = vmatprep.subr.bf16.mxu0 0
      %3984 = vmatpush2.bf16.msra.mxu0 0
      %3985 = vmatprep.subr.bf16.mxu0 0
      %3986 = vmatpush2.bf16.msra.mxu0 0
      %3987 = vmatprep.subr.bf16.mxu0 0
      %3988 = vmatpush2.bf16.msra.mxu0 0
      %3989 = vmatprep.subr.bf16.mxu0 0
      %3990 = vmatpush2.bf16.msra.mxu0 0
      %3991 = vmatprep.subr.bf16.mxu0 0
      %3992 = vmatpush2.bf16.msra.mxu0 0
      %3993 = vmatprep.subr.bf16.mxu0 0
      %3994 = vmatpush2.bf16.msra.mxu0 0
      %3995 = vmatprep.subr.bf16.mxu0 0
      %3996 = vmatpush2.bf16.msra.mxu0 0
      %3997 = vmatprep.subr.bf16.mxu0 0
      %3998 = vmatpush2.bf16.msra.mxu0 0
      %3999 = vmatprep.mubr.bf16.mxu0 0
      %4000 = vmatmul.mubr.bf16.gmra.mxu0 %v470
      %v4001 = vpop.f32.mrf.mxu0
      %v4002 = vadd.f32 0.0, %v4001
      %v4003 = vpop.f32.mrf.mxu0
      %v4004 = vpop.f32.mrf.mxu0
      %v4005 = vadd.f32 0.0, %v4004
      %v4006 = vpop.f32.mrf.mxu0
      %4007 = vmatprep.mubr.bf16.mxu0 0
      %4008 = vmatmul.mubr.bf16.gmra.mxu0 %v473
      %v4009 = vpop.f32.mrf.mxu0
      %v4010 = vadd.f32 0.0, %v4009
      %v4011 = vpop.f32.mrf.mxu0
      %v4012 = vpop.f32.mrf.mxu0
      %v4013 = vadd.f32 0.0, %v4012
      %v4014 = vpop.f32.mrf.mxu0
      %4015 = vmatprep.mubr.bf16.mxu0 0
      %4016 = vmatmul.mubr.bf16.gmra.mxu0 %v476
      %v4017 = vpop.f32.mrf.mxu0
      %v4018 = vadd.f32 0.0, %v4017
      %v4019 = vpop.f32.mrf.mxu0
      %v4020 = vpop.f32.mrf.mxu0
      %v4021 = vadd.f32 0.0, %v4020
      %v4022 = vpop.f32.mrf.mxu0
      %4023 = vmatprep.mubr.bf16.mxu0 0
      %4024 = vmatmul.mubr.bf16.gmra.mxu0 %v479
      %v4025 = vpop.f32.mrf.mxu0
      %v4026 = vadd.f32 0.0, %v4025
      %v4027 = vpop.f32.mrf.mxu0
      %v4028 = vpop.f32.mrf.mxu0
      %v4029 = vadd.f32 0.0, %v4028
      %v4030 = vpop.f32.mrf.mxu0
      %4031 = vmatprep.mubr.bf16.mxu0 0
      %4032 = vmatmul.mubr.bf16.gmra.mxu0 %v482
      %v4033 = vpop.f32.mrf.mxu0
      %v4034 = vadd.f32 0.0, %v4033
      %v4035 = vpop.f32.mrf.mxu0
      %v4036 = vpop.f32.mrf.mxu0
      %v4037 = vadd.f32 0.0, %v4036
      %v4038 = vpop.f32.mrf.mxu0
      %4039 = vmatprep.mubr.bf16.mxu0 0
      %4040 = vmatmul.mubr.bf16.gmra.mxu0 %v485
      %v4041 = vpop.f32.mrf.mxu0
      %v4042 = vadd.f32 0.0, %v4041
      %v4043 = vpop.f32.mrf.mxu0
      %v4044 = vpop.f32.mrf.mxu0
      %v4045 = vadd.f32 0.0, %v4044
      %v4046 = vpop.f32.mrf.mxu0
      %4047 = vmatprep.mubr.bf16.mxu0 0
      %4048 = vmatmul.mubr.bf16.gmra.mxu0 %v488
      %v4049 = vpop.f32.mrf.mxu0
      %v4050 = vadd.f32 0.0, %v4049
      %v4051 = vpop.f32.mrf.mxu0
      %v4052 = vpop.f32.mrf.mxu0
      %v4053 = vadd.f32 0.0, %v4052
      %v4054 = vpop.f32.mrf.mxu0
      %4055 = vmatprep.mubr.bf16.mxu0 0
      %4056 = vmatmul.mubr.bf16.gmra.mxu0 %v491
      %v4057 = vpop.f32.mrf.mxu0
      %v4058 = vadd.f32 0.0, %v4057
      %v4059 = vpop.f32.mrf.mxu0
      %v4060 = vpop.f32.mrf.mxu0
      %v4061 = vadd.f32 0.0, %v4060
      %v4062 = vpop.f32.mrf.mxu0
      %4063 = vmatprep.mubr.bf16.mxu0 0
      %4064 = vmatmul.mubr.bf16.gmra.mxu0 %v494
      %v4065 = vpop.f32.mrf.mxu0
      %v4066 = vadd.f32 0.0, %v4065
      %v4067 = vpop.f32.mrf.mxu0
      %v4068 = vpop.f32.mrf.mxu0
      %v4069 = vadd.f32 0.0, %v4068
      %v4070 = vpop.f32.mrf.mxu0
      %4071 = vmatprep.mubr.bf16.mxu0 0
      %4072 = vmatmul.mubr.bf16.gmra.mxu0 %v497
      %v4073 = vpop.f32.mrf.mxu0
      %v4074 = vadd.f32 0.0, %v4073
      %v4075 = vpop.f32.mrf.mxu0
      %v4076 = vpop.f32.mrf.mxu0
      %v4077 = vadd.f32 0.0, %v4076
      %v4078 = vpop.f32.mrf.mxu0
      %4079 = vmatprep.mubr.bf16.mxu0 0
      %4080 = vmatmul.mubr.bf16.gmra.mxu0 %v500
      %v4081 = vpop.f32.mrf.mxu0
      %v4082 = vadd.f32 0.0, %v4081
      %v4083 = vpop.f32.mrf.mxu0
      %v4084 = vpop.f32.mrf.mxu0
      %v4085 = vadd.f32 0.0, %v4084
      %v4086 = vpop.f32.mrf.mxu0
      %4087 = vmatprep.mubr.bf16.mxu0 0
      %4088 = vmatmul.mubr.bf16.gmra.mxu0 %v503
      %v4089 = vpop.f32.mrf.mxu0
      %v4090 = vadd.f32 0.0, %v4089
      %v4091 = vpop.f32.mrf.mxu0
      %v4092 = vpop.f32.mrf.mxu0
      %v4093 = vadd.f32 0.0, %v4092
      %v4094 = vpop.f32.mrf.mxu0
      %4095 = vmatprep.mubr.bf16.mxu0 0
      %4096 = vmatmul.mubr.bf16.gmra.mxu0 %v506
      %v4097 = vpop.f32.mrf.mxu0
      %v4098 = vadd.f32 0.0, %v4097
      %v4099 = vpop.f32.mrf.mxu0
      %v4100 = vpop.f32.mrf.mxu0
      %v4101 = vadd.f32 0.0, %v4100
      %v4102 = vpop.f32.mrf.mxu0
      %4103 = vmatprep.mubr.bf16.mxu0 0
      %4104 = vmatmul.mubr.bf16.gmra.mxu0 %v509
      %v4105 = vpop.f32.mrf.mxu0
      %v4106 = vadd.f32 0.0, %v4105
      %v4107 = vpop.f32.mrf.mxu0
      %v4108 = vpop.f32.mrf.mxu0
      %v4109 = vadd.f32 0.0, %v4108
      %v4110 = vpop.f32.mrf.mxu0
      %4111 = vmatprep.mubr.bf16.mxu0 0
      %4112 = vmatmul.mubr.bf16.gmra.mxu0 %v512
      %v4113 = vpop.f32.mrf.mxu0
      %v4114 = vadd.f32 0.0, %v4113
      %v4115 = vpop.f32.mrf.mxu0
      %v4116 = vpop.f32.mrf.mxu0
      %v4117 = vadd.f32 0.0, %v4116
      %v4118 = vpop.f32.mrf.mxu0
      %4119 = vmatprep.mubr.bf16.mxu0 0
      %4120 = vmatmul.mubr.bf16.gmra.mxu0 %v515
      %v4121 = vpop.f32.mrf.mxu0
      %v4122 = vpop.f32.mrf.mxu0
      %v4123 = vpop.f32.mrf.mxu0
      %v4124 = vpop.f32.mrf.mxu0
      %4125 = vdwg.mxu0
      %s4126 = scalar_lea.vmem [#allocation2], 272
      %v4127 = vld [vmem:[%s4126] sm:$0xff]
      %v4128 = vld [vmem:[%s4126 + $0x8] sm:$0x7f]
      %v4129 = vld [vmem:[%s4126 + $0x10] sm:$0xff]
      %v4130 = vld [vmem:[%s4126 + $0x18] sm:$0x7f]
      %v4131 = vld [vmem:[%s4126 + $0x20] sm:$0xff]
      %v4132 = vld [vmem:[%s4126 + $0x28] sm:$0x7f]
      %v4133 = vld [vmem:[%s4126 + $0x30] sm:$0xff]
      %v4134 = vld [vmem:[%s4126 + $0x38] sm:$0x7f]
      %v4135 = vld [vmem:[%s4126 + $0x40] sm:$0xff]
      %v4136 = vld [vmem:[%s4126 + $0x48] sm:$0x7f]
      %v4137 = vld [vmem:[%s4126 + $0x50] sm:$0xff]
      %v4138 = vld [vmem:[%s4126 + $0x58] sm:$0x7f]
      %v4139 = vld [vmem:[%s4126 + $0x60] sm:$0xff]
      %v4140 = vld [vmem:[%s4126 + $0x68] sm:$0x7f]
      %v4141 = vld [vmem:[%s4126 + $0x70] sm:$0xff]
      %v4142 = vld [vmem:[%s4126 + $0x78] sm:$0x7f]
      %v4143 = vld [vmem:[%s4126 + $0x80] sm:$0xff]
      %v4144 = vld [vmem:[%s4126 + $0x88] sm:$0x7f]
      %v4145 = vld [vmem:[%s4126 + $0x90] sm:$0xff]
      %v4146 = vld [vmem:[%s4126 + $0x98] sm:$0x7f]
      %v4147 = vld [vmem:[%s4126 + $0xa0] sm:$0xff]
      %v4148 = vld [vmem:[%s4126 + $0xa8] sm:$0x7f]
      %v4149 = vld [vmem:[%s4126 + $0xb0] sm:$0xff]
      %v4150 = vld [vmem:[%s4126 + $0xb8] sm:$0x7f]
      %v4151 = vld [vmem:[%s4126 + $0xc0] sm:$0xff]
      %v4152 = vld [vmem:[%s4126 + $0xc8] sm:$0x7f]
      %v4153 = vld [vmem:[%s4126 + $0xd0] sm:$0xff]
      %v4154 = vld [vmem:[%s4126 + $0xd8] sm:$0x7f]
      %v4155 = vld [vmem:[%s4126 + $0xe0] sm:$0xff]
      %v4156 = vld [vmem:[%s4126 + $0xe8] sm:$0x7f]
      %v4187 = vrot.slane %v4002, 1
      %v4188 = vrot.slane %v4005, 1
      %v4189 = vsel %vm741, %v4187, %v4188
      %v4190 = vrot.slane %v4010, 1
      %v4191 = vrot.slane %v4013, 1
      %v4192 = vsel %vm741, %v4190, %v4191
      %v4193 = vrot.slane %v4018, 1
      %v4194 = vrot.slane %v4021, 1
      %v4195 = vsel %vm741, %v4193, %v4194
      %v4196 = vrot.slane %v4026, 1
      %v4197 = vrot.slane %v4029, 1
      %v4198 = vsel %vm741, %v4196, %v4197
      %v4199 = vrot.slane %v4034, 1
      %v4200 = vrot.slane %v4037, 1
      %v4201 = vsel %vm741, %v4199, %v4200
      %v4202 = vrot.slane %v4042, 1
      %v4203 = vrot.slane %v4045, 1
      %v4204 = vsel %vm741, %v4202, %v4203
      %v4205 = vrot.slane %v4050, 1
      %v4206 = vrot.slane %v4053, 1
      %v4207 = vsel %vm741, %v4205, %v4206
      %v4208 = vrot.slane %v4058, 1
      %v4209 = vrot.slane %v4061, 1
      %v4210 = vsel %vm741, %v4208, %v4209
      %v4211 = vrot.slane %v4066, 1
      %v4212 = vrot.slane %v4069, 1
      %v4213 = vsel %vm741, %v4211, %v4212
      %v4214 = vrot.slane %v4074, 1
      %v4215 = vrot.slane %v4077, 1
      %v4216 = vsel %vm741, %v4214, %v4215
      %v4217 = vrot.slane %v4082, 1
      %v4218 = vrot.slane %v4085, 1
      %v4219 = vsel %vm741, %v4217, %v4218
      %v4220 = vrot.slane %v4090, 1
      %v4221 = vrot.slane %v4093, 1
      %v4222 = vsel %vm741, %v4220, %v4221
      %v4223 = vrot.slane %v4098, 1
      %v4224 = vrot.slane %v4101, 1
      %v4225 = vsel %vm741, %v4223, %v4224
      %v4226 = vrot.slane %v4106, 1
      %v4227 = vrot.slane %v4109, 1
      %v4228 = vsel %vm741, %v4226, %v4227
      %v4229 = vrot.slane %v4114, 1
      %v4230 = vrot.slane %v4117, 1
      %v4231 = vsel %vm741, %v4229, %v4230
      %v4262 = vadd.f32 %v4127, %v4189
      %v4263 = vadd.f32 %v4128, %v4188
      %v4264 = vadd.f32 %v4129, %v4192
      %v4265 = vadd.f32 %v4130, %v4191
      %v4266 = vadd.f32 %v4131, %v4195
      %v4267 = vadd.f32 %v4132, %v4194
      %v4268 = vadd.f32 %v4133, %v4198
      %v4269 = vadd.f32 %v4134, %v4197
      %v4270 = vadd.f32 %v4135, %v4201
      %v4271 = vadd.f32 %v4136, %v4200
      %v4272 = vadd.f32 %v4137, %v4204
      %v4273 = vadd.f32 %v4138, %v4203
      %v4274 = vadd.f32 %v4139, %v4207
      %v4275 = vadd.f32 %v4140, %v4206
      %v4276 = vadd.f32 %v4141, %v4210
      %v4277 = vadd.f32 %v4142, %v4209
      %v4278 = vadd.f32 %v4143, %v4213
      %v4279 = vadd.f32 %v4144, %v4212
      %v4280 = vadd.f32 %v4145, %v4216
      %v4281 = vadd.f32 %v4146, %v4215
      %v4282 = vadd.f32 %v4147, %v4219
      %v4283 = vadd.f32 %v4148, %v4218
      %v4284 = vadd.f32 %v4149, %v4222
      %v4285 = vadd.f32 %v4150, %v4221
      %v4286 = vadd.f32 %v4151, %v4225
      %v4287 = vadd.f32 %v4152, %v4224
      %v4288 = vadd.f32 %v4153, %v4228
      %v4289 = vadd.f32 %v4154, %v4227
      %v4290 = vadd.f32 %v4155, %v4231
      %v4291 = vadd.f32 %v4156, %v4230
      %4292 = vst.msk [vmem:[%s4126] sm:$0xff] %vm226, %v4262
      %4293 = vst.msk [vmem:[%s4126 + $0x8] sm:$0x7f] %vm848, %v4263
      %4294 = vst.msk [vmem:[%s4126 + $0x10] sm:$0xff] %vm226, %v4264
      %4295 = vst.msk [vmem:[%s4126 + $0x18] sm:$0x7f] %vm848, %v4265
      %4296 = vst.msk [vmem:[%s4126 + $0x20] sm:$0xff] %vm226, %v4266
      %4297 = vst.msk [vmem:[%s4126 + $0x28] sm:$0x7f] %vm848, %v4267
      %4298 = vst.msk [vmem:[%s4126 + $0x30] sm:$0xff] %vm226, %v4268
      %4299 = vst.msk [vmem:[%s4126 + $0x38] sm:$0x7f] %vm848, %v4269
      %4300 = vst.msk [vmem:[%s4126 + $0x40] sm:$0xff] %vm226, %v4270
      %4301 = vst.msk [vmem:[%s4126 + $0x48] sm:$0x7f] %vm848, %v4271
      %4302 = vst.msk [vmem:[%s4126 + $0x50] sm:$0xff] %vm226, %v4272
      %4303 = vst.msk [vmem:[%s4126 + $0x58] sm:$0x7f] %vm848, %v4273
      %4304 = vst.msk [vmem:[%s4126 + $0x60] sm:$0xff] %vm226, %v4274
      %4305 = vst.msk [vmem:[%s4126 + $0x68] sm:$0x7f] %vm848, %v4275
      %4306 = vst.msk [vmem:[%s4126 + $0x70] sm:$0xff] %vm226, %v4276
      %4307 = vst.msk [vmem:[%s4126 + $0x78] sm:$0x7f] %vm848, %v4277
      %4308 = vst.msk [vmem:[%s4126 + $0x80] sm:$0xff] %vm226, %v4278
      %4309 = vst.msk [vmem:[%s4126 + $0x88] sm:$0x7f] %vm848, %v4279
      %4310 = vst.msk [vmem:[%s4126 + $0x90] sm:$0xff] %vm226, %v4280
      %4311 = vst.msk [vmem:[%s4126 + $0x98] sm:$0x7f] %vm848, %v4281
      %4312 = vst.msk [vmem:[%s4126 + $0xa0] sm:$0xff] %vm226, %v4282
      %4313 = vst.msk [vmem:[%s4126 + $0xa8] sm:$0x7f] %vm848, %v4283
      %4314 = vst.msk [vmem:[%s4126 + $0xb0] sm:$0xff] %vm226, %v4284
      %4315 = vst.msk [vmem:[%s4126 + $0xb8] sm:$0x7f] %vm848, %v4285
      %4316 = vst.msk [vmem:[%s4126 + $0xc0] sm:$0xff] %vm226, %v4286
      %4317 = vst.msk [vmem:[%s4126 + $0xc8] sm:$0x7f] %vm848, %v4287
      %4318 = vst.msk [vmem:[%s4126 + $0xd0] sm:$0xff] %vm226, %v4288
      %4319 = vst.msk [vmem:[%s4126 + $0xd8] sm:$0x7f] %vm848, %v4289
      %4320 = vst.msk [vmem:[%s4126 + $0xe0] sm:$0xff] %vm226, %v4290
      %4321 = vst.msk [vmem:[%s4126 + $0xe8] sm:$0x7f] %vm848, %v4291
      %s4322 = scalar_lea.vmem %s1, 52
      %v4323 = vld [vmem:[%s4322] sm:$0xf]
      %v4325 = vsel %vm517, %v4323, 0
      %4327 = vmatprep.subr.bf16.mxu0 0
      %4328 = vmatpush1.bf16.msra.mxu0 0
      %4329 = vmatprep.subr.bf16.mxu0 0
      %4330 = vmatpush1.bf16.msra.mxu0 0
      %4331 = vmatprep.subr.bf16.mxu0 0
      %4332 = vmatpush1.bf16.msra.mxu0 0
      %4333 = vmatprep.subr.bf16.mxu0 0
      %4334 = vmatpush1.bf16.msra.mxu0 0
      %4335 = vmatprep.subr.bf16.mxu0 0
      %4336 = vmatpush1.bf16.msra.mxu0 0
      %4337 = vmatprep.subr.bf16.mxu0 0
      %4338 = vmatpush1.bf16.msra.mxu0 0
      %4339 = vmatprep.subr.bf16.mxu0 0
      %4340 = vmatpush1.bf16.msra.mxu0 0
      %4341 = vmatprep.subr.bf16.mxu0 0
      %4342 = vmatpush1.bf16.msra.mxu0 %v4325
      %4343 = vmatprep.subr.bf16.mxu0 0
      %4344 = vmatpush2.bf16.msra.mxu0 0
      %4345 = vmatprep.subr.bf16.mxu0 0
      %4346 = vmatpush2.bf16.msra.mxu0 0
      %4347 = vmatprep.subr.bf16.mxu0 0
      %4348 = vmatpush2.bf16.msra.mxu0 0
      %4349 = vmatprep.subr.bf16.mxu0 0
      %4350 = vmatpush2.bf16.msra.mxu0 0
      %4351 = vmatprep.subr.bf16.mxu0 0
      %4352 = vmatpush2.bf16.msra.mxu0 0
      %4353 = vmatprep.subr.bf16.mxu0 0
      %4354 = vmatpush2.bf16.msra.mxu0 0
      %4355 = vmatprep.subr.bf16.mxu0 0
      %4356 = vmatpush2.bf16.msra.mxu0 0
      %4357 = vmatprep.subr.bf16.mxu0 0
      %4358 = vmatpush2.bf16.msra.mxu0 0
      %4359 = vmatprep.mubr.bf16.mxu0 0
      %4360 = vmatmul.mubr.bf16.gmra.mxu0 %v470
      %v4361 = vpop.f32.mrf.mxu0
      %v4362 = vadd.f32 0.0, %v4361
      %v4363 = vpop.f32.mrf.mxu0
      %v4364 = vpop.f32.mrf.mxu0
      %v4365 = vadd.f32 0.0, %v4364
      %v4366 = vpop.f32.mrf.mxu0
      %4367 = vmatprep.mubr.bf16.mxu0 0
      %4368 = vmatmul.mubr.bf16.gmra.mxu0 %v473
      %v4369 = vpop.f32.mrf.mxu0
      %v4370 = vadd.f32 0.0, %v4369
      %v4371 = vpop.f32.mrf.mxu0
      %v4372 = vpop.f32.mrf.mxu0
      %v4373 = vadd.f32 0.0, %v4372
      %v4374 = vpop.f32.mrf.mxu0
      %4375 = vmatprep.mubr.bf16.mxu0 0
      %4376 = vmatmul.mubr.bf16.gmra.mxu0 %v476
      %v4377 = vpop.f32.mrf.mxu0
      %v4378 = vadd.f32 0.0, %v4377
      %v4379 = vpop.f32.mrf.mxu0
      %v4380 = vpop.f32.mrf.mxu0
      %v4381 = vadd.f32 0.0, %v4380
      %v4382 = vpop.f32.mrf.mxu0
      %4383 = vmatprep.mubr.bf16.mxu0 0
      %4384 = vmatmul.mubr.bf16.gmra.mxu0 %v479
      %v4385 = vpop.f32.mrf.mxu0
      %v4386 = vadd.f32 0.0, %v4385
      %v4387 = vpop.f32.mrf.mxu0
      %v4388 = vpop.f32.mrf.mxu0
      %v4389 = vadd.f32 0.0, %v4388
      %v4390 = vpop.f32.mrf.mxu0
      %4391 = vmatprep.mubr.bf16.mxu0 0
      %4392 = vmatmul.mubr.bf16.gmra.mxu0 %v482
      %v4393 = vpop.f32.mrf.mxu0
      %v4394 = vadd.f32 0.0, %v4393
      %v4395 = vpop.f32.mrf.mxu0
      %v4396 = vpop.f32.mrf.mxu0
      %v4397 = vadd.f32 0.0, %v4396
      %v4398 = vpop.f32.mrf.mxu0
      %4399 = vmatprep.mubr.bf16.mxu0 0
      %4400 = vmatmul.mubr.bf16.gmra.mxu0 %v485
      %v4401 = vpop.f32.mrf.mxu0
      %v4402 = vadd.f32 0.0, %v4401
      %v4403 = vpop.f32.mrf.mxu0
      %v4404 = vpop.f32.mrf.mxu0
      %v4405 = vadd.f32 0.0, %v4404
      %v4406 = vpop.f32.mrf.mxu0
      %4407 = vmatprep.mubr.bf16.mxu0 0
      %4408 = vmatmul.mubr.bf16.gmra.mxu0 %v488
      %v4409 = vpop.f32.mrf.mxu0
      %v4410 = vadd.f32 0.0, %v4409
      %v4411 = vpop.f32.mrf.mxu0
      %v4412 = vpop.f32.mrf.mxu0
      %v4413 = vadd.f32 0.0, %v4412
      %v4414 = vpop.f32.mrf.mxu0
      %4415 = vmatprep.mubr.bf16.mxu0 0
      %4416 = vmatmul.mubr.bf16.gmra.mxu0 %v491
      %v4417 = vpop.f32.mrf.mxu0
      %v4418 = vadd.f32 0.0, %v4417
      %v4419 = vpop.f32.mrf.mxu0
      %v4420 = vpop.f32.mrf.mxu0
      %v4421 = vadd.f32 0.0, %v4420
      %v4422 = vpop.f32.mrf.mxu0
      %4423 = vmatprep.mubr.bf16.mxu0 0
      %4424 = vmatmul.mubr.bf16.gmra.mxu0 %v494
      %v4425 = vpop.f32.mrf.mxu0
      %v4426 = vadd.f32 0.0, %v4425
      %v4427 = vpop.f32.mrf.mxu0
      %v4428 = vpop.f32.mrf.mxu0
      %v4429 = vadd.f32 0.0, %v4428
      %v4430 = vpop.f32.mrf.mxu0
      %4431 = vmatprep.mubr.bf16.mxu0 0
      %4432 = vmatmul.mubr.bf16.gmra.mxu0 %v497
      %v4433 = vpop.f32.mrf.mxu0
      %v4434 = vadd.f32 0.0, %v4433
      %v4435 = vpop.f32.mrf.mxu0
      %v4436 = vpop.f32.mrf.mxu0
      %v4437 = vadd.f32 0.0, %v4436
      %v4438 = vpop.f32.mrf.mxu0
      %4439 = vmatprep.mubr.bf16.mxu0 0
      %4440 = vmatmul.mubr.bf16.gmra.mxu0 %v500
      %v4441 = vpop.f32.mrf.mxu0
      %v4442 = vadd.f32 0.0, %v4441
      %v4443 = vpop.f32.mrf.mxu0
      %v4444 = vpop.f32.mrf.mxu0
      %v4445 = vadd.f32 0.0, %v4444
      %v4446 = vpop.f32.mrf.mxu0
      %4447 = vmatprep.mubr.bf16.mxu0 0
      %4448 = vmatmul.mubr.bf16.gmra.mxu0 %v503
      %v4449 = vpop.f32.mrf.mxu0
      %v4450 = vadd.f32 0.0, %v4449
      %v4451 = vpop.f32.mrf.mxu0
      %v4452 = vpop.f32.mrf.mxu0
      %v4453 = vadd.f32 0.0, %v4452
      %v4454 = vpop.f32.mrf.mxu0
      %4455 = vmatprep.mubr.bf16.mxu0 0
      %4456 = vmatmul.mubr.bf16.gmra.mxu0 %v506
      %v4457 = vpop.f32.mrf.mxu0
      %v4458 = vadd.f32 0.0, %v4457
      %v4459 = vpop.f32.mrf.mxu0
      %v4460 = vpop.f32.mrf.mxu0
      %v4461 = vadd.f32 0.0, %v4460
      %v4462 = vpop.f32.mrf.mxu0
      %4463 = vmatprep.mubr.bf16.mxu0 0
      %4464 = vmatmul.mubr.bf16.gmra.mxu0 %v509
      %v4465 = vpop.f32.mrf.mxu0
      %v4466 = vadd.f32 0.0, %v4465
      %v4467 = vpop.f32.mrf.mxu0
      %v4468 = vpop.f32.mrf.mxu0
      %v4469 = vadd.f32 0.0, %v4468
      %v4470 = vpop.f32.mrf.mxu0
      %4471 = vmatprep.mubr.bf16.mxu0 0
      %4472 = vmatmul.mubr.bf16.gmra.mxu0 %v512
      %v4473 = vpop.f32.mrf.mxu0
      %v4474 = vadd.f32 0.0, %v4473
      %v4475 = vpop.f32.mrf.mxu0
      %v4476 = vpop.f32.mrf.mxu0
      %v4477 = vadd.f32 0.0, %v4476
      %v4478 = vpop.f32.mrf.mxu0
      %4479 = vmatprep.mubr.bf16.mxu0 0
      %4480 = vmatmul.mubr.bf16.gmra.mxu0 %v515
      %v4481 = vpop.f32.mrf.mxu0
      %v4482 = vpop.f32.mrf.mxu0
      %v4483 = vpop.f32.mrf.mxu0
      %v4484 = vpop.f32.mrf.mxu0
      %4485 = vdwg.mxu0
      %s4486 = scalar_lea.vmem [#allocation2], 16
      %v4487 = vld [vmem:[%s4486] sm:$0xff]
      %v4488 = vld [vmem:[%s4486 + $0x8] sm:$0xff]
      %v4489 = vld [vmem:[%s4486 + $0x10] sm:$0xff]
      %v4490 = vld [vmem:[%s4486 + $0x18] sm:$0xff]
      %v4491 = vld [vmem:[%s4486 + $0x20] sm:$0xff]
      %v4492 = vld [vmem:[%s4486 + $0x28] sm:$0xff]
      %v4493 = vld [vmem:[%s4486 + $0x30] sm:$0xff]
      %v4494 = vld [vmem:[%s4486 + $0x38] sm:$0xff]
      %v4495 = vld [vmem:[%s4486 + $0x40] sm:$0xff]
      %v4496 = vld [vmem:[%s4486 + $0x48] sm:$0xff]
      %v4497 = vld [vmem:[%s4486 + $0x50] sm:$0xff]
      %v4498 = vld [vmem:[%s4486 + $0x58] sm:$0xff]
      %v4499 = vld [vmem:[%s4486 + $0x60] sm:$0xff]
      %v4500 = vld [vmem:[%s4486 + $0x68] sm:$0xff]
      %v4501 = vld [vmem:[%s4486 + $0x70] sm:$0xff]
      %v4502 = vld [vmem:[%s4486 + $0x78] sm:$0xff]
      %v4503 = vld [vmem:[%s4486 + $0x80] sm:$0xff]
      %v4504 = vld [vmem:[%s4486 + $0x88] sm:$0xff]
      %v4505 = vld [vmem:[%s4486 + $0x90] sm:$0xff]
      %v4506 = vld [vmem:[%s4486 + $0x98] sm:$0xff]
      %v4507 = vld [vmem:[%s4486 + $0xa0] sm:$0xff]
      %v4508 = vld [vmem:[%s4486 + $0xa8] sm:$0xff]
      %v4509 = vld [vmem:[%s4486 + $0xb0] sm:$0xff]
      %v4510 = vld [vmem:[%s4486 + $0xb8] sm:$0xff]
      %v4511 = vld [vmem:[%s4486 + $0xc0] sm:$0xff]
      %v4512 = vld [vmem:[%s4486 + $0xc8] sm:$0xff]
      %v4513 = vld [vmem:[%s4486 + $0xd0] sm:$0xff]
      %v4514 = vld [vmem:[%s4486 + $0xd8] sm:$0xff]
      %v4515 = vld [vmem:[%s4486 + $0xe0] sm:$0xff]
      %v4516 = vld [vmem:[%s4486 + $0xe8] sm:$0xff]
      %v4517 = vadd.f32 %v4487, %v4362
      %v4518 = vadd.f32 %v4488, %v4365
      %v4519 = vadd.f32 %v4489, %v4370
      %v4520 = vadd.f32 %v4490, %v4373
      %v4521 = vadd.f32 %v4491, %v4378
      %v4522 = vadd.f32 %v4492, %v4381
      %v4523 = vadd.f32 %v4493, %v4386
      %v4524 = vadd.f32 %v4494, %v4389
      %v4525 = vadd.f32 %v4495, %v4394
      %v4526 = vadd.f32 %v4496, %v4397
      %v4527 = vadd.f32 %v4497, %v4402
      %v4528 = vadd.f32 %v4498, %v4405
      %v4529 = vadd.f32 %v4499, %v4410
      %v4530 = vadd.f32 %v4500, %v4413
      %v4531 = vadd.f32 %v4501, %v4418
      %v4532 = vadd.f32 %v4502, %v4421
      %v4533 = vadd.f32 %v4503, %v4426
      %v4534 = vadd.f32 %v4504, %v4429
      %v4535 = vadd.f32 %v4505, %v4434
      %v4536 = vadd.f32 %v4506, %v4437
      %v4537 = vadd.f32 %v4507, %v4442
      %v4538 = vadd.f32 %v4508, %v4445
      %v4539 = vadd.f32 %v4509, %v4450
      %v4540 = vadd.f32 %v4510, %v4453
      %v4541 = vadd.f32 %v4511, %v4458
      %v4542 = vadd.f32 %v4512, %v4461
      %v4543 = vadd.f32 %v4513, %v4466
      %v4544 = vadd.f32 %v4514, %v4469
      %v4545 = vadd.f32 %v4515, %v4474
      %v4546 = vadd.f32 %v4516, %v4477
      %4547 = vst.msk [vmem:[%s4486] sm:$0xff] %vm226, %v4517
      %4548 = vst.msk [vmem:[%s4486 + $0x8] sm:$0xff] %vm226, %v4518
      %4549 = vst.msk [vmem:[%s4486 + $0x10] sm:$0xff] %vm226, %v4519
      %4550 = vst.msk [vmem:[%s4486 + $0x18] sm:$0xff] %vm226, %v4520
      %4551 = vst.msk [vmem:[%s4486 + $0x20] sm:$0xff] %vm226, %v4521
      %4552 = vst.msk [vmem:[%s4486 + $0x28] sm:$0xff] %vm226, %v4522
      %4553 = vst.msk [vmem:[%s4486 + $0x30] sm:$0xff] %vm226, %v4523
      %4554 = vst.msk [vmem:[%s4486 + $0x38] sm:$0xff] %vm226, %v4524
      %4555 = vst.msk [vmem:[%s4486 + $0x40] sm:$0xff] %vm226, %v4525
      %4556 = vst.msk [vmem:[%s4486 + $0x48] sm:$0xff] %vm226, %v4526
      %4557 = vst.msk [vmem:[%s4486 + $0x50] sm:$0xff] %vm226, %v4527
      %4558 = vst.msk [vmem:[%s4486 + $0x58] sm:$0xff] %vm226, %v4528
      %4559 = vst.msk [vmem:[%s4486 + $0x60] sm:$0xff] %vm226, %v4529
      %4560 = vst.msk [vmem:[%s4486 + $0x68] sm:$0xff] %vm226, %v4530
      %4561 = vst.msk [vmem:[%s4486 + $0x70] sm:$0xff] %vm226, %v4531
      %4562 = vst.msk [vmem:[%s4486 + $0x78] sm:$0xff] %vm226, %v4532
      %4563 = vst.msk [vmem:[%s4486 + $0x80] sm:$0xff] %vm226, %v4533
      %4564 = vst.msk [vmem:[%s4486 + $0x88] sm:$0xff] %vm226, %v4534
      %4565 = vst.msk [vmem:[%s4486 + $0x90] sm:$0xff] %vm226, %v4535
      %4566 = vst.msk [vmem:[%s4486 + $0x98] sm:$0xff] %vm226, %v4536
      %4567 = vst.msk [vmem:[%s4486 + $0xa0] sm:$0xff] %vm226, %v4537
      %4568 = vst.msk [vmem:[%s4486 + $0xa8] sm:$0xff] %vm226, %v4538
      %4569 = vst.msk [vmem:[%s4486 + $0xb0] sm:$0xff] %vm226, %v4539
      %4570 = vst.msk [vmem:[%s4486 + $0xb8] sm:$0xff] %vm226, %v4540
      %4571 = vst.msk [vmem:[%s4486 + $0xc0] sm:$0xff] %vm226, %v4541
      %4572 = vst.msk [vmem:[%s4486 + $0xc8] sm:$0xff] %vm226, %v4542
      %4573 = vst.msk [vmem:[%s4486 + $0xd0] sm:$0xff] %vm226, %v4543
      %4574 = vst.msk [vmem:[%s4486 + $0xd8] sm:$0xff] %vm226, %v4544
      %4575 = vst.msk [vmem:[%s4486 + $0xe0] sm:$0xff] %vm226, %v4545
      %4576 = vst.msk [vmem:[%s4486 + $0xe8] sm:$0xff] %vm226, %v4546
      %s4577 = scalar_lea.vmem %s1, 56
      %v4578 = vld [vmem:[%s4577] sm:$0xf]
      %v4580 = vsel %vm517, %v4578, 0
      %4582 = vmatprep.subr.bf16.mxu0 0
      %4583 = vmatpush1.bf16.msra.mxu0 0
      %4584 = vmatprep.subr.bf16.mxu0 0
      %4585 = vmatpush1.bf16.msra.mxu0 0
      %4586 = vmatprep.subr.bf16.mxu0 0
      %4587 = vmatpush1.bf16.msra.mxu0 0
      %4588 = vmatprep.subr.bf16.mxu0 0
      %4589 = vmatpush1.bf16.msra.mxu0 0
      %4590 = vmatprep.subr.bf16.mxu0 0
      %4591 = vmatpush1.bf16.msra.mxu0 0
      %4592 = vmatprep.subr.bf16.mxu0 0
      %4593 = vmatpush1.bf16.msra.mxu0 0
      %4594 = vmatprep.subr.bf16.mxu0 0
      %4595 = vmatpush1.bf16.msra.mxu0 0
      %4596 = vmatprep.subr.bf16.mxu0 0
      %4597 = vmatpush1.bf16.msra.mxu0 %v4580
      %4598 = vmatprep.subr.bf16.mxu0 0
      %4599 = vmatpush2.bf16.msra.mxu0 0
      %4600 = vmatprep.subr.bf16.mxu0 0
      %4601 = vmatpush2.bf16.msra.mxu0 0
      %4602 = vmatprep.subr.bf16.mxu0 0
      %4603 = vmatpush2.bf16.msra.mxu0 0
      %4604 = vmatprep.subr.bf16.mxu0 0
      %4605 = vmatpush2.bf16.msra.mxu0 0
      %4606 = vmatprep.subr.bf16.mxu0 0
      %4607 = vmatpush2.bf16.msra.mxu0 0
      %4608 = vmatprep.subr.bf16.mxu0 0
      %4609 = vmatpush2.bf16.msra.mxu0 0
      %4610 = vmatprep.subr.bf16.mxu0 0
      %4611 = vmatpush2.bf16.msra.mxu0 0
      %4612 = vmatprep.subr.bf16.mxu0 0
      %4613 = vmatpush2.bf16.msra.mxu0 0
      %4614 = vmatprep.mubr.bf16.mxu0 0
      %4615 = vmatmul.mubr.bf16.gmra.mxu0 %v470
      %v4616 = vpop.f32.mrf.mxu0
      %v4617 = vadd.f32 0.0, %v4616
      %v4618 = vpop.f32.mrf.mxu0
      %v4619 = vpop.f32.mrf.mxu0
      %v4620 = vadd.f32 0.0, %v4619
      %v4621 = vpop.f32.mrf.mxu0
      %4622 = vmatprep.mubr.bf16.mxu0 0
      %4623 = vmatmul.mubr.bf16.gmra.mxu0 %v473
      %v4624 = vpop.f32.mrf.mxu0
      %v4625 = vadd.f32 0.0, %v4624
      %v4626 = vpop.f32.mrf.mxu0
      %v4627 = vpop.f32.mrf.mxu0
      %v4628 = vadd.f32 0.0, %v4627
      %v4629 = vpop.f32.mrf.mxu0
      %4630 = vmatprep.mubr.bf16.mxu0 0
      %4631 = vmatmul.mubr.bf16.gmra.mxu0 %v476
      %v4632 = vpop.f32.mrf.mxu0
      %v4633 = vadd.f32 0.0, %v4632
      %v4634 = vpop.f32.mrf.mxu0
      %v4635 = vpop.f32.mrf.mxu0
      %v4636 = vadd.f32 0.0, %v4635
      %v4637 = vpop.f32.mrf.mxu0
      %4638 = vmatprep.mubr.bf16.mxu0 0
      %4639 = vmatmul.mubr.bf16.gmra.mxu0 %v479
      %v4640 = vpop.f32.mrf.mxu0
      %v4641 = vadd.f32 0.0, %v4640
      %v4642 = vpop.f32.mrf.mxu0
      %v4643 = vpop.f32.mrf.mxu0
      %v4644 = vadd.f32 0.0, %v4643
      %v4645 = vpop.f32.mrf.mxu0
      %4646 = vmatprep.mubr.bf16.mxu0 0
      %4647 = vmatmul.mubr.bf16.gmra.mxu0 %v482
      %v4648 = vpop.f32.mrf.mxu0
      %v4649 = vadd.f32 0.0, %v4648
      %v4650 = vpop.f32.mrf.mxu0
      %v4651 = vpop.f32.mrf.mxu0
      %v4652 = vadd.f32 0.0, %v4651
      %v4653 = vpop.f32.mrf.mxu0
      %4654 = vmatprep.mubr.bf16.mxu0 0
      %4655 = vmatmul.mubr.bf16.gmra.mxu0 %v485
      %v4656 = vpop.f32.mrf.mxu0
      %v4657 = vadd.f32 0.0, %v4656
      %v4658 = vpop.f32.mrf.mxu0
      %v4659 = vpop.f32.mrf.mxu0
      %v4660 = vadd.f32 0.0, %v4659
      %v4661 = vpop.f32.mrf.mxu0
      %4662 = vmatprep.mubr.bf16.mxu0 0
      %4663 = vmatmul.mubr.bf16.gmra.mxu0 %v488
      %v4664 = vpop.f32.mrf.mxu0
      %v4665 = vadd.f32 0.0, %v4664
      %v4666 = vpop.f32.mrf.mxu0
      %v4667 = vpop.f32.mrf.mxu0
      %v4668 = vadd.f32 0.0, %v4667
      %v4669 = vpop.f32.mrf.mxu0
      %4670 = vmatprep.mubr.bf16.mxu0 0
      %4671 = vmatmul.mubr.bf16.gmra.mxu0 %v491
      %v4672 = vpop.f32.mrf.mxu0
      %v4673 = vadd.f32 0.0, %v4672
      %v4674 = vpop.f32.mrf.mxu0
      %v4675 = vpop.f32.mrf.mxu0
      %v4676 = vadd.f32 0.0, %v4675
      %v4677 = vpop.f32.mrf.mxu0
      %4678 = vmatprep.mubr.bf16.mxu0 0
      %4679 = vmatmul.mubr.bf16.gmra.mxu0 %v494
      %v4680 = vpop.f32.mrf.mxu0
      %v4681 = vadd.f32 0.0, %v4680
      %v4682 = vpop.f32.mrf.mxu0
      %v4683 = vpop.f32.mrf.mxu0
      %v4684 = vadd.f32 0.0, %v4683
      %v4685 = vpop.f32.mrf.mxu0
      %4686 = vmatprep.mubr.bf16.mxu0 0
      %4687 = vmatmul.mubr.bf16.gmra.mxu0 %v497
      %v4688 = vpop.f32.mrf.mxu0
      %v4689 = vadd.f32 0.0, %v4688
      %v4690 = vpop.f32.mrf.mxu0
      %v4691 = vpop.f32.mrf.mxu0
      %v4692 = vadd.f32 0.0, %v4691
      %v4693 = vpop.f32.mrf.mxu0
      %4694 = vmatprep.mubr.bf16.mxu0 0
      %4695 = vmatmul.mubr.bf16.gmra.mxu0 %v500
      %v4696 = vpop.f32.mrf.mxu0
      %v4697 = vadd.f32 0.0, %v4696
      %v4698 = vpop.f32.mrf.mxu0
      %v4699 = vpop.f32.mrf.mxu0
      %v4700 = vadd.f32 0.0, %v4699
      %v4701 = vpop.f32.mrf.mxu0
      %4702 = vmatprep.mubr.bf16.mxu0 0
      %4703 = vmatmul.mubr.bf16.gmra.mxu0 %v503
      %v4704 = vpop.f32.mrf.mxu0
      %v4705 = vadd.f32 0.0, %v4704
      %v4706 = vpop.f32.mrf.mxu0
      %v4707 = vpop.f32.mrf.mxu0
      %v4708 = vadd.f32 0.0, %v4707
      %v4709 = vpop.f32.mrf.mxu0
      %4710 = vmatprep.mubr.bf16.mxu0 0
      %4711 = vmatmul.mubr.bf16.gmra.mxu0 %v506
      %v4712 = vpop.f32.mrf.mxu0
      %v4713 = vadd.f32 0.0, %v4712
      %v4714 = vpop.f32.mrf.mxu0
      %v4715 = vpop.f32.mrf.mxu0
      %v4716 = vadd.f32 0.0, %v4715
      %v4717 = vpop.f32.mrf.mxu0
      %4718 = vmatprep.mubr.bf16.mxu0 0
      %4719 = vmatmul.mubr.bf16.gmra.mxu0 %v509
      %v4720 = vpop.f32.mrf.mxu0
      %v4721 = vadd.f32 0.0, %v4720
      %v4722 = vpop.f32.mrf.mxu0
      %v4723 = vpop.f32.mrf.mxu0
      %v4724 = vadd.f32 0.0, %v4723
      %v4725 = vpop.f32.mrf.mxu0
      %4726 = vmatprep.mubr.bf16.mxu0 0
      %4727 = vmatmul.mubr.bf16.gmra.mxu0 %v512
      %v4728 = vpop.f32.mrf.mxu0
      %v4729 = vadd.f32 0.0, %v4728
      %v4730 = vpop.f32.mrf.mxu0
      %v4731 = vpop.f32.mrf.mxu0
      %v4732 = vadd.f32 0.0, %v4731
      %v4733 = vpop.f32.mrf.mxu0
      %4734 = vmatprep.mubr.bf16.mxu0 0
      %4735 = vmatmul.mubr.bf16.gmra.mxu0 %v515
      %v4736 = vpop.f32.mrf.mxu0
      %v4737 = vpop.f32.mrf.mxu0
      %v4738 = vpop.f32.mrf.mxu0
      %v4739 = vpop.f32.mrf.mxu0
      %4740 = vdwg.mxu0
      %v4741 = vld [vmem:[%s4126] sm:$0xff]
      %v4742 = vld [vmem:[%s4126 + $0x8] sm:$0xff]
      %v4743 = vld [vmem:[%s4126 + $0x10] sm:$0xff]
      %v4744 = vld [vmem:[%s4126 + $0x18] sm:$0xff]
      %v4745 = vld [vmem:[%s4126 + $0x20] sm:$0xff]
      %v4746 = vld [vmem:[%s4126 + $0x28] sm:$0xff]
      %v4747 = vld [vmem:[%s4126 + $0x30] sm:$0xff]
      %v4748 = vld [vmem:[%s4126 + $0x38] sm:$0xff]
      %v4749 = vld [vmem:[%s4126 + $0x40] sm:$0xff]
      %v4750 = vld [vmem:[%s4126 + $0x48] sm:$0xff]
      %v4751 = vld [vmem:[%s4126 + $0x50] sm:$0xff]
      %v4752 = vld [vmem:[%s4126 + $0x58] sm:$0xff]
      %v4753 = vld [vmem:[%s4126 + $0x60] sm:$0xff]
      %v4754 = vld [vmem:[%s4126 + $0x68] sm:$0xff]
      %v4755 = vld [vmem:[%s4126 + $0x70] sm:$0xff]
      %v4756 = vld [vmem:[%s4126 + $0x78] sm:$0xff]
      %v4757 = vld [vmem:[%s4126 + $0x80] sm:$0xff]
      %v4758 = vld [vmem:[%s4126 + $0x88] sm:$0xff]
      %v4759 = vld [vmem:[%s4126 + $0x90] sm:$0xff]
      %v4760 = vld [vmem:[%s4126 + $0x98] sm:$0xff]
      %v4761 = vld [vmem:[%s4126 + $0xa0] sm:$0xff]
      %v4762 = vld [vmem:[%s4126 + $0xa8] sm:$0xff]
      %v4763 = vld [vmem:[%s4126 + $0xb0] sm:$0xff]
      %v4764 = vld [vmem:[%s4126 + $0xb8] sm:$0xff]
      %v4765 = vld [vmem:[%s4126 + $0xc0] sm:$0xff]
      %v4766 = vld [vmem:[%s4126 + $0xc8] sm:$0xff]
      %v4767 = vld [vmem:[%s4126 + $0xd0] sm:$0xff]
      %v4768 = vld [vmem:[%s4126 + $0xd8] sm:$0xff]
      %v4769 = vld [vmem:[%s4126 + $0xe0] sm:$0xff]
      %v4770 = vld [vmem:[%s4126 + $0xe8] sm:$0xff]
      %v4771 = vadd.f32 %v4741, %v4617
      %v4772 = vadd.f32 %v4742, %v4620
      %v4773 = vadd.f32 %v4743, %v4625
      %v4774 = vadd.f32 %v4744, %v4628
      %v4775 = vadd.f32 %v4745, %v4633
      %v4776 = vadd.f32 %v4746, %v4636
      %v4777 = vadd.f32 %v4747, %v4641
      %v4778 = vadd.f32 %v4748, %v4644
      %v4779 = vadd.f32 %v4749, %v4649
      %v4780 = vadd.f32 %v4750, %v4652
      %v4781 = vadd.f32 %v4751, %v4657
      %v4782 = vadd.f32 %v4752, %v4660
      %v4783 = vadd.f32 %v4753, %v4665
      %v4784 = vadd.f32 %v4754, %v4668
      %v4785 = vadd.f32 %v4755, %v4673
      %v4786 = vadd.f32 %v4756, %v4676
      %v4787 = vadd.f32 %v4757, %v4681
      %v4788 = vadd.f32 %v4758, %v4684
      %v4789 = vadd.f32 %v4759, %v4689
      %v4790 = vadd.f32 %v4760, %v4692
      %v4791 = vadd.f32 %v4761, %v4697
      %v4792 = vadd.f32 %v4762, %v4700
      %v4793 = vadd.f32 %v4763, %v4705
      %v4794 = vadd.f32 %v4764, %v4708
      %v4795 = vadd.f32 %v4765, %v4713
      %v4796 = vadd.f32 %v4766, %v4716
      %v4797 = vadd.f32 %v4767, %v4721
      %v4798 = vadd.f32 %v4768, %v4724
      %v4799 = vadd.f32 %v4769, %v4729
      %v4800 = vadd.f32 %v4770, %v4732
      %4801 = vst.msk [vmem:[%s4126] sm:$0xff] %vm226, %v4771
      %4802 = vst.msk [vmem:[%s4126 + $0x8] sm:$0xff] %vm226, %v4772
      %4803 = vst.msk [vmem:[%s4126 + $0x10] sm:$0xff] %vm226, %v4773
      %4804 = vst.msk [vmem:[%s4126 + $0x18] sm:$0xff] %vm226, %v4774
      %4805 = vst.msk [vmem:[%s4126 + $0x20] sm:$0xff] %vm226, %v4775
      %4806 = vst.msk [vmem:[%s4126 + $0x28] sm:$0xff] %vm226, %v4776
      %4807 = vst.msk [vmem:[%s4126 + $0x30] sm:$0xff] %vm226, %v4777
      %4808 = vst.msk [vmem:[%s4126 + $0x38] sm:$0xff] %vm226, %v4778
      %4809 = vst.msk [vmem:[%s4126 + $0x40] sm:$0xff] %vm226, %v4779
      %4810 = vst.msk [vmem:[%s4126 + $0x48] sm:$0xff] %vm226, %v4780
      %4811 = vst.msk [vmem:[%s4126 + $0x50] sm:$0xff] %vm226, %v4781
      %4812 = vst.msk [vmem:[%s4126 + $0x58] sm:$0xff] %vm226, %v4782
      %4813 = vst.msk [vmem:[%s4126 + $0x60] sm:$0xff] %vm226, %v4783
      %4814 = vst.msk [vmem:[%s4126 + $0x68] sm:$0xff] %vm226, %v4784
      %4815 = vst.msk [vmem:[%s4126 + $0x70] sm:$0xff] %vm226, %v4785
      %4816 = vst.msk [vmem:[%s4126 + $0x78] sm:$0xff] %vm226, %v4786
      %4817 = vst.msk [vmem:[%s4126 + $0x80] sm:$0xff] %vm226, %v4787
      %4818 = vst.msk [vmem:[%s4126 + $0x88] sm:$0xff] %vm226, %v4788
      %4819 = vst.msk [vmem:[%s4126 + $0x90] sm:$0xff] %vm226, %v4789
      %4820 = vst.msk [vmem:[%s4126 + $0x98] sm:$0xff] %vm226, %v4790
      %4821 = vst.msk [vmem:[%s4126 + $0xa0] sm:$0xff] %vm226, %v4791
      %4822 = vst.msk [vmem:[%s4126 + $0xa8] sm:$0xff] %vm226, %v4792
      %4823 = vst.msk [vmem:[%s4126 + $0xb0] sm:$0xff] %vm226, %v4793
      %4824 = vst.msk [vmem:[%s4126 + $0xb8] sm:$0xff] %vm226, %v4794
      %4825 = vst.msk [vmem:[%s4126 + $0xc0] sm:$0xff] %vm226, %v4795
      %4826 = vst.msk [vmem:[%s4126 + $0xc8] sm:$0xff] %vm226, %v4796
      %4827 = vst.msk [vmem:[%s4126 + $0xd0] sm:$0xff] %vm226, %v4797
      %4828 = vst.msk [vmem:[%s4126 + $0xd8] sm:$0xff] %vm226, %v4798
      %4829 = vst.msk [vmem:[%s4126 + $0xe0] sm:$0xff] %vm226, %v4799
      %4830 = vst.msk [vmem:[%s4126 + $0xe8] sm:$0xff] %vm226, %v4800
      %s4831 = scalar_lea.vmem %s1, 60
      %v4832 = vld [vmem:[%s4831] sm:$0xf]
      %v4834 = vsel %vm517, %v4832, 0
      %4836 = vmatprep.subr.bf16.mxu0 0
      %4837 = vmatpush1.bf16.msra.mxu0 0
      %4838 = vmatprep.subr.bf16.mxu0 0
      %4839 = vmatpush1.bf16.msra.mxu0 0
      %4840 = vmatprep.subr.bf16.mxu0 0
      %4841 = vmatpush1.bf16.msra.mxu0 0
      %4842 = vmatprep.subr.bf16.mxu0 0
      %4843 = vmatpush1.bf16.msra.mxu0 0
      %4844 = vmatprep.subr.bf16.mxu0 0
      %4845 = vmatpush1.bf16.msra.mxu0 0
      %4846 = vmatprep.subr.bf16.mxu0 0
      %4847 = vmatpush1.bf16.msra.mxu0 0
      %4848 = vmatprep.subr.bf16.mxu0 0
      %4849 = vmatpush1.bf16.msra.mxu0 0
      %4850 = vmatprep.subr.bf16.mxu0 0
      %4851 = vmatpush1.bf16.msra.mxu0 %v4834
      %4852 = vmatprep.subr.bf16.mxu0 0
      %4853 = vmatpush2.bf16.msra.mxu0 0
      %4854 = vmatprep.subr.bf16.mxu0 0
      %4855 = vmatpush2.bf16.msra.mxu0 0
      %4856 = vmatprep.subr.bf16.mxu0 0
      %4857 = vmatpush2.bf16.msra.mxu0 0
      %4858 = vmatprep.subr.bf16.mxu0 0
      %4859 = vmatpush2.bf16.msra.mxu0 0
      %4860 = vmatprep.subr.bf16.mxu0 0
      %4861 = vmatpush2.bf16.msra.mxu0 0
      %4862 = vmatprep.subr.bf16.mxu0 0
      %4863 = vmatpush2.bf16.msra.mxu0 0
      %4864 = vmatprep.subr.bf16.mxu0 0
      %4865 = vmatpush2.bf16.msra.mxu0 0
      %4866 = vmatprep.subr.bf16.mxu0 0
      %4867 = vmatpush2.bf16.msra.mxu0 0
      %4868 = vmatprep.mubr.bf16.mxu0 0
      %4869 = vmatmul.mubr.bf16.gmra.mxu0 %v470
      %v4870 = vpop.f32.mrf.mxu0
      %v4871 = vadd.f32 0.0, %v4870
      %v4872 = vpop.f32.mrf.mxu0
      %v4873 = vpop.f32.mrf.mxu0
      %v4874 = vadd.f32 0.0, %v4873
      %v4875 = vpop.f32.mrf.mxu0
      %4876 = vmatprep.mubr.bf16.mxu0 0
      %4877 = vmatmul.mubr.bf16.gmra.mxu0 %v473
      %v4878 = vpop.f32.mrf.mxu0
      %v4879 = vadd.f32 0.0, %v4878
      %v4880 = vpop.f32.mrf.mxu0
      %v4881 = vpop.f32.mrf.mxu0
      %v4882 = vadd.f32 0.0, %v4881
      %v4883 = vpop.f32.mrf.mxu0
      %4884 = vmatprep.mubr.bf16.mxu0 0
      %4885 = vmatmul.mubr.bf16.gmra.mxu0 %v476
      %v4886 = vpop.f32.mrf.mxu0
      %v4887 = vadd.f32 0.0, %v4886
      %v4888 = vpop.f32.mrf.mxu0
      %v4889 = vpop.f32.mrf.mxu0
      %v4890 = vadd.f32 0.0, %v4889
      %v4891 = vpop.f32.mrf.mxu0
      %4892 = vmatprep.mubr.bf16.mxu0 0
      %4893 = vmatmul.mubr.bf16.gmra.mxu0 %v479
      %v4894 = vpop.f32.mrf.mxu0
      %v4895 = vadd.f32 0.0, %v4894
      %v4896 = vpop.f32.mrf.mxu0
      %v4897 = vpop.f32.mrf.mxu0
      %v4898 = vadd.f32 0.0, %v4897
      %v4899 = vpop.f32.mrf.mxu0
      %4900 = vmatprep.mubr.bf16.mxu0 0
      %4901 = vmatmul.mubr.bf16.gmra.mxu0 %v482
      %v4902 = vpop.f32.mrf.mxu0
      %v4903 = vadd.f32 0.0, %v4902
      %v4904 = vpop.f32.mrf.mxu0
      %v4905 = vpop.f32.mrf.mxu0
      %v4906 = vadd.f32 0.0, %v4905
      %v4907 = vpop.f32.mrf.mxu0
      %4908 = vmatprep.mubr.bf16.mxu0 0
      %4909 = vmatmul.mubr.bf16.gmra.mxu0 %v485
      %v4910 = vpop.f32.mrf.mxu0
      %v4911 = vadd.f32 0.0, %v4910
      %v4912 = vpop.f32.mrf.mxu0
      %v4913 = vpop.f32.mrf.mxu0
      %v4914 = vadd.f32 0.0, %v4913
      %v4915 = vpop.f32.mrf.mxu0
      %4916 = vmatprep.mubr.bf16.mxu0 0
      %4917 = vmatmul.mubr.bf16.gmra.mxu0 %v488
      %v4918 = vpop.f32.mrf.mxu0
      %v4919 = vadd.f32 0.0, %v4918
      %v4920 = vpop.f32.mrf.mxu0
      %v4921 = vpop.f32.mrf.mxu0
      %v4922 = vadd.f32 0.0, %v4921
      %v4923 = vpop.f32.mrf.mxu0
      %4924 = vmatprep.mubr.bf16.mxu0 0
      %4925 = vmatmul.mubr.bf16.gmra.mxu0 %v491
      %v4926 = vpop.f32.mrf.mxu0
      %v4927 = vadd.f32 0.0, %v4926
      %v4928 = vpop.f32.mrf.mxu0
      %v4929 = vpop.f32.mrf.mxu0
      %v4930 = vadd.f32 0.0, %v4929
      %v4931 = vpop.f32.mrf.mxu0
      %4932 = vmatprep.mubr.bf16.mxu0 0
      %4933 = vmatmul.mubr.bf16.gmra.mxu0 %v494
      %v4934 = vpop.f32.mrf.mxu0
      %v4935 = vadd.f32 0.0, %v4934
      %v4936 = vpop.f32.mrf.mxu0
      %v4937 = vpop.f32.mrf.mxu0
      %v4938 = vadd.f32 0.0, %v4937
      %v4939 = vpop.f32.mrf.mxu0
      %4940 = vmatprep.mubr.bf16.mxu0 0
      %4941 = vmatmul.mubr.bf16.gmra.mxu0 %v497
      %v4942 = vpop.f32.mrf.mxu0
      %v4943 = vadd.f32 0.0, %v4942
      %v4944 = vpop.f32.mrf.mxu0
      %v4945 = vpop.f32.mrf.mxu0
      %v4946 = vadd.f32 0.0, %v4945
      %v4947 = vpop.f32.mrf.mxu0
      %4948 = vmatprep.mubr.bf16.mxu0 0
      %4949 = vmatmul.mubr.bf16.gmra.mxu0 %v500
      %v4950 = vpop.f32.mrf.mxu0
      %v4951 = vadd.f32 0.0, %v4950
      %v4952 = vpop.f32.mrf.mxu0
      %v4953 = vpop.f32.mrf.mxu0
      %v4954 = vadd.f32 0.0, %v4953
      %v4955 = vpop.f32.mrf.mxu0
      %4956 = vmatprep.mubr.bf16.mxu0 0
      %4957 = vmatmul.mubr.bf16.gmra.mxu0 %v503
      %v4958 = vpop.f32.mrf.mxu0
      %v4959 = vadd.f32 0.0, %v4958
      %v4960 = vpop.f32.mrf.mxu0
      %v4961 = vpop.f32.mrf.mxu0
      %v4962 = vadd.f32 0.0, %v4961
      %v4963 = vpop.f32.mrf.mxu0
      %4964 = vmatprep.mubr.bf16.mxu0 0
      %4965 = vmatmul.mubr.bf16.gmra.mxu0 %v506
      %v4966 = vpop.f32.mrf.mxu0
      %v4967 = vadd.f32 0.0, %v4966
      %v4968 = vpop.f32.mrf.mxu0
      %v4969 = vpop.f32.mrf.mxu0
      %v4970 = vadd.f32 0.0, %v4969
      %v4971 = vpop.f32.mrf.mxu0
      %4972 = vmatprep.mubr.bf16.mxu0 0
      %4973 = vmatmul.mubr.bf16.gmra.mxu0 %v509
      %v4974 = vpop.f32.mrf.mxu0
      %v4975 = vadd.f32 0.0, %v4974
      %v4976 = vpop.f32.mrf.mxu0
      %v4977 = vpop.f32.mrf.mxu0
      %v4978 = vadd.f32 0.0, %v4977
      %v4979 = vpop.f32.mrf.mxu0
      %4980 = vmatprep.mubr.bf16.mxu0 0
      %4981 = vmatmul.mubr.bf16.gmra.mxu0 %v512
      %v4982 = vpop.f32.mrf.mxu0
      %v4983 = vadd.f32 0.0, %v4982
      %v4984 = vpop.f32.mrf.mxu0
      %v4985 = vpop.f32.mrf.mxu0
      %v4986 = vadd.f32 0.0, %v4985
      %v4987 = vpop.f32.mrf.mxu0
      %4988 = vmatprep.mubr.bf16.mxu0 0
      %4989 = vmatmul.mubr.bf16.gmra.mxu0 %v515
      %v4990 = vpop.f32.mrf.mxu0
      %v4991 = vpop.f32.mrf.mxu0
      %v4992 = vpop.f32.mrf.mxu0
      %v4993 = vpop.f32.mrf.mxu0
      %4994 = vdwg.mxu0
      %v4995 = vld [vmem:[%s4486 + $0x1] sm:$0xff]
      %v4996 = vld [vmem:[%s4486 + $0x9] sm:$0x7f]
      %v4997 = vld [vmem:[%s4486 + $0x11] sm:$0xff]
      %v4998 = vld [vmem:[%s4486 + $0x19] sm:$0x7f]
      %v4999 = vld [vmem:[%s4486 + $0x21] sm:$0xff]
      %v5000 = vld [vmem:[%s4486 + $0x29] sm:$0x7f]
      %v5001 = vld [vmem:[%s4486 + $0x31] sm:$0xff]
      %v5002 = vld [vmem:[%s4486 + $0x39] sm:$0x7f]
      %v5003 = vld [vmem:[%s4486 + $0x41] sm:$0xff]
      %v5004 = vld [vmem:[%s4486 + $0x49] sm:$0x7f]
      %v5005 = vld [vmem:[%s4486 + $0x51] sm:$0xff]
      %v5006 = vld [vmem:[%s4486 + $0x59] sm:$0x7f]
      %v5007 = vld [vmem:[%s4486 + $0x61] sm:$0xff]
      %v5008 = vld [vmem:[%s4486 + $0x69] sm:$0x7f]
      %v5009 = vld [vmem:[%s4486 + $0x71] sm:$0xff]
      %v5010 = vld [vmem:[%s4486 + $0x79] sm:$0x7f]
      %v5011 = vld [vmem:[%s4486 + $0x81] sm:$0xff]
      %v5012 = vld [vmem:[%s4486 + $0x89] sm:$0x7f]
      %v5013 = vld [vmem:[%s4486 + $0x91] sm:$0xff]
      %v5014 = vld [vmem:[%s4486 + $0x99] sm:$0x7f]
      %v5015 = vld [vmem:[%s4486 + $0xa1] sm:$0xff]
      %v5016 = vld [vmem:[%s4486 + $0xa9] sm:$0x7f]
      %v5017 = vld [vmem:[%s4486 + $0xb1] sm:$0xff]
      %v5018 = vld [vmem:[%s4486 + $0xb9] sm:$0x7f]
      %v5019 = vld [vmem:[%s4486 + $0xc1] sm:$0xff]
      %v5020 = vld [vmem:[%s4486 + $0xc9] sm:$0x7f]
      %v5021 = vld [vmem:[%s4486 + $0xd1] sm:$0xff]
      %v5022 = vld [vmem:[%s4486 + $0xd9] sm:$0x7f]
      %v5023 = vld [vmem:[%s4486 + $0xe1] sm:$0xff]
      %v5024 = vld [vmem:[%s4486 + $0xe9] sm:$0x7f]
      %v5025 = vadd.f32 %v4995, %v4871
      %v5026 = vadd.f32 %v4996, %v4874
      %v5027 = vadd.f32 %v4997, %v4879
      %v5028 = vadd.f32 %v4998, %v4882
      %v5029 = vadd.f32 %v4999, %v4887
      %v5030 = vadd.f32 %v5000, %v4890
      %v5031 = vadd.f32 %v5001, %v4895
      %v5032 = vadd.f32 %v5002, %v4898
      %v5033 = vadd.f32 %v5003, %v4903
      %v5034 = vadd.f32 %v5004, %v4906
      %v5035 = vadd.f32 %v5005, %v4911
      %v5036 = vadd.f32 %v5006, %v4914
      %v5037 = vadd.f32 %v5007, %v4919
      %v5038 = vadd.f32 %v5008, %v4922
      %v5039 = vadd.f32 %v5009, %v4927
      %v5040 = vadd.f32 %v5010, %v4930
      %v5041 = vadd.f32 %v5011, %v4935
      %v5042 = vadd.f32 %v5012, %v4938
      %v5043 = vadd.f32 %v5013, %v4943
      %v5044 = vadd.f32 %v5014, %v4946
      %v5045 = vadd.f32 %v5015, %v4951
      %v5046 = vadd.f32 %v5016, %v4954
      %v5047 = vadd.f32 %v5017, %v4959
      %v5048 = vadd.f32 %v5018, %v4962
      %v5049 = vadd.f32 %v5019, %v4967
      %v5050 = vadd.f32 %v5020, %v4970
      %v5051 = vadd.f32 %v5021, %v4975
      %v5052 = vadd.f32 %v5022, %v4978
      %v5053 = vadd.f32 %v5023, %v4983
      %v5054 = vadd.f32 %v5024, %v4986
      %5055 = vst.msk [vmem:[%s4486 + $0x1] sm:$0xff] %vm226, %v5025
      %5056 = vst.msk [vmem:[%s4486 + $0x9] sm:$0x7f] %vm848, %v5026
      %5057 = vst.msk [vmem:[%s4486 + $0x11] sm:$0xff] %vm226, %v5027
      %5058 = vst.msk [vmem:[%s4486 + $0x19] sm:$0x7f] %vm848, %v5028
      %5059 = vst.msk [vmem:[%s4486 + $0x21] sm:$0xff] %vm226, %v5029
      %5060 = vst.msk [vmem:[%s4486 + $0x29] sm:$0x7f] %vm848, %v5030
      %5061 = vst.msk [vmem:[%s4486 + $0x31] sm:$0xff] %vm226, %v5031
      %5062 = vst.msk [vmem:[%s4486 + $0x39] sm:$0x7f] %vm848, %v5032
      %5063 = vst.msk [vmem:[%s4486 + $0x41] sm:$0xff] %vm226, %v5033
      %5064 = vst.msk [vmem:[%s4486 + $0x49] sm:$0x7f] %vm848, %v5034
      %5065 = vst.msk [vmem:[%s4486 + $0x51] sm:$0xff] %vm226, %v5035
      %5066 = vst.msk [vmem:[%s4486 + $0x59] sm:$0x7f] %vm848, %v5036
      %5067 = vst.msk [vmem:[%s4486 + $0x61] sm:$0xff] %vm226, %v5037
      %5068 = vst.msk [vmem:[%s4486 + $0x69] sm:$0x7f] %vm848, %v5038
      %5069 = vst.msk [vmem:[%s4486 + $0x71] sm:$0xff] %vm226, %v5039
      %5070 = vst.msk [vmem:[%s4486 + $0x79] sm:$0x7f] %vm848, %v5040
      %5071 = vst.msk [vmem:[%s4486 + $0x81] sm:$0xff] %vm226, %v5041
      %5072 = vst.msk [vmem:[%s4486 + $0x89] sm:$0x7f] %vm848, %v5042
      %5073 = vst.msk [vmem:[%s4486 + $0x91] sm:$0xff] %vm226, %v5043
      %5074 = vst.msk [vmem:[%s4486 + $0x99] sm:$0x7f] %vm848, %v5044
      %5075 = vst.msk [vmem:[%s4486 + $0xa1] sm:$0xff] %vm226, %v5045
      %5076 = vst.msk [vmem:[%s4486 + $0xa9] sm:$0x7f] %vm848, %v5046
      %5077 = vst.msk [vmem:[%s4486 + $0xb1] sm:$0xff] %vm226, %v5047
      %5078 = vst.msk [vmem:[%s4486 + $0xb9] sm:$0x7f] %vm848, %v5048
      %5079 = vst.msk [vmem:[%s4486 + $0xc1] sm:$0xff] %vm226, %v5049
      %5080 = vst.msk [vmem:[%s4486 + $0xc9] sm:$0x7f] %vm848, %v5050
      %5081 = vst.msk [vmem:[%s4486 + $0xd1] sm:$0xff] %vm226, %v5051
      %5082 = vst.msk [vmem:[%s4486 + $0xd9] sm:$0x7f] %vm848, %v5052
      %5083 = vst.msk [vmem:[%s4486 + $0xe1] sm:$0xff] %vm226, %v5053
      %5084 = vst.msk [vmem:[%s4486 + $0xe9] sm:$0x7f] %vm848, %v5054
      %v5085 = vld [vmem:[#allocation2] sm:$0xff]
      %v5086 = vld [vmem:[#allocation2 + $0x8] sm:$0xff]
      %v5087 = vld [vmem:[#allocation2 + $0x10] sm:$0xff]
      %v5088 = vld [vmem:[#allocation2 + $0x18] sm:$0xff]
      %v5089 = vld [vmem:[#allocation2 + $0x20] sm:$0xff]
      %v5090 = vld [vmem:[#allocation2 + $0x28] sm:$0xff]
      %v5091 = vld [vmem:[#allocation2 + $0x30] sm:$0xff]
      %v5092 = vld [vmem:[#allocation2 + $0x38] sm:$0xff]
      %v5093 = vld [vmem:[#allocation2 + $0x40] sm:$0xff]
      %v5094 = vld [vmem:[#allocation2 + $0x48] sm:$0xff]
      %v5095 = vld [vmem:[#allocation2 + $0x50] sm:$0xff]
      %v5096 = vld [vmem:[#allocation2 + $0x58] sm:$0xff]
      %v5097 = vld [vmem:[#allocation2 + $0x60] sm:$0xff]
      %v5098 = vld [vmem:[#allocation2 + $0x68] sm:$0xff]
      %v5099 = vld [vmem:[#allocation2 + $0x70] sm:$0xff]
      %v5100 = vld [vmem:[#allocation2 + $0x78] sm:$0xff]
      %v5101 = vld [vmem:[#allocation2 + $0x80] sm:$0xff]
      %v5102 = vld [vmem:[#allocation2 + $0x88] sm:$0xff]
      %v5103 = vld [vmem:[#allocation2 + $0x90] sm:$0xff]
      %v5104 = vld [vmem:[#allocation2 + $0x98] sm:$0xff]
      %v5105 = vld [vmem:[#allocation2 + $0xa0] sm:$0xff]
      %v5106 = vld [vmem:[#allocation2 + $0xa8] sm:$0xff]
      %v5107 = vld [vmem:[#allocation2 + $0xb0] sm:$0xff]
      %v5108 = vld [vmem:[#allocation2 + $0xb8] sm:$0xff]
      %v5109 = vld [vmem:[#allocation2 + $0xc0] sm:$0xff]
      %v5110 = vld [vmem:[#allocation2 + $0xc8] sm:$0xff]
      %v5111 = vld [vmem:[#allocation2 + $0xd0] sm:$0xff]
      %v5112 = vld [vmem:[#allocation2 + $0xd8] sm:$0xff]
      %v5113 = vld [vmem:[#allocation2 + $0xe0] sm:$0xff]
      %v5114 = vld [vmem:[#allocation2 + $0xe8] sm:$0xff]
      %v5115 = vld [vmem:[#allocation2 + $0xf0] sm:$0xff]
      %v5116 = vld [vmem:[#allocation2 + $0xf8] sm:$0xff]
      %v5117 = vld [vmem:[#allocation2 + $0x100] sm:$0xff]
      %v5118 = vld [vmem:[#allocation2 + $0x108] sm:$0xff]
      %v5119 = vld [vmem:[#allocation2 + $0x110] sm:$0xff]
      %v5120 = vld [vmem:[#allocation2 + $0x118] sm:$0xff]
      %v5121 = vld [vmem:[#allocation2 + $0x120] sm:$0xff]
      %v5122 = vld [vmem:[#allocation2 + $0x128] sm:$0xff]
      %v5123 = vld [vmem:[#allocation2 + $0x130] sm:$0xff]
      %v5124 = vld [vmem:[#allocation2 + $0x138] sm:$0xff]
      %v5125 = vld [vmem:[#allocation2 + $0x140] sm:$0xff]
      %v5126 = vld [vmem:[#allocation2 + $0x148] sm:$0xff]
      %v5127 = vld [vmem:[#allocation2 + $0x150] sm:$0xff]
      %v5128 = vld [vmem:[#allocation2 + $0x158] sm:$0xff]
      %v5129 = vld [vmem:[#allocation2 + $0x160] sm:$0xff]
      %v5130 = vld [vmem:[#allocation2 + $0x168] sm:$0xff]
      %v5131 = vld [vmem:[#allocation2 + $0x170] sm:$0xff]
      %v5132 = vld [vmem:[#allocation2 + $0x178] sm:$0xff]
      %v5133 = vld [vmem:[#allocation2 + $0x180] sm:$0xff]
      %v5134 = vld [vmem:[#allocation2 + $0x188] sm:$0xff]
      %v5135 = vld [vmem:[#allocation2 + $0x190] sm:$0xff]
      %v5136 = vld [vmem:[#allocation2 + $0x198] sm:$0xff]
      %v5137 = vld [vmem:[#allocation2 + $0x1a0] sm:$0xff]
      %v5138 = vld [vmem:[#allocation2 + $0x1a8] sm:$0xff]
      %v5139 = vld [vmem:[#allocation2 + $0x1b0] sm:$0xff]
      %v5140 = vld [vmem:[#allocation2 + $0x1b8] sm:$0xff]
      %v5141 = vld [vmem:[#allocation2 + $0x1c0] sm:$0xff]
      %v5142 = vld [vmem:[#allocation2 + $0x1c8] sm:$0xff]
      %v5143 = vld [vmem:[#allocation2 + $0x1d0] sm:$0xff]
      %v5144 = vld [vmem:[#allocation2 + $0x1d8] sm:$0xff]
      %v5145 = vld [vmem:[#allocation2 + $0x1e0] sm:$0xff]
      %v5146 = vld [vmem:[#allocation2 + $0x1e8] sm:$0xff]
      %v5147 = vld [vmem:[#allocation2 + $0x1f0] sm:$0xff]
      %v5148 = vld [vmem:[#allocation2 + $0x1f8] sm:$0xff]
      %v5149 = vld [vmem:[#allocation2 + $0x200] sm:$0xff]
      %v5150 = vld [vmem:[#allocation2 + $0x208] sm:$0xff]
      %v5151 = vld [vmem:[#allocation2 + $0x210] sm:$0xff]
      %v5152 = vld [vmem:[#allocation2 + $0x218] sm:$0xff]
      %v5153 = vld [vmem:[#allocation2 + $0x220] sm:$0xff]
      %v5154 = vld [vmem:[#allocation2 + $0x228] sm:$0xff]
      %v5155 = vld [vmem:[#allocation2 + $0x230] sm:$0xff]
      %v5156 = vld [vmem:[#allocation2 + $0x238] sm:$0xff]
      %v5157 = vld [vmem:[#allocation2 + $0x240] sm:$0xff]
      %v5158 = vld [vmem:[#allocation2 + $0x248] sm:$0xff]
      %v5159 = vld [vmem:[#allocation2 + $0x250] sm:$0xff]
      %v5160 = vld [vmem:[#allocation2 + $0x258] sm:$0xff]
      %v5161 = vld [vmem:[#allocation2 + $0x260] sm:$0xff]
      %v5162 = vld [vmem:[#allocation2 + $0x268] sm:$0xff]
      %v5163 = vld [vmem:[#allocation2 + $0x270] sm:$0xff]
      %v5164 = vld [vmem:[#allocation2 + $0x278] sm:$0xff]
      %v5165 = vld [vmem:[#allocation2 + $0x280] sm:$0xff]
      %v5166 = vld [vmem:[#allocation2 + $0x288] sm:$0xff]
      %v5167 = vld [vmem:[#allocation2 + $0x290] sm:$0xff]
      %v5168 = vld [vmem:[#allocation2 + $0x298] sm:$0xff]
      %v5169 = vld [vmem:[#allocation2 + $0x2a0] sm:$0xff]
      %v5170 = vld [vmem:[#allocation2 + $0x2a8] sm:$0xff]
      %v5171 = vld [vmem:[#allocation2 + $0x2b0] sm:$0xff]
      %v5172 = vld [vmem:[#allocation2 + $0x2b8] sm:$0xff]
      %v5173 = vld [vmem:[#allocation2 + $0x2c0] sm:$0xff]
      %v5174 = vld [vmem:[#allocation2 + $0x2c8] sm:$0xff]
      %v5175 = vld [vmem:[#allocation2 + $0x2d0] sm:$0xff]
      %v5176 = vld [vmem:[#allocation2 + $0x2d8] sm:$0xff]
      %v5177 = vld [vmem:[#allocation2 + $0x2e0] sm:$0xff]
      %v5178 = vld [vmem:[#allocation2 + $0x2e8] sm:$0xff]
      %v5179 = vld [vmem:[#allocation2 + $0x2f0] sm:$0xff]
      %v5180 = vld [vmem:[#allocation2 + $0x2f8] sm:$0xff]
      %v5181 = vld [vmem:[#allocation2 + $0x300] sm:$0xff]
      %v5182 = vld [vmem:[#allocation2 + $0x308] sm:$0xff]
      %v5183 = vld [vmem:[#allocation2 + $0x310] sm:$0xff]
      %v5184 = vld [vmem:[#allocation2 + $0x318] sm:$0xff]
      %v5185 = vld [vmem:[#allocation2 + $0x320] sm:$0xff]
      %v5186 = vld [vmem:[#allocation2 + $0x328] sm:$0xff]
      %v5187 = vld [vmem:[#allocation2 + $0x330] sm:$0xff]
      %v5188 = vld [vmem:[#allocation2 + $0x338] sm:$0xff]
      %v5189 = vld [vmem:[#allocation2 + $0x340] sm:$0xff]
      %v5190 = vld [vmem:[#allocation2 + $0x348] sm:$0xff]
      %v5191 = vld [vmem:[#allocation2 + $0x350] sm:$0xff]
      %v5192 = vld [vmem:[#allocation2 + $0x358] sm:$0xff]
      %v5193 = vld [vmem:[#allocation2 + $0x360] sm:$0xff]
      %v5194 = vld [vmem:[#allocation2 + $0x368] sm:$0xff]
      %v5195 = vld [vmem:[#allocation2 + $0x370] sm:$0xff]
      %v5196 = vld [vmem:[#allocation2 + $0x378] sm:$0xff]
      %v5197 = vld [vmem:[#allocation2 + $0x380] sm:$0xff]
      %v5198 = vld [vmem:[#allocation2 + $0x388] sm:$0xff]
      %v5199 = vld [vmem:[#allocation2 + $0x390] sm:$0xff]
      %v5200 = vld [vmem:[#allocation2 + $0x398] sm:$0xff]
      %v5201 = vld [vmem:[#allocation2 + $0x3a0] sm:$0xff]
      %v5202 = vld [vmem:[#allocation2 + $0x3a8] sm:$0xff]
      %v5203 = vld [vmem:[#allocation2 + $0x3b0] sm:$0xff]
      %v5204 = vld [vmem:[#allocation2 + $0x3b8] sm:$0xff]
      %v5205 = vld [vmem:[#allocation2 + $0x3c0] sm:$0xff]
      %v5206 = vld [vmem:[#allocation2 + $0x3c8] sm:$0xff]
      %v5207 = vld [vmem:[#allocation2 + $0x3d0] sm:$0xff]
      %v5208 = vld [vmem:[#allocation2 + $0x3d8] sm:$0xff]
      %v5209 = vld [vmem:[#allocation2 + $0x3e0] sm:$0xff]
      %v5210 = vld [vmem:[#allocation2 + $0x3e8] sm:$0xff]
      %v5211 = vld [vmem:[#allocation2 + $0x3f0] sm:$0xff]
      %v5212 = vld [vmem:[#allocation2 + $0x3f8] sm:$0xff]
      %v5213 = vld [vmem:[%s2] sm:$0x1]
      %v5215 = vlaneseq
      %v5216 = vshrl.u32 %v5215, 7
      %v5217 = vsub.s32 0, %v5216
      %v5218 = vrot.slane %v5213, %v5217
      %v5220 = vmul.f32 %v5085, %v5218
      %v5221 = vmul.f32 %v5086, %v5218
      %v5222 = vmul.f32 %v5087, %v5218
      %v5223 = vmul.f32 %v5088, %v5218
      %v5224 = vmul.f32 %v5089, %v5218
      %v5225 = vmul.f32 %v5090, %v5218
      %v5226 = vmul.f32 %v5091, %v5218
      %v5227 = vmul.f32 %v5092, %v5218
      %v5228 = vmul.f32 %v5093, %v5218
      %v5229 = vmul.f32 %v5094, %v5218
      %v5230 = vmul.f32 %v5095, %v5218
      %v5231 = vmul.f32 %v5096, %v5218
      %v5232 = vmul.f32 %v5097, %v5218
      %v5233 = vmul.f32 %v5098, %v5218
      %v5234 = vmul.f32 %v5099, %v5218
      %v5235 = vmul.f32 %v5100, %v5218
      %v5236 = vmul.f32 %v5101, %v5218
      %v5237 = vmul.f32 %v5102, %v5218
      %v5238 = vmul.f32 %v5103, %v5218
      %v5239 = vmul.f32 %v5104, %v5218
      %v5240 = vmul.f32 %v5105, %v5218
      %v5241 = vmul.f32 %v5106, %v5218
      %v5242 = vmul.f32 %v5107, %v5218
      %v5243 = vmul.f32 %v5108, %v5218
      %v5244 = vmul.f32 %v5109, %v5218
      %v5245 = vmul.f32 %v5110, %v5218
      %v5246 = vmul.f32 %v5111, %v5218
      %v5247 = vmul.f32 %v5112, %v5218
      %v5248 = vmul.f32 %v5113, %v5218
      %v5249 = vmul.f32 %v5114, %v5218
      %v5250 = vmul.f32 %v5115, %v5218
      %v5251 = vmul.f32 %v5116, %v5218
      %v5252 = vmul.f32 %v5117, %v5218
      %v5253 = vmul.f32 %v5118, %v5218
      %v5254 = vmul.f32 %v5119, %v5218
      %v5255 = vmul.f32 %v5120, %v5218
      %v5256 = vmul.f32 %v5121, %v5218
      %v5257 = vmul.f32 %v5122, %v5218
      %v5258 = vmul.f32 %v5123, %v5218
      %v5259 = vmul.f32 %v5124, %v5218
      %v5260 = vmul.f32 %v5125, %v5218
      %v5261 = vmul.f32 %v5126, %v5218
      %v5262 = vmul.f32 %v5127, %v5218
      %v5263 = vmul.f32 %v5128, %v5218
      %v5264 = vmul.f32 %v5129, %v5218
      %v5265 = vmul.f32 %v5130, %v5218
      %v5266 = vmul.f32 %v5131, %v5218
      %v5267 = vmul.f32 %v5132, %v5218
      %v5268 = vmul.f32 %v5133, %v5218
      %v5269 = vmul.f32 %v5134, %v5218
      %v5270 = vmul.f32 %v5135, %v5218
      %v5271 = vmul.f32 %v5136, %v5218
      %v5272 = vmul.f32 %v5137, %v5218
      %v5273 = vmul.f32 %v5138, %v5218
      %v5274 = vmul.f32 %v5139, %v5218
      %v5275 = vmul.f32 %v5140, %v5218
      %v5276 = vmul.f32 %v5141, %v5218
      %v5277 = vmul.f32 %v5142, %v5218
      %v5278 = vmul.f32 %v5143, %v5218
      %v5279 = vmul.f32 %v5144, %v5218
      %v5280 = vmul.f32 %v5145, %v5218
      %v5281 = vmul.f32 %v5146, %v5218
      %v5282 = vmul.f32 %v5147, %v5218
      %v5283 = vmul.f32 %v5148, %v5218
      %v5284 = vmul.f32 %v5149, %v5218
      %v5285 = vmul.f32 %v5150, %v5218
      %v5286 = vmul.f32 %v5151, %v5218
      %v5287 = vmul.f32 %v5152, %v5218
      %v5288 = vmul.f32 %v5153, %v5218
      %v5289 = vmul.f32 %v5154, %v5218
      %v5290 = vmul.f32 %v5155, %v5218
      %v5291 = vmul.f32 %v5156, %v5218
      %v5292 = vmul.f32 %v5157, %v5218
      %v5293 = vmul.f32 %v5158, %v5218
      %v5294 = vmul.f32 %v5159, %v5218
      %v5295 = vmul.f32 %v5160, %v5218
      %v5296 = vmul.f32 %v5161, %v5218
      %v5297 = vmul.f32 %v5162, %v5218
      %v5298 = vmul.f32 %v5163, %v5218
      %v5299 = vmul.f32 %v5164, %v5218
      %v5300 = vmul.f32 %v5165, %v5218
      %v5301 = vmul.f32 %v5166, %v5218
      %v5302 = vmul.f32 %v5167, %v5218
      %v5303 = vmul.f32 %v5168, %v5218
      %v5304 = vmul.f32 %v5169, %v5218
      %v5305 = vmul.f32 %v5170, %v5218
      %v5306 = vmul.f32 %v5171, %v5218
      %v5307 = vmul.f32 %v5172, %v5218
      %v5308 = vmul.f32 %v5173, %v5218
      %v5309 = vmul.f32 %v5174, %v5218
      %v5310 = vmul.f32 %v5175, %v5218
      %v5311 = vmul.f32 %v5176, %v5218
      %v5312 = vmul.f32 %v5177, %v5218
      %v5313 = vmul.f32 %v5178, %v5218
      %v5314 = vmul.f32 %v5179, %v5218
      %v5315 = vmul.f32 %v5180, %v5218
      %v5316 = vmul.f32 %v5181, %v5218
      %v5317 = vmul.f32 %v5182, %v5218
      %v5318 = vmul.f32 %v5183, %v5218
      %v5319 = vmul.f32 %v5184, %v5218
      %v5320 = vmul.f32 %v5185, %v5218
      %v5321 = vmul.f32 %v5186, %v5218
      %v5322 = vmul.f32 %v5187, %v5218
      %v5323 = vmul.f32 %v5188, %v5218
      %v5324 = vmul.f32 %v5189, %v5218
      %v5325 = vmul.f32 %v5190, %v5218
      %v5326 = vmul.f32 %v5191, %v5218
      %v5327 = vmul.f32 %v5192, %v5218
      %v5328 = vmul.f32 %v5193, %v5218
      %v5329 = vmul.f32 %v5194, %v5218
      %v5330 = vmul.f32 %v5195, %v5218
      %v5331 = vmul.f32 %v5196, %v5218
      %v5332 = vmul.f32 %v5197, %v5218
      %v5333 = vmul.f32 %v5198, %v5218
      %v5334 = vmul.f32 %v5199, %v5218
      %v5335 = vmul.f32 %v5200, %v5218
      %v5336 = vmul.f32 %v5201, %v5218
      %v5337 = vmul.f32 %v5202, %v5218
      %v5338 = vmul.f32 %v5203, %v5218
      %v5339 = vmul.f32 %v5204, %v5218
      %v5340 = vmul.f32 %v5205, %v5218
      %v5341 = vmul.f32 %v5206, %v5218
      %v5342 = vmul.f32 %v5207, %v5218
      %v5343 = vmul.f32 %v5208, %v5218
      %v5344 = vmul.f32 %v5209, %v5218
      %v5345 = vmul.f32 %v5210, %v5218
      %v5346 = vmul.f32 %v5211, %v5218
      %v5347 = vmul.f32 %v5212, %v5218
      %v5348 = vld [vmem:[%s3] sm:$0x1]
      %v5350 = vlaneseq
      %v5351 = vshrl.u32 %v5350, 7
      %v5352 = vsub.s32 0, %v5351
      %v5353 = vrot.slane %v5348, %v5352
      %v5355 = vadd.f32 %v5220, %v5353
      %v5356 = vadd.f32 %v5221, %v5353
      %v5357 = vadd.f32 %v5222, %v5353
      %v5358 = vadd.f32 %v5223, %v5353
      %v5359 = vadd.f32 %v5224, %v5353
      %v5360 = vadd.f32 %v5225, %v5353
      %v5361 = vadd.f32 %v5226, %v5353
      %v5362 = vadd.f32 %v5227, %v5353
      %v5363 = vadd.f32 %v5228, %v5353
      %v5364 = vadd.f32 %v5229, %v5353
      %v5365 = vadd.f32 %v5230, %v5353
      %v5366 = vadd.f32 %v5231, %v5353
      %v5367 = vadd.f32 %v5232, %v5353
      %v5368 = vadd.f32 %v5233, %v5353
      %v5369 = vadd.f32 %v5234, %v5353
      %v5370 = vadd.f32 %v5235, %v5353
      %v5371 = vadd.f32 %v5236, %v5353
      %v5372 = vadd.f32 %v5237, %v5353
      %v5373 = vadd.f32 %v5238, %v5353
      %v5374 = vadd.f32 %v5239, %v5353
      %v5375 = vadd.f32 %v5240, %v5353
      %v5376 = vadd.f32 %v5241, %v5353
      %v5377 = vadd.f32 %v5242, %v5353
      %v5378 = vadd.f32 %v5243, %v5353
      %v5379 = vadd.f32 %v5244, %v5353
      %v5380 = vadd.f32 %v5245, %v5353
      %v5381 = vadd.f32 %v5246, %v5353
      %v5382 = vadd.f32 %v5247, %v5353
      %v5383 = vadd.f32 %v5248, %v5353
      %v5384 = vadd.f32 %v5249, %v5353
      %v5385 = vadd.f32 %v5250, %v5353
      %v5386 = vadd.f32 %v5251, %v5353
      %v5387 = vadd.f32 %v5252, %v5353
      %v5388 = vadd.f32 %v5253, %v5353
      %v5389 = vadd.f32 %v5254, %v5353
      %v5390 = vadd.f32 %v5255, %v5353
      %v5391 = vadd.f32 %v5256, %v5353
      %v5392 = vadd.f32 %v5257, %v5353
      %v5393 = vadd.f32 %v5258, %v5353
      %v5394 = vadd.f32 %v5259, %v5353
      %v5395 = vadd.f32 %v5260, %v5353
      %v5396 = vadd.f32 %v5261, %v5353
      %v5397 = vadd.f32 %v5262, %v5353
      %v5398 = vadd.f32 %v5263, %v5353
      %v5399 = vadd.f32 %v5264, %v5353
      %v5400 = vadd.f32 %v5265, %v5353
      %v5401 = vadd.f32 %v5266, %v5353
      %v5402 = vadd.f32 %v5267, %v5353
      %v5403 = vadd.f32 %v5268, %v5353
      %v5404 = vadd.f32 %v5269, %v5353
      %v5405 = vadd.f32 %v5270, %v5353
      %v5406 = vadd.f32 %v5271, %v5353
      %v5407 = vadd.f32 %v5272, %v5353
      %v5408 = vadd.f32 %v5273, %v5353
      %v5409 = vadd.f32 %v5274, %v5353
      %v5410 = vadd.f32 %v5275, %v5353
      %v5411 = vadd.f32 %v5276, %v5353
      %v5412 = vadd.f32 %v5277, %v5353
      %v5413 = vadd.f32 %v5278, %v5353
      %v5414 = vadd.f32 %v5279, %v5353
      %v5415 = vadd.f32 %v5280, %v5353
      %v5416 = vadd.f32 %v5281, %v5353
      %v5417 = vadd.f32 %v5282, %v5353
      %v5418 = vadd.f32 %v5283, %v5353
      %v5419 = vadd.f32 %v5284, %v5353
      %v5420 = vadd.f32 %v5285, %v5353
      %v5421 = vadd.f32 %v5286, %v5353
      %v5422 = vadd.f32 %v5287, %v5353
      %v5423 = vadd.f32 %v5288, %v5353
      %v5424 = vadd.f32 %v5289, %v5353
      %v5425 = vadd.f32 %v5290, %v5353
      %v5426 = vadd.f32 %v5291, %v5353
      %v5427 = vadd.f32 %v5292, %v5353
      %v5428 = vadd.f32 %v5293, %v5353
      %v5429 = vadd.f32 %v5294, %v5353
      %v5430 = vadd.f32 %v5295, %v5353
      %v5431 = vadd.f32 %v5296, %v5353
      %v5432 = vadd.f32 %v5297, %v5353
      %v5433 = vadd.f32 %v5298, %v5353
      %v5434 = vadd.f32 %v5299, %v5353
      %v5435 = vadd.f32 %v5300, %v5353
      %v5436 = vadd.f32 %v5301, %v5353
      %v5437 = vadd.f32 %v5302, %v5353
      %v5438 = vadd.f32 %v5303, %v5353
      %v5439 = vadd.f32 %v5304, %v5353
      %v5440 = vadd.f32 %v5305, %v5353
      %v5441 = vadd.f32 %v5306, %v5353
      %v5442 = vadd.f32 %v5307, %v5353
      %v5443 = vadd.f32 %v5308, %v5353
      %v5444 = vadd.f32 %v5309, %v5353
      %v5445 = vadd.f32 %v5310, %v5353
      %v5446 = vadd.f32 %v5311, %v5353
      %v5447 = vadd.f32 %v5312, %v5353
      %v5448 = vadd.f32 %v5313, %v5353
      %v5449 = vadd.f32 %v5314, %v5353
      %v5450 = vadd.f32 %v5315, %v5353
      %v5451 = vadd.f32 %v5316, %v5353
      %v5452 = vadd.f32 %v5317, %v5353
      %v5453 = vadd.f32 %v5318, %v5353
      %v5454 = vadd.f32 %v5319, %v5353
      %v5455 = vadd.f32 %v5320, %v5353
      %v5456 = vadd.f32 %v5321, %v5353
      %v5457 = vadd.f32 %v5322, %v5353
      %v5458 = vadd.f32 %v5323, %v5353
      %v5459 = vadd.f32 %v5324, %v5353
      %v5460 = vadd.f32 %v5325, %v5353
      %v5461 = vadd.f32 %v5326, %v5353
      %v5462 = vadd.f32 %v5327, %v5353
      %v5463 = vadd.f32 %v5328, %v5353
      %v5464 = vadd.f32 %v5329, %v5353
      %v5465 = vadd.f32 %v5330, %v5353
      %v5466 = vadd.f32 %v5331, %v5353
      %v5467 = vadd.f32 %v5332, %v5353
      %v5468 = vadd.f32 %v5333, %v5353
      %v5469 = vadd.f32 %v5334, %v5353
      %v5470 = vadd.f32 %v5335, %v5353
      %v5471 = vadd.f32 %v5336, %v5353
      %v5472 = vadd.f32 %v5337, %v5353
      %v5473 = vadd.f32 %v5338, %v5353
      %v5474 = vadd.f32 %v5339, %v5353
      %v5475 = vadd.f32 %v5340, %v5353
      %v5476 = vadd.f32 %v5341, %v5353
      %v5477 = vadd.f32 %v5342, %v5353
      %v5478 = vadd.f32 %v5343, %v5353
      %v5479 = vadd.f32 %v5344, %v5353
      %v5480 = vadd.f32 %v5345, %v5353
      %v5481 = vadd.f32 %v5346, %v5353
      %v5482 = vadd.f32 %v5347, %v5353
      %v5483 = vmax.f32 %v5355, 0.0
      %v5484 = vmax.f32 %v5356, 0.0
      %v5485 = vmax.f32 %v5357, 0.0
      %v5486 = vmax.f32 %v5358, 0.0
      %v5487 = vmax.f32 %v5359, 0.0
      %v5488 = vmax.f32 %v5360, 0.0
      %v5489 = vmax.f32 %v5361, 0.0
      %v5490 = vmax.f32 %v5362, 0.0
      %v5491 = vmax.f32 %v5363, 0.0
      %v5492 = vmax.f32 %v5364, 0.0
      %v5493 = vmax.f32 %v5365, 0.0
      %v5494 = vmax.f32 %v5366, 0.0
      %v5495 = vmax.f32 %v5367, 0.0
      %v5496 = vmax.f32 %v5368, 0.0
      %v5497 = vmax.f32 %v5369, 0.0
      %v5498 = vmax.f32 %v5370, 0.0
      %v5499 = vmax.f32 %v5371, 0.0
      %v5500 = vmax.f32 %v5372, 0.0
      %v5501 = vmax.f32 %v5373, 0.0
      %v5502 = vmax.f32 %v5374, 0.0
      %v5503 = vmax.f32 %v5375, 0.0
      %v5504 = vmax.f32 %v5376, 0.0
      %v5505 = vmax.f32 %v5377, 0.0
      %v5506 = vmax.f32 %v5378, 0.0
      %v5507 = vmax.f32 %v5379, 0.0
      %v5508 = vmax.f32 %v5380, 0.0
      %v5509 = vmax.f32 %v5381, 0.0
      %v5510 = vmax.f32 %v5382, 0.0
      %v5511 = vmax.f32 %v5383, 0.0
      %v5512 = vmax.f32 %v5384, 0.0
      %v5513 = vmax.f32 %v5385, 0.0
      %v5514 = vmax.f32 %v5386, 0.0
      %v5515 = vmax.f32 %v5387, 0.0
      %v5516 = vmax.f32 %v5388, 0.0
      %v5517 = vmax.f32 %v5389, 0.0
      %v5518 = vmax.f32 %v5390, 0.0
      %v5519 = vmax.f32 %v5391, 0.0
      %v5520 = vmax.f32 %v5392, 0.0
      %v5521 = vmax.f32 %v5393, 0.0
      %v5522 = vmax.f32 %v5394, 0.0
      %v5523 = vmax.f32 %v5395, 0.0
      %v5524 = vmax.f32 %v5396, 0.0
      %v5525 = vmax.f32 %v5397, 0.0
      %v5526 = vmax.f32 %v5398, 0.0
      %v5527 = vmax.f32 %v5399, 0.0
      %v5528 = vmax.f32 %v5400, 0.0
      %v5529 = vmax.f32 %v5401, 0.0
      %v5530 = vmax.f32 %v5402, 0.0
      %v5531 = vmax.f32 %v5403, 0.0
      %v5532 = vmax.f32 %v5404, 0.0
      %v5533 = vmax.f32 %v5405, 0.0
      %v5534 = vmax.f32 %v5406, 0.0
      %v5535 = vmax.f32 %v5407, 0.0
      %v5536 = vmax.f32 %v5408, 0.0
      %v5537 = vmax.f32 %v5409, 0.0
      %v5538 = vmax.f32 %v5410, 0.0
      %v5539 = vmax.f32 %v5411, 0.0
      %v5540 = vmax.f32 %v5412, 0.0
      %v5541 = vmax.f32 %v5413, 0.0
      %v5542 = vmax.f32 %v5414, 0.0
      %v5543 = vmax.f32 %v5415, 0.0
      %v5544 = vmax.f32 %v5416, 0.0
      %v5545 = vmax.f32 %v5417, 0.0
      %v5546 = vmax.f32 %v5418, 0.0
      %v5547 = vmax.f32 %v5419, 0.0
      %v5548 = vmax.f32 %v5420, 0.0
      %v5549 = vmax.f32 %v5421, 0.0
      %v5550 = vmax.f32 %v5422, 0.0
      %v5551 = vmax.f32 %v5423, 0.0
      %v5552 = vmax.f32 %v5424, 0.0
      %v5553 = vmax.f32 %v5425, 0.0
      %v5554 = vmax.f32 %v5426, 0.0
      %v5555 = vmax.f32 %v5427, 0.0
      %v5556 = vmax.f32 %v5428, 0.0
      %v5557 = vmax.f32 %v5429, 0.0
      %v5558 = vmax.f32 %v5430, 0.0
      %v5559 = vmax.f32 %v5431, 0.0
      %v5560 = vmax.f32 %v5432, 0.0
      %v5561 = vmax.f32 %v5433, 0.0
      %v5562 = vmax.f32 %v5434, 0.0
      %v5563 = vmax.f32 %v5435, 0.0
      %v5564 = vmax.f32 %v5436, 0.0
      %v5565 = vmax.f32 %v5437, 0.0
      %v5566 = vmax.f32 %v5438, 0.0
      %v5567 = vmax.f32 %v5439, 0.0
      %v5568 = vmax.f32 %v5440, 0.0
      %v5569 = vmax.f32 %v5441, 0.0
      %v5570 = vmax.f32 %v5442, 0.0
      %v5571 = vmax.f32 %v5443, 0.0
      %v5572 = vmax.f32 %v5444, 0.0
      %v5573 = vmax.f32 %v5445, 0.0
      %v5574 = vmax.f32 %v5446, 0.0
      %v5575 = vmax.f32 %v5447, 0.0
      %v5576 = vmax.f32 %v5448, 0.0
      %v5577 = vmax.f32 %v5449, 0.0
      %v5578 = vmax.f32 %v5450, 0.0
      %v5579 = vmax.f32 %v5451, 0.0
      %v5580 = vmax.f32 %v5452, 0.0
      %v5581 = vmax.f32 %v5453, 0.0
      %v5582 = vmax.f32 %v5454, 0.0
      %v5583 = vmax.f32 %v5455, 0.0
      %v5584 = vmax.f32 %v5456, 0.0
      %v5585 = vmax.f32 %v5457, 0.0
      %v5586 = vmax.f32 %v5458, 0.0
      %v5587 = vmax.f32 %v5459, 0.0
      %v5588 = vmax.f32 %v5460, 0.0
      %v5589 = vmax.f32 %v5461, 0.0
      %v5590 = vmax.f32 %v5462, 0.0
      %v5591 = vmax.f32 %v5463, 0.0
      %v5592 = vmax.f32 %v5464, 0.0
      %v5593 = vmax.f32 %v5465, 0.0
      %v5594 = vmax.f32 %v5466, 0.0
      %v5595 = vmax.f32 %v5467, 0.0
      %v5596 = vmax.f32 %v5468, 0.0
      %v5597 = vmax.f32 %v5469, 0.0
      %v5598 = vmax.f32 %v5470, 0.0
      %v5599 = vmax.f32 %v5471, 0.0
      %v5600 = vmax.f32 %v5472, 0.0
      %v5601 = vmax.f32 %v5473, 0.0
      %v5602 = vmax.f32 %v5474, 0.0
      %v5603 = vmax.f32 %v5475, 0.0
      %v5604 = vmax.f32 %v5476, 0.0
      %v5605 = vmax.f32 %v5477, 0.0
      %v5606 = vmax.f32 %v5478, 0.0
      %v5607 = vmax.f32 %v5479, 0.0
      %v5608 = vmax.f32 %v5480, 0.0
      %v5609 = vmax.f32 %v5481, 0.0
      %v5610 = vmax.f32 %v5482, 0.0
      %v5611 = vld [vmem:[%s4] sm:$0x1]
      %v5612 = vmin.f32 %v5355, 0.0
      %v5613 = vmin.f32 %v5356, 0.0
      %v5614 = vmin.f32 %v5357, 0.0
      %v5615 = vmin.f32 %v5358, 0.0
      %v5616 = vmin.f32 %v5359, 0.0
      %v5617 = vmin.f32 %v5360, 0.0
      %v5618 = vmin.f32 %v5361, 0.0
      %v5619 = vmin.f32 %v5362, 0.0
      %v5620 = vmin.f32 %v5363, 0.0
      %v5621 = vmin.f32 %v5364, 0.0
      %v5622 = vmin.f32 %v5365, 0.0
      %v5623 = vmin.f32 %v5366, 0.0
      %v5624 = vmin.f32 %v5367, 0.0
      %v5625 = vmin.f32 %v5368, 0.0
      %v5626 = vmin.f32 %v5369, 0.0
      %v5627 = vmin.f32 %v5370, 0.0
      %v5628 = vmin.f32 %v5371, 0.0
      %v5629 = vmin.f32 %v5372, 0.0
      %v5630 = vmin.f32 %v5373, 0.0
      %v5631 = vmin.f32 %v5374, 0.0
      %v5632 = vmin.f32 %v5375, 0.0
      %v5633 = vmin.f32 %v5376, 0.0
      %v5634 = vmin.f32 %v5377, 0.0
      %v5635 = vmin.f32 %v5378, 0.0
      %v5636 = vmin.f32 %v5379, 0.0
      %v5637 = vmin.f32 %v5380, 0.0
      %v5638 = vmin.f32 %v5381, 0.0
      %v5639 = vmin.f32 %v5382, 0.0
      %v5640 = vmin.f32 %v5383, 0.0
      %v5641 = vmin.f32 %v5384, 0.0
      %v5642 = vmin.f32 %v5385, 0.0
      %v5643 = vmin.f32 %v5386, 0.0
      %v5644 = vmin.f32 %v5387, 0.0
      %v5645 = vmin.f32 %v5388, 0.0
      %v5646 = vmin.f32 %v5389, 0.0
      %v5647 = vmin.f32 %v5390, 0.0
      %v5648 = vmin.f32 %v5391, 0.0
      %v5649 = vmin.f32 %v5392, 0.0
      %v5650 = vmin.f32 %v5393, 0.0
      %v5651 = vmin.f32 %v5394, 0.0
      %v5652 = vmin.f32 %v5395, 0.0
      %v5653 = vmin.f32 %v5396, 0.0
      %v5654 = vmin.f32 %v5397, 0.0
      %v5655 = vmin.f32 %v5398, 0.0
      %v5656 = vmin.f32 %v5399, 0.0
      %v5657 = vmin.f32 %v5400, 0.0
      %v5658 = vmin.f32 %v5401, 0.0
      %v5659 = vmin.f32 %v5402, 0.0
      %v5660 = vmin.f32 %v5403, 0.0
      %v5661 = vmin.f32 %v5404, 0.0
      %v5662 = vmin.f32 %v5405, 0.0
      %v5663 = vmin.f32 %v5406, 0.0
      %v5664 = vmin.f32 %v5407, 0.0
      %v5665 = vmin.f32 %v5408, 0.0
      %v5666 = vmin.f32 %v5409, 0.0
      %v5667 = vmin.f32 %v5410, 0.0
      %v5668 = vmin.f32 %v5411, 0.0
      %v5669 = vmin.f32 %v5412, 0.0
      %v5670 = vmin.f32 %v5413, 0.0
      %v5671 = vmin.f32 %v5414, 0.0
      %v5672 = vmin.f32 %v5415, 0.0
      %v5673 = vmin.f32 %v5416, 0.0
      %v5674 = vmin.f32 %v5417, 0.0
      %v5675 = vmin.f32 %v5418, 0.0
      %v5676 = vmin.f32 %v5419, 0.0
      %v5677 = vmin.f32 %v5420, 0.0
      %v5678 = vmin.f32 %v5421, 0.0
      %v5679 = vmin.f32 %v5422, 0.0
      %v5680 = vmin.f32 %v5423, 0.0
      %v5681 = vmin.f32 %v5424, 0.0
      %v5682 = vmin.f32 %v5425, 0.0
      %v5683 = vmin.f32 %v5426, 0.0
      %v5684 = vmin.f32 %v5427, 0.0
      %v5685 = vmin.f32 %v5428, 0.0
      %v5686 = vmin.f32 %v5429, 0.0
      %v5687 = vmin.f32 %v5430, 0.0
      %v5688 = vmin.f32 %v5431, 0.0
      %v5689 = vmin.f32 %v5432, 0.0
      %v5690 = vmin.f32 %v5433, 0.0
      %v5691 = vmin.f32 %v5434, 0.0
      %v5692 = vmin.f32 %v5435, 0.0
      %v5693 = vmin.f32 %v5436, 0.0
      %v5694 = vmin.f32 %v5437, 0.0
      %v5695 = vmin.f32 %v5438, 0.0
      %v5696 = vmin.f32 %v5439, 0.0
      %v5697 = vmin.f32 %v5440, 0.0
      %v5698 = vmin.f32 %v5441, 0.0
      %v5699 = vmin.f32 %v5442, 0.0
      %v5700 = vmin.f32 %v5443, 0.0
      %v5701 = vmin.f32 %v5444, 0.0
      %v5702 = vmin.f32 %v5445, 0.0
      %v5703 = vmin.f32 %v5446, 0.0
      %v5704 = vmin.f32 %v5447, 0.0
      %v5705 = vmin.f32 %v5448, 0.0
      %v5706 = vmin.f32 %v5449, 0.0
      %v5707 = vmin.f32 %v5450, 0.0
      %v5708 = vmin.f32 %v5451, 0.0
      %v5709 = vmin.f32 %v5452, 0.0
      %v5710 = vmin.f32 %v5453, 0.0
      %v5711 = vmin.f32 %v5454, 0.0
      %v5712 = vmin.f32 %v5455, 0.0
      %v5713 = vmin.f32 %v5456, 0.0
      %v5714 = vmin.f32 %v5457, 0.0
      %v5715 = vmin.f32 %v5458, 0.0
      %v5716 = vmin.f32 %v5459, 0.0
      %v5717 = vmin.f32 %v5460, 0.0
      %v5718 = vmin.f32 %v5461, 0.0
      %v5719 = vmin.f32 %v5462, 0.0
      %v5720 = vmin.f32 %v5463, 0.0
      %v5721 = vmin.f32 %v5464, 0.0
      %v5722 = vmin.f32 %v5465, 0.0
      %v5723 = vmin.f32 %v5466, 0.0
      %v5724 = vmin.f32 %v5467, 0.0
      %v5725 = vmin.f32 %v5468, 0.0
      %v5726 = vmin.f32 %v5469, 0.0
      %v5727 = vmin.f32 %v5470, 0.0
      %v5728 = vmin.f32 %v5471, 0.0
      %v5729 = vmin.f32 %v5472, 0.0
      %v5730 = vmin.f32 %v5473, 0.0
      %v5731 = vmin.f32 %v5474, 0.0
      %v5732 = vmin.f32 %v5475, 0.0
      %v5733 = vmin.f32 %v5476, 0.0
      %v5734 = vmin.f32 %v5477, 0.0
      %v5735 = vmin.f32 %v5478, 0.0
      %v5736 = vmin.f32 %v5479, 0.0
      %v5737 = vmin.f32 %v5480, 0.0
      %v5738 = vmin.f32 %v5481, 0.0
      %v5739 = vmin.f32 %v5482, 0.0
      %v5741 = vlaneseq
      %v5742 = vshrl.u32 %v5741, 7
      %v5743 = vsub.s32 0, %v5742
      %v5744 = vrot.slane %v5611, %v5743
      %v5746 = vmul.f32 %v5744, %v5612
      %v5747 = vmul.f32 %v5744, %v5613
      %v5748 = vmul.f32 %v5744, %v5614
      %v5749 = vmul.f32 %v5744, %v5615
      %v5750 = vmul.f32 %v5744, %v5616
      %v5751 = vmul.f32 %v5744, %v5617
      %v5752 = vmul.f32 %v5744, %v5618
      %v5753 = vmul.f32 %v5744, %v5619
      %v5754 = vmul.f32 %v5744, %v5620
      %v5755 = vmul.f32 %v5744, %v5621
      %v5756 = vmul.f32 %v5744, %v5622
      %v5757 = vmul.f32 %v5744, %v5623
      %v5758 = vmul.f32 %v5744, %v5624
      %v5759 = vmul.f32 %v5744, %v5625
      %v5760 = vmul.f32 %v5744, %v5626
      %v5761 = vmul.f32 %v5744, %v5627
      %v5762 = vmul.f32 %v5744, %v5628
      %v5763 = vmul.f32 %v5744, %v5629
      %v5764 = vmul.f32 %v5744, %v5630
      %v5765 = vmul.f32 %v5744, %v5631
      %v5766 = vmul.f32 %v5744, %v5632
      %v5767 = vmul.f32 %v5744, %v5633
      %v5768 = vmul.f32 %v5744, %v5634
      %v5769 = vmul.f32 %v5744, %v5635
      %v5770 = vmul.f32 %v5744, %v5636
      %v5771 = vmul.f32 %v5744, %v5637
      %v5772 = vmul.f32 %v5744, %v5638
      %v5773 = vmul.f32 %v5744, %v5639
      %v5774 = vmul.f32 %v5744, %v5640
      %v5775 = vmul.f32 %v5744, %v5641
      %v5776 = vmul.f32 %v5744, %v5642
      %v5777 = vmul.f32 %v5744, %v5643
      %v5778 = vmul.f32 %v5744, %v5644
      %v5779 = vmul.f32 %v5744, %v5645
      %v5780 = vmul.f32 %v5744, %v5646
      %v5781 = vmul.f32 %v5744, %v5647
      %v5782 = vmul.f32 %v5744, %v5648
      %v5783 = vmul.f32 %v5744, %v5649
      %v5784 = vmul.f32 %v5744, %v5650
      %v5785 = vmul.f32 %v5744, %v5651
      %v5786 = vmul.f32 %v5744, %v5652
      %v5787 = vmul.f32 %v5744, %v5653
      %v5788 = vmul.f32 %v5744, %v5654
      %v5789 = vmul.f32 %v5744, %v5655
      %v5790 = vmul.f32 %v5744, %v5656
      %v5791 = vmul.f32 %v5744, %v5657
      %v5792 = vmul.f32 %v5744, %v5658
      %v5793 = vmul.f32 %v5744, %v5659
      %v5794 = vmul.f32 %v5744, %v5660
      %v5795 = vmul.f32 %v5744, %v5661
      %v5796 = vmul.f32 %v5744, %v5662
      %v5797 = vmul.f32 %v5744, %v5663
      %v5798 = vmul.f32 %v5744, %v5664
      %v5799 = vmul.f32 %v5744, %v5665
      %v5800 = vmul.f32 %v5744, %v5666
      %v5801 = vmul.f32 %v5744, %v5667
      %v5802 = vmul.f32 %v5744, %v5668
      %v5803 = vmul.f32 %v5744, %v5669
      %v5804 = vmul.f32 %v5744, %v5670
      %v5805 = vmul.f32 %v5744, %v5671
      %v5806 = vmul.f32 %v5744, %v5672
      %v5807 = vmul.f32 %v5744, %v5673
      %v5808 = vmul.f32 %v5744, %v5674
      %v5809 = vmul.f32 %v5744, %v5675
      %v5810 = vmul.f32 %v5744, %v5676
      %v5811 = vmul.f32 %v5744, %v5677
      %v5812 = vmul.f32 %v5744, %v5678
      %v5813 = vmul.f32 %v5744, %v5679
      %v5814 = vmul.f32 %v5744, %v5680
      %v5815 = vmul.f32 %v5744, %v5681
      %v5816 = vmul.f32 %v5744, %v5682
      %v5817 = vmul.f32 %v5744, %v5683
      %v5818 = vmul.f32 %v5744, %v5684
      %v5819 = vmul.f32 %v5744, %v5685
      %v5820 = vmul.f32 %v5744, %v5686
      %v5821 = vmul.f32 %v5744, %v5687
      %v5822 = vmul.f32 %v5744, %v5688
      %v5823 = vmul.f32 %v5744, %v5689
      %v5824 = vmul.f32 %v5744, %v5690
      %v5825 = vmul.f32 %v5744, %v5691
      %v5826 = vmul.f32 %v5744, %v5692
      %v5827 = vmul.f32 %v5744, %v5693
      %v5828 = vmul.f32 %v5744, %v5694
      %v5829 = vmul.f32 %v5744, %v5695
      %v5830 = vmul.f32 %v5744, %v5696
      %v5831 = vmul.f32 %v5744, %v5697
      %v5832 = vmul.f32 %v5744, %v5698
      %v5833 = vmul.f32 %v5744, %v5699
      %v5834 = vmul.f32 %v5744, %v5700
      %v5835 = vmul.f32 %v5744, %v5701
      %v5836 = vmul.f32 %v5744, %v5702
      %v5837 = vmul.f32 %v5744, %v5703
      %v5838 = vmul.f32 %v5744, %v5704
      %v5839 = vmul.f32 %v5744, %v5705
      %v5840 = vmul.f32 %v5744, %v5706
      %v5841 = vmul.f32 %v5744, %v5707
      %v5842 = vmul.f32 %v5744, %v5708
      %v5843 = vmul.f32 %v5744, %v5709
      %v5844 = vmul.f32 %v5744, %v5710
      %v5845 = vmul.f32 %v5744, %v5711
      %v5846 = vmul.f32 %v5744, %v5712
      %v5847 = vmul.f32 %v5744, %v5713
      %v5848 = vmul.f32 %v5744, %v5714
      %v5849 = vmul.f32 %v5744, %v5715
      %v5850 = vmul.f32 %v5744, %v5716
      %v5851 = vmul.f32 %v5744, %v5717
      %v5852 = vmul.f32 %v5744, %v5718
      %v5853 = vmul.f32 %v5744, %v5719
      %v5854 = vmul.f32 %v5744, %v5720
      %v5855 = vmul.f32 %v5744, %v5721
      %v5856 = vmul.f32 %v5744, %v5722
      %v5857 = vmul.f32 %v5744, %v5723
      %v5858 = vmul.f32 %v5744, %v5724
      %v5859 = vmul.f32 %v5744, %v5725
      %v5860 = vmul.f32 %v5744, %v5726
      %v5861 = vmul.f32 %v5744, %v5727
      %v5862 = vmul.f32 %v5744, %v5728
      %v5863 = vmul.f32 %v5744, %v5729
      %v5864 = vmul.f32 %v5744, %v5730
      %v5865 = vmul.f32 %v5744, %v5731
      %v5866 = vmul.f32 %v5744, %v5732
      %v5867 = vmul.f32 %v5744, %v5733
      %v5868 = vmul.f32 %v5744, %v5734
      %v5869 = vmul.f32 %v5744, %v5735
      %v5870 = vmul.f32 %v5744, %v5736
      %v5871 = vmul.f32 %v5744, %v5737
      %v5872 = vmul.f32 %v5744, %v5738
      %v5873 = vmul.f32 %v5744, %v5739
      %v5874 = vadd.f32 %v5483, %v5746
      %v5875 = vadd.f32 %v5484, %v5747
      %v5876 = vadd.f32 %v5485, %v5748
      %v5877 = vadd.f32 %v5486, %v5749
      %v5878 = vadd.f32 %v5487, %v5750
      %v5879 = vadd.f32 %v5488, %v5751
      %v5880 = vadd.f32 %v5489, %v5752
      %v5881 = vadd.f32 %v5490, %v5753
      %v5882 = vadd.f32 %v5491, %v5754
      %v5883 = vadd.f32 %v5492, %v5755
      %v5884 = vadd.f32 %v5493, %v5756
      %v5885 = vadd.f32 %v5494, %v5757
      %v5886 = vadd.f32 %v5495, %v5758
      %v5887 = vadd.f32 %v5496, %v5759
      %v5888 = vadd.f32 %v5497, %v5760
      %v5889 = vadd.f32 %v5498, %v5761
      %v5890 = vadd.f32 %v5499, %v5762
      %v5891 = vadd.f32 %v5500, %v5763
      %v5892 = vadd.f32 %v5501, %v5764
      %v5893 = vadd.f32 %v5502, %v5765
      %v5894 = vadd.f32 %v5503, %v5766
      %v5895 = vadd.f32 %v5504, %v5767
      %v5896 = vadd.f32 %v5505, %v5768
      %v5897 = vadd.f32 %v5506, %v5769
      %v5898 = vadd.f32 %v5507, %v5770
      %v5899 = vadd.f32 %v5508, %v5771
      %v5900 = vadd.f32 %v5509, %v5772
      %v5901 = vadd.f32 %v5510, %v5773
      %v5902 = vadd.f32 %v5511, %v5774
      %v5903 = vadd.f32 %v5512, %v5775
      %v5904 = vadd.f32 %v5513, %v5776
      %v5905 = vadd.f32 %v5514, %v5777
      %v5906 = vadd.f32 %v5515, %v5778
      %v5907 = vadd.f32 %v5516, %v5779
      %v5908 = vadd.f32 %v5517, %v5780
      %v5909 = vadd.f32 %v5518, %v5781
      %v5910 = vadd.f32 %v5519, %v5782
      %v5911 = vadd.f32 %v5520, %v5783
      %v5912 = vadd.f32 %v5521, %v5784
      %v5913 = vadd.f32 %v5522, %v5785
      %v5914 = vadd.f32 %v5523, %v5786
      %v5915 = vadd.f32 %v5524, %v5787
      %v5916 = vadd.f32 %v5525, %v5788
      %v5917 = vadd.f32 %v5526, %v5789
      %v5918 = vadd.f32 %v5527, %v5790
      %v5919 = vadd.f32 %v5528, %v5791
      %v5920 = vadd.f32 %v5529, %v5792
      %v5921 = vadd.f32 %v5530, %v5793
      %v5922 = vadd.f32 %v5531, %v5794
      %v5923 = vadd.f32 %v5532, %v5795
      %v5924 = vadd.f32 %v5533, %v5796
      %v5925 = vadd.f32 %v5534, %v5797
      %v5926 = vadd.f32 %v5535, %v5798
      %v5927 = vadd.f32 %v5536, %v5799
      %v5928 = vadd.f32 %v5537, %v5800
      %v5929 = vadd.f32 %v5538, %v5801
      %v5930 = vadd.f32 %v5539, %v5802
      %v5931 = vadd.f32 %v5540, %v5803
      %v5932 = vadd.f32 %v5541, %v5804
      %v5933 = vadd.f32 %v5542, %v5805
      %v5934 = vadd.f32 %v5543, %v5806
      %v5935 = vadd.f32 %v5544, %v5807
      %v5936 = vadd.f32 %v5545, %v5808
      %v5937 = vadd.f32 %v5546, %v5809
      %v5938 = vadd.f32 %v5547, %v5810
      %v5939 = vadd.f32 %v5548, %v5811
      %v5940 = vadd.f32 %v5549, %v5812
      %v5941 = vadd.f32 %v5550, %v5813
      %v5942 = vadd.f32 %v5551, %v5814
      %v5943 = vadd.f32 %v5552, %v5815
      %v5944 = vadd.f32 %v5553, %v5816
      %v5945 = vadd.f32 %v5554, %v5817
      %v5946 = vadd.f32 %v5555, %v5818
      %v5947 = vadd.f32 %v5556, %v5819
      %v5948 = vadd.f32 %v5557, %v5820
      %v5949 = vadd.f32 %v5558, %v5821
      %v5950 = vadd.f32 %v5559, %v5822
      %v5951 = vadd.f32 %v5560, %v5823
      %v5952 = vadd.f32 %v5561, %v5824
      %v5953 = vadd.f32 %v5562, %v5825
      %v5954 = vadd.f32 %v5563, %v5826
      %v5955 = vadd.f32 %v5564, %v5827
      %v5956 = vadd.f32 %v5565, %v5828
      %v5957 = vadd.f32 %v5566, %v5829
      %v5958 = vadd.f32 %v5567, %v5830
      %v5959 = vadd.f32 %v5568, %v5831
      %v5960 = vadd.f32 %v5569, %v5832
      %v5961 = vadd.f32 %v5570, %v5833
      %v5962 = vadd.f32 %v5571, %v5834
      %v5963 = vadd.f32 %v5572, %v5835
      %v5964 = vadd.f32 %v5573, %v5836
      %v5965 = vadd.f32 %v5574, %v5837
      %v5966 = vadd.f32 %v5575, %v5838
      %v5967 = vadd.f32 %v5576, %v5839
      %v5968 = vadd.f32 %v5577, %v5840
      %v5969 = vadd.f32 %v5578, %v5841
      %v5970 = vadd.f32 %v5579, %v5842
      %v5971 = vadd.f32 %v5580, %v5843
      %v5972 = vadd.f32 %v5581, %v5844
      %v5973 = vadd.f32 %v5582, %v5845
      %v5974 = vadd.f32 %v5583, %v5846
      %v5975 = vadd.f32 %v5584, %v5847
      %v5976 = vadd.f32 %v5585, %v5848
      %v5977 = vadd.f32 %v5586, %v5849
      %v5978 = vadd.f32 %v5587, %v5850
      %v5979 = vadd.f32 %v5588, %v5851
      %v5980 = vadd.f32 %v5589, %v5852
      %v5981 = vadd.f32 %v5590, %v5853
      %v5982 = vadd.f32 %v5591, %v5854
      %v5983 = vadd.f32 %v5592, %v5855
      %v5984 = vadd.f32 %v5593, %v5856
      %v5985 = vadd.f32 %v5594, %v5857
      %v5986 = vadd.f32 %v5595, %v5858
      %v5987 = vadd.f32 %v5596, %v5859
      %v5988 = vadd.f32 %v5597, %v5860
      %v5989 = vadd.f32 %v5598, %v5861
      %v5990 = vadd.f32 %v5599, %v5862
      %v5991 = vadd.f32 %v5600, %v5863
      %v5992 = vadd.f32 %v5601, %v5864
      %v5993 = vadd.f32 %v5602, %v5865
      %v5994 = vadd.f32 %v5603, %v5866
      %v5995 = vadd.f32 %v5604, %v5867
      %v5996 = vadd.f32 %v5605, %v5868
      %v5997 = vadd.f32 %v5606, %v5869
      %v5998 = vadd.f32 %v5607, %v5870
      %v5999 = vadd.f32 %v5608, %v5871
      %v6000 = vadd.f32 %v5609, %v5872
      %v6001 = vadd.f32 %v5610, %v5873
      %6002 = vst.msk [vmem:[%s224] sm:$0xff] %vm226, %v5874
      %6003 = vst.msk [vmem:[%s224 + $0x8] sm:$0xff] %vm226, %v5875
      %6004 = vst.msk [vmem:[%s224 + $0x10] sm:$0xff] %vm226, %v5876
      %6005 = vst.msk [vmem:[%s224 + $0x18] sm:$0xff] %vm226, %v5877
      %6006 = vst.msk [vmem:[%s224 + $0x20] sm:$0xff] %vm226, %v5878
      %6007 = vst.msk [vmem:[%s224 + $0x28] sm:$0xff] %vm226, %v5879
      %6008 = vst.msk [vmem:[%s224 + $0x30] sm:$0xff] %vm226, %v5880
      %6009 = vst.msk [vmem:[%s224 + $0x38] sm:$0xff] %vm226, %v5881
      %6010 = vst.msk [vmem:[%s224 + $0x40] sm:$0xff] %vm226, %v5882
      %6011 = vst.msk [vmem:[%s224 + $0x48] sm:$0xff] %vm226, %v5883
      %6012 = vst.msk [vmem:[%s224 + $0x50] sm:$0xff] %vm226, %v5884
      %6013 = vst.msk [vmem:[%s224 + $0x58] sm:$0xff] %vm226, %v5885
      %6014 = vst.msk [vmem:[%s224 + $0x60] sm:$0xff] %vm226, %v5886
      %6015 = vst.msk [vmem:[%s224 + $0x68] sm:$0xff] %vm226, %v5887
      %6016 = vst.msk [vmem:[%s224 + $0x70] sm:$0xff] %vm226, %v5888
      %6017 = vst.msk [vmem:[%s224 + $0x78] sm:$0xff] %vm226, %v5889
      %6018 = vst.msk [vmem:[%s224 + $0x80] sm:$0xff] %vm226, %v5890
      %6019 = vst.msk [vmem:[%s224 + $0x88] sm:$0xff] %vm226, %v5891
      %6020 = vst.msk [vmem:[%s224 + $0x90] sm:$0xff] %vm226, %v5892
      %6021 = vst.msk [vmem:[%s224 + $0x98] sm:$0xff] %vm226, %v5893
      %6022 = vst.msk [vmem:[%s224 + $0xa0] sm:$0xff] %vm226, %v5894
      %6023 = vst.msk [vmem:[%s224 + $0xa8] sm:$0xff] %vm226, %v5895
      %6024 = vst.msk [vmem:[%s224 + $0xb0] sm:$0xff] %vm226, %v5896
      %6025 = vst.msk [vmem:[%s224 + $0xb8] sm:$0xff] %vm226, %v5897
      %6026 = vst.msk [vmem:[%s224 + $0xc0] sm:$0xff] %vm226, %v5898
      %6027 = vst.msk [vmem:[%s224 + $0xc8] sm:$0xff] %vm226, %v5899
      %6028 = vst.msk [vmem:[%s224 + $0xd0] sm:$0xff] %vm226, %v5900
      %6029 = vst.msk [vmem:[%s224 + $0xd8] sm:$0xff] %vm226, %v5901
      %6030 = vst.msk [vmem:[%s224 + $0xe0] sm:$0xff] %vm226, %v5902
      %6031 = vst.msk [vmem:[%s224 + $0xe8] sm:$0xff] %vm226, %v5903
      %6032 = vst.msk [vmem:[%s224 + $0xf0] sm:$0xff] %vm226, %v5904
      %6033 = vst.msk [vmem:[%s224 + $0xf8] sm:$0xff] %vm226, %v5905
      %6034 = vst.msk [vmem:[%s224 + $0x100] sm:$0xff] %vm226, %v5906
      %6035 = vst.msk [vmem:[%s224 + $0x108] sm:$0xff] %vm226, %v5907
      %6036 = vst.msk [vmem:[%s224 + $0x110] sm:$0xff] %vm226, %v5908
      %6037 = vst.msk [vmem:[%s224 + $0x118] sm:$0xff] %vm226, %v5909
      %6038 = vst.msk [vmem:[%s224 + $0x120] sm:$0xff] %vm226, %v5910
      %6039 = vst.msk [vmem:[%s224 + $0x128] sm:$0xff] %vm226, %v5911
      %6040 = vst.msk [vmem:[%s224 + $0x130] sm:$0xff] %vm226, %v5912
      %6041 = vst.msk [vmem:[%s224 + $0x138] sm:$0xff] %vm226, %v5913
      %6042 = vst.msk [vmem:[%s224 + $0x140] sm:$0xff] %vm226, %v5914
      %6043 = vst.msk [vmem:[%s224 + $0x148] sm:$0xff] %vm226, %v5915
      %6044 = vst.msk [vmem:[%s224 + $0x150] sm:$0xff] %vm226, %v5916
      %6045 = vst.msk [vmem:[%s224 + $0x158] sm:$0xff] %vm226, %v5917
      %6046 = vst.msk [vmem:[%s224 + $0x160] sm:$0xff] %vm226, %v5918
      %6047 = vst.msk [vmem:[%s224 + $0x168] sm:$0xff] %vm226, %v5919
      %6048 = vst.msk [vmem:[%s224 + $0x170] sm:$0xff] %vm226, %v5920
      %6049 = vst.msk [vmem:[%s224 + $0x178] sm:$0xff] %vm226, %v5921
      %6050 = vst.msk [vmem:[%s224 + $0x180] sm:$0xff] %vm226, %v5922
      %6051 = vst.msk [vmem:[%s224 + $0x188] sm:$0xff] %vm226, %v5923
      %6052 = vst.msk [vmem:[%s224 + $0x190] sm:$0xff] %vm226, %v5924
      %6053 = vst.msk [vmem:[%s224 + $0x198] sm:$0xff] %vm226, %v5925
      %6054 = vst.msk [vmem:[%s224 + $0x1a0] sm:$0xff] %vm226, %v5926
      %6055 = vst.msk [vmem:[%s224 + $0x1a8] sm:$0xff] %vm226, %v5927
      %6056 = vst.msk [vmem:[%s224 + $0x1b0] sm:$0xff] %vm226, %v5928
      %6057 = vst.msk [vmem:[%s224 + $0x1b8] sm:$0xff] %vm226, %v5929
      %6058 = vst.msk [vmem:[%s224 + $0x1c0] sm:$0xff] %vm226, %v5930
      %6059 = vst.msk [vmem:[%s224 + $0x1c8] sm:$0xff] %vm226, %v5931
      %6060 = vst.msk [vmem:[%s224 + $0x1d0] sm:$0xff] %vm226, %v5932
      %6061 = vst.msk [vmem:[%s224 + $0x1d8] sm:$0xff] %vm226, %v5933
      %6062 = vst.msk [vmem:[%s224 + $0x1e0] sm:$0xff] %vm226, %v5934
      %6063 = vst.msk [vmem:[%s224 + $0x1e8] sm:$0xff] %vm226, %v5935
      %6064 = vst.msk [vmem:[%s224 + $0x1f0] sm:$0xff] %vm226, %v5936
      %6065 = vst.msk [vmem:[%s224 + $0x1f8] sm:$0xff] %vm226, %v5937
      %6066 = vst.msk [vmem:[%s224 + $0x200] sm:$0xff] %vm226, %v5938
      %6067 = vst.msk [vmem:[%s224 + $0x208] sm:$0xff] %vm226, %v5939
      %6068 = vst.msk [vmem:[%s224 + $0x210] sm:$0xff] %vm226, %v5940
      %6069 = vst.msk [vmem:[%s224 + $0x218] sm:$0xff] %vm226, %v5941
      %6070 = vst.msk [vmem:[%s224 + $0x220] sm:$0xff] %vm226, %v5942
      %6071 = vst.msk [vmem:[%s224 + $0x228] sm:$0xff] %vm226, %v5943
      %6072 = vst.msk [vmem:[%s224 + $0x230] sm:$0xff] %vm226, %v5944
      %6073 = vst.msk [vmem:[%s224 + $0x238] sm:$0xff] %vm226, %v5945
      %6074 = vst.msk [vmem:[%s224 + $0x240] sm:$0xff] %vm226, %v5946
      %6075 = vst.msk [vmem:[%s224 + $0x248] sm:$0xff] %vm226, %v5947
      %6076 = vst.msk [vmem:[%s224 + $0x250] sm:$0xff] %vm226, %v5948
      %6077 = vst.msk [vmem:[%s224 + $0x258] sm:$0xff] %vm226, %v5949
      %6078 = vst.msk [vmem:[%s224 + $0x260] sm:$0xff] %vm226, %v5950
      %6079 = vst.msk [vmem:[%s224 + $0x268] sm:$0xff] %vm226, %v5951
      %6080 = vst.msk [vmem:[%s224 + $0x270] sm:$0xff] %vm226, %v5952
      %6081 = vst.msk [vmem:[%s224 + $0x278] sm:$0xff] %vm226, %v5953
      %6082 = vst.msk [vmem:[%s224 + $0x280] sm:$0xff] %vm226, %v5954
      %6083 = vst.msk [vmem:[%s224 + $0x288] sm:$0xff] %vm226, %v5955
      %6084 = vst.msk [vmem:[%s224 + $0x290] sm:$0xff] %vm226, %v5956
      %6085 = vst.msk [vmem:[%s224 + $0x298] sm:$0xff] %vm226, %v5957
      %6086 = vst.msk [vmem:[%s224 + $0x2a0] sm:$0xff] %vm226, %v5958
      %6087 = vst.msk [vmem:[%s224 + $0x2a8] sm:$0xff] %vm226, %v5959
      %6088 = vst.msk [vmem:[%s224 + $0x2b0] sm:$0xff] %vm226, %v5960
      %6089 = vst.msk [vmem:[%s224 + $0x2b8] sm:$0xff] %vm226, %v5961
      %6090 = vst.msk [vmem:[%s224 + $0x2c0] sm:$0xff] %vm226, %v5962
      %6091 = vst.msk [vmem:[%s224 + $0x2c8] sm:$0xff] %vm226, %v5963
      %6092 = vst.msk [vmem:[%s224 + $0x2d0] sm:$0xff] %vm226, %v5964
      %6093 = vst.msk [vmem:[%s224 + $0x2d8] sm:$0xff] %vm226, %v5965
      %6094 = vst.msk [vmem:[%s224 + $0x2e0] sm:$0xff] %vm226, %v5966
      %6095 = vst.msk [vmem:[%s224 + $0x2e8] sm:$0xff] %vm226, %v5967
      %6096 = vst.msk [vmem:[%s224 + $0x2f0] sm:$0xff] %vm226, %v5968
      %6097 = vst.msk [vmem:[%s224 + $0x2f8] sm:$0xff] %vm226, %v5969
      %6098 = vst.msk [vmem:[%s224 + $0x300] sm:$0xff] %vm226, %v5970
      %6099 = vst.msk [vmem:[%s224 + $0x308] sm:$0xff] %vm226, %v5971
      %6100 = vst.msk [vmem:[%s224 + $0x310] sm:$0xff] %vm226, %v5972
      %6101 = vst.msk [vmem:[%s224 + $0x318] sm:$0xff] %vm226, %v5973
      %6102 = vst.msk [vmem:[%s224 + $0x320] sm:$0xff] %vm226, %v5974
      %6103 = vst.msk [vmem:[%s224 + $0x328] sm:$0xff] %vm226, %v5975
      %6104 = vst.msk [vmem:[%s224 + $0x330] sm:$0xff] %vm226, %v5976
      %6105 = vst.msk [vmem:[%s224 + $0x338] sm:$0xff] %vm226, %v5977
      %6106 = vst.msk [vmem:[%s224 + $0x340] sm:$0xff] %vm226, %v5978
      %6107 = vst.msk [vmem:[%s224 + $0x348] sm:$0xff] %vm226, %v5979
      %6108 = vst.msk [vmem:[%s224 + $0x350] sm:$0xff] %vm226, %v5980
      %6109 = vst.msk [vmem:[%s224 + $0x358] sm:$0xff] %vm226, %v5981
      %6110 = vst.msk [vmem:[%s224 + $0x360] sm:$0xff] %vm226, %v5982
      %6111 = vst.msk [vmem:[%s224 + $0x368] sm:$0xff] %vm226, %v5983
      %6112 = vst.msk [vmem:[%s224 + $0x370] sm:$0xff] %vm226, %v5984
      %6113 = vst.msk [vmem:[%s224 + $0x378] sm:$0xff] %vm226, %v5985
      %6114 = vst.msk [vmem:[%s224 + $0x380] sm:$0xff] %vm226, %v5986
      %6115 = vst.msk [vmem:[%s224 + $0x388] sm:$0xff] %vm226, %v5987
      %6116 = vst.msk [vmem:[%s224 + $0x390] sm:$0xff] %vm226, %v5988
      %6117 = vst.msk [vmem:[%s224 + $0x398] sm:$0xff] %vm226, %v5989
      %6118 = vst.msk [vmem:[%s224 + $0x3a0] sm:$0xff] %vm226, %v5990
      %6119 = vst.msk [vmem:[%s224 + $0x3a8] sm:$0xff] %vm226, %v5991
      %6120 = vst.msk [vmem:[%s224 + $0x3b0] sm:$0xff] %vm226, %v5992
      %6121 = vst.msk [vmem:[%s224 + $0x3b8] sm:$0xff] %vm226, %v5993
      %6122 = vst.msk [vmem:[%s224 + $0x3c0] sm:$0xff] %vm226, %v5994
      %6123 = vst.msk [vmem:[%s224 + $0x3c8] sm:$0xff] %vm226, %v5995
      %6124 = vst.msk [vmem:[%s224 + $0x3d0] sm:$0xff] %vm226, %v5996
      %6125 = vst.msk [vmem:[%s224 + $0x3d8] sm:$0xff] %vm226, %v5997
      %6126 = vst.msk [vmem:[%s224 + $0x3e0] sm:$0xff] %vm226, %v5998
      %6127 = vst.msk [vmem:[%s224 + $0x3e8] sm:$0xff] %vm226, %v5999
      %6128 = vst.msk [vmem:[%s224 + $0x3f0] sm:$0xff] %vm226, %v6000
      %6129 = vst.msk [vmem:[%s224 + $0x3f8] sm:$0xff] %vm226, %v6001
      %p6130 = scmp.lt.s32.totalorder %s16, 1
      %s6131 = scalar_select %p6130, %s16, 1
      %s6132 = smul.addr %s6131, 128
      %s6133 = smul.addr %s6132, 8
      %s6134 = scalar_lea.vmem %s5, %s6133
      // Predicated region
      $region41: #{upconv_block_forward.1} parent=39 // pred_check
        %p6135 = pneg %p144
      $region42: #{upconv_block_forward.1} parent=39 // pred_check_branch
        %6137 = sbr.rel (%p6135) target = $region44
      $region43: #{upconv_block_forward.1} parent=39 // pred_region
        _
      $region44: #{upconv_block_forward.1} parent=39 // pred_fallthru
        _
    $region40: #{upconv_block_forward.1} parent=5 // pred_fallthru
      _
    %p6138 = scmp.le.s32.totalorder 2, %s11
    // Predicated region
    $region45: #{upconv_block_forward.1} parent=5 // pred_check
      %p6139 = pneg %p6138
    $region46: #{upconv_block_forward.1} parent=5 // pred_check_branch
      %6141 = sbr.rel (%p6139) target = $region48
    $region47: #{upconv_block_forward.1} parent=5 // pred_region
      %s6142 = ssub.s32 %s11, 2
      // Predicated region
      $region49: #{upconv_block_forward.1} parent=47 // pred_check
        %p6143 = pneg %p150
      $region50: #{upconv_block_forward.1} parent=47 // pred_check_branch
        %6145 = sbr.rel (%p6143) target = $region52
      $region51: #{upconv_block_forward.1} parent=47 // pred_region
        %p6146 = scmp.lt.s32.totalorder %s17, 1
        %s6147 = scalar_select %p6146, %s17, 1
        %s6148 = smul.addr %s6147, 128
        %s6149 = smul.addr %s6148, 8
        %s6150 = scalar_lea.vmem %s5, %s6149
      $region52: #{upconv_block_forward.1} parent=47 // pred_fallthru
        _
    $region48: #{upconv_block_forward.1} parent=5 // pred_fallthru
      _
  $region6: #{upconv_block_forward.1} parent=0 // loop_footer
    %s15 = sadd.s32 1, %s11
  $region7: #{upconv_block_forward.1} parent=0 // loop_footer_branch
    %10 = sbr.rel target = $region3
  $region8: #{upconv_block_forward.1} parent=0 // loop_exit
    _

</llo_original>
